<compile_context>
chip_gen: v7x
topology: tpu7x:2x2x1
jax: 0.10.0
libtpu: 0.0.40
codegen_flags: <defaults>
</compile_context>

<pallas_src>
import functools

import jax
import jax.numpy as jnp
from jax.experimental import pallas as pl
from jax.experimental.pallas import tpu as pltpu


TM = 256  # output rows per grid tile (multiple of 128 keeps v5e's 4 MXUs fed)


def _round_up(x, m):
    return (x + m - 1) // m * m


def _conv_stats_kernel(x_ref, w1_ref, mask_ref, conv_ref, stats_ref, *, wp):
    """Dilated 3x3 conv (9 aligned bf16 matmuls) + per-tile BN partial stats.

    x_ref    : (3, L, Cin)  bf16  kw-preshifted flattened padded input (resident)
    w1_ref   : (3, 3, Cin, Cmid) bf16
    mask_ref : (TM, 1) f32   1.0 for valid output pixels, 0.0 for padding rows
    conv_ref : (TM, Cmid) f32 out  conv1 result for this tile (acts as accumulator)
    stats_ref: (8, Cmid) f32 out   row0 = sum(valid conv1), row1 = sum(valid conv1^2)
    """
    cmid = conv_ref.shape[1]
    base = pl.multiple_of(pl.program_id(0) * TM, TM)

    conv_ref[...] = jnp.zeros_like(conv_ref)
    for kh in range(3):
        off = pl.multiple_of(base + kh * 2 * wp, 8)
        for kw in range(3):
            conv_ref[...] += jnp.dot(
                x_ref[kw, pl.ds(off, TM), :], w1_ref[kh, kw],
                preferred_element_type=jnp.float32)

    acc = conv_ref[...]
    masked = acc * mask_ref[...]                            # zero out padding rows
    s1 = jnp.sum(masked, axis=0, keepdims=True)             # (1, Cmid)
    s2 = jnp.sum(masked * acc, axis=0, keepdims=True)       # (1, Cmid)
    stats_ref[...] = jnp.concatenate(
        [s1, s2, jnp.zeros((6, cmid), jnp.float32)], axis=0)


def _bn_relu_matmul_kernel(conv_ref, scale_ref, shift_ref, w2_ref, out_ref):
    """BN affine apply + ReLU (f32) + 1x1 conv as bf16 matmul (f32 accumulation)."""
    y = jnp.maximum(conv_ref[...] * scale_ref[...] + shift_ref[...], 0.0)
    out_ref[...] = jnp.dot(y.astype(jnp.bfloat16), w2_ref[...],
                           preferred_element_type=jnp.float32).astype(out_ref.dtype)


def fused_forward(x_nchw, w1_oihw, w2_oihw, gamma, beta, eps=1e-5):
    """x_nchw: (N, 256, H, W). Returns (N, 1024, H, W) float32."""
    N, Cin, H, W = x_nchw.shape
    Cmid = w1_oihw.shape[0]          # 256
    Cout = w2_oihw.shape[0]          # 1024

    HP = H + 4                        # pad=2 top/bottom
    WP = _round_up(W + 4, 8)          # pad=2 left + right-pad so 2*WP is 16-aligned
    P = N * HP * WP                   # "extended" output rows (incl. padding rows)
    PT = _round_up(P, TM)
    num_tiles = PT // TM
    L = PT + 4 * WP                   # rows each shifted input copy must expose

    # ---- wrapper-side layout plumbing: NCHW -> NHWC, zero pad, flatten ----
    x_nhwc = jnp.transpose(x_nchw, (0, 2, 3, 1))
    xpad = jnp.pad(x_nhwc, ((0, 0), (2, 2), (2, WP - W - 2), (0, 0)))
    x_flat = xpad.reshape(P, Cin).astype(jnp.bfloat16)
    x_flat = jnp.pad(x_flat, ((0, L + 4 - P), (0, 0)))
    # 3 kw-shifted copies -> every in-kernel slice is an aligned contiguous window.
    x_shifts = jnp.stack([x_flat[2 * j:2 * j + L] for j in range(3)], axis=0)

    # valid-pixel mask (excludes spatial zero-padding / tail rows) for BN stats
    mask = jnp.pad(jnp.ones((N, H, W), jnp.float32),
                   ((0, 0), (0, HP - H), (0, WP - W)))
    mask = jnp.pad(mask.reshape(P), (0, PT - P)).reshape(PT, 1)

    w1 = jnp.transpose(w1_oihw, (2, 3, 1, 0)).astype(jnp.bfloat16)   # (3,3,Cin,Cmid)
    w2 = jnp.transpose(w2_oihw[:, :, 0, 0], (1, 0)).astype(jnp.bfloat16)  # (Cmid,Cout)

    cparams = pltpu.CompilerParams(dimension_semantics=("parallel",),
                                   vmem_limit_bytes=32 * 1024 * 1024)

    # ---- pass 1: dilated conv + partial BN statistics ----
    conv_ext, stats = pl.pallas_call(
        functools.partial(_conv_stats_kernel, wp=WP),
        out_shape=(jax.ShapeDtypeStruct((PT, Cmid), jnp.float32),
                   jax.ShapeDtypeStruct((num_tiles * 8, Cmid), jnp.float32)),
        grid=(num_tiles,),
        in_specs=[pl.BlockSpec((3, L, Cin), lambda t: (0, 0, 0)),
                  pl.BlockSpec((3, 3, Cin, Cmid), lambda t: (0, 0, 0, 0)),
                  pl.BlockSpec((TM, 1), lambda t: (t, 0))],
        out_specs=(pl.BlockSpec((TM, Cmid), lambda t: (t, 0)),
                   pl.BlockSpec((8, Cmid), lambda t: (t, 0))),
        compiler_params=cparams,
    )(x_shifts, w1, mask)

    # ---- finish BN statistics on tiny (Cmid,) vectors (training-mode batch stats) ----
    stats = stats.reshape(num_tiles, 8, Cmid)
    cnt = float(N * H * W)
    mean = jnp.sum(stats[:, 0, :], axis=0) / cnt
    var = jnp.sum(stats[:, 1, :], axis=0) / cnt - mean * mean   # biased batch var
    inv_std = jax.lax.rsqrt(var + eps)
    scale = (gamma * inv_std).reshape(1, Cmid).astype(jnp.float32)
    shift = (beta - mean * gamma * inv_std).reshape(1, Cmid).astype(jnp.float32)

    # ---- pass 2: normalize + ReLU + 1x1 conv ----
    out_ext = pl.pallas_call(
        _bn_relu_matmul_kernel,
        out_shape=jax.ShapeDtypeStruct((PT, Cout), jnp.float32),
        grid=(num_tiles,),
        in_specs=[pl.BlockSpec((TM, Cmid), lambda t: (t, 0)),
                  pl.BlockSpec((1, Cmid), lambda t: (0, 0)),
                  pl.BlockSpec((1, Cmid), lambda t: (0, 0)),
                  pl.BlockSpec((Cmid, Cout), lambda t: (0, 0))],
        out_specs=pl.BlockSpec((TM, Cout), lambda t: (t, 0)),
        compiler_params=cparams,
    )(conv_ext, scale, shift, w2)

    out = out_ext[:P].reshape(N, HP, WP, Cout)[:, :H, :W, :]
    return jnp.transpose(out, (0, 3, 1, 2))                     # back to NCHW


def reference_forward(x_nchw, w1_oihw, w2_oihw, gamma, beta):
    """Pure-JAX f32 reference (same training-mode BN semantics)."""
    conv1 = jax.lax.conv_general_dilated(
        x_nchw, w1_oihw, window_strides=(1, 1), padding=((2, 2), (2, 2)),
        rhs_dilation=(2, 2), dimension_numbers=("NCHW", "OIHW", "NCHW"))
    mean = jnp.mean(conv1, axis=(0, 2, 3), keepdims=True)
    var = jnp.mean(conv1 * conv1, axis=(0, 2, 3), keepdims=True) - mean * mean
    bn = (conv1 - mean) * jax.lax.rsqrt(var + 1e-5)
    bn = bn * gamma.reshape(1, -1, 1, 1) + beta.reshape(1, -1, 1, 1)
    act = jnp.maximum(bn, 0.0)
    return jax.lax.conv_general_dilated(
        act, w2_oihw, window_strides=(1, 1), padding=((0, 0), (0, 0)),
        dimension_numbers=("NCHW", "OIHW", "NCHW"))


if __name__ == "__main__":
    # Channels fixed by the module (256 -> 256 -> 1024); reduced spatial/batch.
    key = jax.random.PRNGKey(0)
    kx, kw1, kw2, kg, kb = jax.random.split(key, 5)

    N, Cin, H, W = 1, 256, 16, 16
    Cmid, Cout = 256, 1024

    x = jax.random.normal(kx, (N, Cin, H, W), dtype=jnp.float32)
    w1 = jax.random.normal(kw1, (Cmid, Cin, 3, 3), dtype=jnp.float32) * 0.05
    w2 = jax.random.normal(kw2, (Cout, Cmid, 1, 1), dtype=jnp.float32) * 0.05
    gamma = 1.0 + 0.1 * jax.random.normal(kg, (Cmid,), dtype=jnp.float32)
    beta = 0.1 * jax.random.normal(kb, (Cmid,), dtype=jnp.float32)

    fused = jax.jit(fused_forward)
    out = jax.block_until_ready(fused(x, w1, w2, gamma, beta))

    ref = jax.block_until_ready(reference_forward(x, w1, w2, gamma, beta))
    assert out.shape == (N, Cout, H, W), out.shape
    err = jnp.max(jnp.abs(out - ref)) / (jnp.max(jnp.abs(ref)) + 1e-6)
    assert float(err) < 2e-2, f"max relative error too large: {float(err)}"

    print("KERNEL_OK")
</pallas_src>

<mosaic_0001>
module attributes {stable_mosaic.version = 11 : i64} {
  func.func @_conv_stats_kernel(%arg0: i32, %arg1: memref<3x608x256xbf16, #tpu.memory_space<vmem>>, %arg2: memref<3x3x256x256xbf16, #tpu.memory_space<vmem>>, %arg3: memref<256x1xf32, #tpu.memory_space<vmem>>, %arg4: memref<256x256xf32, #tpu.memory_space<vmem>>, %arg5: memref<8x256xf32, #tpu.memory_space<vmem>>) attributes {dimension_semantics = [#tpu.dimension_semantics<parallel>], iteration_bounds = array<i64: 2>, scalar_prefetch = 0 : i64, scratch_operands = 0 : i64, tpu.core_type = #tpu.core_type<tc>, window_params = [{pipeline_mode = #tpu.pipeline_mode<synchronous>, transform_indices = @transform_0, window_bounds = array<i64: 3, 608, 256>}, {pipeline_mode = #tpu.pipeline_mode<synchronous>, transform_indices = @transform_1, window_bounds = array<i64: 3, 3, 256, 256>}, {transform_indices = @transform_2, window_bounds = array<i64: 256, 1>}, {transform_indices = @transform_3, window_bounds = array<i64: 256, 256>}, {transform_indices = @transform_4, window_bounds = array<i64: 8, 256>}]} {
    %c256_i32 = arith.constant 256 : i32
    %0 = arith.muli %arg0, %c256_i32 : i32
    %1 = tpu.assume_multiple %0, 256 : i32
    %cst = arith.constant 0.000000e+00 : f32
    %2 = vector.broadcast %cst : f32 to vector<256x256xf32>
    %c0 = arith.constant 0 : index
    %c0_0 = arith.constant 0 : index
    %3 = vector.load %arg4[%c0, %c0_0] : memref<256x256xf32, #tpu.memory_space<vmem>>, vector<256x256xf32>
    tpu.vector_store %arg4[%c0, %c0_0], %2 {strides = array<i32>} : memref<256x256xf32, #tpu.memory_space<vmem>>, vector<256x256xf32>,
    %c0_i32 = arith.constant 0 : i32
    %4 = arith.addi %1, %c0_i32 : i32
    %5 = tpu.assume_multiple %4, 8 : i32
    %c0_1 = arith.constant 0 : index
    %c0_2 = arith.constant 0 : index
    %6 = vector.load %arg4[%c0_1, %c0_2] : memref<256x256xf32, #tpu.memory_space<vmem>>, vector<256x256xf32>
    %c0_3 = arith.constant 0 : index
    %7 = arith.index_cast %5 : i32 to index
    %c0_4 = arith.constant 0 : index
    %8 = vector.load %arg1[%c0_3, %7, %c0_4] : memref<3x608x256xbf16, #tpu.memory_space<vmem>>, vector<1x256x256xbf16>
    %9 = vector.shape_cast %8 : vector<1x256x256xbf16> to vector<256x256xbf16>
    %c0_5 = arith.constant 0 : index
    %c0_6 = arith.constant 0 : index
    %c0_7 = arith.constant 0 : index
    %c0_8 = arith.constant 0 : index
    %10 = vector.load %arg2[%c0_5, %c0_6, %c0_7, %c0_8] : memref<3x3x256x256xbf16, #tpu.memory_space<vmem>>, vector<1x1x256x256xbf16>
    %11 = vector.shape_cast %10 : vector<1x1x256x256xbf16> to vector<256x256xbf16>
    %cst_9 = arith.constant dense<0.000000e+00> : vector<256x256xf32>
    %12 = tpu.matmul %9, %11, %cst_9 {dimension_numbers = #tpu.dot_dimension_numbers<[1], [0], [0], [1], [0, 0, 1, 1], [], []>} : vector<256x256xbf16>, vector<256x256xbf16>, vector<256x256xf32> -> vector<256x256xf32>
    %13 = arith.addf %6, %12 : vector<256x256xf32>
    %c0_10 = arith.constant 0 : index
    %c0_11 = arith.constant 0 : index
    %14 = vector.load %arg4[%c0_10, %c0_11] : memref<256x256xf32, #tpu.memory_space<vmem>>, vector<256x256xf32>
    tpu.vector_store %arg4[%c0_10, %c0_11], %13 {strides = array<i32>} : memref<256x256xf32, #tpu.memory_space<vmem>>, vector<256x256xf32>,
    %c0_12 = arith.constant 0 : index
    %c0_13 = arith.constant 0 : index
    %15 = vector.load %arg4[%c0_12, %c0_13] : memref<256x256xf32, #tpu.memory_space<vmem>>, vector<256x256xf32>
    %c1 = arith.constant 1 : index
    %16 = arith.index_cast %5 : i32 to index
    %c0_14 = arith.constant 0 : index
    %17 = vector.load %arg1[%c1, %16, %c0_14] : memref<3x608x256xbf16, #tpu.memory_space<vmem>>, vector<1x256x256xbf16>
    %18 = vector.shape_cast %17 : vector<1x256x256xbf16> to vector<256x256xbf16>
    %c0_15 = arith.constant 0 : index
    %c1_16 = arith.constant 1 : index
    %c0_17 = arith.constant 0 : index
    %c0_18 = arith.constant 0 : index
    %19 = vector.load %arg2[%c0_15, %c1_16, %c0_17, %c0_18] : memref<3x3x256x256xbf16, #tpu.memory_space<vmem>>, vector<1x1x256x256xbf16>
    %20 = vector.shape_cast %19 : vector<1x1x256x256xbf16> to vector<256x256xbf16>
    %cst_19 = arith.constant dense<0.000000e+00> : vector<256x256xf32>
    %21 = tpu.matmul %18, %20, %cst_19 {dimension_numbers = #tpu.dot_dimension_numbers<[1], [0], [0], [1], [0, 0, 1, 1], [], []>} : vector<256x256xbf16>, vector<256x256xbf16>, vector<256x256xf32> -> vector<256x256xf32>
    %22 = arith.addf %15, %21 : vector<256x256xf32>
    %c0_20 = arith.constant 0 : index
    %c0_21 = arith.constant 0 : index
    %23 = vector.load %arg4[%c0_20, %c0_21] : memref<256x256xf32, #tpu.memory_space<vmem>>, vector<256x256xf32>
    tpu.vector_store %arg4[%c0_20, %c0_21], %22 {strides = array<i32>} : memref<256x256xf32, #tpu.memory_space<vmem>>, vector<256x256xf32>,
    %c0_22 = arith.constant 0 : index
    %c0_23 = arith.constant 0 : index
    %24 = vector.load %arg4[%c0_22, %c0_23] : memref<256x256xf32, #tpu.memory_space<vmem>>, vector<256x256xf32>
    %c2 = arith.constant 2 : index
    %25 = arith.index_cast %5 : i32 to index
    %c0_24 = arith.constant 0 : index
    %26 = vector.load %arg1[%c2, %25, %c0_24] : memref<3x608x256xbf16, #tpu.memory_space<vmem>>, vector<1x256x256xbf16>
    %27 = vector.shape_cast %26 : vector<1x256x256xbf16> to vector<256x256xbf16>
    %c0_25 = arith.constant 0 : index
    %c2_26 = arith.constant 2 : index
    %c0_27 = arith.constant 0 : index
    %c0_28 = arith.constant 0 : index
    %28 = vector.load %arg2[%c0_25, %c2_26, %c0_27, %c0_28] : memref<3x3x256x256xbf16, #tpu.memory_space<vmem>>, vector<1x1x256x256xbf16>
    %29 = vector.shape_cast %28 : vector<1x1x256x256xbf16> to vector<256x256xbf16>
    %cst_29 = arith.constant dense<0.000000e+00> : vector<256x256xf32>
    %30 = tpu.matmul %27, %29, %cst_29 {dimension_numbers = #tpu.dot_dimension_numbers<[1], [0], [0], [1], [0, 0, 1, 1], [], []>} : vector<256x256xbf16>, vector<256x256xbf16>, vector<256x256xf32> -> vector<256x256xf32>
    %31 = arith.addf %24, %30 : vector<256x256xf32>
    %c0_30 = arith.constant 0 : index
    %c0_31 = arith.constant 0 : index
    %32 = vector.load %arg4[%c0_30, %c0_31] : memref<256x256xf32, #tpu.memory_space<vmem>>, vector<256x256xf32>
    tpu.vector_store %arg4[%c0_30, %c0_31], %31 {strides = array<i32>} : memref<256x256xf32, #tpu.memory_space<vmem>>, vector<256x256xf32>,
    %c48_i32 = arith.constant 48 : i32
    %33 = arith.addi %1, %c48_i32 : i32
    %34 = tpu.assume_multiple %33, 8 : i32
    %c0_32 = arith.constant 0 : index
    %c0_33 = arith.constant 0 : index
    %35 = vector.load %arg4[%c0_32, %c0_33] : memref<256x256xf32, #tpu.memory_space<vmem>>, vector<256x256xf32>
    %c0_34 = arith.constant 0 : index
    %36 = arith.index_cast %34 : i32 to index
    %c0_35 = arith.constant 0 : index
    %37 = vector.load %arg1[%c0_34, %36, %c0_35] : memref<3x608x256xbf16, #tpu.memory_space<vmem>>, vector<1x256x256xbf16>
    %38 = vector.shape_cast %37 : vector<1x256x256xbf16> to vector<256x256xbf16>
    %c1_36 = arith.constant 1 : index
    %c0_37 = arith.constant 0 : index
    %c0_38 = arith.constant 0 : index
    %c0_39 = arith.constant 0 : index
    %39 = vector.load %arg2[%c1_36, %c0_37, %c0_38, %c0_39] : memref<3x3x256x256xbf16, #tpu.memory_space<vmem>>, vector<1x1x256x256xbf16>
    %40 = vector.shape_cast %39 : vector<1x1x256x256xbf16> to vector<256x256xbf16>
    %cst_40 = arith.constant dense<0.000000e+00> : vector<256x256xf32>
    %41 = tpu.matmul %38, %40, %cst_40 {dimension_numbers = #tpu.dot_dimension_numbers<[1], [0], [0], [1], [0, 0, 1, 1], [], []>} : vector<256x256xbf16>, vector<256x256xbf16>, vector<256x256xf32> -> vector<256x256xf32>
    %42 = arith.addf %35, %41 : vector<256x256xf32>
    %c0_41 = arith.constant 0 : index
    %c0_42 = arith.constant 0 : index
    %43 = vector.load %arg4[%c0_41, %c0_42] : memref<256x256xf32, #tpu.memory_space<vmem>>, vector<256x256xf32>
    tpu.vector_store %arg4[%c0_41, %c0_42], %42 {strides = array<i32>} : memref<256x256xf32, #tpu.memory_space<vmem>>, vector<256x256xf32>,
    %c0_43 = arith.constant 0 : index
    %c0_44 = arith.constant 0 : index
    %44 = vector.load %arg4[%c0_43, %c0_44] : memref<256x256xf32, #tpu.memory_space<vmem>>, vector<256x256xf32>
    %c1_45 = arith.constant 1 : index
    %45 = arith.index_cast %34 : i32 to index
    %c0_46 = arith.constant 0 : index
    %46 = vector.load %arg1[%c1_45, %45, %c0_46] : memref<3x608x256xbf16, #tpu.memory_space<vmem>>, vector<1x256x256xbf16>
    %47 = vector.shape_cast %46 : vector<1x256x256xbf16> to vector<256x256xbf16>
    %c1_47 = arith.constant 1 : index
    %c1_48 = arith.constant 1 : index
    %c0_49 = arith.constant 0 : index
    %c0_50 = arith.constant 0 : index
    %48 = vector.load %arg2[%c1_47, %c1_48, %c0_49, %c0_50] : memref<3x3x256x256xbf16, #tpu.memory_space<vmem>>, vector<1x1x256x256xbf16>
    %49 = vector.shape_cast %48 : vector<1x1x256x256xbf16> to vector<256x256xbf16>
    %cst_51 = arith.constant dense<0.000000e+00> : vector<256x256xf32>
    %50 = tpu.matmul %47, %49, %cst_51 {dimension_numbers = #tpu.dot_dimension_numbers<[1], [0], [0], [1], [0, 0, 1, 1], [], []>} : vector<256x256xbf16>, vector<256x256xbf16>, vector<256x256xf32> -> vector<256x256xf32>
    %51 = arith.addf %44, %50 : vector<256x256xf32>
    %c0_52 = arith.constant 0 : index
    %c0_53 = arith.constant 0 : index
    %52 = vector.load %arg4[%c0_52, %c0_53] : memref<256x256xf32, #tpu.memory_space<vmem>>, vector<256x256xf32>
    tpu.vector_store %arg4[%c0_52, %c0_53], %51 {strides = array<i32>} : memref<256x256xf32, #tpu.memory_space<vmem>>, vector<256x256xf32>,
    %c0_54 = arith.constant 0 : index
    %c0_55 = arith.constant 0 : index
    %53 = vector.load %arg4[%c0_54, %c0_55] : memref<256x256xf32, #tpu.memory_space<vmem>>, vector<256x256xf32>
    %c2_56 = arith.constant 2 : index
    %54 = arith.index_cast %34 : i32 to index
    %c0_57 = arith.constant 0 : index
    %55 = vector.load %arg1[%c2_56, %54, %c0_57] : memref<3x608x256xbf16, #tpu.memory_space<vmem>>, vector<1x256x256xbf16>
    %56 = vector.shape_cast %55 : vector<1x256x256xbf16> to vector<256x256xbf16>
    %c1_58 = arith.constant 1 : index
    %c2_59 = arith.constant 2 : index
    %c0_60 = arith.constant 0 : index
    %c0_61 = arith.constant 0 : index
    %57 = vector.load %arg2[%c1_58, %c2_59, %c0_60, %c0_61] : memref<3x3x256x256xbf16, #tpu.memory_space<vmem>>, vector<1x1x256x256xbf16>
    %58 = vector.shape_cast %57 : vector<1x1x256x256xbf16> to vector<256x256xbf16>
    %cst_62 = arith.constant dense<0.000000e+00> : vector<256x256xf32>
    %59 = tpu.matmul %56, %58, %cst_62 {dimension_numbers = #tpu.dot_dimension_numbers<[1], [0], [0], [1], [0, 0, 1, 1], [], []>} : vector<256x256xbf16>, vector<256x256xbf16>, vector<256x256xf32> -> vector<256x256xf32>
    %60 = arith.addf %53, %59 : vector<256x256xf32>
    %c0_63 = arith.constant 0 : index
    %c0_64 = arith.constant 0 : index
    %61 = vector.load %arg4[%c0_63, %c0_64] : memref<256x256xf32, #tpu.memory_space<vmem>>, vector<256x256xf32>
    tpu.vector_store %arg4[%c0_63, %c0_64], %60 {strides = array<i32>} : memref<256x256xf32, #tpu.memory_space<vmem>>, vector<256x256xf32>,
    %c96_i32 = arith.constant 96 : i32
    %62 = arith.addi %1, %c96_i32 : i32
    %63 = tpu.assume_multiple %62, 8 : i32
    %c0_65 = arith.constant 0 : index
    %c0_66 = arith.constant 0 : index
    %64 = vector.load %arg4[%c0_65, %c0_66] : memref<256x256xf32, #tpu.memory_space<vmem>>, vector<256x256xf32>
    %c0_67 = arith.constant 0 : index
    %65 = arith.index_cast %63 : i32 to index
    %c0_68 = arith.constant 0 : index
    %66 = vector.load %arg1[%c0_67, %65, %c0_68] : memref<3x608x256xbf16, #tpu.memory_space<vmem>>, vector<1x256x256xbf16>
    %67 = vector.shape_cast %66 : vector<1x256x256xbf16> to vector<256x256xbf16>
    %c2_69 = arith.constant 2 : index
    %c0_70 = arith.constant 0 : index
    %c0_71 = arith.constant 0 : index
    %c0_72 = arith.constant 0 : index
    %68 = vector.load %arg2[%c2_69, %c0_70, %c0_71, %c0_72] : memref<3x3x256x256xbf16, #tpu.memory_space<vmem>>, vector<1x1x256x256xbf16>
    %69 = vector.shape_cast %68 : vector<1x1x256x256xbf16> to vector<256x256xbf16>
    %cst_73 = arith.constant dense<0.000000e+00> : vector<256x256xf32>
    %70 = tpu.matmul %67, %69, %cst_73 {dimension_numbers = #tpu.dot_dimension_numbers<[1], [0], [0], [1], [0, 0, 1, 1], [], []>} : vector<256x256xbf16>, vector<256x256xbf16>, vector<256x256xf32> -> vector<256x256xf32>
    %71 = arith.addf %64, %70 : vector<256x256xf32>
    %c0_74 = arith.constant 0 : index
    %c0_75 = arith.constant 0 : index
    %72 = vector.load %arg4[%c0_74, %c0_75] : memref<256x256xf32, #tpu.memory_space<vmem>>, vector<256x256xf32>
    tpu.vector_store %arg4[%c0_74, %c0_75], %71 {strides = array<i32>} : memref<256x256xf32, #tpu.memory_space<vmem>>, vector<256x256xf32>,
    %c0_76 = arith.constant 0 : index
    %c0_77 = arith.constant 0 : index
    %73 = vector.load %arg4[%c0_76, %c0_77] : memref<256x256xf32, #tpu.memory_space<vmem>>, vector<256x256xf32>
    %c1_78 = arith.constant 1 : index
    %74 = arith.index_cast %63 : i32 to index
    %c0_79 = arith.constant 0 : index
    %75 = vector.load %arg1[%c1_78, %74, %c0_79] : memref<3x608x256xbf16, #tpu.memory_space<vmem>>, vector<1x256x256xbf16>
    %76 = vector.shape_cast %75 : vector<1x256x256xbf16> to vector<256x256xbf16>
    %c2_80 = arith.constant 2 : index
    %c1_81 = arith.constant 1 : index
    %c0_82 = arith.constant 0 : index
    %c0_83 = arith.constant 0 : index
    %77 = vector.load %arg2[%c2_80, %c1_81, %c0_82, %c0_83] : memref<3x3x256x256xbf16, #tpu.memory_space<vmem>>, vector<1x1x256x256xbf16>
    %78 = vector.shape_cast %77 : vector<1x1x256x256xbf16> to vector<256x256xbf16>
    %cst_84 = arith.constant dense<0.000000e+00> : vector<256x256xf32>
    %79 = tpu.matmul %76, %78, %cst_84 {dimension_numbers = #tpu.dot_dimension_numbers<[1], [0], [0], [1], [0, 0, 1, 1], [], []>} : vector<256x256xbf16>, vector<256x256xbf16>, vector<256x256xf32> -> vector<256x256xf32>
    %80 = arith.addf %73, %79 : vector<256x256xf32>
    %c0_85 = arith.constant 0 : index
    %c0_86 = arith.constant 0 : index
    %81 = vector.load %arg4[%c0_85, %c0_86] : memref<256x256xf32, #tpu.memory_space<vmem>>, vector<256x256xf32>
    tpu.vector_store %arg4[%c0_85, %c0_86], %80 {strides = array<i32>} : memref<256x256xf32, #tpu.memory_space<vmem>>, vector<256x256xf32>,
    %c0_87 = arith.constant 0 : index
    %c0_88 = arith.constant 0 : index
    %82 = vector.load %arg4[%c0_87, %c0_88] : memref<256x256xf32, #tpu.memory_space<vmem>>, vector<256x256xf32>
    %c2_89 = arith.constant 2 : index
    %83 = arith.index_cast %63 : i32 to index
    %c0_90 = arith.constant 0 : index
    %84 = vector.load %arg1[%c2_89, %83, %c0_90] : memref<3x608x256xbf16, #tpu.memory_space<vmem>>, vector<1x256x256xbf16>
    %85 = vector.shape_cast %84 : vector<1x256x256xbf16> to vector<256x256xbf16>
    %c2_91 = arith.constant 2 : index
    %c2_92 = arith.constant 2 : index
    %c0_93 = arith.constant 0 : index
    %c0_94 = arith.constant 0 : index
    %86 = vector.load %arg2[%c2_91, %c2_92, %c0_93, %c0_94] : memref<3x3x256x256xbf16, #tpu.memory_space<vmem>>, vector<1x1x256x256xbf16>
    %87 = vector.shape_cast %86 : vector<1x1x256x256xbf16> to vector<256x256xbf16>
    %cst_95 = arith.constant dense<0.000000e+00> : vector<256x256xf32>
    %88 = tpu.matmul %85, %87, %cst_95 {dimension_numbers = #tpu.dot_dimension_numbers<[1], [0], [0], [1], [0, 0, 1, 1], [], []>} : vector<256x256xbf16>, vector<256x256xbf16>, vector<256x256xf32> -> vector<256x256xf32>
    %89 = arith.addf %82, %88 : vector<256x256xf32>
    %c0_96 = arith.constant 0 : index
    %c0_97 = arith.constant 0 : index
    %90 = vector.load %arg4[%c0_96, %c0_97] : memref<256x256xf32, #tpu.memory_space<vmem>>, vector<256x256xf32>
    tpu.vector_store %arg4[%c0_96, %c0_97], %89 {strides = array<i32>} : memref<256x256xf32, #tpu.memory_space<vmem>>, vector<256x256xf32>,
    %c0_98 = arith.constant 0 : index
    %c0_99 = arith.constant 0 : index
    %91 = vector.load %arg4[%c0_98, %c0_99] : memref<256x256xf32, #tpu.memory_space<vmem>>, vector<256x256xf32>
    %c0_100 = arith.constant 0 : index
    %c0_101 = arith.constant 0 : index
    %92 = vector.load %arg3[%c0_100, %c0_101] : memref<256x1xf32, #tpu.memory_space<vmem>>, vector<256x1xf32>
    %93 = vector.broadcast %92 : vector<256x1xf32> to vector<256x256xf32>
    %94 = arith.mulf %91, %93 : vector<256x256xf32>
    %cst_102 = arith.constant dense<0.000000e+00> : vector<256xf32>
    %95 = vector.multi_reduction <add>, %94, %cst_102 [0] : vector<256x256xf32> to vector<256xf32>
    %96 = vector.shape_cast %95 : vector<256xf32> to vector<1x256xf32>
    %97 = arith.mulf %94, %91 : vector<256x256xf32>
    %cst_103 = arith.constant dense<0.000000e+00> : vector<256xf32>
    %98 = vector.multi_reduction <add>, %97, %cst_103 [0] : vector<256x256xf32> to vector<256xf32>
    %99 = vector.shape_cast %98 : vector<256xf32> to vector<1x256xf32>
    %cst_104 = arith.constant 0.000000e+00 : f32
    %100 = vector.broadcast %cst_104 : f32 to vector<6x256xf32>
    %101 = tpu.concatenate %96, %99, %100 in 0 : vector<1x256xf32>, vector<1x256xf32>, vector<6x256xf32> -> vector<8x256xf32>
    %c0_105 = arith.constant 0 : index
    %c0_106 = arith.constant 0 : index
    %102 = vector.load %arg5[%c0_105, %c0_106] : memref<8x256xf32, #tpu.memory_space<vmem>>, vector<8x256xf32>
    tpu.vector_store %arg5[%c0_105, %c0_106], %101 {strides = array<i32>} : memref<8x256xf32, #tpu.memory_space<vmem>>, vector<8x256xf32>,
    return
  }
  func.func @transform_0(%arg0: i32) -> (i32, i32, i32) {
    %c0_i32 = arith.constant 0 : i32
    %c0_i32_0 = arith.constant 0 : i32
    %c0_i32_1 = arith.constant 0 : i32
    %c0_i32_2 = arith.constant 0 : i32
    return %c0_i32, %c0_i32_0, %c0_i32_1 : i32, i32, i32
  }
  func.func @transform_1(%arg0: i32) -> (i32, i32, i32, i32) {
    %c0_i32 = arith.constant 0 : i32
    %c0_i32_0 = arith.constant 0 : i32
    %c0_i32_1 = arith.constant 0 : i32
    %c0_i32_2 = arith.constant 0 : i32
    %c0_i32_3 = arith.constant 0 : i32
    return %c0_i32, %c0_i32_0, %c0_i32_1, %c0_i32_2 : i32, i32, i32, i32
  }
  func.func @transform_2(%arg0: i32) -> (i32, i32) {
    %c0_i32 = arith.constant 0 : i32
    %c0_i32_0 = arith.constant 0 : i32
    return %arg0, %c0_i32 : i32, i32
  }
  func.func @transform_3(%arg0: i32) -> (i32, i32) {
    %c0_i32 = arith.constant 0 : i32
    %c0_i32_0 = arith.constant 0 : i32
    return %arg0, %c0_i32 : i32, i32
  }
  func.func @transform_4(%arg0: i32) -> (i32, i32) {
    %c0_i32 = arith.constant 0 : i32
    %c0_i32_0 = arith.constant 0 : i32
    return %arg0, %c0_i32 : i32, i32
  }
}

module attributes {stable_mosaic.version = 11 : i64} {
  func.func @_bn_relu_matmul_kernel(%arg0: i32, %arg1: memref<256x256xf32, #tpu.memory_space<vmem>>, %arg2: memref<1x256xf32, #tpu.memory_space<vmem>>, %arg3: memref<1x256xf32, #tpu.memory_space<vmem>>, %arg4: memref<256x1024xbf16, #tpu.memory_space<vmem>>, %arg5: memref<256x1024xf32, #tpu.memory_space<vmem>>) attributes {dimension_semantics = [#tpu.dimension_semantics<parallel>], iteration_bounds = array<i64: 2>, scalar_prefetch = 0 : i64, scratch_operands = 0 : i64, tpu.core_type = #tpu.core_type<tc>, window_params = [{transform_indices = @transform_0, window_bounds = array<i64: 256, 256>}, {pipeline_mode = #tpu.pipeline_mode<synchronous>, transform_indices = @transform_1, window_bounds = array<i64: 1, 256>}, {pipeline_mode = #tpu.pipeline_mode<synchronous>, transform_indices = @transform_2, window_bounds = array<i64: 1, 256>}, {pipeline_mode = #tpu.pipeline_mode<synchronous>, transform_indices = @transform_3, window_bounds = array<i64: 256, 1024>}, {transform_indices = @transform_4, window_bounds = array<i64: 256, 1024>}]} {
    %c0 = arith.constant 0 : index
    %c0_0 = arith.constant 0 : index
    %0 = vector.load %arg1[%c0, %c0_0] : memref<256x256xf32, #tpu.memory_space<vmem>>, vector<256x256xf32>
    %c0_1 = arith.constant 0 : index
    %c0_2 = arith.constant 0 : index
    %1 = vector.load %arg2[%c0_1, %c0_2] : memref<1x256xf32, #tpu.memory_space<vmem>>, vector<1x256xf32>
    %2 = vector.broadcast %1 : vector<1x256xf32> to vector<256x256xf32>
    %3 = arith.mulf %0, %2 : vector<256x256xf32>
    %c0_3 = arith.constant 0 : index
    %c0_4 = arith.constant 0 : index
    %4 = vector.load %arg3[%c0_3, %c0_4] : memref<1x256xf32, #tpu.memory_space<vmem>>, vector<1x256xf32>
    %5 = vector.broadcast %4 : vector<1x256xf32> to vector<256x256xf32>
    %6 = arith.addf %3, %5 : vector<256x256xf32>
    %cst = arith.constant 0.000000e+00 : f32
    %7 = vector.broadcast %cst : f32 to vector<256x256xf32>
    %8 = arith.maximumf %6, %7 : vector<256x256xf32>
    %9 = arith.truncf %8 : vector<256x256xf32> to vector<256x256xbf16>
    %c0_5 = arith.constant 0 : index
    %c0_6 = arith.constant 0 : index
    %10 = vector.load %arg4[%c0_5, %c0_6] : memref<256x1024xbf16, #tpu.memory_space<vmem>>, vector<256x1024xbf16>
    %cst_7 = arith.constant dense<0.000000e+00> : vector<256x1024xf32>
    %11 = tpu.matmul %9, %10, %cst_7 {dimension_numbers = #tpu.dot_dimension_numbers<[1], [0], [0], [1], [0, 0, 1, 1], [], []>} : vector<256x256xbf16>, vector<256x1024xbf16>, vector<256x1024xf32> -> vector<256x1024xf32>
    %c0_8 = arith.constant 0 : index
    %c0_9 = arith.constant 0 : index
    %12 = vector.load %arg5[%c0_8, %c0_9] : memref<256x1024xf32, #tpu.memory_space<vmem>>, vector<256x1024xf32>
    tpu.vector_store %arg5[%c0_8, %c0_9], %11 {strides = array<i32>} : memref<256x1024xf32, #tpu.memory_space<vmem>>, vector<256x1024xf32>,
    return
  }
  func.func @transform_0(%arg0: i32) -> (i32, i32) {
    %c0_i32 = arith.constant 0 : i32
    %c0_i32_0 = arith.constant 0 : i32
    return %arg0, %c0_i32 : i32, i32
  }
  func.func @transform_1(%arg0: i32) -> (i32, i32) {
    %c0_i32 = arith.constant 0 : i32
    %c0_i32_0 = arith.constant 0 : i32
    %c0_i32_1 = arith.constant 0 : i32
    return %c0_i32, %c0_i32_0 : i32, i32
  }
  func.func @transform_2(%arg0: i32) -> (i32, i32) {
    %c0_i32 = arith.constant 0 : i32
    %c0_i32_0 = arith.constant 0 : i32
    %c0_i32_1 = arith.constant 0 : i32
    return %c0_i32, %c0_i32_0 : i32, i32
  }
  func.func @transform_3(%arg0: i32) -> (i32, i32) {
    %c0_i32 = arith.constant 0 : i32
    %c0_i32_0 = arith.constant 0 : i32
    %c0_i32_1 = arith.constant 0 : i32
    return %c0_i32, %c0_i32_0 : i32, i32
  }
  func.func @transform_4(%arg0: i32) -> (i32, i32) {
    %c0_i32 = arith.constant 0 : i32
    %c0_i32_0 = arith.constant 0 : i32
    return %arg0, %c0_i32 : i32, i32
  }
}

</mosaic_0001>

<llo_original>
// kernel: fused_forward.3
$region0: #{fused_forward.3}
  #allocation0 [shape = 'u32[]', space=smem, size = 0x4, offset = 0x4, fixed_abs, tag = 'smem constant byte address 0x4 - core index']
  #allocation1 [shape = 'u32[144,128]{1,0:T(1,128)}', space=vmem, size = 0x12000, scoped, tag = 'internal scratch']
  %s0 = inlined_call_operand.vmem [shape: f32[512,256], index: 0, kind: input, shape index: {}]
  %s1 = inlined_call_operand.vmem [shape: f32[1,256], index: 1, kind: input, shape index: {}]
  %s2 = inlined_call_operand.vmem [shape: f32[1,256], index: 2, kind: input, shape index: {}]
  %s3 = inlined_call_operand.vmem [shape: bf16[256,1024], index: 3, kind: input, shape index: {}]
  %s4 = inlined_call_operand.vmem [shape: f32[512,1024], index: 4, kind: output, shape index: {}]
  %s5 = sld [smem:[#allocation0]]
  $region49: #{fused_forward.3} parent=0
    _
  %s7 = ssub.s32 1, %s5
  %s8 = scalar_select 0, %s7, %s5
  loop: start=0, step=1, limit=4
  $region2: #{fused_forward.3} parent=0 // loop_pre_header
    _
  $region3: #{fused_forward.3} parent=0 // loop_header
    %s10 = sphi 0, %s14
    %p11 = scmp.ge.s32.totalorder %s10, 4
    %s20 = sphi 0, %s22
    %s23 = sphi 0, %s20
    %s24 = sphi 0, %s23
    %s40 = sphi 0, %s24
    %s44 = sphi 0, %s44
    %s46 = sphi 0, %s44
    %s47 = sphi 0, %s46
    %s61 = sphi 0, %s47
    %s65 = sphi 0, %s65
    %s67 = sphi 0, %s65
    %s68 = sphi 0, %s67
    %s82 = sphi 0, %s68
    %s86 = sphi 0, %s86
    %s88 = sphi 0, %s86
    %s89 = sphi 0, %s88
    %s103 = sphi 0, %s89
    %s109 = sphi 0, %s111
    %s112 = sphi 0, %s109
    %s113 = sphi 0, %s112
    %s129 = sphi 0, %s113
  $region4: #{fused_forward.3} parent=0 // loop_header_branch
    %13 = sbr.rel (%p11) target = $region8
  $region5: #{fused_forward.3} parent=0 // loop_body
    %s15 = ssub.s32 %s10, 1
    %s16 = ssub.s32 %s10, 2
    %s17 = sadd.s32 %s10, 1
    %s18 = ssub.s32 %s10, %s17
    %p19 = scmp.eq.s32.totalorder %s18, 0
    %s21 = sadd.s32 %s20, 1
    %s22 = scalar_select %p19, %s20, %s21
    %p25 = pneg %p19
    %p26 = scmp.eq.s32.totalorder %s10, 1
    %p27 = por %p25, %p26
    %p28 = scmp.ne.s32.totalorder %s20, %s23
    %p29 = scmp.eq.s32.totalorder %s10, 0
    %p30 = por %p28, %p29
    %p31 = scmp.ne.s32.totalorder %s20, %s23
    %p32 = scmp.eq.s32.totalorder %s15, 1
    %p33 = por %p31, %p32
    %p34 = scmp.ne.s32.totalorder %s23, %s24
    %p35 = scmp.eq.s32.totalorder %s15, 0
    %p36 = por %p34, %p35
    %p37 = scmp.ne.s32.totalorder %s23, %s24
    %p38 = scmp.eq.s32.totalorder %s16, 1
    %p39 = por %p37, %p38
    %p41 = scmp.ne.s32.totalorder %s24, %s40
    %p42 = scmp.eq.s32.totalorder %s16, 0
    %p43 = por %p41, %p42
    %s45 = sadd.s32 %s44, 1
    %p48 = scmp.eq.s32.totalorder %s10, 1
    %p49 = scmp.ne.s32.totalorder %s44, %s46
    %p50 = scmp.eq.s32.totalorder %s10, 0
    %p51 = por %p49, %p50
    %p52 = scmp.ne.s32.totalorder %s44, %s46
    %p53 = scmp.eq.s32.totalorder %s15, 1
    %p54 = por %p52, %p53
    %p55 = scmp.ne.s32.totalorder %s46, %s47
    %p56 = scmp.eq.s32.totalorder %s15, 0
    %p57 = por %p55, %p56
    %p58 = scmp.ne.s32.totalorder %s46, %s47
    %p59 = scmp.eq.s32.totalorder %s16, 1
    %p60 = por %p58, %p59
    %p62 = scmp.ne.s32.totalorder %s47, %s61
    %p63 = scmp.eq.s32.totalorder %s16, 0
    %p64 = por %p62, %p63
    %s66 = sadd.s32 %s65, 1
    %p69 = scmp.eq.s32.totalorder %s10, 1
    %p70 = scmp.ne.s32.totalorder %s65, %s67
    %p71 = scmp.eq.s32.totalorder %s10, 0
    %p72 = por %p70, %p71
    %p73 = scmp.ne.s32.totalorder %s65, %s67
    %p74 = scmp.eq.s32.totalorder %s15, 1
    %p75 = por %p73, %p74
    %p76 = scmp.ne.s32.totalorder %s67, %s68
    %p77 = scmp.eq.s32.totalorder %s15, 0
    %p78 = por %p76, %p77
    %p79 = scmp.ne.s32.totalorder %s67, %s68
    %p80 = scmp.eq.s32.totalorder %s16, 1
    %p81 = por %p79, %p80
    %p83 = scmp.ne.s32.totalorder %s68, %s82
    %p84 = scmp.eq.s32.totalorder %s16, 0
    %p85 = por %p83, %p84
    %s87 = sadd.s32 %s86, 1
    %p90 = scmp.eq.s32.totalorder %s10, 1
    %p91 = scmp.ne.s32.totalorder %s86, %s88
    %p92 = scmp.eq.s32.totalorder %s10, 0
    %p93 = por %p91, %p92
    %p94 = scmp.ne.s32.totalorder %s86, %s88
    %p95 = scmp.eq.s32.totalorder %s15, 1
    %p96 = por %p94, %p95
    %p97 = scmp.ne.s32.totalorder %s88, %s89
    %p98 = scmp.eq.s32.totalorder %s15, 0
    %p99 = por %p97, %p98
    %p100 = scmp.ne.s32.totalorder %s88, %s89
    %p101 = scmp.eq.s32.totalorder %s16, 1
    %p102 = por %p100, %p101
    %p104 = scmp.ne.s32.totalorder %s89, %s103
    %p105 = scmp.eq.s32.totalorder %s16, 0
    %p106 = por %p104, %p105
    %s107 = ssub.s32 %s10, %s17
    %p108 = scmp.eq.s32.totalorder %s107, 0
    %s110 = sadd.s32 %s109, 1
    %s111 = scalar_select %p108, %s109, %s110
    %p114 = pneg %p108
    %p115 = scmp.eq.s32.totalorder %s10, 1
    %p116 = por %p114, %p115
    %p117 = scmp.ne.s32.totalorder %s109, %s112
    %p118 = scmp.eq.s32.totalorder %s10, 0
    %p119 = por %p117, %p118
    %p120 = scmp.ne.s32.totalorder %s109, %s112
    %p121 = scmp.eq.s32.totalorder %s15, 1
    %p122 = por %p120, %p121
    %p123 = scmp.ne.s32.totalorder %s112, %s113
    %p124 = scmp.eq.s32.totalorder %s15, 0
    %p125 = por %p123, %p124
    %p126 = scmp.ne.s32.totalorder %s112, %s113
    %p127 = scmp.eq.s32.totalorder %s16, 1
    %p128 = por %p126, %p127
    %p130 = scmp.ne.s32.totalorder %s113, %s129
    %p131 = scmp.eq.s32.totalorder %s16, 0
    %p132 = por %p130, %p131
    %p133 = scmp.le.s32.totalorder 1, %s10
    %p134 = scmp.lt.s32.totalorder %s10, 3
    %p135 = pnand %p133, %p134
    %p136 = pneg %p135
    // Predicated region
    $region9: #{fused_forward.3} parent=5 // pred_check
      _
    $region10: #{fused_forward.3} parent=5 // pred_check_branch
      %138 = sbr.rel (%p135) target = $region12
    $region11: #{fused_forward.3} parent=5 // pred_region
      %s139 = ssub.s32 %s10, 1
      // Predicated region
      $region13: #{fused_forward.3} parent=11 // pred_check
        %p140 = pneg %p57
      $region14: #{fused_forward.3} parent=11 // pred_check_branch
        %142 = sbr.rel (%p140) target = $region16
      $region15: #{fused_forward.3} parent=11 // pred_region
        _
      $region16: #{fused_forward.3} parent=11 // pred_fallthru
        _
      // Predicated region
      $region17: #{fused_forward.3} parent=11 // pred_check
        %p143 = pneg %p78
      $region18: #{fused_forward.3} parent=11 // pred_check_branch
        %145 = sbr.rel (%p143) target = $region20
      $region19: #{fused_forward.3} parent=11 // pred_region
        _
      $region20: #{fused_forward.3} parent=11 // pred_fallthru
        _
      // Predicated region
      $region21: #{fused_forward.3} parent=11 // pred_check
        %p146 = pneg %p99
      $region22: #{fused_forward.3} parent=11 // pred_check_branch
        %148 = sbr.rel (%p146) target = $region24
      $region23: #{fused_forward.3} parent=11 // pred_region
        _
      $region24: #{fused_forward.3} parent=11 // pred_fallthru
        _
    $region12: #{fused_forward.3} parent=5 // pred_fallthru
      _
    %p149 = scmp.lt.s32.totalorder %s10, 2
    // Predicated region
    $region25: #{fused_forward.3} parent=5 // pred_check
      %p150 = pneg %p149
    $region26: #{fused_forward.3} parent=5 // pred_check_branch
      %152 = sbr.rel (%p150) target = $region28
    $region27: #{fused_forward.3} parent=5 // pred_region
      // Predicated region
      $region29: #{fused_forward.3} parent=27 // pred_check
        %p153 = pneg %p30
      $region30: #{fused_forward.3} parent=27 // pred_check_branch
        %155 = sbr.rel (%p153) target = $region32
      $region31: #{fused_forward.3} parent=27 // pred_region
        %s156 = smul.u32 32, %s10
        %p157 = scmp.lt.s32.totalorder %s156, 63
        %s158 = scalar_select %p157, %s156, 63
        %s159 = smul.addr %s158, 2
        %s160 = smul.addr %s159, 8
        %s161 = scalar_lea.vmem %s0, %s160
        %s162 = smul.u32 32, %s10
      $region32: #{fused_forward.3} parent=27 // pred_fallthru
        _
    $region28: #{fused_forward.3} parent=5 // pred_fallthru
      _
    %p163 = scmp.le.s32.totalorder 1, %s10
    %p164 = scmp.lt.s32.totalorder %s10, 3
    %p165 = pnand %p163, %p164
    %p166 = pneg %p165
    // Predicated region
    $region33: #{fused_forward.3} parent=5 // pred_check
      _
    $region34: #{fused_forward.3} parent=5 // pred_check_branch
      %168 = sbr.rel (%p165) target = $region36
    $region35: #{fused_forward.3} parent=5 // pred_region
      %s169 = ssub.s32 %s10, 1
      %s170 = smul.u32 32, %s15
      %p171 = scmp.lt.s32.totalorder %s170, 63
      %s172 = scalar_select %p171, %s170, 63
      %s173 = smul.addr %s172, 2
      %s174 = smul.addr %s173, 8
      %s175 = scalar_lea.vmem %s0, %s174
      %p176 = pneg %p36
      %p177 = pneg %p33
      %p178 = pneg %p57
      %p179 = pneg %p54
      %p180 = pneg %p78
      %p181 = pneg %p75
      %p182 = pneg %p99
      %p183 = pneg %p96
      %p184 = pneg %p125
      %p185 = pneg %p122
      %s186 = smul.u32 32, %s15
      %p187 = scmp.lt.s32.totalorder %s186, 63
      %s188 = scalar_select %p187, %s186, 63
      %s189 = smul.addr %s188, 8
      %s190 = smul.addr %s189, 8
      %s191 = scalar_lea.vmem %s4, %s190
      %s192 = smul.u32 32, %s15
      %p193 = scmp.lt.s32.totalorder %s192, 63
      %s194 = scalar_select %p193, %s192, 63
      %s195 = smul.addr %s194, 2
      %s196 = smul.addr %s195, 8
      %s197 = scalar_lea.vmem %s0, %s196
      %s198 = smul.u32 32, %s15
      %s199 = smul.u32 32, %s15
      %p200 = scmp.lt.s32.totalorder %s199, 63
      %s201 = scalar_select %p200, %s199, 63
      %s202 = smul.addr %s201, 8
      %s203 = smul.addr %s202, 8
      %s204 = scalar_lea.vmem %s4, %s203
      %s205 = smul.u32 32, %s15
      %v206 = vld [vmem:[%s197] sm:$0xff]
      %v207 = vld [vmem:[%s197 + $0x8] sm:$0xff]
      %v208 = vld [vmem:[%s197 + $0x10] sm:$0xff]
      %v209 = vld [vmem:[%s197 + $0x18] sm:$0xff]
      %v210 = vld [vmem:[%s197 + $0x20] sm:$0xff]
      %v211 = vld [vmem:[%s197 + $0x28] sm:$0xff]
      %v212 = vld [vmem:[%s197 + $0x30] sm:$0xff]
      %v213 = vld [vmem:[%s197 + $0x38] sm:$0xff]
      %v214 = vld [vmem:[%s197 + $0x40] sm:$0xff]
      %v215 = vld [vmem:[%s197 + $0x48] sm:$0xff]
      %v216 = vld [vmem:[%s197 + $0x50] sm:$0xff]
      %v217 = vld [vmem:[%s197 + $0x58] sm:$0xff]
      %v218 = vld [vmem:[%s197 + $0x60] sm:$0xff]
      %v219 = vld [vmem:[%s197 + $0x68] sm:$0xff]
      %v220 = vld [vmem:[%s197 + $0x70] sm:$0xff]
      %v221 = vld [vmem:[%s197 + $0x78] sm:$0xff]
      %v222 = vld [vmem:[%s197 + $0x80] sm:$0xff]
      %v223 = vld [vmem:[%s197 + $0x88] sm:$0xff]
      %v224 = vld [vmem:[%s197 + $0x90] sm:$0xff]
      %v225 = vld [vmem:[%s197 + $0x98] sm:$0xff]
      %v226 = vld [vmem:[%s197 + $0xa0] sm:$0xff]
      %v227 = vld [vmem:[%s197 + $0xa8] sm:$0xff]
      %v228 = vld [vmem:[%s197 + $0xb0] sm:$0xff]
      %v229 = vld [vmem:[%s197 + $0xb8] sm:$0xff]
      %v230 = vld [vmem:[%s197 + $0xc0] sm:$0xff]
      %v231 = vld [vmem:[%s197 + $0xc8] sm:$0xff]
      %v232 = vld [vmem:[%s197 + $0xd0] sm:$0xff]
      %v233 = vld [vmem:[%s197 + $0xd8] sm:$0xff]
      %v234 = vld [vmem:[%s197 + $0xe0] sm:$0xff]
      %v235 = vld [vmem:[%s197 + $0xe8] sm:$0xff]
      %v236 = vld [vmem:[%s197 + $0xf0] sm:$0xff]
      %v237 = vld [vmem:[%s197 + $0xf8] sm:$0xff]
      %v238 = vld [vmem:[%s197 + $0x100] sm:$0xff]
      %v239 = vld [vmem:[%s197 + $0x108] sm:$0xff]
      %v240 = vld [vmem:[%s197 + $0x110] sm:$0xff]
      %v241 = vld [vmem:[%s197 + $0x118] sm:$0xff]
      %v242 = vld [vmem:[%s197 + $0x120] sm:$0xff]
      %v243 = vld [vmem:[%s197 + $0x128] sm:$0xff]
      %v244 = vld [vmem:[%s197 + $0x130] sm:$0xff]
      %v245 = vld [vmem:[%s197 + $0x138] sm:$0xff]
      %v246 = vld [vmem:[%s197 + $0x140] sm:$0xff]
      %v247 = vld [vmem:[%s197 + $0x148] sm:$0xff]
      %v248 = vld [vmem:[%s197 + $0x150] sm:$0xff]
      %v249 = vld [vmem:[%s197 + $0x158] sm:$0xff]
      %v250 = vld [vmem:[%s197 + $0x160] sm:$0xff]
      %v251 = vld [vmem:[%s197 + $0x168] sm:$0xff]
      %v252 = vld [vmem:[%s197 + $0x170] sm:$0xff]
      %v253 = vld [vmem:[%s197 + $0x178] sm:$0xff]
      %v254 = vld [vmem:[%s197 + $0x180] sm:$0xff]
      %v255 = vld [vmem:[%s197 + $0x188] sm:$0xff]
      %v256 = vld [vmem:[%s197 + $0x190] sm:$0xff]
      %v257 = vld [vmem:[%s197 + $0x198] sm:$0xff]
      %v258 = vld [vmem:[%s197 + $0x1a0] sm:$0xff]
      %v259 = vld [vmem:[%s197 + $0x1a8] sm:$0xff]
      %v260 = vld [vmem:[%s197 + $0x1b0] sm:$0xff]
      %v261 = vld [vmem:[%s197 + $0x1b8] sm:$0xff]
      %v262 = vld [vmem:[%s197 + $0x1c0] sm:$0xff]
      %v263 = vld [vmem:[%s197 + $0x1c8] sm:$0xff]
      %v264 = vld [vmem:[%s197 + $0x1d0] sm:$0xff]
      %v265 = vld [vmem:[%s197 + $0x1d8] sm:$0xff]
      %v266 = vld [vmem:[%s197 + $0x1e0] sm:$0xff]
      %v267 = vld [vmem:[%s197 + $0x1e8] sm:$0xff]
      %v268 = vld [vmem:[%s197 + $0x1f0] sm:$0xff]
      %v269 = vld [vmem:[%s197 + $0x1f8] sm:$0xff]
      %v270 = vld [vmem:[%s1] sm:$0x3]
      %v272 = vlaneseq
      %v273 = vshrl.u32 %v272, 7
      %v274 = vsub.s32 0, %v273
      %v275 = vrot.slane %v270, %v274
      %v276 = vlaneseq
      %v277 = vshrl.u32 %v276, 7
      %v278 = vsub.s32 1, %v277
      %v279 = vrot.slane %v270, %v278
      %v282 = vmul.f32 %v206, %v275
      %v283 = vmul.f32 %v207, %v279
      %v284 = vmul.f32 %v208, %v275
      %v285 = vmul.f32 %v209, %v279
      %v286 = vmul.f32 %v210, %v275
      %v287 = vmul.f32 %v211, %v279
      %v288 = vmul.f32 %v212, %v275
      %v289 = vmul.f32 %v213, %v279
      %v290 = vmul.f32 %v214, %v275
      %v291 = vmul.f32 %v215, %v279
      %v292 = vmul.f32 %v216, %v275
      %v293 = vmul.f32 %v217, %v279
      %v294 = vmul.f32 %v218, %v275
      %v295 = vmul.f32 %v219, %v279
      %v296 = vmul.f32 %v220, %v275
      %v297 = vmul.f32 %v221, %v279
      %v298 = vmul.f32 %v222, %v275
      %v299 = vmul.f32 %v223, %v279
      %v300 = vmul.f32 %v224, %v275
      %v301 = vmul.f32 %v225, %v279
      %v302 = vmul.f32 %v226, %v275
      %v303 = vmul.f32 %v227, %v279
      %v304 = vmul.f32 %v228, %v275
      %v305 = vmul.f32 %v229, %v279
      %v306 = vmul.f32 %v230, %v275
      %v307 = vmul.f32 %v231, %v279
      %v308 = vmul.f32 %v232, %v275
      %v309 = vmul.f32 %v233, %v279
      %v310 = vmul.f32 %v234, %v275
      %v311 = vmul.f32 %v235, %v279
      %v312 = vmul.f32 %v236, %v275
      %v313 = vmul.f32 %v237, %v279
      %v314 = vmul.f32 %v238, %v275
      %v315 = vmul.f32 %v239, %v279
      %v316 = vmul.f32 %v240, %v275
      %v317 = vmul.f32 %v241, %v279
      %v318 = vmul.f32 %v242, %v275
      %v319 = vmul.f32 %v243, %v279
      %v320 = vmul.f32 %v244, %v275
      %v321 = vmul.f32 %v245, %v279
      %v322 = vmul.f32 %v246, %v275
      %v323 = vmul.f32 %v247, %v279
      %v324 = vmul.f32 %v248, %v275
      %v325 = vmul.f32 %v249, %v279
      %v326 = vmul.f32 %v250, %v275
      %v327 = vmul.f32 %v251, %v279
      %v328 = vmul.f32 %v252, %v275
      %v329 = vmul.f32 %v253, %v279
      %v330 = vmul.f32 %v254, %v275
      %v331 = vmul.f32 %v255, %v279
      %v332 = vmul.f32 %v256, %v275
      %v333 = vmul.f32 %v257, %v279
      %v334 = vmul.f32 %v258, %v275
      %v335 = vmul.f32 %v259, %v279
      %v336 = vmul.f32 %v260, %v275
      %v337 = vmul.f32 %v261, %v279
      %v338 = vmul.f32 %v262, %v275
      %v339 = vmul.f32 %v263, %v279
      %v340 = vmul.f32 %v264, %v275
      %v341 = vmul.f32 %v265, %v279
      %v342 = vmul.f32 %v266, %v275
      %v343 = vmul.f32 %v267, %v279
      %v344 = vmul.f32 %v268, %v275
      %v345 = vmul.f32 %v269, %v279
      %v346 = vld [vmem:[%s2] sm:$0x3]
      %v348 = vlaneseq
      %v349 = vshrl.u32 %v348, 7
      %v350 = vsub.s32 0, %v349
      %v351 = vrot.slane %v346, %v350
      %v352 = vlaneseq
      %v353 = vshrl.u32 %v352, 7
      %v354 = vsub.s32 1, %v353
      %v355 = vrot.slane %v346, %v354
      %v358 = vadd.f32 %v282, %v351
      %v359 = vadd.f32 %v283, %v355
      %v360 = vadd.f32 %v284, %v351
      %v361 = vadd.f32 %v285, %v355
      %v362 = vadd.f32 %v286, %v351
      %v363 = vadd.f32 %v287, %v355
      %v364 = vadd.f32 %v288, %v351
      %v365 = vadd.f32 %v289, %v355
      %v366 = vadd.f32 %v290, %v351
      %v367 = vadd.f32 %v291, %v355
      %v368 = vadd.f32 %v292, %v351
      %v369 = vadd.f32 %v293, %v355
      %v370 = vadd.f32 %v294, %v351
      %v371 = vadd.f32 %v295, %v355
      %v372 = vadd.f32 %v296, %v351
      %v373 = vadd.f32 %v297, %v355
      %v374 = vadd.f32 %v298, %v351
      %v375 = vadd.f32 %v299, %v355
      %v376 = vadd.f32 %v300, %v351
      %v377 = vadd.f32 %v301, %v355
      %v378 = vadd.f32 %v302, %v351
      %v379 = vadd.f32 %v303, %v355
      %v380 = vadd.f32 %v304, %v351
      %v381 = vadd.f32 %v305, %v355
      %v382 = vadd.f32 %v306, %v351
      %v383 = vadd.f32 %v307, %v355
      %v384 = vadd.f32 %v308, %v351
      %v385 = vadd.f32 %v309, %v355
      %v386 = vadd.f32 %v310, %v351
      %v387 = vadd.f32 %v311, %v355
      %v388 = vadd.f32 %v312, %v351
      %v389 = vadd.f32 %v313, %v355
      %v390 = vadd.f32 %v314, %v351
      %v391 = vadd.f32 %v315, %v355
      %v392 = vadd.f32 %v316, %v351
      %v393 = vadd.f32 %v317, %v355
      %v394 = vadd.f32 %v318, %v351
      %v395 = vadd.f32 %v319, %v355
      %v396 = vadd.f32 %v320, %v351
      %v397 = vadd.f32 %v321, %v355
      %v398 = vadd.f32 %v322, %v351
      %v399 = vadd.f32 %v323, %v355
      %v400 = vadd.f32 %v324, %v351
      %v401 = vadd.f32 %v325, %v355
      %v402 = vadd.f32 %v326, %v351
      %v403 = vadd.f32 %v327, %v355
      %v404 = vadd.f32 %v328, %v351
      %v405 = vadd.f32 %v329, %v355
      %v406 = vadd.f32 %v330, %v351
      %v407 = vadd.f32 %v331, %v355
      %v408 = vadd.f32 %v332, %v351
      %v409 = vadd.f32 %v333, %v355
      %v410 = vadd.f32 %v334, %v351
      %v411 = vadd.f32 %v335, %v355
      %v412 = vadd.f32 %v336, %v351
      %v413 = vadd.f32 %v337, %v355
      %v414 = vadd.f32 %v338, %v351
      %v415 = vadd.f32 %v339, %v355
      %v416 = vadd.f32 %v340, %v351
      %v417 = vadd.f32 %v341, %v355
      %v418 = vadd.f32 %v342, %v351
      %v419 = vadd.f32 %v343, %v355
      %v420 = vadd.f32 %v344, %v351
      %v421 = vadd.f32 %v345, %v355
      %v422 = vmax.f32 %v358, 0.0
      %v423 = vmax.f32 %v359, 0.0
      %v424 = vmax.f32 %v360, 0.0
      %v425 = vmax.f32 %v361, 0.0
      %v426 = vmax.f32 %v362, 0.0
      %v427 = vmax.f32 %v363, 0.0
      %v428 = vmax.f32 %v364, 0.0
      %v429 = vmax.f32 %v365, 0.0
      %v430 = vmax.f32 %v366, 0.0
      %v431 = vmax.f32 %v367, 0.0
      %v432 = vmax.f32 %v368, 0.0
      %v433 = vmax.f32 %v369, 0.0
      %v434 = vmax.f32 %v370, 0.0
      %v435 = vmax.f32 %v371, 0.0
      %v436 = vmax.f32 %v372, 0.0
      %v437 = vmax.f32 %v373, 0.0
      %v438 = vmax.f32 %v374, 0.0
      %v439 = vmax.f32 %v375, 0.0
      %v440 = vmax.f32 %v376, 0.0
      %v441 = vmax.f32 %v377, 0.0
      %v442 = vmax.f32 %v378, 0.0
      %v443 = vmax.f32 %v379, 0.0
      %v444 = vmax.f32 %v380, 0.0
      %v445 = vmax.f32 %v381, 0.0
      %v446 = vmax.f32 %v382, 0.0
      %v447 = vmax.f32 %v383, 0.0
      %v448 = vmax.f32 %v384, 0.0
      %v449 = vmax.f32 %v385, 0.0
      %v450 = vmax.f32 %v386, 0.0
      %v451 = vmax.f32 %v387, 0.0
      %v452 = vmax.f32 %v388, 0.0
      %v453 = vmax.f32 %v389, 0.0
      %v454 = vmax.f32 %v390, 0.0
      %v455 = vmax.f32 %v391, 0.0
      %v456 = vmax.f32 %v392, 0.0
      %v457 = vmax.f32 %v393, 0.0
      %v458 = vmax.f32 %v394, 0.0
      %v459 = vmax.f32 %v395, 0.0
      %v460 = vmax.f32 %v396, 0.0
      %v461 = vmax.f32 %v397, 0.0
      %v462 = vmax.f32 %v398, 0.0
      %v463 = vmax.f32 %v399, 0.0
      %v464 = vmax.f32 %v400, 0.0
      %v465 = vmax.f32 %v401, 0.0
      %v466 = vmax.f32 %v402, 0.0
      %v467 = vmax.f32 %v403, 0.0
      %v468 = vmax.f32 %v404, 0.0
      %v469 = vmax.f32 %v405, 0.0
      %v470 = vmax.f32 %v406, 0.0
      %v471 = vmax.f32 %v407, 0.0
      %v472 = vmax.f32 %v408, 0.0
      %v473 = vmax.f32 %v409, 0.0
      %v474 = vmax.f32 %v410, 0.0
      %v475 = vmax.f32 %v411, 0.0
      %v476 = vmax.f32 %v412, 0.0
      %v477 = vmax.f32 %v413, 0.0
      %v478 = vmax.f32 %v414, 0.0
      %v479 = vmax.f32 %v415, 0.0
      %v480 = vmax.f32 %v416, 0.0
      %v481 = vmax.f32 %v417, 0.0
      %v482 = vmax.f32 %v418, 0.0
      %v483 = vmax.f32 %v419, 0.0
      %v484 = vmax.f32 %v420, 0.0
      %v485 = vmax.f32 %v421, 0.0
      %v486 = vpack.c.bf16 %v424, %v422
      %v487 = vpack.c.bf16 %v425, %v423
      %v488 = vpack.c.bf16 %v428, %v426
      %v489 = vpack.c.bf16 %v429, %v427
      %v490 = vpack.c.bf16 %v432, %v430
      %v491 = vpack.c.bf16 %v433, %v431
      %v492 = vpack.c.bf16 %v436, %v434
      %v493 = vpack.c.bf16 %v437, %v435
      %v494 = vpack.c.bf16 %v440, %v438
      %v495 = vpack.c.bf16 %v441, %v439
      %v496 = vpack.c.bf16 %v444, %v442
      %v497 = vpack.c.bf16 %v445, %v443
      %v498 = vpack.c.bf16 %v448, %v446
      %v499 = vpack.c.bf16 %v449, %v447
      %v500 = vpack.c.bf16 %v452, %v450
      %v501 = vpack.c.bf16 %v453, %v451
      %v502 = vpack.c.bf16 %v456, %v454
      %v503 = vpack.c.bf16 %v457, %v455
      %v504 = vpack.c.bf16 %v460, %v458
      %v505 = vpack.c.bf16 %v461, %v459
      %v506 = vpack.c.bf16 %v464, %v462
      %v507 = vpack.c.bf16 %v465, %v463
      %v508 = vpack.c.bf16 %v468, %v466
      %v509 = vpack.c.bf16 %v469, %v467
      %v510 = vpack.c.bf16 %v472, %v470
      %v511 = vpack.c.bf16 %v473, %v471
      %v512 = vpack.c.bf16 %v476, %v474
      %v513 = vpack.c.bf16 %v477, %v475
      %v514 = vpack.c.bf16 %v480, %v478
      %v515 = vpack.c.bf16 %v481, %v479
      %v516 = vpack.c.bf16 %v484, %v482
      %v517 = vpack.c.bf16 %v485, %v483
      %v518 = vld [vmem:[%s3] sm:$0xff]
      %v519 = vld [vmem:[%s3 + $0x8] sm:$0xff]
      %v520 = vld [vmem:[%s3 + $0x10] sm:$0xff]
      %v521 = vld [vmem:[%s3 + $0x18] sm:$0xff]
      %v522 = vld [vmem:[%s3 + $0x20] sm:$0xff]
      %v523 = vld [vmem:[%s3 + $0x28] sm:$0xff]
      %v524 = vld [vmem:[%s3 + $0x30] sm:$0xff]
      %v525 = vld [vmem:[%s3 + $0x38] sm:$0xff]
      %v526 = vld [vmem:[%s3 + $0x40] sm:$0xff]
      %v527 = vld [vmem:[%s3 + $0x48] sm:$0xff]
      %v528 = vld [vmem:[%s3 + $0x50] sm:$0xff]
      %v529 = vld [vmem:[%s3 + $0x58] sm:$0xff]
      %v530 = vld [vmem:[%s3 + $0x60] sm:$0xff]
      %v531 = vld [vmem:[%s3 + $0x68] sm:$0xff]
      %v532 = vld [vmem:[%s3 + $0x70] sm:$0xff]
      %v533 = vld [vmem:[%s3 + $0x78] sm:$0xff]
      %v534 = vld [vmem:[%s3 + $0x80] sm:$0xff]
      %v535 = vld [vmem:[%s3 + $0x88] sm:$0xff]
      %v536 = vld [vmem:[%s3 + $0x90] sm:$0xff]
      %v537 = vld [vmem:[%s3 + $0x98] sm:$0xff]
      %v538 = vld [vmem:[%s3 + $0xa0] sm:$0xff]
      %v539 = vld [vmem:[%s3 + $0xa8] sm:$0xff]
      %v540 = vld [vmem:[%s3 + $0xb0] sm:$0xff]
      %v541 = vld [vmem:[%s3 + $0xb8] sm:$0xff]
      %v542 = vld [vmem:[%s3 + $0xc0] sm:$0xff]
      %v543 = vld [vmem:[%s3 + $0xc8] sm:$0xff]
      %v544 = vld [vmem:[%s3 + $0xd0] sm:$0xff]
      %v545 = vld [vmem:[%s3 + $0xd8] sm:$0xff]
      %v546 = vld [vmem:[%s3 + $0xe0] sm:$0xff]
      %v547 = vld [vmem:[%s3 + $0xe8] sm:$0xff]
      %v548 = vld [vmem:[%s3 + $0xf0] sm:$0xff]
      %v549 = vld [vmem:[%s3 + $0xf8] sm:$0xff]
      %v550 = vld [vmem:[%s3 + $0x100] sm:$0xff]
      %v551 = vld [vmem:[%s3 + $0x108] sm:$0xff]
      %v552 = vld [vmem:[%s3 + $0x110] sm:$0xff]
      %v553 = vld [vmem:[%s3 + $0x118] sm:$0xff]
      %v554 = vld [vmem:[%s3 + $0x120] sm:$0xff]
      %v555 = vld [vmem:[%s3 + $0x128] sm:$0xff]
      %v556 = vld [vmem:[%s3 + $0x130] sm:$0xff]
      %v557 = vld [vmem:[%s3 + $0x138] sm:$0xff]
      %v558 = vld [vmem:[%s3 + $0x140] sm:$0xff]
      %v559 = vld [vmem:[%s3 + $0x148] sm:$0xff]
      %v560 = vld [vmem:[%s3 + $0x150] sm:$0xff]
      %v561 = vld [vmem:[%s3 + $0x158] sm:$0xff]
      %v562 = vld [vmem:[%s3 + $0x160] sm:$0xff]
      %v563 = vld [vmem:[%s3 + $0x168] sm:$0xff]
      %v564 = vld [vmem:[%s3 + $0x170] sm:$0xff]
      %v565 = vld [vmem:[%s3 + $0x178] sm:$0xff]
      %v566 = vld [vmem:[%s3 + $0x180] sm:$0xff]
      %v567 = vld [vmem:[%s3 + $0x188] sm:$0xff]
      %v568 = vld [vmem:[%s3 + $0x190] sm:$0xff]
      %v569 = vld [vmem:[%s3 + $0x198] sm:$0xff]
      %v570 = vld [vmem:[%s3 + $0x1a0] sm:$0xff]
      %v571 = vld [vmem:[%s3 + $0x1a8] sm:$0xff]
      %v572 = vld [vmem:[%s3 + $0x1b0] sm:$0xff]
      %v573 = vld [vmem:[%s3 + $0x1b8] sm:$0xff]
      %v574 = vld [vmem:[%s3 + $0x1c0] sm:$0xff]
      %v575 = vld [vmem:[%s3 + $0x1c8] sm:$0xff]
      %v576 = vld [vmem:[%s3 + $0x1d0] sm:$0xff]
      %v577 = vld [vmem:[%s3 + $0x1d8] sm:$0xff]
      %v578 = vld [vmem:[%s3 + $0x1e0] sm:$0xff]
      %v579 = vld [vmem:[%s3 + $0x1e8] sm:$0xff]
      %v580 = vld [vmem:[%s3 + $0x1f0] sm:$0xff]
      %v581 = vld [vmem:[%s3 + $0x1f8] sm:$0xff]
      %v582 = vld [vmem:[%s3 + $0x200] sm:$0xff]
      %v583 = vld [vmem:[%s3 + $0x208] sm:$0xff]
      %v584 = vld [vmem:[%s3 + $0x210] sm:$0xff]
      %v585 = vld [vmem:[%s3 + $0x218] sm:$0xff]
      %v586 = vld [vmem:[%s3 + $0x220] sm:$0xff]
      %v587 = vld [vmem:[%s3 + $0x228] sm:$0xff]
      %v588 = vld [vmem:[%s3 + $0x230] sm:$0xff]
      %v589 = vld [vmem:[%s3 + $0x238] sm:$0xff]
      %v590 = vld [vmem:[%s3 + $0x240] sm:$0xff]
      %v591 = vld [vmem:[%s3 + $0x248] sm:$0xff]
      %v592 = vld [vmem:[%s3 + $0x250] sm:$0xff]
      %v593 = vld [vmem:[%s3 + $0x258] sm:$0xff]
      %v594 = vld [vmem:[%s3 + $0x260] sm:$0xff]
      %v595 = vld [vmem:[%s3 + $0x268] sm:$0xff]
      %v596 = vld [vmem:[%s3 + $0x270] sm:$0xff]
      %v597 = vld [vmem:[%s3 + $0x278] sm:$0xff]
      %v598 = vld [vmem:[%s3 + $0x280] sm:$0xff]
      %v599 = vld [vmem:[%s3 + $0x288] sm:$0xff]
      %v600 = vld [vmem:[%s3 + $0x290] sm:$0xff]
      %v601 = vld [vmem:[%s3 + $0x298] sm:$0xff]
      %v602 = vld [vmem:[%s3 + $0x2a0] sm:$0xff]
      %v603 = vld [vmem:[%s3 + $0x2a8] sm:$0xff]
      %v604 = vld [vmem:[%s3 + $0x2b0] sm:$0xff]
      %v605 = vld [vmem:[%s3 + $0x2b8] sm:$0xff]
      %v606 = vld [vmem:[%s3 + $0x2c0] sm:$0xff]
      %v607 = vld [vmem:[%s3 + $0x2c8] sm:$0xff]
      %v608 = vld [vmem:[%s3 + $0x2d0] sm:$0xff]
      %v609 = vld [vmem:[%s3 + $0x2d8] sm:$0xff]
      %v610 = vld [vmem:[%s3 + $0x2e0] sm:$0xff]
      %v611 = vld [vmem:[%s3 + $0x2e8] sm:$0xff]
      %v612 = vld [vmem:[%s3 + $0x2f0] sm:$0xff]
      %v613 = vld [vmem:[%s3 + $0x2f8] sm:$0xff]
      %v614 = vld [vmem:[%s3 + $0x300] sm:$0xff]
      %v615 = vld [vmem:[%s3 + $0x308] sm:$0xff]
      %v616 = vld [vmem:[%s3 + $0x310] sm:$0xff]
      %v617 = vld [vmem:[%s3 + $0x318] sm:$0xff]
      %v618 = vld [vmem:[%s3 + $0x320] sm:$0xff]
      %v619 = vld [vmem:[%s3 + $0x328] sm:$0xff]
      %v620 = vld [vmem:[%s3 + $0x330] sm:$0xff]
      %v621 = vld [vmem:[%s3 + $0x338] sm:$0xff]
      %v622 = vld [vmem:[%s3 + $0x340] sm:$0xff]
      %v623 = vld [vmem:[%s3 + $0x348] sm:$0xff]
      %v624 = vld [vmem:[%s3 + $0x350] sm:$0xff]
      %v625 = vld [vmem:[%s3 + $0x358] sm:$0xff]
      %v626 = vld [vmem:[%s3 + $0x360] sm:$0xff]
      %v627 = vld [vmem:[%s3 + $0x368] sm:$0xff]
      %v628 = vld [vmem:[%s3 + $0x370] sm:$0xff]
      %v629 = vld [vmem:[%s3 + $0x378] sm:$0xff]
      %v630 = vld [vmem:[%s3 + $0x380] sm:$0xff]
      %v631 = vld [vmem:[%s3 + $0x388] sm:$0xff]
      %v632 = vld [vmem:[%s3 + $0x390] sm:$0xff]
      %v633 = vld [vmem:[%s3 + $0x398] sm:$0xff]
      %v634 = vld [vmem:[%s3 + $0x3a0] sm:$0xff]
      %v635 = vld [vmem:[%s3 + $0x3a8] sm:$0xff]
      %v636 = vld [vmem:[%s3 + $0x3b0] sm:$0xff]
      %v637 = vld [vmem:[%s3 + $0x3b8] sm:$0xff]
      %v638 = vld [vmem:[%s3 + $0x3c0] sm:$0xff]
      %v639 = vld [vmem:[%s3 + $0x3c8] sm:$0xff]
      %v640 = vld [vmem:[%s3 + $0x3d0] sm:$0xff]
      %v641 = vld [vmem:[%s3 + $0x3d8] sm:$0xff]
      %v642 = vld [vmem:[%s3 + $0x3e0] sm:$0xff]
      %v643 = vld [vmem:[%s3 + $0x3e8] sm:$0xff]
      %v644 = vld [vmem:[%s3 + $0x3f0] sm:$0xff]
      %v645 = vld [vmem:[%s3 + $0x3f8] sm:$0xff]
      %v774 = vunpack.c.l.b16 %v518
      %v775 = vunpack.c.h.b16 %v518
      %v776 = vunpack.c.l.b16 %v519
      %v777 = vunpack.c.h.b16 %v519
      %v778 = vunpack.c.l.b16 %v520
      %v779 = vunpack.c.h.b16 %v520
      %v780 = vunpack.c.l.b16 %v521
      %v781 = vunpack.c.h.b16 %v521
      %v782 = vunpack.c.l.b16 %v522
      %v783 = vunpack.c.h.b16 %v522
      %v784 = vunpack.c.l.b16 %v523
      %v785 = vunpack.c.h.b16 %v523
      %v786 = vunpack.c.l.b16 %v524
      %v787 = vunpack.c.h.b16 %v524
      %v788 = vunpack.c.l.b16 %v525
      %v789 = vunpack.c.h.b16 %v525
      %v790 = vunpack.c.l.b16 %v526
      %v791 = vunpack.c.h.b16 %v526
      %v792 = vunpack.c.l.b16 %v527
      %v793 = vunpack.c.h.b16 %v527
      %v794 = vunpack.c.l.b16 %v528
      %v795 = vunpack.c.h.b16 %v528
      %v796 = vunpack.c.l.b16 %v529
      %v797 = vunpack.c.h.b16 %v529
      %v798 = vunpack.c.l.b16 %v530
      %v799 = vunpack.c.h.b16 %v530
      %v800 = vunpack.c.l.b16 %v531
      %v801 = vunpack.c.h.b16 %v531
      %v802 = vunpack.c.l.b16 %v532
      %v803 = vunpack.c.h.b16 %v532
      %v804 = vunpack.c.l.b16 %v533
      %v805 = vunpack.c.h.b16 %v533
      %v806 = vunpack.c.l.b16 %v534
      %v807 = vunpack.c.h.b16 %v534
      %v808 = vunpack.c.l.b16 %v535
      %v809 = vunpack.c.h.b16 %v535
      %v810 = vunpack.c.l.b16 %v536
      %v811 = vunpack.c.h.b16 %v536
      %v812 = vunpack.c.l.b16 %v537
      %v813 = vunpack.c.h.b16 %v537
      %v814 = vunpack.c.l.b16 %v538
      %v815 = vunpack.c.h.b16 %v538
      %v816 = vunpack.c.l.b16 %v539
      %v817 = vunpack.c.h.b16 %v539
      %v818 = vunpack.c.l.b16 %v540
      %v819 = vunpack.c.h.b16 %v540
      %v820 = vunpack.c.l.b16 %v541
      %v821 = vunpack.c.h.b16 %v541
      %v822 = vunpack.c.l.b16 %v542
      %v823 = vunpack.c.h.b16 %v542
      %v824 = vunpack.c.l.b16 %v543
      %v825 = vunpack.c.h.b16 %v543
      %v826 = vunpack.c.l.b16 %v544
      %v827 = vunpack.c.h.b16 %v544
      %v828 = vunpack.c.l.b16 %v545
      %v829 = vunpack.c.h.b16 %v545
      %v830 = vunpack.c.l.b16 %v546
      %v831 = vunpack.c.h.b16 %v546
      %v832 = vunpack.c.l.b16 %v547
      %v833 = vunpack.c.h.b16 %v547
      %v834 = vunpack.c.l.b16 %v548
      %v835 = vunpack.c.h.b16 %v548
      %v836 = vunpack.c.l.b16 %v549
      %v837 = vunpack.c.h.b16 %v549
      %v838 = vunpack.c.l.b16 %v550
      %v839 = vunpack.c.h.b16 %v550
      %v840 = vunpack.c.l.b16 %v551
      %v841 = vunpack.c.h.b16 %v551
      %v842 = vunpack.c.l.b16 %v552
      %v843 = vunpack.c.h.b16 %v552
      %v844 = vunpack.c.l.b16 %v553
      %v845 = vunpack.c.h.b16 %v553
      %v846 = vunpack.c.l.b16 %v554
      %v847 = vunpack.c.h.b16 %v554
      %v848 = vunpack.c.l.b16 %v555
      %v849 = vunpack.c.h.b16 %v555
      %v850 = vunpack.c.l.b16 %v556
      %v851 = vunpack.c.h.b16 %v556
      %v852 = vunpack.c.l.b16 %v557
      %v853 = vunpack.c.h.b16 %v557
      %v854 = vunpack.c.l.b16 %v558
      %v855 = vunpack.c.h.b16 %v558
      %v856 = vunpack.c.l.b16 %v559
      %v857 = vunpack.c.h.b16 %v559
      %v858 = vunpack.c.l.b16 %v560
      %v859 = vunpack.c.h.b16 %v560
      %v860 = vunpack.c.l.b16 %v561
      %v861 = vunpack.c.h.b16 %v561
      %v862 = vunpack.c.l.b16 %v562
      %v863 = vunpack.c.h.b16 %v562
      %v864 = vunpack.c.l.b16 %v563
      %v865 = vunpack.c.h.b16 %v563
      %v866 = vunpack.c.l.b16 %v564
      %v867 = vunpack.c.h.b16 %v564
      %v868 = vunpack.c.l.b16 %v565
      %v869 = vunpack.c.h.b16 %v565
      %v870 = vunpack.c.l.b16 %v566
      %v871 = vunpack.c.h.b16 %v566
      %v872 = vunpack.c.l.b16 %v567
      %v873 = vunpack.c.h.b16 %v567
      %v874 = vunpack.c.l.b16 %v568
      %v875 = vunpack.c.h.b16 %v568
      %v876 = vunpack.c.l.b16 %v569
      %v877 = vunpack.c.h.b16 %v569
      %v878 = vunpack.c.l.b16 %v570
      %v879 = vunpack.c.h.b16 %v570
      %v880 = vunpack.c.l.b16 %v571
      %v881 = vunpack.c.h.b16 %v571
      %v882 = vunpack.c.l.b16 %v572
      %v883 = vunpack.c.h.b16 %v572
      %v884 = vunpack.c.l.b16 %v573
      %v885 = vunpack.c.h.b16 %v573
      %v886 = vunpack.c.l.b16 %v574
      %v887 = vunpack.c.h.b16 %v574
      %v888 = vunpack.c.l.b16 %v575
      %v889 = vunpack.c.h.b16 %v575
      %v890 = vunpack.c.l.b16 %v576
      %v891 = vunpack.c.h.b16 %v576
      %v892 = vunpack.c.l.b16 %v577
      %v893 = vunpack.c.h.b16 %v577
      %v894 = vunpack.c.l.b16 %v578
      %v895 = vunpack.c.h.b16 %v578
      %v896 = vunpack.c.l.b16 %v579
      %v897 = vunpack.c.h.b16 %v579
      %v898 = vunpack.c.l.b16 %v580
      %v899 = vunpack.c.h.b16 %v580
      %v900 = vunpack.c.l.b16 %v581
      %v901 = vunpack.c.h.b16 %v581
      %v902 = vunpack.c.l.b16 %v582
      %v903 = vunpack.c.h.b16 %v582
      %v904 = vunpack.c.l.b16 %v583
      %v905 = vunpack.c.h.b16 %v583
      %v906 = vunpack.c.l.b16 %v584
      %v907 = vunpack.c.h.b16 %v584
      %v908 = vunpack.c.l.b16 %v585
      %v909 = vunpack.c.h.b16 %v585
      %v910 = vunpack.c.l.b16 %v586
      %v911 = vunpack.c.h.b16 %v586
      %v912 = vunpack.c.l.b16 %v587
      %v913 = vunpack.c.h.b16 %v587
      %v914 = vunpack.c.l.b16 %v588
      %v915 = vunpack.c.h.b16 %v588
      %v916 = vunpack.c.l.b16 %v589
      %v917 = vunpack.c.h.b16 %v589
      %v918 = vunpack.c.l.b16 %v590
      %v919 = vunpack.c.h.b16 %v590
      %v920 = vunpack.c.l.b16 %v591
      %v921 = vunpack.c.h.b16 %v591
      %v922 = vunpack.c.l.b16 %v592
      %v923 = vunpack.c.h.b16 %v592
      %v924 = vunpack.c.l.b16 %v593
      %v925 = vunpack.c.h.b16 %v593
      %v926 = vunpack.c.l.b16 %v594
      %v927 = vunpack.c.h.b16 %v594
      %v928 = vunpack.c.l.b16 %v595
      %v929 = vunpack.c.h.b16 %v595
      %v930 = vunpack.c.l.b16 %v596
      %v931 = vunpack.c.h.b16 %v596
      %v932 = vunpack.c.l.b16 %v597
      %v933 = vunpack.c.h.b16 %v597
      %v934 = vunpack.c.l.b16 %v598
      %v935 = vunpack.c.h.b16 %v598
      %v936 = vunpack.c.l.b16 %v599
      %v937 = vunpack.c.h.b16 %v599
      %v938 = vunpack.c.l.b16 %v600
      %v939 = vunpack.c.h.b16 %v600
      %v940 = vunpack.c.l.b16 %v601
      %v941 = vunpack.c.h.b16 %v601
      %v942 = vunpack.c.l.b16 %v602
      %v943 = vunpack.c.h.b16 %v602
      %v944 = vunpack.c.l.b16 %v603
      %v945 = vunpack.c.h.b16 %v603
      %v946 = vunpack.c.l.b16 %v604
      %v947 = vunpack.c.h.b16 %v604
      %v948 = vunpack.c.l.b16 %v605
      %v949 = vunpack.c.h.b16 %v605
      %v950 = vunpack.c.l.b16 %v606
      %v951 = vunpack.c.h.b16 %v606
      %v952 = vunpack.c.l.b16 %v607
      %v953 = vunpack.c.h.b16 %v607
      %v954 = vunpack.c.l.b16 %v608
      %v955 = vunpack.c.h.b16 %v608
      %v956 = vunpack.c.l.b16 %v609
      %v957 = vunpack.c.h.b16 %v609
      %v958 = vunpack.c.l.b16 %v610
      %v959 = vunpack.c.h.b16 %v610
      %v960 = vunpack.c.l.b16 %v611
      %v961 = vunpack.c.h.b16 %v611
      %v962 = vunpack.c.l.b16 %v612
      %v963 = vunpack.c.h.b16 %v612
      %v964 = vunpack.c.l.b16 %v613
      %v965 = vunpack.c.h.b16 %v613
      %v966 = vunpack.c.l.b16 %v614
      %v967 = vunpack.c.h.b16 %v614
      %v968 = vunpack.c.l.b16 %v615
      %v969 = vunpack.c.h.b16 %v615
      %v970 = vunpack.c.l.b16 %v616
      %v971 = vunpack.c.h.b16 %v616
      %v972 = vunpack.c.l.b16 %v617
      %v973 = vunpack.c.h.b16 %v617
      %v974 = vunpack.c.l.b16 %v618
      %v975 = vunpack.c.h.b16 %v618
      %v976 = vunpack.c.l.b16 %v619
      %v977 = vunpack.c.h.b16 %v619
      %v978 = vunpack.c.l.b16 %v620
      %v979 = vunpack.c.h.b16 %v620
      %v980 = vunpack.c.l.b16 %v621
      %v981 = vunpack.c.h.b16 %v621
      %v982 = vunpack.c.l.b16 %v622
      %v983 = vunpack.c.h.b16 %v622
      %v984 = vunpack.c.l.b16 %v623
      %v985 = vunpack.c.h.b16 %v623
      %v986 = vunpack.c.l.b16 %v624
      %v987 = vunpack.c.h.b16 %v624
      %v988 = vunpack.c.l.b16 %v625
      %v989 = vunpack.c.h.b16 %v625
      %v990 = vunpack.c.l.b16 %v626
      %v991 = vunpack.c.h.b16 %v626
      %v992 = vunpack.c.l.b16 %v627
      %v993 = vunpack.c.h.b16 %v627
      %v994 = vunpack.c.l.b16 %v628
      %v995 = vunpack.c.h.b16 %v628
      %v996 = vunpack.c.l.b16 %v629
      %v997 = vunpack.c.h.b16 %v629
      %v998 = vunpack.c.l.b16 %v630
      %v999 = vunpack.c.h.b16 %v630
      %v1000 = vunpack.c.l.b16 %v631
      %v1001 = vunpack.c.h.b16 %v631
      %v1002 = vunpack.c.l.b16 %v632
      %v1003 = vunpack.c.h.b16 %v632
      %v1004 = vunpack.c.l.b16 %v633
      %v1005 = vunpack.c.h.b16 %v633
      %v1006 = vunpack.c.l.b16 %v634
      %v1007 = vunpack.c.h.b16 %v634
      %v1008 = vunpack.c.l.b16 %v635
      %v1009 = vunpack.c.h.b16 %v635
      %v1010 = vunpack.c.l.b16 %v636
      %v1011 = vunpack.c.h.b16 %v636
      %v1012 = vunpack.c.l.b16 %v637
      %v1013 = vunpack.c.h.b16 %v637
      %v1014 = vunpack.c.l.b16 %v638
      %v1015 = vunpack.c.h.b16 %v638
      %v1016 = vunpack.c.l.b16 %v639
      %v1017 = vunpack.c.h.b16 %v639
      %v1018 = vunpack.c.l.b16 %v640
      %v1019 = vunpack.c.h.b16 %v640
      %v1020 = vunpack.c.l.b16 %v641
      %v1021 = vunpack.c.h.b16 %v641
      %v1022 = vunpack.c.l.b16 %v642
      %v1023 = vunpack.c.h.b16 %v642
      %v1024 = vunpack.c.l.b16 %v643
      %v1025 = vunpack.c.h.b16 %v643
      %v1026 = vunpack.c.l.b16 %v644
      %v1027 = vunpack.c.h.b16 %v644
      %v1028 = vunpack.c.l.b16 %v645
      %v1029 = vunpack.c.h.b16 %v645
      %v1030 = vpack.c.b16 %v782, %v774
      %v1031 = vpack.c.b16 %v783, %v775
      %v1032 = vpack.c.b16 %v784, %v776
      %v1033 = vpack.c.b16 %v785, %v777
      %v1034 = vpack.c.b16 %v786, %v778
      %v1035 = vpack.c.b16 %v787, %v779
      %v1036 = vpack.c.b16 %v788, %v780
      %v1037 = vpack.c.b16 %v789, %v781
      %v1038 = vpack.c.b16 %v798, %v790
      %v1039 = vpack.c.b16 %v799, %v791
      %v1040 = vpack.c.b16 %v800, %v792
      %v1041 = vpack.c.b16 %v801, %v793
      %v1042 = vpack.c.b16 %v802, %v794
      %v1043 = vpack.c.b16 %v803, %v795
      %v1044 = vpack.c.b16 %v804, %v796
      %v1045 = vpack.c.b16 %v805, %v797
      %v1046 = vpack.c.b16 %v814, %v806
      %v1047 = vpack.c.b16 %v815, %v807
      %v1048 = vpack.c.b16 %v816, %v808
      %v1049 = vpack.c.b16 %v817, %v809
      %v1050 = vpack.c.b16 %v818, %v810
      %v1051 = vpack.c.b16 %v819, %v811
      %v1052 = vpack.c.b16 %v820, %v812
      %v1053 = vpack.c.b16 %v821, %v813
      %v1054 = vpack.c.b16 %v830, %v822
      %v1055 = vpack.c.b16 %v831, %v823
      %v1056 = vpack.c.b16 %v832, %v824
      %v1057 = vpack.c.b16 %v833, %v825
      %v1058 = vpack.c.b16 %v834, %v826
      %v1059 = vpack.c.b16 %v835, %v827
      %v1060 = vpack.c.b16 %v836, %v828
      %v1061 = vpack.c.b16 %v837, %v829
      %v1062 = vpack.c.b16 %v846, %v838
      %v1063 = vpack.c.b16 %v847, %v839
      %v1064 = vpack.c.b16 %v848, %v840
      %v1065 = vpack.c.b16 %v849, %v841
      %v1066 = vpack.c.b16 %v850, %v842
      %v1067 = vpack.c.b16 %v851, %v843
      %v1068 = vpack.c.b16 %v852, %v844
      %v1069 = vpack.c.b16 %v853, %v845
      %v1070 = vpack.c.b16 %v862, %v854
      %v1071 = vpack.c.b16 %v863, %v855
      %v1072 = vpack.c.b16 %v864, %v856
      %v1073 = vpack.c.b16 %v865, %v857
      %v1074 = vpack.c.b16 %v866, %v858
      %v1075 = vpack.c.b16 %v867, %v859
      %v1076 = vpack.c.b16 %v868, %v860
      %v1077 = vpack.c.b16 %v869, %v861
      %v1078 = vpack.c.b16 %v878, %v870
      %v1079 = vpack.c.b16 %v879, %v871
      %v1080 = vpack.c.b16 %v880, %v872
      %v1081 = vpack.c.b16 %v881, %v873
      %v1082 = vpack.c.b16 %v882, %v874
      %v1083 = vpack.c.b16 %v883, %v875
      %v1084 = vpack.c.b16 %v884, %v876
      %v1085 = vpack.c.b16 %v885, %v877
      %v1086 = vpack.c.b16 %v894, %v886
      %v1087 = vpack.c.b16 %v895, %v887
      %v1088 = vpack.c.b16 %v896, %v888
      %v1089 = vpack.c.b16 %v897, %v889
      %v1090 = vpack.c.b16 %v898, %v890
      %v1091 = vpack.c.b16 %v899, %v891
      %v1092 = vpack.c.b16 %v900, %v892
      %v1093 = vpack.c.b16 %v901, %v893
      %v1094 = vpack.c.b16 %v910, %v902
      %v1095 = vpack.c.b16 %v911, %v903
      %v1096 = vpack.c.b16 %v912, %v904
      %v1097 = vpack.c.b16 %v913, %v905
      %v1098 = vpack.c.b16 %v914, %v906
      %v1099 = vpack.c.b16 %v915, %v907
      %v1100 = vpack.c.b16 %v916, %v908
      %v1101 = vpack.c.b16 %v917, %v909
      %v1102 = vpack.c.b16 %v926, %v918
      %v1103 = vpack.c.b16 %v927, %v919
      %v1104 = vpack.c.b16 %v928, %v920
      %v1105 = vpack.c.b16 %v929, %v921
      %v1106 = vpack.c.b16 %v930, %v922
      %v1107 = vpack.c.b16 %v931, %v923
      %v1108 = vpack.c.b16 %v932, %v924
      %v1109 = vpack.c.b16 %v933, %v925
      %v1110 = vpack.c.b16 %v942, %v934
      %v1111 = vpack.c.b16 %v943, %v935
      %v1112 = vpack.c.b16 %v944, %v936
      %v1113 = vpack.c.b16 %v945, %v937
      %v1114 = vpack.c.b16 %v946, %v938
      %v1115 = vpack.c.b16 %v947, %v939
      %v1116 = vpack.c.b16 %v948, %v940
      %v1117 = vpack.c.b16 %v949, %v941
      %v1118 = vpack.c.b16 %v958, %v950
      %v1119 = vpack.c.b16 %v959, %v951
      %v1120 = vpack.c.b16 %v960, %v952
      %v1121 = vpack.c.b16 %v961, %v953
      %v1122 = vpack.c.b16 %v962, %v954
      %v1123 = vpack.c.b16 %v963, %v955
      %v1124 = vpack.c.b16 %v964, %v956
      %v1125 = vpack.c.b16 %v965, %v957
      %v1126 = vpack.c.b16 %v974, %v966
      %v1127 = vpack.c.b16 %v975, %v967
      %v1128 = vpack.c.b16 %v976, %v968
      %v1129 = vpack.c.b16 %v977, %v969
      %v1130 = vpack.c.b16 %v978, %v970
      %v1131 = vpack.c.b16 %v979, %v971
      %v1132 = vpack.c.b16 %v980, %v972
      %v1133 = vpack.c.b16 %v981, %v973
      %v1134 = vpack.c.b16 %v990, %v982
      %v1135 = vpack.c.b16 %v991, %v983
      %v1136 = vpack.c.b16 %v992, %v984
      %v1137 = vpack.c.b16 %v993, %v985
      %v1138 = vpack.c.b16 %v994, %v986
      %v1139 = vpack.c.b16 %v995, %v987
      %v1140 = vpack.c.b16 %v996, %v988
      %v1141 = vpack.c.b16 %v997, %v989
      %v1142 = vpack.c.b16 %v1006, %v998
      %v1143 = vpack.c.b16 %v1007, %v999
      %v1144 = vpack.c.b16 %v1008, %v1000
      %v1145 = vpack.c.b16 %v1009, %v1001
      %v1146 = vpack.c.b16 %v1010, %v1002
      %v1147 = vpack.c.b16 %v1011, %v1003
      %v1148 = vpack.c.b16 %v1012, %v1004
      %v1149 = vpack.c.b16 %v1013, %v1005
      %v1150 = vpack.c.b16 %v1022, %v1014
      %v1151 = vpack.c.b16 %v1023, %v1015
      %v1152 = vpack.c.b16 %v1024, %v1016
      %v1153 = vpack.c.b16 %v1025, %v1017
      %v1154 = vpack.c.b16 %v1026, %v1018
      %v1155 = vpack.c.b16 %v1027, %v1019
      %v1156 = vpack.c.b16 %v1028, %v1020
      %v1157 = vpack.c.b16 %v1029, %v1021
      %1286 = vmatprep.subr.bf16.mxu0 %v1031
      %1287 = vmatpush1.bf16.msra.mxu0 %v1030
      %1288 = vmatprep.subr.bf16.mxu0 %v1039
      %1289 = vmatpush1.bf16.msra.mxu0 %v1038
      %1290 = vmatprep.subr.bf16.mxu0 %v1047
      %1291 = vmatpush1.bf16.msra.mxu0 %v1046
      %1292 = vmatprep.subr.bf16.mxu0 %v1055
      %1293 = vmatpush1.bf16.msra.mxu0 %v1054
      %1294 = vmatprep.subr.bf16.mxu0 %v1063
      %1295 = vmatpush1.bf16.msra.mxu0 %v1062
      %1296 = vmatprep.subr.bf16.mxu0 %v1071
      %1297 = vmatpush1.bf16.msra.mxu0 %v1070
      %1298 = vmatprep.subr.bf16.mxu0 %v1079
      %1299 = vmatpush1.bf16.msra.mxu0 %v1078
      %1300 = vmatprep.subr.bf16.mxu0 %v1087
      %1301 = vmatpush1.bf16.msra.mxu0 %v1086
      %1302 = vmatprep.subr.bf16.mxu0 %v1095
      %1303 = vmatpush1.bf16.msra.mxu0 %v1094
      %1304 = vmatprep.subr.bf16.mxu0 %v1103
      %1305 = vmatpush1.bf16.msra.mxu0 %v1102
      %1306 = vmatprep.subr.bf16.mxu0 %v1111
      %1307 = vmatpush1.bf16.msra.mxu0 %v1110
      %1308 = vmatprep.subr.bf16.mxu0 %v1119
      %1309 = vmatpush1.bf16.msra.mxu0 %v1118
      %1310 = vmatprep.subr.bf16.mxu0 %v1127
      %1311 = vmatpush1.bf16.msra.mxu0 %v1126
      %1312 = vmatprep.subr.bf16.mxu0 %v1135
      %1313 = vmatpush1.bf16.msra.mxu0 %v1134
      %1314 = vmatprep.subr.bf16.mxu0 %v1143
      %1315 = vmatpush1.bf16.msra.mxu0 %v1142
      %1316 = vmatprep.subr.bf16.mxu0 %v1151
      %1317 = vmatpush1.bf16.msra.mxu0 %v1150
      %1318 = vmatprep.mubr.bf16.mxu0 %v487
      %1319 = vmatmul.mubr.bf16.gmra.mrb[0].mxu0 %v486
      %v1320 = vpop.f32.mrb[0].mxu0
      %v1321 = vadd.f32 0.0, %v1320
      %v1322 = vpop.f32.mrb[0].mxu0
      %v1323 = vadd.f32 0.0, %v1322
      %v1324 = vpop.f32.mrb[0].mxu0
      %v1325 = vadd.f32 0.0, %v1324
      %v1326 = vpop.f32.mrb[0].mxu0
      %v1327 = vadd.f32 0.0, %v1326
      %1328 = vmatprep.mubr.bf16.mxu0 %v489
      %1329 = vmatmul.mubr.bf16.gmra.mrb[0].mxu0 %v488
      %v1330 = vpop.f32.mrb[0].mxu0
      %v1331 = vadd.f32 0.0, %v1330
      %v1332 = vpop.f32.mrb[0].mxu0
      %v1333 = vadd.f32 0.0, %v1332
      %v1334 = vpop.f32.mrb[0].mxu0
      %v1335 = vadd.f32 0.0, %v1334
      %v1336 = vpop.f32.mrb[0].mxu0
      %v1337 = vadd.f32 0.0, %v1336
      %1338 = vmatprep.mubr.bf16.mxu0 %v491
      %1339 = vmatmul.mubr.bf16.gmra.mrb[0].mxu0 %v490
      %v1340 = vpop.f32.mrb[0].mxu0
      %v1341 = vadd.f32 0.0, %v1340
      %v1342 = vpop.f32.mrb[0].mxu0
      %v1343 = vadd.f32 0.0, %v1342
      %v1344 = vpop.f32.mrb[0].mxu0
      %v1345 = vadd.f32 0.0, %v1344
      %v1346 = vpop.f32.mrb[0].mxu0
      %v1347 = vadd.f32 0.0, %v1346
      %1348 = vmatprep.mubr.bf16.mxu0 %v493
      %1349 = vmatmul.mubr.bf16.gmra.mrb[0].mxu0 %v492
      %v1350 = vpop.f32.mrb[0].mxu0
      %v1351 = vadd.f32 0.0, %v1350
      %v1352 = vpop.f32.mrb[0].mxu0
      %v1353 = vadd.f32 0.0, %v1352
      %v1354 = vpop.f32.mrb[0].mxu0
      %v1355 = vadd.f32 0.0, %v1354
      %v1356 = vpop.f32.mrb[0].mxu0
      %v1357 = vadd.f32 0.0, %v1356
      %1358 = vmatprep.mubr.bf16.mxu0 %v495
      %1359 = vmatmul.mubr.bf16.gmra.mrb[0].mxu0 %v494
      %v1360 = vpop.f32.mrb[0].mxu0
      %v1361 = vadd.f32 0.0, %v1360
      %v1362 = vpop.f32.mrb[0].mxu0
      %v1363 = vadd.f32 0.0, %v1362
      %v1364 = vpop.f32.mrb[0].mxu0
      %v1365 = vadd.f32 0.0, %v1364
      %v1366 = vpop.f32.mrb[0].mxu0
      %v1367 = vadd.f32 0.0, %v1366
      %1368 = vmatprep.mubr.bf16.mxu0 %v497
      %1369 = vmatmul.mubr.bf16.gmra.mrb[0].mxu0 %v496
      %v1370 = vpop.f32.mrb[0].mxu0
      %v1371 = vadd.f32 0.0, %v1370
      %v1372 = vpop.f32.mrb[0].mxu0
      %v1373 = vadd.f32 0.0, %v1372
      %v1374 = vpop.f32.mrb[0].mxu0
      %v1375 = vadd.f32 0.0, %v1374
      %v1376 = vpop.f32.mrb[0].mxu0
      %v1377 = vadd.f32 0.0, %v1376
      %1378 = vmatprep.mubr.bf16.mxu0 %v499
      %1379 = vmatmul.mubr.bf16.gmra.mrb[0].mxu0 %v498
      %v1380 = vpop.f32.mrb[0].mxu0
      %v1381 = vadd.f32 0.0, %v1380
      %v1382 = vpop.f32.mrb[0].mxu0
      %v1383 = vadd.f32 0.0, %v1382
      %v1384 = vpop.f32.mrb[0].mxu0
      %v1385 = vadd.f32 0.0, %v1384
      %v1386 = vpop.f32.mrb[0].mxu0
      %v1387 = vadd.f32 0.0, %v1386
      %1388 = vmatprep.mubr.bf16.mxu0 %v501
      %1389 = vmatmul.mubr.bf16.gmra.mrb[0].mxu0 %v500
      %v1390 = vpop.f32.mrb[0].mxu0
      %v1391 = vadd.f32 0.0, %v1390
      %v1392 = vpop.f32.mrb[0].mxu0
      %v1393 = vadd.f32 0.0, %v1392
      %v1394 = vpop.f32.mrb[0].mxu0
      %v1395 = vadd.f32 0.0, %v1394
      %v1396 = vpop.f32.mrb[0].mxu0
      %v1397 = vadd.f32 0.0, %v1396
      %1398 = vmatprep.mubr.bf16.mxu0 %v503
      %1399 = vmatmul.mubr.bf16.gmra.mrb[0].mxu0 %v502
      %v1400 = vpop.f32.mrb[0].mxu0
      %v1401 = vadd.f32 0.0, %v1400
      %v1402 = vpop.f32.mrb[0].mxu0
      %v1403 = vadd.f32 0.0, %v1402
      %v1404 = vpop.f32.mrb[0].mxu0
      %v1405 = vadd.f32 0.0, %v1404
      %v1406 = vpop.f32.mrb[0].mxu0
      %v1407 = vadd.f32 0.0, %v1406
      %1408 = vmatprep.mubr.bf16.mxu0 %v505
      %1409 = vmatmul.mubr.bf16.gmra.mrb[0].mxu0 %v504
      %v1410 = vpop.f32.mrb[0].mxu0
      %v1411 = vadd.f32 0.0, %v1410
      %v1412 = vpop.f32.mrb[0].mxu0
      %v1413 = vadd.f32 0.0, %v1412
      %v1414 = vpop.f32.mrb[0].mxu0
      %v1415 = vadd.f32 0.0, %v1414
      %v1416 = vpop.f32.mrb[0].mxu0
      %v1417 = vadd.f32 0.0, %v1416
      %1418 = vmatprep.mubr.bf16.mxu0 %v507
      %1419 = vmatmul.mubr.bf16.gmra.mrb[0].mxu0 %v506
      %v1420 = vpop.f32.mrb[0].mxu0
      %v1421 = vadd.f32 0.0, %v1420
      %v1422 = vpop.f32.mrb[0].mxu0
      %v1423 = vadd.f32 0.0, %v1422
      %v1424 = vpop.f32.mrb[0].mxu0
      %v1425 = vadd.f32 0.0, %v1424
      %v1426 = vpop.f32.mrb[0].mxu0
      %v1427 = vadd.f32 0.0, %v1426
      %1428 = vmatprep.mubr.bf16.mxu0 %v509
      %1429 = vmatmul.mubr.bf16.gmra.mrb[0].mxu0 %v508
      %v1430 = vpop.f32.mrb[0].mxu0
      %v1431 = vadd.f32 0.0, %v1430
      %v1432 = vpop.f32.mrb[0].mxu0
      %v1433 = vadd.f32 0.0, %v1432
      %v1434 = vpop.f32.mrb[0].mxu0
      %v1435 = vadd.f32 0.0, %v1434
      %v1436 = vpop.f32.mrb[0].mxu0
      %v1437 = vadd.f32 0.0, %v1436
      %1438 = vmatprep.mubr.bf16.mxu0 %v511
      %1439 = vmatmul.mubr.bf16.gmra.mrb[0].mxu0 %v510
      %v1440 = vpop.f32.mrb[0].mxu0
      %v1441 = vadd.f32 0.0, %v1440
      %v1442 = vpop.f32.mrb[0].mxu0
      %v1443 = vadd.f32 0.0, %v1442
      %v1444 = vpop.f32.mrb[0].mxu0
      %v1445 = vadd.f32 0.0, %v1444
      %v1446 = vpop.f32.mrb[0].mxu0
      %v1447 = vadd.f32 0.0, %v1446
      %1448 = vmatprep.mubr.bf16.mxu0 %v513
      %1449 = vmatmul.mubr.bf16.gmra.mrb[0].mxu0 %v512
      %v1450 = vpop.f32.mrb[0].mxu0
      %v1451 = vadd.f32 0.0, %v1450
      %v1452 = vpop.f32.mrb[0].mxu0
      %v1453 = vadd.f32 0.0, %v1452
      %v1454 = vpop.f32.mrb[0].mxu0
      %v1455 = vadd.f32 0.0, %v1454
      %v1456 = vpop.f32.mrb[0].mxu0
      %v1457 = vadd.f32 0.0, %v1456
      %1458 = vmatprep.mubr.bf16.mxu0 %v515
      %1459 = vmatmul.mubr.bf16.gmra.mrb[0].mxu0 %v514
      %v1460 = vpop.f32.mrb[0].mxu0
      %v1461 = vadd.f32 0.0, %v1460
      %v1462 = vpop.f32.mrb[0].mxu0
      %v1463 = vadd.f32 0.0, %v1462
      %v1464 = vpop.f32.mrb[0].mxu0
      %v1465 = vadd.f32 0.0, %v1464
      %v1466 = vpop.f32.mrb[0].mxu0
      %v1467 = vadd.f32 0.0, %v1466
      %1468 = vmatprep.mubr.bf16.mxu0 %v517
      %1469 = vmatmul.mubr.bf16.gmra.mrb[0].mxu0 %v516
      %v1470 = vpop.f32.mrb[0].mxu0
      %v1471 = vadd.f32 0.0, %v1470
      %v1472 = vpop.f32.mrb[0].mxu0
      %v1473 = vadd.f32 0.0, %v1472
      %v1474 = vpop.f32.mrb[0].mxu0
      %v1475 = vadd.f32 0.0, %v1474
      %v1476 = vpop.f32.mrb[0].mxu0
      %v1477 = vadd.f32 0.0, %v1476
      %1478 = vdwg.mxu0
      %1479 = vmatprep.subr.bf16.mxu0 %v1033
      %1480 = vmatpush1.bf16.msra.mxu0 %v1032
      %1481 = vmatprep.subr.bf16.mxu0 %v1041
      %1482 = vmatpush1.bf16.msra.mxu0 %v1040
      %1483 = vmatprep.subr.bf16.mxu0 %v1049
      %1484 = vmatpush1.bf16.msra.mxu0 %v1048
      %1485 = vmatprep.subr.bf16.mxu0 %v1057
      %1486 = vmatpush1.bf16.msra.mxu0 %v1056
      %1487 = vmatprep.subr.bf16.mxu0 %v1065
      %1488 = vmatpush1.bf16.msra.mxu0 %v1064
      %1489 = vmatprep.subr.bf16.mxu0 %v1073
      %1490 = vmatpush1.bf16.msra.mxu0 %v1072
      %1491 = vmatprep.subr.bf16.mxu0 %v1081
      %1492 = vmatpush1.bf16.msra.mxu0 %v1080
      %1493 = vmatprep.subr.bf16.mxu0 %v1089
      %1494 = vmatpush1.bf16.msra.mxu0 %v1088
      %1495 = vmatprep.subr.bf16.mxu0 %v1097
      %1496 = vmatpush1.bf16.msra.mxu0 %v1096
      %1497 = vmatprep.subr.bf16.mxu0 %v1105
      %1498 = vmatpush1.bf16.msra.mxu0 %v1104
      %1499 = vmatprep.subr.bf16.mxu0 %v1113
      %1500 = vmatpush1.bf16.msra.mxu0 %v1112
      %1501 = vmatprep.subr.bf16.mxu0 %v1121
      %1502 = vmatpush1.bf16.msra.mxu0 %v1120
      %1503 = vmatprep.subr.bf16.mxu0 %v1129
      %1504 = vmatpush1.bf16.msra.mxu0 %v1128
      %1505 = vmatprep.subr.bf16.mxu0 %v1137
      %1506 = vmatpush1.bf16.msra.mxu0 %v1136
      %1507 = vmatprep.subr.bf16.mxu0 %v1145
      %1508 = vmatpush1.bf16.msra.mxu0 %v1144
      %1509 = vmatprep.subr.bf16.mxu0 %v1153
      %1510 = vmatpush1.bf16.msra.mxu0 %v1152
      %1511 = vmatprep.mubr.bf16.mxu0 %v487
      %1512 = vmatmul.mubr.bf16.gmra.mrb[0].mxu0 %v486
      %v1513 = vpop.f32.mrb[0].mxu0
      %v1514 = vadd.f32 0.0, %v1513
      %v1515 = vpop.f32.mrb[0].mxu0
      %v1516 = vadd.f32 0.0, %v1515
      %v1517 = vpop.f32.mrb[0].mxu0
      %v1518 = vadd.f32 0.0, %v1517
      %v1519 = vpop.f32.mrb[0].mxu0
      %v1520 = vadd.f32 0.0, %v1519
      %1521 = vmatprep.mubr.bf16.mxu0 %v489
      %1522 = vmatmul.mubr.bf16.gmra.mrb[0].mxu0 %v488
      %v1523 = vpop.f32.mrb[0].mxu0
      %v1524 = vadd.f32 0.0, %v1523
      %v1525 = vpop.f32.mrb[0].mxu0
      %v1526 = vadd.f32 0.0, %v1525
      %v1527 = vpop.f32.mrb[0].mxu0
      %v1528 = vadd.f32 0.0, %v1527
      %v1529 = vpop.f32.mrb[0].mxu0
      %v1530 = vadd.f32 0.0, %v1529
      %1531 = vmatprep.mubr.bf16.mxu0 %v491
      %1532 = vmatmul.mubr.bf16.gmra.mrb[0].mxu0 %v490
      %v1533 = vpop.f32.mrb[0].mxu0
      %v1534 = vadd.f32 0.0, %v1533
      %v1535 = vpop.f32.mrb[0].mxu0
      %v1536 = vadd.f32 0.0, %v1535
      %v1537 = vpop.f32.mrb[0].mxu0
      %v1538 = vadd.f32 0.0, %v1537
      %v1539 = vpop.f32.mrb[0].mxu0
      %v1540 = vadd.f32 0.0, %v1539
      %1541 = vmatprep.mubr.bf16.mxu0 %v493
      %1542 = vmatmul.mubr.bf16.gmra.mrb[0].mxu0 %v492
      %v1543 = vpop.f32.mrb[0].mxu0
      %v1544 = vadd.f32 0.0, %v1543
      %v1545 = vpop.f32.mrb[0].mxu0
      %v1546 = vadd.f32 0.0, %v1545
      %v1547 = vpop.f32.mrb[0].mxu0
      %v1548 = vadd.f32 0.0, %v1547
      %v1549 = vpop.f32.mrb[0].mxu0
      %v1550 = vadd.f32 0.0, %v1549
      %1551 = vmatprep.mubr.bf16.mxu0 %v495
      %1552 = vmatmul.mubr.bf16.gmra.mrb[0].mxu0 %v494
      %v1553 = vpop.f32.mrb[0].mxu0
      %v1554 = vadd.f32 0.0, %v1553
      %v1555 = vpop.f32.mrb[0].mxu0
      %v1556 = vadd.f32 0.0, %v1555
      %v1557 = vpop.f32.mrb[0].mxu0
      %v1558 = vadd.f32 0.0, %v1557
      %v1559 = vpop.f32.mrb[0].mxu0
      %v1560 = vadd.f32 0.0, %v1559
      %1561 = vmatprep.mubr.bf16.mxu0 %v497
      %1562 = vmatmul.mubr.bf16.gmra.mrb[0].mxu0 %v496
      %v1563 = vpop.f32.mrb[0].mxu0
      %v1564 = vadd.f32 0.0, %v1563
      %v1565 = vpop.f32.mrb[0].mxu0
      %v1566 = vadd.f32 0.0, %v1565
      %v1567 = vpop.f32.mrb[0].mxu0
      %v1568 = vadd.f32 0.0, %v1567
      %v1569 = vpop.f32.mrb[0].mxu0
      %v1570 = vadd.f32 0.0, %v1569
      %1571 = vmatprep.mubr.bf16.mxu0 %v499
      %1572 = vmatmul.mubr.bf16.gmra.mrb[0].mxu0 %v498
      %v1573 = vpop.f32.mrb[0].mxu0
      %v1574 = vadd.f32 0.0, %v1573
      %v1575 = vpop.f32.mrb[0].mxu0
      %v1576 = vadd.f32 0.0, %v1575
      %v1577 = vpop.f32.mrb[0].mxu0
      %v1578 = vadd.f32 0.0, %v1577
      %v1579 = vpop.f32.mrb[0].mxu0
      %v1580 = vadd.f32 0.0, %v1579
      %1581 = vmatprep.mubr.bf16.mxu0 %v501
      %1582 = vmatmul.mubr.bf16.gmra.mrb[0].mxu0 %v500
      %v1583 = vpop.f32.mrb[0].mxu0
      %v1584 = vadd.f32 0.0, %v1583
      %v1585 = vpop.f32.mrb[0].mxu0
      %v1586 = vadd.f32 0.0, %v1585
      %v1587 = vpop.f32.mrb[0].mxu0
      %v1588 = vadd.f32 0.0, %v1587
      %v1589 = vpop.f32.mrb[0].mxu0
      %v1590 = vadd.f32 0.0, %v1589
      %1591 = vmatprep.mubr.bf16.mxu0 %v503
      %1592 = vmatmul.mubr.bf16.gmra.mrb[0].mxu0 %v502
      %v1593 = vpop.f32.mrb[0].mxu0
      %v1594 = vadd.f32 0.0, %v1593
      %v1595 = vpop.f32.mrb[0].mxu0
      %v1596 = vadd.f32 0.0, %v1595
      %v1597 = vpop.f32.mrb[0].mxu0
      %v1598 = vadd.f32 0.0, %v1597
      %v1599 = vpop.f32.mrb[0].mxu0
      %v1600 = vadd.f32 0.0, %v1599
      %1601 = vmatprep.mubr.bf16.mxu0 %v505
      %1602 = vmatmul.mubr.bf16.gmra.mrb[0].mxu0 %v504
      %v1603 = vpop.f32.mrb[0].mxu0
      %v1604 = vadd.f32 0.0, %v1603
      %v1605 = vpop.f32.mrb[0].mxu0
      %v1606 = vadd.f32 0.0, %v1605
      %v1607 = vpop.f32.mrb[0].mxu0
      %v1608 = vadd.f32 0.0, %v1607
      %v1609 = vpop.f32.mrb[0].mxu0
      %v1610 = vadd.f32 0.0, %v1609
      %1611 = vmatprep.mubr.bf16.mxu0 %v507
      %1612 = vmatmul.mubr.bf16.gmra.mrb[0].mxu0 %v506
      %v1613 = vpop.f32.mrb[0].mxu0
      %v1614 = vadd.f32 0.0, %v1613
      %v1615 = vpop.f32.mrb[0].mxu0
      %v1616 = vadd.f32 0.0, %v1615
      %v1617 = vpop.f32.mrb[0].mxu0
      %v1618 = vadd.f32 0.0, %v1617
      %v1619 = vpop.f32.mrb[0].mxu0
      %v1620 = vadd.f32 0.0, %v1619
      %1621 = vmatprep.mubr.bf16.mxu0 %v509
      %1622 = vmatmul.mubr.bf16.gmra.mrb[0].mxu0 %v508
      %v1623 = vpop.f32.mrb[0].mxu0
      %v1624 = vadd.f32 0.0, %v1623
      %v1625 = vpop.f32.mrb[0].mxu0
      %v1626 = vadd.f32 0.0, %v1625
      %v1627 = vpop.f32.mrb[0].mxu0
      %v1628 = vadd.f32 0.0, %v1627
      %v1629 = vpop.f32.mrb[0].mxu0
      %v1630 = vadd.f32 0.0, %v1629
      %1631 = vmatprep.mubr.bf16.mxu0 %v511
      %1632 = vmatmul.mubr.bf16.gmra.mrb[0].mxu0 %v510
      %v1633 = vpop.f32.mrb[0].mxu0
      %v1634 = vadd.f32 0.0, %v1633
      %v1635 = vpop.f32.mrb[0].mxu0
      %v1636 = vadd.f32 0.0, %v1635
      %v1637 = vpop.f32.mrb[0].mxu0
      %v1638 = vadd.f32 0.0, %v1637
      %v1639 = vpop.f32.mrb[0].mxu0
      %v1640 = vadd.f32 0.0, %v1639
      %1641 = vmatprep.mubr.bf16.mxu0 %v513
      %1642 = vmatmul.mubr.bf16.gmra.mrb[0].mxu0 %v512
      %v1643 = vpop.f32.mrb[0].mxu0
      %v1644 = vadd.f32 0.0, %v1643
      %v1645 = vpop.f32.mrb[0].mxu0
      %v1646 = vadd.f32 0.0, %v1645
      %v1647 = vpop.f32.mrb[0].mxu0
      %v1648 = vadd.f32 0.0, %v1647
      %v1649 = vpop.f32.mrb[0].mxu0
      %v1650 = vadd.f32 0.0, %v1649
      %1651 = vmatprep.mubr.bf16.mxu0 %v515
      %1652 = vmatmul.mubr.bf16.gmra.mrb[0].mxu0 %v514
      %v1653 = vpop.f32.mrb[0].mxu0
      %v1654 = vadd.f32 0.0, %v1653
      %v1655 = vpop.f32.mrb[0].mxu0
      %v1656 = vadd.f32 0.0, %v1655
      %v1657 = vpop.f32.mrb[0].mxu0
      %v1658 = vadd.f32 0.0, %v1657
      %v1659 = vpop.f32.mrb[0].mxu0
      %v1660 = vadd.f32 0.0, %v1659
      %1661 = vmatprep.mubr.bf16.mxu0 %v517
      %1662 = vmatmul.mubr.bf16.gmra.mrb[0].mxu0 %v516
      %v1663 = vpop.f32.mrb[0].mxu0
      %v1664 = vadd.f32 0.0, %v1663
      %v1665 = vpop.f32.mrb[0].mxu0
      %v1666 = vadd.f32 0.0, %v1665
      %v1667 = vpop.f32.mrb[0].mxu0
      %v1668 = vadd.f32 0.0, %v1667
      %v1669 = vpop.f32.mrb[0].mxu0
      %v1670 = vadd.f32 0.0, %v1669
      %1671 = vdwg.mxu0
      %1672 = vmatprep.subr.bf16.mxu0 %v1035
      %1673 = vmatpush1.bf16.msra.mxu0 %v1034
      %1674 = vmatprep.subr.bf16.mxu0 %v1043
      %1675 = vmatpush1.bf16.msra.mxu0 %v1042
      %1676 = vmatprep.subr.bf16.mxu0 %v1051
      %1677 = vmatpush1.bf16.msra.mxu0 %v1050
      %1678 = vmatprep.subr.bf16.mxu0 %v1059
      %1679 = vmatpush1.bf16.msra.mxu0 %v1058
      %1680 = vmatprep.subr.bf16.mxu0 %v1067
      %1681 = vmatpush1.bf16.msra.mxu0 %v1066
      %1682 = vmatprep.subr.bf16.mxu0 %v1075
      %1683 = vmatpush1.bf16.msra.mxu0 %v1074
      %1684 = vmatprep.subr.bf16.mxu0 %v1083
      %1685 = vmatpush1.bf16.msra.mxu0 %v1082
      %1686 = vmatprep.subr.bf16.mxu0 %v1091
      %1687 = vmatpush1.bf16.msra.mxu0 %v1090
      %1688 = vmatprep.subr.bf16.mxu0 %v1099
      %1689 = vmatpush1.bf16.msra.mxu0 %v1098
      %1690 = vmatprep.subr.bf16.mxu0 %v1107
      %1691 = vmatpush1.bf16.msra.mxu0 %v1106
      %1692 = vmatprep.subr.bf16.mxu0 %v1115
      %1693 = vmatpush1.bf16.msra.mxu0 %v1114
      %1694 = vmatprep.subr.bf16.mxu0 %v1123
      %1695 = vmatpush1.bf16.msra.mxu0 %v1122
      %1696 = vmatprep.subr.bf16.mxu0 %v1131
      %1697 = vmatpush1.bf16.msra.mxu0 %v1130
      %1698 = vmatprep.subr.bf16.mxu0 %v1139
      %1699 = vmatpush1.bf16.msra.mxu0 %v1138
      %1700 = vmatprep.subr.bf16.mxu0 %v1147
      %1701 = vmatpush1.bf16.msra.mxu0 %v1146
      %1702 = vmatprep.subr.bf16.mxu0 %v1155
      %1703 = vmatpush1.bf16.msra.mxu0 %v1154
      %1704 = vmatprep.mubr.bf16.mxu0 %v487
      %1705 = vmatmul.mubr.bf16.gmra.mrb[0].mxu0 %v486
      %v1706 = vpop.f32.mrb[0].mxu0
      %v1707 = vadd.f32 0.0, %v1706
      %v1708 = vpop.f32.mrb[0].mxu0
      %v1709 = vadd.f32 0.0, %v1708
      %v1710 = vpop.f32.mrb[0].mxu0
      %v1711 = vadd.f32 0.0, %v1710
      %v1712 = vpop.f32.mrb[0].mxu0
      %v1713 = vadd.f32 0.0, %v1712
      %1714 = vmatprep.mubr.bf16.mxu0 %v489
      %1715 = vmatmul.mubr.bf16.gmra.mrb[0].mxu0 %v488
      %v1716 = vpop.f32.mrb[0].mxu0
      %v1717 = vadd.f32 0.0, %v1716
      %v1718 = vpop.f32.mrb[0].mxu0
      %v1719 = vadd.f32 0.0, %v1718
      %v1720 = vpop.f32.mrb[0].mxu0
      %v1721 = vadd.f32 0.0, %v1720
      %v1722 = vpop.f32.mrb[0].mxu0
      %v1723 = vadd.f32 0.0, %v1722
      %1724 = vmatprep.mubr.bf16.mxu0 %v491
      %1725 = vmatmul.mubr.bf16.gmra.mrb[0].mxu0 %v490
      %v1726 = vpop.f32.mrb[0].mxu0
      %v1727 = vadd.f32 0.0, %v1726
      %v1728 = vpop.f32.mrb[0].mxu0
      %v1729 = vadd.f32 0.0, %v1728
      %v1730 = vpop.f32.mrb[0].mxu0
      %v1731 = vadd.f32 0.0, %v1730
      %v1732 = vpop.f32.mrb[0].mxu0
      %v1733 = vadd.f32 0.0, %v1732
      %1734 = vmatprep.mubr.bf16.mxu0 %v493
      %1735 = vmatmul.mubr.bf16.gmra.mrb[0].mxu0 %v492
      %v1736 = vpop.f32.mrb[0].mxu0
      %v1737 = vadd.f32 0.0, %v1736
      %v1738 = vpop.f32.mrb[0].mxu0
      %v1739 = vadd.f32 0.0, %v1738
      %v1740 = vpop.f32.mrb[0].mxu0
      %v1741 = vadd.f32 0.0, %v1740
      %v1742 = vpop.f32.mrb[0].mxu0
      %v1743 = vadd.f32 0.0, %v1742
      %1744 = vmatprep.mubr.bf16.mxu0 %v495
      %1745 = vmatmul.mubr.bf16.gmra.mrb[0].mxu0 %v494
      %v1746 = vpop.f32.mrb[0].mxu0
      %v1747 = vadd.f32 0.0, %v1746
      %v1748 = vpop.f32.mrb[0].mxu0
      %v1749 = vadd.f32 0.0, %v1748
      %v1750 = vpop.f32.mrb[0].mxu0
      %v1751 = vadd.f32 0.0, %v1750
      %v1752 = vpop.f32.mrb[0].mxu0
      %v1753 = vadd.f32 0.0, %v1752
      %1754 = vmatprep.mubr.bf16.mxu0 %v497
      %1755 = vmatmul.mubr.bf16.gmra.mrb[0].mxu0 %v496
      %v1756 = vpop.f32.mrb[0].mxu0
      %v1757 = vadd.f32 0.0, %v1756
      %v1758 = vpop.f32.mrb[0].mxu0
      %v1759 = vadd.f32 0.0, %v1758
      %v1760 = vpop.f32.mrb[0].mxu0
      %v1761 = vadd.f32 0.0, %v1760
      %v1762 = vpop.f32.mrb[0].mxu0
      %v1763 = vadd.f32 0.0, %v1762
      %1764 = vmatprep.mubr.bf16.mxu0 %v499
      %1765 = vmatmul.mubr.bf16.gmra.mrb[0].mxu0 %v498
      %v1766 = vpop.f32.mrb[0].mxu0
      %v1767 = vadd.f32 0.0, %v1766
      %v1768 = vpop.f32.mrb[0].mxu0
      %v1769 = vadd.f32 0.0, %v1768
      %v1770 = vpop.f32.mrb[0].mxu0
      %v1771 = vadd.f32 0.0, %v1770
      %v1772 = vpop.f32.mrb[0].mxu0
      %v1773 = vadd.f32 0.0, %v1772
      %1774 = vmatprep.mubr.bf16.mxu0 %v501
      %1775 = vmatmul.mubr.bf16.gmra.mrb[0].mxu0 %v500
      %v1776 = vpop.f32.mrb[0].mxu0
      %v1777 = vadd.f32 0.0, %v1776
      %v1778 = vpop.f32.mrb[0].mxu0
      %v1779 = vadd.f32 0.0, %v1778
      %v1780 = vpop.f32.mrb[0].mxu0
      %v1781 = vadd.f32 0.0, %v1780
      %v1782 = vpop.f32.mrb[0].mxu0
      %v1783 = vadd.f32 0.0, %v1782
      %1784 = vmatprep.mubr.bf16.mxu0 %v503
      %1785 = vmatmul.mubr.bf16.gmra.mrb[0].mxu0 %v502
      %v1786 = vpop.f32.mrb[0].mxu0
      %v1787 = vadd.f32 0.0, %v1786
      %v1788 = vpop.f32.mrb[0].mxu0
      %v1789 = vadd.f32 0.0, %v1788
      %v1790 = vpop.f32.mrb[0].mxu0
      %v1791 = vadd.f32 0.0, %v1790
      %v1792 = vpop.f32.mrb[0].mxu0
      %v1793 = vadd.f32 0.0, %v1792
      %1794 = vmatprep.mubr.bf16.mxu0 %v505
      %1795 = vmatmul.mubr.bf16.gmra.mrb[0].mxu0 %v504
      %v1796 = vpop.f32.mrb[0].mxu0
      %v1797 = vadd.f32 0.0, %v1796
      %v1798 = vpop.f32.mrb[0].mxu0
      %v1799 = vadd.f32 0.0, %v1798
      %v1800 = vpop.f32.mrb[0].mxu0
      %v1801 = vadd.f32 0.0, %v1800
      %v1802 = vpop.f32.mrb[0].mxu0
      %v1803 = vadd.f32 0.0, %v1802
      %1804 = vmatprep.mubr.bf16.mxu0 %v507
      %1805 = vmatmul.mubr.bf16.gmra.mrb[0].mxu0 %v506
      %v1806 = vpop.f32.mrb[0].mxu0
      %v1807 = vadd.f32 0.0, %v1806
      %v1808 = vpop.f32.mrb[0].mxu0
      %v1809 = vadd.f32 0.0, %v1808
      %v1810 = vpop.f32.mrb[0].mxu0
      %v1811 = vadd.f32 0.0, %v1810
      %v1812 = vpop.f32.mrb[0].mxu0
      %v1813 = vadd.f32 0.0, %v1812
      %1814 = vmatprep.mubr.bf16.mxu0 %v509
      %1815 = vmatmul.mubr.bf16.gmra.mrb[0].mxu0 %v508
      %v1816 = vpop.f32.mrb[0].mxu0
      %v1817 = vadd.f32 0.0, %v1816
      %v1818 = vpop.f32.mrb[0].mxu0
      %v1819 = vadd.f32 0.0, %v1818
      %v1820 = vpop.f32.mrb[0].mxu0
      %v1821 = vadd.f32 0.0, %v1820
      %v1822 = vpop.f32.mrb[0].mxu0
      %v1823 = vadd.f32 0.0, %v1822
      %1824 = vmatprep.mubr.bf16.mxu0 %v511
      %1825 = vmatmul.mubr.bf16.gmra.mrb[0].mxu0 %v510
      %v1826 = vpop.f32.mrb[0].mxu0
      %v1827 = vadd.f32 0.0, %v1826
      %v1828 = vpop.f32.mrb[0].mxu0
      %v1829 = vadd.f32 0.0, %v1828
      %v1830 = vpop.f32.mrb[0].mxu0
      %v1831 = vadd.f32 0.0, %v1830
      %v1832 = vpop.f32.mrb[0].mxu0
      %v1833 = vadd.f32 0.0, %v1832
      %1834 = vmatprep.mubr.bf16.mxu0 %v513
      %1835 = vmatmul.mubr.bf16.gmra.mrb[0].mxu0 %v512
      %v1836 = vpop.f32.mrb[0].mxu0
      %v1837 = vadd.f32 0.0, %v1836
      %v1838 = vpop.f32.mrb[0].mxu0
      %v1839 = vadd.f32 0.0, %v1838
      %v1840 = vpop.f32.mrb[0].mxu0
      %v1841 = vadd.f32 0.0, %v1840
      %v1842 = vpop.f32.mrb[0].mxu0
      %v1843 = vadd.f32 0.0, %v1842
      %1844 = vmatprep.mubr.bf16.mxu0 %v515
      %1845 = vmatmul.mubr.bf16.gmra.mrb[0].mxu0 %v514
      %v1846 = vpop.f32.mrb[0].mxu0
      %v1847 = vadd.f32 0.0, %v1846
      %v1848 = vpop.f32.mrb[0].mxu0
      %v1849 = vadd.f32 0.0, %v1848
      %v1850 = vpop.f32.mrb[0].mxu0
      %v1851 = vadd.f32 0.0, %v1850
      %v1852 = vpop.f32.mrb[0].mxu0
      %v1853 = vadd.f32 0.0, %v1852
      %1854 = vmatprep.mubr.bf16.mxu0 %v517
      %1855 = vmatmul.mubr.bf16.gmra.mrb[0].mxu0 %v516
      %v1856 = vpop.f32.mrb[0].mxu0
      %v1857 = vadd.f32 0.0, %v1856
      %v1858 = vpop.f32.mrb[0].mxu0
      %v1859 = vadd.f32 0.0, %v1858
      %v1860 = vpop.f32.mrb[0].mxu0
      %v1861 = vadd.f32 0.0, %v1860
      %v1862 = vpop.f32.mrb[0].mxu0
      %v1863 = vadd.f32 0.0, %v1862
      %1864 = vdwg.mxu0
      %1865 = vmatprep.subr.bf16.mxu0 %v1037
      %1866 = vmatpush1.bf16.msra.mxu0 %v1036
      %1867 = vmatprep.subr.bf16.mxu0 %v1045
      %1868 = vmatpush1.bf16.msra.mxu0 %v1044
      %1869 = vmatprep.subr.bf16.mxu0 %v1053
      %1870 = vmatpush1.bf16.msra.mxu0 %v1052
      %1871 = vmatprep.subr.bf16.mxu0 %v1061
      %1872 = vmatpush1.bf16.msra.mxu0 %v1060
      %1873 = vmatprep.subr.bf16.mxu0 %v1069
      %1874 = vmatpush1.bf16.msra.mxu0 %v1068
      %1875 = vmatprep.subr.bf16.mxu0 %v1077
      %1876 = vmatpush1.bf16.msra.mxu0 %v1076
      %1877 = vmatprep.subr.bf16.mxu0 %v1085
      %1878 = vmatpush1.bf16.msra.mxu0 %v1084
      %1879 = vmatprep.subr.bf16.mxu0 %v1093
      %1880 = vmatpush1.bf16.msra.mxu0 %v1092
      %1881 = vmatprep.subr.bf16.mxu0 %v1101
      %1882 = vmatpush1.bf16.msra.mxu0 %v1100
      %1883 = vmatprep.subr.bf16.mxu0 %v1109
      %1884 = vmatpush1.bf16.msra.mxu0 %v1108
      %1885 = vmatprep.subr.bf16.mxu0 %v1117
      %1886 = vmatpush1.bf16.msra.mxu0 %v1116
      %1887 = vmatprep.subr.bf16.mxu0 %v1125
      %1888 = vmatpush1.bf16.msra.mxu0 %v1124
      %1889 = vmatprep.subr.bf16.mxu0 %v1133
      %1890 = vmatpush1.bf16.msra.mxu0 %v1132
      %1891 = vmatprep.subr.bf16.mxu0 %v1141
      %1892 = vmatpush1.bf16.msra.mxu0 %v1140
      %1893 = vmatprep.subr.bf16.mxu0 %v1149
      %1894 = vmatpush1.bf16.msra.mxu0 %v1148
      %1895 = vmatprep.subr.bf16.mxu0 %v1157
      %1896 = vmatpush1.bf16.msra.mxu0 %v1156
      %1897 = vmatprep.mubr.bf16.mxu0 %v487
      %1898 = vmatmul.mubr.bf16.gmra.mrb[0].mxu0 %v486
      %v1899 = vpop.f32.mrb[0].mxu0
      %v1900 = vadd.f32 0.0, %v1899
      %v1901 = vpop.f32.mrb[0].mxu0
      %v1902 = vadd.f32 0.0, %v1901
      %v1903 = vpop.f32.mrb[0].mxu0
      %v1904 = vadd.f32 0.0, %v1903
      %v1905 = vpop.f32.mrb[0].mxu0
      %v1906 = vadd.f32 0.0, %v1905
      %1907 = vmatprep.mubr.bf16.mxu0 %v489
      %1908 = vmatmul.mubr.bf16.gmra.mrb[0].mxu0 %v488
      %v1909 = vpop.f32.mrb[0].mxu0
      %v1910 = vadd.f32 0.0, %v1909
      %v1911 = vpop.f32.mrb[0].mxu0
      %v1912 = vadd.f32 0.0, %v1911
      %v1913 = vpop.f32.mrb[0].mxu0
      %v1914 = vadd.f32 0.0, %v1913
      %v1915 = vpop.f32.mrb[0].mxu0
      %v1916 = vadd.f32 0.0, %v1915
      %1917 = vmatprep.mubr.bf16.mxu0 %v491
      %1918 = vmatmul.mubr.bf16.gmra.mrb[0].mxu0 %v490
      %v1919 = vpop.f32.mrb[0].mxu0
      %v1920 = vadd.f32 0.0, %v1919
      %v1921 = vpop.f32.mrb[0].mxu0
      %v1922 = vadd.f32 0.0, %v1921
      %v1923 = vpop.f32.mrb[0].mxu0
      %v1924 = vadd.f32 0.0, %v1923
      %v1925 = vpop.f32.mrb[0].mxu0
      %v1926 = vadd.f32 0.0, %v1925
      %1927 = vmatprep.mubr.bf16.mxu0 %v493
      %1928 = vmatmul.mubr.bf16.gmra.mrb[0].mxu0 %v492
      %v1929 = vpop.f32.mrb[0].mxu0
      %v1930 = vadd.f32 0.0, %v1929
      %v1931 = vpop.f32.mrb[0].mxu0
      %v1932 = vadd.f32 0.0, %v1931
      %v1933 = vpop.f32.mrb[0].mxu0
      %v1934 = vadd.f32 0.0, %v1933
      %v1935 = vpop.f32.mrb[0].mxu0
      %v1936 = vadd.f32 0.0, %v1935
      %1937 = vmatprep.mubr.bf16.mxu0 %v495
      %1938 = vmatmul.mubr.bf16.gmra.mrb[0].mxu0 %v494
      %v1939 = vpop.f32.mrb[0].mxu0
      %v1940 = vadd.f32 0.0, %v1939
      %v1941 = vpop.f32.mrb[0].mxu0
      %v1942 = vadd.f32 0.0, %v1941
      %v1943 = vpop.f32.mrb[0].mxu0
      %v1944 = vadd.f32 0.0, %v1943
      %v1945 = vpop.f32.mrb[0].mxu0
      %v1946 = vadd.f32 0.0, %v1945
      %1947 = vmatprep.mubr.bf16.mxu0 %v497
      %1948 = vmatmul.mubr.bf16.gmra.mrb[0].mxu0 %v496
      %v1949 = vpop.f32.mrb[0].mxu0
      %v1950 = vadd.f32 0.0, %v1949
      %v1951 = vpop.f32.mrb[0].mxu0
      %v1952 = vadd.f32 0.0, %v1951
      %v1953 = vpop.f32.mrb[0].mxu0
      %v1954 = vadd.f32 0.0, %v1953
      %v1955 = vpop.f32.mrb[0].mxu0
      %v1956 = vadd.f32 0.0, %v1955
      %1957 = vmatprep.mubr.bf16.mxu0 %v499
      %1958 = vmatmul.mubr.bf16.gmra.mrb[0].mxu0 %v498
      %v1959 = vpop.f32.mrb[0].mxu0
      %v1960 = vadd.f32 0.0, %v1959
      %v1961 = vpop.f32.mrb[0].mxu0
      %v1962 = vadd.f32 0.0, %v1961
      %v1963 = vpop.f32.mrb[0].mxu0
      %v1964 = vadd.f32 0.0, %v1963
      %v1965 = vpop.f32.mrb[0].mxu0
      %v1966 = vadd.f32 0.0, %v1965
      %1967 = vmatprep.mubr.bf16.mxu0 %v501
      %1968 = vmatmul.mubr.bf16.gmra.mrb[0].mxu0 %v500
      %v1969 = vpop.f32.mrb[0].mxu0
      %v1970 = vadd.f32 0.0, %v1969
      %v1971 = vpop.f32.mrb[0].mxu0
      %v1972 = vadd.f32 0.0, %v1971
      %v1973 = vpop.f32.mrb[0].mxu0
      %v1974 = vadd.f32 0.0, %v1973
      %v1975 = vpop.f32.mrb[0].mxu0
      %v1976 = vadd.f32 0.0, %v1975
      %1977 = vmatprep.mubr.bf16.mxu0 %v503
      %1978 = vmatmul.mubr.bf16.gmra.mrb[0].mxu0 %v502
      %v1979 = vpop.f32.mrb[0].mxu0
      %v1980 = vadd.f32 0.0, %v1979
      %v1981 = vpop.f32.mrb[0].mxu0
      %v1982 = vadd.f32 0.0, %v1981
      %v1983 = vpop.f32.mrb[0].mxu0
      %v1984 = vadd.f32 0.0, %v1983
      %v1985 = vpop.f32.mrb[0].mxu0
      %v1986 = vadd.f32 0.0, %v1985
      %1987 = vmatprep.mubr.bf16.mxu0 %v505
      %1988 = vmatmul.mubr.bf16.gmra.mrb[0].mxu0 %v504
      %v1989 = vpop.f32.mrb[0].mxu0
      %v1990 = vadd.f32 0.0, %v1989
      %v1991 = vpop.f32.mrb[0].mxu0
      %v1992 = vadd.f32 0.0, %v1991
      %v1993 = vpop.f32.mrb[0].mxu0
      %v1994 = vadd.f32 0.0, %v1993
      %v1995 = vpop.f32.mrb[0].mxu0
      %v1996 = vadd.f32 0.0, %v1995
      %1997 = vmatprep.mubr.bf16.mxu0 %v507
      %1998 = vmatmul.mubr.bf16.gmra.mrb[0].mxu0 %v506
      %v1999 = vpop.f32.mrb[0].mxu0
      %v2000 = vadd.f32 0.0, %v1999
      %v2001 = vpop.f32.mrb[0].mxu0
      %v2002 = vadd.f32 0.0, %v2001
      %v2003 = vpop.f32.mrb[0].mxu0
      %v2004 = vadd.f32 0.0, %v2003
      %v2005 = vpop.f32.mrb[0].mxu0
      %v2006 = vadd.f32 0.0, %v2005
      %2007 = vmatprep.mubr.bf16.mxu0 %v509
      %2008 = vmatmul.mubr.bf16.gmra.mrb[0].mxu0 %v508
      %v2009 = vpop.f32.mrb[0].mxu0
      %v2010 = vadd.f32 0.0, %v2009
      %v2011 = vpop.f32.mrb[0].mxu0
      %v2012 = vadd.f32 0.0, %v2011
      %v2013 = vpop.f32.mrb[0].mxu0
      %v2014 = vadd.f32 0.0, %v2013
      %v2015 = vpop.f32.mrb[0].mxu0
      %v2016 = vadd.f32 0.0, %v2015
      %2017 = vmatprep.mubr.bf16.mxu0 %v511
      %2018 = vmatmul.mubr.bf16.gmra.mrb[0].mxu0 %v510
      %v2019 = vpop.f32.mrb[0].mxu0
      %v2020 = vadd.f32 0.0, %v2019
      %v2021 = vpop.f32.mrb[0].mxu0
      %v2022 = vadd.f32 0.0, %v2021
      %v2023 = vpop.f32.mrb[0].mxu0
      %v2024 = vadd.f32 0.0, %v2023
      %v2025 = vpop.f32.mrb[0].mxu0
      %v2026 = vadd.f32 0.0, %v2025
      %2027 = vmatprep.mubr.bf16.mxu0 %v513
      %2028 = vmatmul.mubr.bf16.gmra.mrb[0].mxu0 %v512
      %v2029 = vpop.f32.mrb[0].mxu0
      %v2030 = vadd.f32 0.0, %v2029
      %v2031 = vpop.f32.mrb[0].mxu0
      %v2032 = vadd.f32 0.0, %v2031
      %v2033 = vpop.f32.mrb[0].mxu0
      %v2034 = vadd.f32 0.0, %v2033
      %v2035 = vpop.f32.mrb[0].mxu0
      %v2036 = vadd.f32 0.0, %v2035
      %2037 = vmatprep.mubr.bf16.mxu0 %v515
      %2038 = vmatmul.mubr.bf16.gmra.mrb[0].mxu0 %v514
      %v2039 = vpop.f32.mrb[0].mxu0
      %v2040 = vadd.f32 0.0, %v2039
      %v2041 = vpop.f32.mrb[0].mxu0
      %v2042 = vadd.f32 0.0, %v2041
      %v2043 = vpop.f32.mrb[0].mxu0
      %v2044 = vadd.f32 0.0, %v2043
      %v2045 = vpop.f32.mrb[0].mxu0
      %v2046 = vadd.f32 0.0, %v2045
      %2047 = vmatprep.mubr.bf16.mxu0 %v517
      %2048 = vmatmul.mubr.bf16.gmra.mrb[0].mxu0 %v516
      %v2049 = vpop.f32.mrb[0].mxu0
      %v2050 = vadd.f32 0.0, %v2049
      %v2051 = vpop.f32.mrb[0].mxu0
      %v2052 = vadd.f32 0.0, %v2051
      %v2053 = vpop.f32.mrb[0].mxu0
      %v2054 = vadd.f32 0.0, %v2053
      %v2055 = vpop.f32.mrb[0].mxu0
      %v2056 = vadd.f32 0.0, %v2055
      %2057 = vdwg.mxu0
      %2058 = vst [vmem:[%s204] sm:$0xff] %v1321
      %2059 = vst [vmem:[%s204 + $0x8] sm:$0xff] %v1323
      %2060 = vst [vmem:[%s204 + $0x10] sm:$0xff] %v1514
      %2061 = vst [vmem:[%s204 + $0x18] sm:$0xff] %v1516
      %2062 = vst [vmem:[%s204 + $0x20] sm:$0xff] %v1707
      %2063 = vst [vmem:[%s204 + $0x28] sm:$0xff] %v1709
      %2064 = vst [vmem:[%s204 + $0x30] sm:$0xff] %v1900
      %2065 = vst [vmem:[%s204 + $0x38] sm:$0xff] %v1902
      %2066 = vst [vmem:[%s204 + $0x40] sm:$0xff] %v1325
      %2067 = vst [vmem:[%s204 + $0x48] sm:$0xff] %v1327
      %2068 = vst [vmem:[%s204 + $0x50] sm:$0xff] %v1518
      %2069 = vst [vmem:[%s204 + $0x58] sm:$0xff] %v1520
      %2070 = vst [vmem:[%s204 + $0x60] sm:$0xff] %v1711
      %2071 = vst [vmem:[%s204 + $0x68] sm:$0xff] %v1713
      %2072 = vst [vmem:[%s204 + $0x70] sm:$0xff] %v1904
      %2073 = vst [vmem:[%s204 + $0x78] sm:$0xff] %v1906
      %2074 = vst [vmem:[%s204 + $0x80] sm:$0xff] %v1331
      %2075 = vst [vmem:[%s204 + $0x88] sm:$0xff] %v1333
      %2076 = vst [vmem:[%s204 + $0x90] sm:$0xff] %v1524
      %2077 = vst [vmem:[%s204 + $0x98] sm:$0xff] %v1526
      %2078 = vst [vmem:[%s204 + $0xa0] sm:$0xff] %v1717
      %2079 = vst [vmem:[%s204 + $0xa8] sm:$0xff] %v1719
      %2080 = vst [vmem:[%s204 + $0xb0] sm:$0xff] %v1910
      %2081 = vst [vmem:[%s204 + $0xb8] sm:$0xff] %v1912
      %2082 = vst [vmem:[%s204 + $0xc0] sm:$0xff] %v1335
      %2083 = vst [vmem:[%s204 + $0xc8] sm:$0xff] %v1337
      %2084 = vst [vmem:[%s204 + $0xd0] sm:$0xff] %v1528
      %2085 = vst [vmem:[%s204 + $0xd8] sm:$0xff] %v1530
      %2086 = vst [vmem:[%s204 + $0xe0] sm:$0xff] %v1721
      %2087 = vst [vmem:[%s204 + $0xe8] sm:$0xff] %v1723
      %2088 = vst [vmem:[%s204 + $0xf0] sm:$0xff] %v1914
      %2089 = vst [vmem:[%s204 + $0xf8] sm:$0xff] %v1916
      %2090 = vst [vmem:[%s204 + $0x100] sm:$0xff] %v1341
      %2091 = vst [vmem:[%s204 + $0x108] sm:$0xff] %v1343
      %2092 = vst [vmem:[%s204 + $0x110] sm:$0xff] %v1534
      %2093 = vst [vmem:[%s204 + $0x118] sm:$0xff] %v1536
      %2094 = vst [vmem:[%s204 + $0x120] sm:$0xff] %v1727
      %2095 = vst [vmem:[%s204 + $0x128] sm:$0xff] %v1729
      %2096 = vst [vmem:[%s204 + $0x130] sm:$0xff] %v1920
      %2097 = vst [vmem:[%s204 + $0x138] sm:$0xff] %v1922
      %2098 = vst [vmem:[%s204 + $0x140] sm:$0xff] %v1345
      %2099 = vst [vmem:[%s204 + $0x148] sm:$0xff] %v1347
      %2100 = vst [vmem:[%s204 + $0x150] sm:$0xff] %v1538
      %2101 = vst [vmem:[%s204 + $0x158] sm:$0xff] %v1540
      %2102 = vst [vmem:[%s204 + $0x160] sm:$0xff] %v1731
      %2103 = vst [vmem:[%s204 + $0x168] sm:$0xff] %v1733
      %2104 = vst [vmem:[%s204 + $0x170] sm:$0xff] %v1924
      %2105 = vst [vmem:[%s204 + $0x178] sm:$0xff] %v1926
      %2106 = vst [vmem:[%s204 + $0x180] sm:$0xff] %v1351
      %2107 = vst [vmem:[%s204 + $0x188] sm:$0xff] %v1353
      %2108 = vst [vmem:[%s204 + $0x190] sm:$0xff] %v1544
      %2109 = vst [vmem:[%s204 + $0x198] sm:$0xff] %v1546
      %2110 = vst [vmem:[%s204 + $0x1a0] sm:$0xff] %v1737
      %2111 = vst [vmem:[%s204 + $0x1a8] sm:$0xff] %v1739
      %2112 = vst [vmem:[%s204 + $0x1b0] sm:$0xff] %v1930
      %2113 = vst [vmem:[%s204 + $0x1b8] sm:$0xff] %v1932
      %2114 = vst [vmem:[%s204 + $0x1c0] sm:$0xff] %v1355
      %2115 = vst [vmem:[%s204 + $0x1c8] sm:$0xff] %v1357
      %2116 = vst [vmem:[%s204 + $0x1d0] sm:$0xff] %v1548
      %2117 = vst [vmem:[%s204 + $0x1d8] sm:$0xff] %v1550
      %2118 = vst [vmem:[%s204 + $0x1e0] sm:$0xff] %v1741
      %2119 = vst [vmem:[%s204 + $0x1e8] sm:$0xff] %v1743
      %2120 = vst [vmem:[%s204 + $0x1f0] sm:$0xff] %v1934
      %2121 = vst [vmem:[%s204 + $0x1f8] sm:$0xff] %v1936
      %2122 = vst [vmem:[%s204 + $0x200] sm:$0xff] %v1361
      %2123 = vst [vmem:[%s204 + $0x208] sm:$0xff] %v1363
      %2124 = vst [vmem:[%s204 + $0x210] sm:$0xff] %v1554
      %2125 = vst [vmem:[%s204 + $0x218] sm:$0xff] %v1556
      %2126 = vst [vmem:[%s204 + $0x220] sm:$0xff] %v1747
      %2127 = vst [vmem:[%s204 + $0x228] sm:$0xff] %v1749
      %2128 = vst [vmem:[%s204 + $0x230] sm:$0xff] %v1940
      %2129 = vst [vmem:[%s204 + $0x238] sm:$0xff] %v1942
      %2130 = vst [vmem:[%s204 + $0x240] sm:$0xff] %v1365
      %2131 = vst [vmem:[%s204 + $0x248] sm:$0xff] %v1367
      %2132 = vst [vmem:[%s204 + $0x250] sm:$0xff] %v1558
      %2133 = vst [vmem:[%s204 + $0x258] sm:$0xff] %v1560
      %2134 = vst [vmem:[%s204 + $0x260] sm:$0xff] %v1751
      %2135 = vst [vmem:[%s204 + $0x268] sm:$0xff] %v1753
      %2136 = vst [vmem:[%s204 + $0x270] sm:$0xff] %v1944
      %2137 = vst [vmem:[%s204 + $0x278] sm:$0xff] %v1946
      %2138 = vst [vmem:[%s204 + $0x280] sm:$0xff] %v1371
      %2139 = vst [vmem:[%s204 + $0x288] sm:$0xff] %v1373
      %2140 = vst [vmem:[%s204 + $0x290] sm:$0xff] %v1564
      %2141 = vst [vmem:[%s204 + $0x298] sm:$0xff] %v1566
      %2142 = vst [vmem:[%s204 + $0x2a0] sm:$0xff] %v1757
      %2143 = vst [vmem:[%s204 + $0x2a8] sm:$0xff] %v1759
      %2144 = vst [vmem:[%s204 + $0x2b0] sm:$0xff] %v1950
      %2145 = vst [vmem:[%s204 + $0x2b8] sm:$0xff] %v1952
      %2146 = vst [vmem:[%s204 + $0x2c0] sm:$0xff] %v1375
      %2147 = vst [vmem:[%s204 + $0x2c8] sm:$0xff] %v1377
      %2148 = vst [vmem:[%s204 + $0x2d0] sm:$0xff] %v1568
      %2149 = vst [vmem:[%s204 + $0x2d8] sm:$0xff] %v1570
      %2150 = vst [vmem:[%s204 + $0x2e0] sm:$0xff] %v1761
      %2151 = vst [vmem:[%s204 + $0x2e8] sm:$0xff] %v1763
      %2152 = vst [vmem:[%s204 + $0x2f0] sm:$0xff] %v1954
      %2153 = vst [vmem:[%s204 + $0x2f8] sm:$0xff] %v1956
      %2154 = vst [vmem:[%s204 + $0x300] sm:$0xff] %v1381
      %2155 = vst [vmem:[%s204 + $0x308] sm:$0xff] %v1383
      %2156 = vst [vmem:[%s204 + $0x310] sm:$0xff] %v1574
      %2157 = vst [vmem:[%s204 + $0x318] sm:$0xff] %v1576
      %2158 = vst [vmem:[%s204 + $0x320] sm:$0xff] %v1767
      %2159 = vst [vmem:[%s204 + $0x328] sm:$0xff] %v1769
      %2160 = vst [vmem:[%s204 + $0x330] sm:$0xff] %v1960
      %2161 = vst [vmem:[%s204 + $0x338] sm:$0xff] %v1962
      %2162 = vst [vmem:[%s204 + $0x340] sm:$0xff] %v1385
      %2163 = vst [vmem:[%s204 + $0x348] sm:$0xff] %v1387
      %2164 = vst [vmem:[%s204 + $0x350] sm:$0xff] %v1578
      %2165 = vst [vmem:[%s204 + $0x358] sm:$0xff] %v1580
      %2166 = vst [vmem:[%s204 + $0x360] sm:$0xff] %v1771
      %2167 = vst [vmem:[%s204 + $0x368] sm:$0xff] %v1773
      %2168 = vst [vmem:[%s204 + $0x370] sm:$0xff] %v1964
      %2169 = vst [vmem:[%s204 + $0x378] sm:$0xff] %v1966
      %2170 = vst [vmem:[%s204 + $0x380] sm:$0xff] %v1391
      %2171 = vst [vmem:[%s204 + $0x388] sm:$0xff] %v1393
      %2172 = vst [vmem:[%s204 + $0x390] sm:$0xff] %v1584
      %2173 = vst [vmem:[%s204 + $0x398] sm:$0xff] %v1586
      %2174 = vst [vmem:[%s204 + $0x3a0] sm:$0xff] %v1777
      %2175 = vst [vmem:[%s204 + $0x3a8] sm:$0xff] %v1779
      %2176 = vst [vmem:[%s204 + $0x3b0] sm:$0xff] %v1970
      %2177 = vst [vmem:[%s204 + $0x3b8] sm:$0xff] %v1972
      %2178 = vst [vmem:[%s204 + $0x3c0] sm:$0xff] %v1395
      %2179 = vst [vmem:[%s204 + $0x3c8] sm:$0xff] %v1397
      %2180 = vst [vmem:[%s204 + $0x3d0] sm:$0xff] %v1588
      %2181 = vst [vmem:[%s204 + $0x3d8] sm:$0xff] %v1590
      %2182 = vst [vmem:[%s204 + $0x3e0] sm:$0xff] %v1781
      %2183 = vst [vmem:[%s204 + $0x3e8] sm:$0xff] %v1783
      %2184 = vst [vmem:[%s204 + $0x3f0] sm:$0xff] %v1974
      %2185 = vst [vmem:[%s204 + $0x3f8] sm:$0xff] %v1976
      %2186 = vst [vmem:[%s204 + $0x400] sm:$0xff] %v1401
      %2187 = vst [vmem:[%s204 + $0x408] sm:$0xff] %v1403
      %2188 = vst [vmem:[%s204 + $0x410] sm:$0xff] %v1594
      %2189 = vst [vmem:[%s204 + $0x418] sm:$0xff] %v1596
      %2190 = vst [vmem:[%s204 + $0x420] sm:$0xff] %v1787
      %2191 = vst [vmem:[%s204 + $0x428] sm:$0xff] %v1789
      %2192 = vst [vmem:[%s204 + $0x430] sm:$0xff] %v1980
      %2193 = vst [vmem:[%s204 + $0x438] sm:$0xff] %v1982
      %2194 = vst [vmem:[%s204 + $0x440] sm:$0xff] %v1405
      %2195 = vst [vmem:[%s204 + $0x448] sm:$0xff] %v1407
      %2196 = vst [vmem:[%s204 + $0x450] sm:$0xff] %v1598
      %2197 = vst [vmem:[%s204 + $0x458] sm:$0xff] %v1600
      %2198 = vst [vmem:[%s204 + $0x460] sm:$0xff] %v1791
      %2199 = vst [vmem:[%s204 + $0x468] sm:$0xff] %v1793
      %2200 = vst [vmem:[%s204 + $0x470] sm:$0xff] %v1984
      %2201 = vst [vmem:[%s204 + $0x478] sm:$0xff] %v1986
      %2202 = vst [vmem:[%s204 + $0x480] sm:$0xff] %v1411
      %2203 = vst [vmem:[%s204 + $0x488] sm:$0xff] %v1413
      %2204 = vst [vmem:[%s204 + $0x490] sm:$0xff] %v1604
      %2205 = vst [vmem:[%s204 + $0x498] sm:$0xff] %v1606
      %2206 = vst [vmem:[%s204 + $0x4a0] sm:$0xff] %v1797
      %2207 = vst [vmem:[%s204 + $0x4a8] sm:$0xff] %v1799
      %2208 = vst [vmem:[%s204 + $0x4b0] sm:$0xff] %v1990
      %2209 = vst [vmem:[%s204 + $0x4b8] sm:$0xff] %v1992
      %2210 = vst [vmem:[%s204 + $0x4c0] sm:$0xff] %v1415
      %2211 = vst [vmem:[%s204 + $0x4c8] sm:$0xff] %v1417
      %2212 = vst [vmem:[%s204 + $0x4d0] sm:$0xff] %v1608
      %2213 = vst [vmem:[%s204 + $0x4d8] sm:$0xff] %v1610
      %2214 = vst [vmem:[%s204 + $0x4e0] sm:$0xff] %v1801
      %2215 = vst [vmem:[%s204 + $0x4e8] sm:$0xff] %v1803
      %2216 = vst [vmem:[%s204 + $0x4f0] sm:$0xff] %v1994
      %2217 = vst [vmem:[%s204 + $0x4f8] sm:$0xff] %v1996
      %2218 = vst [vmem:[%s204 + $0x500] sm:$0xff] %v1421
      %2219 = vst [vmem:[%s204 + $0x508] sm:$0xff] %v1423
      %2220 = vst [vmem:[%s204 + $0x510] sm:$0xff] %v1614
      %2221 = vst [vmem:[%s204 + $0x518] sm:$0xff] %v1616
      %2222 = vst [vmem:[%s204 + $0x520] sm:$0xff] %v1807
      %2223 = vst [vmem:[%s204 + $0x528] sm:$0xff] %v1809
      %2224 = vst [vmem:[%s204 + $0x530] sm:$0xff] %v2000
      %2225 = vst [vmem:[%s204 + $0x538] sm:$0xff] %v2002
      %2226 = vst [vmem:[%s204 + $0x540] sm:$0xff] %v1425
      %2227 = vst [vmem:[%s204 + $0x548] sm:$0xff] %v1427
      %2228 = vst [vmem:[%s204 + $0x550] sm:$0xff] %v1618
      %2229 = vst [vmem:[%s204 + $0x558] sm:$0xff] %v1620
      %2230 = vst [vmem:[%s204 + $0x560] sm:$0xff] %v1811
      %2231 = vst [vmem:[%s204 + $0x568] sm:$0xff] %v1813
      %2232 = vst [vmem:[%s204 + $0x570] sm:$0xff] %v2004
      %2233 = vst [vmem:[%s204 + $0x578] sm:$0xff] %v2006
      %2234 = vst [vmem:[%s204 + $0x580] sm:$0xff] %v1431
      %2235 = vst [vmem:[%s204 + $0x588] sm:$0xff] %v1433
      %2236 = vst [vmem:[%s204 + $0x590] sm:$0xff] %v1624
      %2237 = vst [vmem:[%s204 + $0x598] sm:$0xff] %v1626
      %2238 = vst [vmem:[%s204 + $0x5a0] sm:$0xff] %v1817
      %2239 = vst [vmem:[%s204 + $0x5a8] sm:$0xff] %v1819
      %2240 = vst [vmem:[%s204 + $0x5b0] sm:$0xff] %v2010
      %2241 = vst [vmem:[%s204 + $0x5b8] sm:$0xff] %v2012
      %2242 = vst [vmem:[%s204 + $0x5c0] sm:$0xff] %v1435
      %2243 = vst [vmem:[%s204 + $0x5c8] sm:$0xff] %v1437
      %2244 = vst [vmem:[%s204 + $0x5d0] sm:$0xff] %v1628
      %2245 = vst [vmem:[%s204 + $0x5d8] sm:$0xff] %v1630
      %2246 = vst [vmem:[%s204 + $0x5e0] sm:$0xff] %v1821
      %2247 = vst [vmem:[%s204 + $0x5e8] sm:$0xff] %v1823
      %2248 = vst [vmem:[%s204 + $0x5f0] sm:$0xff] %v2014
      %2249 = vst [vmem:[%s204 + $0x5f8] sm:$0xff] %v2016
      %2250 = vst [vmem:[%s204 + $0x600] sm:$0xff] %v1441
      %2251 = vst [vmem:[%s204 + $0x608] sm:$0xff] %v1443
      %2252 = vst [vmem:[%s204 + $0x610] sm:$0xff] %v1634
      %2253 = vst [vmem:[%s204 + $0x618] sm:$0xff] %v1636
      %2254 = vst [vmem:[%s204 + $0x620] sm:$0xff] %v1827
      %2255 = vst [vmem:[%s204 + $0x628] sm:$0xff] %v1829
      %2256 = vst [vmem:[%s204 + $0x630] sm:$0xff] %v2020
      %2257 = vst [vmem:[%s204 + $0x638] sm:$0xff] %v2022
      %2258 = vst [vmem:[%s204 + $0x640] sm:$0xff] %v1445
      %2259 = vst [vmem:[%s204 + $0x648] sm:$0xff] %v1447
      %2260 = vst [vmem:[%s204 + $0x650] sm:$0xff] %v1638
      %2261 = vst [vmem:[%s204 + $0x658] sm:$0xff] %v1640
      %2262 = vst [vmem:[%s204 + $0x660] sm:$0xff] %v1831
      %2263 = vst [vmem:[%s204 + $0x668] sm:$0xff] %v1833
      %2264 = vst [vmem:[%s204 + $0x670] sm:$0xff] %v2024
      %2265 = vst [vmem:[%s204 + $0x678] sm:$0xff] %v2026
      %2266 = vst [vmem:[%s204 + $0x680] sm:$0xff] %v1451
      %2267 = vst [vmem:[%s204 + $0x688] sm:$0xff] %v1453
      %2268 = vst [vmem:[%s204 + $0x690] sm:$0xff] %v1644
      %2269 = vst [vmem:[%s204 + $0x698] sm:$0xff] %v1646
      %2270 = vst [vmem:[%s204 + $0x6a0] sm:$0xff] %v1837
      %2271 = vst [vmem:[%s204 + $0x6a8] sm:$0xff] %v1839
      %2272 = vst [vmem:[%s204 + $0x6b0] sm:$0xff] %v2030
      %2273 = vst [vmem:[%s204 + $0x6b8] sm:$0xff] %v2032
      %2274 = vst [vmem:[%s204 + $0x6c0] sm:$0xff] %v1455
      %2275 = vst [vmem:[%s204 + $0x6c8] sm:$0xff] %v1457
      %2276 = vst [vmem:[%s204 + $0x6d0] sm:$0xff] %v1648
      %2277 = vst [vmem:[%s204 + $0x6d8] sm:$0xff] %v1650
      %2278 = vst [vmem:[%s204 + $0x6e0] sm:$0xff] %v1841
      %2279 = vst [vmem:[%s204 + $0x6e8] sm:$0xff] %v1843
      %2280 = vst [vmem:[%s204 + $0x6f0] sm:$0xff] %v2034
      %2281 = vst [vmem:[%s204 + $0x6f8] sm:$0xff] %v2036
      %2282 = vst [vmem:[%s204 + $0x700] sm:$0xff] %v1461
      %2283 = vst [vmem:[%s204 + $0x708] sm:$0xff] %v1463
      %2284 = vst [vmem:[%s204 + $0x710] sm:$0xff] %v1654
      %2285 = vst [vmem:[%s204 + $0x718] sm:$0xff] %v1656
      %2286 = vst [vmem:[%s204 + $0x720] sm:$0xff] %v1847
      %2287 = vst [vmem:[%s204 + $0x728] sm:$0xff] %v1849
      %2288 = vst [vmem:[%s204 + $0x730] sm:$0xff] %v2040
      %2289 = vst [vmem:[%s204 + $0x738] sm:$0xff] %v2042
      %2290 = vst [vmem:[%s204 + $0x740] sm:$0xff] %v1465
      %2291 = vst [vmem:[%s204 + $0x748] sm:$0xff] %v1467
      %2292 = vst [vmem:[%s204 + $0x750] sm:$0xff] %v1658
      %2293 = vst [vmem:[%s204 + $0x758] sm:$0xff] %v1660
      %2294 = vst [vmem:[%s204 + $0x760] sm:$0xff] %v1851
      %2295 = vst [vmem:[%s204 + $0x768] sm:$0xff] %v1853
      %2296 = vst [vmem:[%s204 + $0x770] sm:$0xff] %v2044
      %2297 = vst [vmem:[%s204 + $0x778] sm:$0xff] %v2046
      %2298 = vst [vmem:[%s204 + $0x780] sm:$0xff] %v1471
      %2299 = vst [vmem:[%s204 + $0x788] sm:$0xff] %v1473
      %2300 = vst [vmem:[%s204 + $0x790] sm:$0xff] %v1664
      %2301 = vst [vmem:[%s204 + $0x798] sm:$0xff] %v1666
      %2302 = vst [vmem:[%s204 + $0x7a0] sm:$0xff] %v1857
      %2303 = vst [vmem:[%s204 + $0x7a8] sm:$0xff] %v1859
      %2304 = vst [vmem:[%s204 + $0x7b0] sm:$0xff] %v2050
      %2305 = vst [vmem:[%s204 + $0x7b8] sm:$0xff] %v2052
      %2306 = vst [vmem:[%s204 + $0x7c0] sm:$0xff] %v1475
      %2307 = vst [vmem:[%s204 + $0x7c8] sm:$0xff] %v1477
      %2308 = vst [vmem:[%s204 + $0x7d0] sm:$0xff] %v1668
      %2309 = vst [vmem:[%s204 + $0x7d8] sm:$0xff] %v1670
      %2310 = vst [vmem:[%s204 + $0x7e0] sm:$0xff] %v1861
      %2311 = vst [vmem:[%s204 + $0x7e8] sm:$0xff] %v1863
      %2312 = vst [vmem:[%s204 + $0x7f0] sm:$0xff] %v2054
      %2313 = vst [vmem:[%s204 + $0x7f8] sm:$0xff] %v2056
      %s2314 = smul.u32 32, %s15
      %p2315 = scmp.lt.s32.totalorder %s2314, 63
      %s2316 = scalar_select %p2315, %s2314, 63
      %s2317 = smul.addr %s2316, 8
      %s2318 = smul.addr %s2317, 8
      %s2319 = scalar_lea.vmem %s4, %s2318
      // Predicated region
      $region37: #{fused_forward.3} parent=35 // pred_check
        %p2320 = pneg %p122
      $region38: #{fused_forward.3} parent=35 // pred_check_branch
        %2322 = sbr.rel (%p2320) target = $region40
      $region39: #{fused_forward.3} parent=35 // pred_region
        %s2323 = smul.u32 32, %s15
      $region40: #{fused_forward.3} parent=35 // pred_fallthru
        _
    $region36: #{fused_forward.3} parent=5 // pred_fallthru
      _
    %p2324 = scmp.le.s32.totalorder 2, %s10
    // Predicated region
    $region41: #{fused_forward.3} parent=5 // pred_check
      %p2325 = pneg %p2324
    $region42: #{fused_forward.3} parent=5 // pred_check_branch
      %2327 = sbr.rel (%p2325) target = $region44
    $region43: #{fused_forward.3} parent=5 // pred_region
      %s2328 = ssub.s32 %s10, 2
      // Predicated region
      $region45: #{fused_forward.3} parent=43 // pred_check
        %p2329 = pneg %p128
      $region46: #{fused_forward.3} parent=43 // pred_check_branch
        %2331 = sbr.rel (%p2329) target = $region48
      $region47: #{fused_forward.3} parent=43 // pred_region
        %s2332 = smul.u32 32, %s16
        %p2333 = scmp.lt.s32.totalorder %s2332, 63
        %s2334 = scalar_select %p2333, %s2332, 63
        %s2335 = smul.addr %s2334, 8
        %s2336 = smul.addr %s2335, 8
        %s2337 = scalar_lea.vmem %s4, %s2336
      $region48: #{fused_forward.3} parent=43 // pred_fallthru
        _
    $region44: #{fused_forward.3} parent=5 // pred_fallthru
      _
  $region6: #{fused_forward.3} parent=0 // loop_footer
    %s14 = sadd.s32 1, %s10
  $region7: #{fused_forward.3} parent=0 // loop_footer_branch
    %9 = sbr.rel target = $region3
  $region8: #{fused_forward.3} parent=0 // loop_exit
    _

// kernel: fused_forward.2
$region0: #{fused_forward.2}
  #allocation0 [shape = 'u32[]', space=smem, size = 0x4, offset = 0x4, fixed_abs, tag = 'smem constant byte address 0x4 - core index']
  #allocation1 [shape = 'u32[144,128]{1,0:T(1,128)}', space=vmem, size = 0x12000, scoped, tag = 'internal scratch']
  %s0 = inlined_call_operand.vmem [shape: bf16[3,608,256], index: 0, kind: input, shape index: {}]
  %s1 = inlined_call_operand.vmem [shape: bf16[3,3,256,256], index: 1, kind: input, shape index: {}]
  %s2 = inlined_call_operand.vmem [shape: f32[512,1], index: 2, kind: input, shape index: {}]
  %s3 = inlined_call_operand.vmem [shape: f32[512,256], index: 3, kind: output, shape index: {0}]
  %s4 = inlined_call_operand.vmem [shape: f32[16,256], index: 4, kind: output, shape index: {1}]
  %5 = xla_tuple %s3, %s4
  %s6 = sld [smem:[#allocation0]]
  $region53: #{fused_forward.2} parent=0
    _
  %s8 = ssub.s32 1, %s6
  %s9 = scalar_select 0, %s8, %s6
  loop: start=0, step=1, limit=4
  $region2: #{fused_forward.2} parent=0 // loop_pre_header
    _
  $region3: #{fused_forward.2} parent=0 // loop_header
    %s11 = sphi 0, %s15
    %p12 = scmp.ge.s32.totalorder %s11, 4
    %s19 = sphi 0, %s19
    %s21 = sphi 0, %s19
    %s22 = sphi 0, %s21
    %s36 = sphi 0, %s22
    %s40 = sphi 0, %s40
    %s42 = sphi 0, %s40
    %s43 = sphi 0, %s42
    %s57 = sphi 0, %s43
    %s63 = sphi 0, %s65
    %s66 = sphi 0, %s63
    %s67 = sphi 0, %s66
    %s83 = sphi 0, %s67
    %s89 = sphi 0, %s91
    %s92 = sphi 0, %s89
    %s93 = sphi 0, %s92
    %s109 = sphi 0, %s93
    %s115 = sphi 0, %s117
    %s118 = sphi 0, %s115
    %s119 = sphi 0, %s118
    %s135 = sphi 0, %s119
  $region4: #{fused_forward.2} parent=0 // loop_header_branch
    %14 = sbr.rel (%p12) target = $region8
  $region5: #{fused_forward.2} parent=0 // loop_body
    %s16 = ssub.s32 %s11, 1
    %s17 = ssub.s32 %s11, 2
    %s18 = sadd.s32 %s11, 1
    %s20 = sadd.s32 %s19, 1
    %p23 = scmp.eq.s32.totalorder %s11, 1
    %p24 = scmp.ne.s32.totalorder %s19, %s21
    %p25 = scmp.eq.s32.totalorder %s11, 0
    %p26 = por %p24, %p25
    %p27 = scmp.ne.s32.totalorder %s19, %s21
    %p28 = scmp.eq.s32.totalorder %s16, 1
    %p29 = por %p27, %p28
    %p30 = scmp.ne.s32.totalorder %s21, %s22
    %p31 = scmp.eq.s32.totalorder %s16, 0
    %p32 = por %p30, %p31
    %p33 = scmp.ne.s32.totalorder %s21, %s22
    %p34 = scmp.eq.s32.totalorder %s17, 1
    %p35 = por %p33, %p34
    %p37 = scmp.ne.s32.totalorder %s22, %s36
    %p38 = scmp.eq.s32.totalorder %s17, 0
    %p39 = por %p37, %p38
    %s41 = sadd.s32 %s40, 1
    %p44 = scmp.eq.s32.totalorder %s11, 1
    %p45 = scmp.ne.s32.totalorder %s40, %s42
    %p46 = scmp.eq.s32.totalorder %s11, 0
    %p47 = por %p45, %p46
    %p48 = scmp.ne.s32.totalorder %s40, %s42
    %p49 = scmp.eq.s32.totalorder %s16, 1
    %p50 = por %p48, %p49
    %p51 = scmp.ne.s32.totalorder %s42, %s43
    %p52 = scmp.eq.s32.totalorder %s16, 0
    %p53 = por %p51, %p52
    %p54 = scmp.ne.s32.totalorder %s42, %s43
    %p55 = scmp.eq.s32.totalorder %s17, 1
    %p56 = por %p54, %p55
    %p58 = scmp.ne.s32.totalorder %s43, %s57
    %p59 = scmp.eq.s32.totalorder %s17, 0
    %p60 = por %p58, %p59
    %s61 = ssub.s32 %s11, %s18
    %p62 = scmp.eq.s32.totalorder %s61, 0
    %s64 = sadd.s32 %s63, 1
    %s65 = scalar_select %p62, %s63, %s64
    %p68 = pneg %p62
    %p69 = scmp.eq.s32.totalorder %s11, 1
    %p70 = por %p68, %p69
    %p71 = scmp.ne.s32.totalorder %s63, %s66
    %p72 = scmp.eq.s32.totalorder %s11, 0
    %p73 = por %p71, %p72
    %p74 = scmp.ne.s32.totalorder %s63, %s66
    %p75 = scmp.eq.s32.totalorder %s16, 1
    %p76 = por %p74, %p75
    %p77 = scmp.ne.s32.totalorder %s66, %s67
    %p78 = scmp.eq.s32.totalorder %s16, 0
    %p79 = por %p77, %p78
    %p80 = scmp.ne.s32.totalorder %s66, %s67
    %p81 = scmp.eq.s32.totalorder %s17, 1
    %p82 = por %p80, %p81
    %p84 = scmp.ne.s32.totalorder %s67, %s83
    %p85 = scmp.eq.s32.totalorder %s17, 0
    %p86 = por %p84, %p85
    %s87 = ssub.s32 %s11, %s18
    %p88 = scmp.eq.s32.totalorder %s87, 0
    %s90 = sadd.s32 %s89, 1
    %s91 = scalar_select %p88, %s89, %s90
    %p94 = pneg %p88
    %p95 = scmp.eq.s32.totalorder %s11, 1
    %p96 = por %p94, %p95
    %p97 = scmp.ne.s32.totalorder %s89, %s92
    %p98 = scmp.eq.s32.totalorder %s11, 0
    %p99 = por %p97, %p98
    %p100 = scmp.ne.s32.totalorder %s89, %s92
    %p101 = scmp.eq.s32.totalorder %s16, 1
    %p102 = por %p100, %p101
    %p103 = scmp.ne.s32.totalorder %s92, %s93
    %p104 = scmp.eq.s32.totalorder %s16, 0
    %p105 = por %p103, %p104
    %p106 = scmp.ne.s32.totalorder %s92, %s93
    %p107 = scmp.eq.s32.totalorder %s17, 1
    %p108 = por %p106, %p107
    %p110 = scmp.ne.s32.totalorder %s93, %s109
    %p111 = scmp.eq.s32.totalorder %s17, 0
    %p112 = por %p110, %p111
    %s113 = ssub.s32 %s11, %s18
    %p114 = scmp.eq.s32.totalorder %s113, 0
    %s116 = sadd.s32 %s115, 1
    %s117 = scalar_select %p114, %s115, %s116
    %p120 = pneg %p114
    %p121 = scmp.eq.s32.totalorder %s11, 1
    %p122 = por %p120, %p121
    %p123 = scmp.ne.s32.totalorder %s115, %s118
    %p124 = scmp.eq.s32.totalorder %s11, 0
    %p125 = por %p123, %p124
    %p126 = scmp.ne.s32.totalorder %s115, %s118
    %p127 = scmp.eq.s32.totalorder %s16, 1
    %p128 = por %p126, %p127
    %p129 = scmp.ne.s32.totalorder %s118, %s119
    %p130 = scmp.eq.s32.totalorder %s16, 0
    %p131 = por %p129, %p130
    %p132 = scmp.ne.s32.totalorder %s118, %s119
    %p133 = scmp.eq.s32.totalorder %s17, 1
    %p134 = por %p132, %p133
    %p136 = scmp.ne.s32.totalorder %s119, %s135
    %p137 = scmp.eq.s32.totalorder %s17, 0
    %p138 = por %p136, %p137
    %p139 = scmp.le.s32.totalorder 1, %s11
    %p140 = scmp.lt.s32.totalorder %s11, 3
    %p141 = pnand %p139, %p140
    %p142 = pneg %p141
    // Predicated region
    $region9: #{fused_forward.2} parent=5 // pred_check
      _
    $region10: #{fused_forward.2} parent=5 // pred_check_branch
      %144 = sbr.rel (%p141) target = $region12
    $region11: #{fused_forward.2} parent=5 // pred_region
      %s145 = ssub.s32 %s11, 1
      // Predicated region
      $region13: #{fused_forward.2} parent=11 // pred_check
        %p146 = pneg %p32
      $region14: #{fused_forward.2} parent=11 // pred_check_branch
        %148 = sbr.rel (%p146) target = $region16
      $region15: #{fused_forward.2} parent=11 // pred_region
        _
      $region16: #{fused_forward.2} parent=11 // pred_fallthru
        _
      // Predicated region
      $region17: #{fused_forward.2} parent=11 // pred_check
        %p149 = pneg %p53
      $region18: #{fused_forward.2} parent=11 // pred_check_branch
        %151 = sbr.rel (%p149) target = $region20
      $region19: #{fused_forward.2} parent=11 // pred_region
        _
      $region20: #{fused_forward.2} parent=11 // pred_fallthru
        _
    $region12: #{fused_forward.2} parent=5 // pred_fallthru
      _
    %p152 = scmp.lt.s32.totalorder %s11, 2
    // Predicated region
    $region21: #{fused_forward.2} parent=5 // pred_check
      %p153 = pneg %p152
    $region22: #{fused_forward.2} parent=5 // pred_check_branch
      %155 = sbr.rel (%p153) target = $region24
    $region23: #{fused_forward.2} parent=5 // pred_region
      // Predicated region
      $region25: #{fused_forward.2} parent=23 // pred_check
        %p156 = pneg %p73
      $region26: #{fused_forward.2} parent=23 // pred_check_branch
        %158 = sbr.rel (%p156) target = $region28
      $region27: #{fused_forward.2} parent=23 // pred_region
        %s159 = smul.u32 32, %s11
        %p160 = scmp.lt.s32.totalorder %s159, 63
        %s161 = scalar_select %p160, %s159, 63
        %s162 = smul.addr %s161, 8
        %s163 = scalar_lea.vmem %s2, %s162
        %s164 = smul.u32 32, %s11
      $region28: #{fused_forward.2} parent=23 // pred_fallthru
        _
    $region24: #{fused_forward.2} parent=5 // pred_fallthru
      _
    %p165 = scmp.le.s32.totalorder 1, %s11
    %p166 = scmp.lt.s32.totalorder %s11, 3
    %p167 = pnand %p165, %p166
    %p168 = pneg %p167
    // Predicated region
    $region29: #{fused_forward.2} parent=5 // pred_check
      _
    $region30: #{fused_forward.2} parent=5 // pred_check_branch
      %170 = sbr.rel (%p167) target = $region32
    $region31: #{fused_forward.2} parent=5 // pred_region
      %s171 = ssub.s32 %s11, 1
      %p172 = pneg %p32
      %p173 = pneg %p29
      %p174 = pneg %p53
      %p175 = pneg %p50
      %s176 = smul.u32 32, %s16
      %p177 = scmp.lt.s32.totalorder %s176, 63
      %s178 = scalar_select %p177, %s176, 63
      %s179 = smul.addr %s178, 8
      %s180 = scalar_lea.vmem %s2, %s179
      %p181 = pneg %p79
      %p182 = pneg %p76
      %p183 = pneg %p105
      %p184 = pneg %p102
      %s185 = smul.u32 32, %s16
      %p186 = scmp.lt.s32.totalorder %s185, 63
      %s187 = scalar_select %p186, %s185, 63
      %s188 = smul.addr %s187, 2
      %s189 = smul.addr %s188, 8
      %s190 = scalar_lea.vmem %s3, %s189
      %p191 = pneg %p131
      %p192 = pneg %p128
      %p193 = scmp.lt.s32.totalorder %s16, 1
      %s194 = scalar_select %p193, %s16, 1
      %s195 = smul.addr %s194, 2
      %s196 = smul.addr %s195, 8
      %s197 = scalar_lea.vmem %s4, %s196
      %s198 = smul.u32 32, %s16
      %p199 = scmp.lt.s32.totalorder %s198, 63
      %s200 = scalar_select %p199, %s198, 63
      %s201 = smul.addr %s200, 8
      %s202 = scalar_lea.vmem %s2, %s201
      %s203 = smul.u32 32, %s16
      %s204 = smul.u32 32, %s16
      %p205 = scmp.lt.s32.totalorder %s204, 63
      %s206 = scalar_select %p205, %s204, 63
      %s207 = smul.addr %s206, 2
      %s208 = smul.addr %s207, 8
      %s209 = scalar_lea.vmem %s3, %s208
      %s210 = smul.u32 32, %s16
      %p211 = scmp.lt.s32.totalorder %s16, 1
      %s212 = scalar_select %p211, %s16, 1
      %s213 = smul.addr %s212, 2
      %s214 = smul.addr %s213, 8
      %s215 = scalar_lea.vmem %s4, %s214
      %s216 = smul.u32 %s16, 256
      %217 = vst [vmem:[%s209] sm:$0xff] 0.0
      %218 = vst [vmem:[%s209 + $0x8] sm:$0xff] 0.0
      %219 = vst [vmem:[%s209 + $0x10] sm:$0xff] 0.0
      %220 = vst [vmem:[%s209 + $0x18] sm:$0xff] 0.0
      %221 = vst [vmem:[%s209 + $0x20] sm:$0xff] 0.0
      %222 = vst [vmem:[%s209 + $0x28] sm:$0xff] 0.0
      %223 = vst [vmem:[%s209 + $0x30] sm:$0xff] 0.0
      %224 = vst [vmem:[%s209 + $0x38] sm:$0xff] 0.0
      %225 = vst [vmem:[%s209 + $0x40] sm:$0xff] 0.0
      %226 = vst [vmem:[%s209 + $0x48] sm:$0xff] 0.0
      %227 = vst [vmem:[%s209 + $0x50] sm:$0xff] 0.0
      %228 = vst [vmem:[%s209 + $0x58] sm:$0xff] 0.0
      %229 = vst [vmem:[%s209 + $0x60] sm:$0xff] 0.0
      %230 = vst [vmem:[%s209 + $0x68] sm:$0xff] 0.0
      %231 = vst [vmem:[%s209 + $0x70] sm:$0xff] 0.0
      %232 = vst [vmem:[%s209 + $0x78] sm:$0xff] 0.0
      %233 = vst [vmem:[%s209 + $0x80] sm:$0xff] 0.0
      %234 = vst [vmem:[%s209 + $0x88] sm:$0xff] 0.0
      %235 = vst [vmem:[%s209 + $0x90] sm:$0xff] 0.0
      %236 = vst [vmem:[%s209 + $0x98] sm:$0xff] 0.0
      %237 = vst [vmem:[%s209 + $0xa0] sm:$0xff] 0.0
      %238 = vst [vmem:[%s209 + $0xa8] sm:$0xff] 0.0
      %239 = vst [vmem:[%s209 + $0xb0] sm:$0xff] 0.0
      %240 = vst [vmem:[%s209 + $0xb8] sm:$0xff] 0.0
      %241 = vst [vmem:[%s209 + $0xc0] sm:$0xff] 0.0
      %242 = vst [vmem:[%s209 + $0xc8] sm:$0xff] 0.0
      %243 = vst [vmem:[%s209 + $0xd0] sm:$0xff] 0.0
      %244 = vst [vmem:[%s209 + $0xd8] sm:$0xff] 0.0
      %245 = vst [vmem:[%s209 + $0xe0] sm:$0xff] 0.0
      %246 = vst [vmem:[%s209 + $0xe8] sm:$0xff] 0.0
      %247 = vst [vmem:[%s209 + $0xf0] sm:$0xff] 0.0
      %248 = vst [vmem:[%s209 + $0xf8] sm:$0xff] 0.0
      %249 = vst [vmem:[%s209 + $0x100] sm:$0xff] 0.0
      %250 = vst [vmem:[%s209 + $0x108] sm:$0xff] 0.0
      %251 = vst [vmem:[%s209 + $0x110] sm:$0xff] 0.0
      %252 = vst [vmem:[%s209 + $0x118] sm:$0xff] 0.0
      %253 = vst [vmem:[%s209 + $0x120] sm:$0xff] 0.0
      %254 = vst [vmem:[%s209 + $0x128] sm:$0xff] 0.0
      %255 = vst [vmem:[%s209 + $0x130] sm:$0xff] 0.0
      %256 = vst [vmem:[%s209 + $0x138] sm:$0xff] 0.0
      %257 = vst [vmem:[%s209 + $0x140] sm:$0xff] 0.0
      %258 = vst [vmem:[%s209 + $0x148] sm:$0xff] 0.0
      %259 = vst [vmem:[%s209 + $0x150] sm:$0xff] 0.0
      %260 = vst [vmem:[%s209 + $0x158] sm:$0xff] 0.0
      %261 = vst [vmem:[%s209 + $0x160] sm:$0xff] 0.0
      %262 = vst [vmem:[%s209 + $0x168] sm:$0xff] 0.0
      %263 = vst [vmem:[%s209 + $0x170] sm:$0xff] 0.0
      %264 = vst [vmem:[%s209 + $0x178] sm:$0xff] 0.0
      %265 = vst [vmem:[%s209 + $0x180] sm:$0xff] 0.0
      %266 = vst [vmem:[%s209 + $0x188] sm:$0xff] 0.0
      %267 = vst [vmem:[%s209 + $0x190] sm:$0xff] 0.0
      %268 = vst [vmem:[%s209 + $0x198] sm:$0xff] 0.0
      %269 = vst [vmem:[%s209 + $0x1a0] sm:$0xff] 0.0
      %270 = vst [vmem:[%s209 + $0x1a8] sm:$0xff] 0.0
      %271 = vst [vmem:[%s209 + $0x1b0] sm:$0xff] 0.0
      %272 = vst [vmem:[%s209 + $0x1b8] sm:$0xff] 0.0
      %273 = vst [vmem:[%s209 + $0x1c0] sm:$0xff] 0.0
      %274 = vst [vmem:[%s209 + $0x1c8] sm:$0xff] 0.0
      %275 = vst [vmem:[%s209 + $0x1d0] sm:$0xff] 0.0
      %276 = vst [vmem:[%s209 + $0x1d8] sm:$0xff] 0.0
      %277 = vst [vmem:[%s209 + $0x1e0] sm:$0xff] 0.0
      %278 = vst [vmem:[%s209 + $0x1e8] sm:$0xff] 0.0
      %279 = vst [vmem:[%s209 + $0x1f0] sm:$0xff] 0.0
      %280 = vst [vmem:[%s209 + $0x1f8] sm:$0xff] 0.0
      %v281 = vld [vmem:[%s209] sm:$0xff]
      %v282 = vld [vmem:[%s209 + $0x8] sm:$0xff]
      %v283 = vld [vmem:[%s209 + $0x10] sm:$0xff]
      %v284 = vld [vmem:[%s209 + $0x18] sm:$0xff]
      %v285 = vld [vmem:[%s209 + $0x20] sm:$0xff]
      %v286 = vld [vmem:[%s209 + $0x28] sm:$0xff]
      %v287 = vld [vmem:[%s209 + $0x30] sm:$0xff]
      %v288 = vld [vmem:[%s209 + $0x38] sm:$0xff]
      %v289 = vld [vmem:[%s209 + $0x40] sm:$0xff]
      %v290 = vld [vmem:[%s209 + $0x48] sm:$0xff]
      %v291 = vld [vmem:[%s209 + $0x50] sm:$0xff]
      %v292 = vld [vmem:[%s209 + $0x58] sm:$0xff]
      %v293 = vld [vmem:[%s209 + $0x60] sm:$0xff]
      %v294 = vld [vmem:[%s209 + $0x68] sm:$0xff]
      %v295 = vld [vmem:[%s209 + $0x70] sm:$0xff]
      %v296 = vld [vmem:[%s209 + $0x78] sm:$0xff]
      %v297 = vld [vmem:[%s209 + $0x80] sm:$0xff]
      %v298 = vld [vmem:[%s209 + $0x88] sm:$0xff]
      %v299 = vld [vmem:[%s209 + $0x90] sm:$0xff]
      %v300 = vld [vmem:[%s209 + $0x98] sm:$0xff]
      %v301 = vld [vmem:[%s209 + $0xa0] sm:$0xff]
      %v302 = vld [vmem:[%s209 + $0xa8] sm:$0xff]
      %v303 = vld [vmem:[%s209 + $0xb0] sm:$0xff]
      %v304 = vld [vmem:[%s209 + $0xb8] sm:$0xff]
      %v305 = vld [vmem:[%s209 + $0xc0] sm:$0xff]
      %v306 = vld [vmem:[%s209 + $0xc8] sm:$0xff]
      %v307 = vld [vmem:[%s209 + $0xd0] sm:$0xff]
      %v308 = vld [vmem:[%s209 + $0xd8] sm:$0xff]
      %v309 = vld [vmem:[%s209 + $0xe0] sm:$0xff]
      %v310 = vld [vmem:[%s209 + $0xe8] sm:$0xff]
      %v311 = vld [vmem:[%s209 + $0xf0] sm:$0xff]
      %v312 = vld [vmem:[%s209 + $0xf8] sm:$0xff]
      %v313 = vld [vmem:[%s209 + $0x100] sm:$0xff]
      %v314 = vld [vmem:[%s209 + $0x108] sm:$0xff]
      %v315 = vld [vmem:[%s209 + $0x110] sm:$0xff]
      %v316 = vld [vmem:[%s209 + $0x118] sm:$0xff]
      %v317 = vld [vmem:[%s209 + $0x120] sm:$0xff]
      %v318 = vld [vmem:[%s209 + $0x128] sm:$0xff]
      %v319 = vld [vmem:[%s209 + $0x130] sm:$0xff]
      %v320 = vld [vmem:[%s209 + $0x138] sm:$0xff]
      %v321 = vld [vmem:[%s209 + $0x140] sm:$0xff]
      %v322 = vld [vmem:[%s209 + $0x148] sm:$0xff]
      %v323 = vld [vmem:[%s209 + $0x150] sm:$0xff]
      %v324 = vld [vmem:[%s209 + $0x158] sm:$0xff]
      %v325 = vld [vmem:[%s209 + $0x160] sm:$0xff]
      %v326 = vld [vmem:[%s209 + $0x168] sm:$0xff]
      %v327 = vld [vmem:[%s209 + $0x170] sm:$0xff]
      %v328 = vld [vmem:[%s209 + $0x178] sm:$0xff]
      %v329 = vld [vmem:[%s209 + $0x180] sm:$0xff]
      %v330 = vld [vmem:[%s209 + $0x188] sm:$0xff]
      %v331 = vld [vmem:[%s209 + $0x190] sm:$0xff]
      %v332 = vld [vmem:[%s209 + $0x198] sm:$0xff]
      %v333 = vld [vmem:[%s209 + $0x1a0] sm:$0xff]
      %v334 = vld [vmem:[%s209 + $0x1a8] sm:$0xff]
      %v335 = vld [vmem:[%s209 + $0x1b0] sm:$0xff]
      %v336 = vld [vmem:[%s209 + $0x1b8] sm:$0xff]
      %v337 = vld [vmem:[%s209 + $0x1c0] sm:$0xff]
      %v338 = vld [vmem:[%s209 + $0x1c8] sm:$0xff]
      %v339 = vld [vmem:[%s209 + $0x1d0] sm:$0xff]
      %v340 = vld [vmem:[%s209 + $0x1d8] sm:$0xff]
      %v341 = vld [vmem:[%s209 + $0x1e0] sm:$0xff]
      %v342 = vld [vmem:[%s209 + $0x1e8] sm:$0xff]
      %v343 = vld [vmem:[%s209 + $0x1f0] sm:$0xff]
      %v344 = vld [vmem:[%s209 + $0x1f8] sm:$0xff]
      %s345 = sshra.s32 %s216, 3
      %s346 = sand.u32 %s216, 7
      %s347 = smul.u32 %s345, 2
      %s348 = smul.addr %s347, 4
      %s349 = scalar_lea.vmem %s0, %s348
      %v350 = vld [vmem:[%s349] sm:$0xff]
      %v351 = vld [vmem:[%s349 + $0x8] sm:$0xff]
      %v352 = vld [vmem:[%s349 + $0x10] sm:$0xff]
      %v353 = vld [vmem:[%s349 + $0x18] sm:$0xff]
      %v354 = vld [vmem:[%s349 + $0x20] sm:$0xff]
      %v355 = vld [vmem:[%s349 + $0x28] sm:$0xff]
      %v356 = vld [vmem:[%s349 + $0x30] sm:$0xff]
      %v357 = vld [vmem:[%s349 + $0x38] sm:$0xff]
      %v358 = vld [vmem:[%s349 + $0x40] sm:$0xff]
      %v359 = vld [vmem:[%s349 + $0x48] sm:$0xff]
      %v360 = vld [vmem:[%s349 + $0x50] sm:$0xff]
      %v361 = vld [vmem:[%s349 + $0x58] sm:$0xff]
      %v362 = vld [vmem:[%s349 + $0x60] sm:$0xff]
      %v363 = vld [vmem:[%s349 + $0x68] sm:$0xff]
      %v364 = vld [vmem:[%s349 + $0x70] sm:$0xff]
      %v365 = vld [vmem:[%s349 + $0x78] sm:$0xff]
      %v366 = vld [vmem:[%s349 + $0x80] sm:$0xff]
      %v367 = vld [vmem:[%s349 + $0x88] sm:$0xff]
      %v368 = vld [vmem:[%s349 + $0x90] sm:$0xff]
      %v369 = vld [vmem:[%s349 + $0x98] sm:$0xff]
      %v370 = vld [vmem:[%s349 + $0xa0] sm:$0xff]
      %v371 = vld [vmem:[%s349 + $0xa8] sm:$0xff]
      %v372 = vld [vmem:[%s349 + $0xb0] sm:$0xff]
      %v373 = vld [vmem:[%s349 + $0xb8] sm:$0xff]
      %v374 = vld [vmem:[%s349 + $0xc0] sm:$0xff]
      %v375 = vld [vmem:[%s349 + $0xc8] sm:$0xff]
      %v376 = vld [vmem:[%s349 + $0xd0] sm:$0xff]
      %v377 = vld [vmem:[%s349 + $0xd8] sm:$0xff]
      %v378 = vld [vmem:[%s349 + $0xe0] sm:$0xff]
      %v379 = vld [vmem:[%s349 + $0xe8] sm:$0xff]
      %v380 = vld [vmem:[%s349 + $0xf0] sm:$0xff]
      %v381 = vld [vmem:[%s349 + $0xf8] sm:$0xff]
      %v382 = vld [vmem:[%s1] sm:$0xff]
      %v383 = vld [vmem:[%s1 + $0x8] sm:$0xff]
      %v384 = vld [vmem:[%s1 + $0x10] sm:$0xff]
      %v385 = vld [vmem:[%s1 + $0x18] sm:$0xff]
      %v386 = vld [vmem:[%s1 + $0x20] sm:$0xff]
      %v387 = vld [vmem:[%s1 + $0x28] sm:$0xff]
      %v388 = vld [vmem:[%s1 + $0x30] sm:$0xff]
      %v389 = vld [vmem:[%s1 + $0x38] sm:$0xff]
      %v390 = vld [vmem:[%s1 + $0x40] sm:$0xff]
      %v391 = vld [vmem:[%s1 + $0x48] sm:$0xff]
      %v392 = vld [vmem:[%s1 + $0x50] sm:$0xff]
      %v393 = vld [vmem:[%s1 + $0x58] sm:$0xff]
      %v394 = vld [vmem:[%s1 + $0x60] sm:$0xff]
      %v395 = vld [vmem:[%s1 + $0x68] sm:$0xff]
      %v396 = vld [vmem:[%s1 + $0x70] sm:$0xff]
      %v397 = vld [vmem:[%s1 + $0x78] sm:$0xff]
      %v398 = vld [vmem:[%s1 + $0x80] sm:$0xff]
      %v399 = vld [vmem:[%s1 + $0x88] sm:$0xff]
      %v400 = vld [vmem:[%s1 + $0x90] sm:$0xff]
      %v401 = vld [vmem:[%s1 + $0x98] sm:$0xff]
      %v402 = vld [vmem:[%s1 + $0xa0] sm:$0xff]
      %v403 = vld [vmem:[%s1 + $0xa8] sm:$0xff]
      %v404 = vld [vmem:[%s1 + $0xb0] sm:$0xff]
      %v405 = vld [vmem:[%s1 + $0xb8] sm:$0xff]
      %v406 = vld [vmem:[%s1 + $0xc0] sm:$0xff]
      %v407 = vld [vmem:[%s1 + $0xc8] sm:$0xff]
      %v408 = vld [vmem:[%s1 + $0xd0] sm:$0xff]
      %v409 = vld [vmem:[%s1 + $0xd8] sm:$0xff]
      %v410 = vld [vmem:[%s1 + $0xe0] sm:$0xff]
      %v411 = vld [vmem:[%s1 + $0xe8] sm:$0xff]
      %v412 = vld [vmem:[%s1 + $0xf0] sm:$0xff]
      %v413 = vld [vmem:[%s1 + $0xf8] sm:$0xff]
      %v446 = vunpack.c.l.b16 %v350
      %v447 = vunpack.c.h.b16 %v350
      %v448 = vunpack.c.l.b16 %v351
      %v449 = vunpack.c.h.b16 %v351
      %v450 = vunpack.c.l.b16 %v352
      %v451 = vunpack.c.h.b16 %v352
      %v452 = vunpack.c.l.b16 %v353
      %v453 = vunpack.c.h.b16 %v353
      %v454 = vunpack.c.l.b16 %v354
      %v455 = vunpack.c.h.b16 %v354
      %v456 = vunpack.c.l.b16 %v355
      %v457 = vunpack.c.h.b16 %v355
      %v458 = vunpack.c.l.b16 %v356
      %v459 = vunpack.c.h.b16 %v356
      %v460 = vunpack.c.l.b16 %v357
      %v461 = vunpack.c.h.b16 %v357
      %v462 = vunpack.c.l.b16 %v358
      %v463 = vunpack.c.h.b16 %v358
      %v464 = vunpack.c.l.b16 %v359
      %v465 = vunpack.c.h.b16 %v359
      %v466 = vunpack.c.l.b16 %v360
      %v467 = vunpack.c.h.b16 %v360
      %v468 = vunpack.c.l.b16 %v361
      %v469 = vunpack.c.h.b16 %v361
      %v470 = vunpack.c.l.b16 %v362
      %v471 = vunpack.c.h.b16 %v362
      %v472 = vunpack.c.l.b16 %v363
      %v473 = vunpack.c.h.b16 %v363
      %v474 = vunpack.c.l.b16 %v364
      %v475 = vunpack.c.h.b16 %v364
      %v476 = vunpack.c.l.b16 %v365
      %v477 = vunpack.c.h.b16 %v365
      %v478 = vunpack.c.l.b16 %v366
      %v479 = vunpack.c.h.b16 %v366
      %v480 = vunpack.c.l.b16 %v367
      %v481 = vunpack.c.h.b16 %v367
      %v482 = vunpack.c.l.b16 %v368
      %v483 = vunpack.c.h.b16 %v368
      %v484 = vunpack.c.l.b16 %v369
      %v485 = vunpack.c.h.b16 %v369
      %v486 = vunpack.c.l.b16 %v370
      %v487 = vunpack.c.h.b16 %v370
      %v488 = vunpack.c.l.b16 %v371
      %v489 = vunpack.c.h.b16 %v371
      %v490 = vunpack.c.l.b16 %v372
      %v491 = vunpack.c.h.b16 %v372
      %v492 = vunpack.c.l.b16 %v373
      %v493 = vunpack.c.h.b16 %v373
      %v494 = vunpack.c.l.b16 %v374
      %v495 = vunpack.c.h.b16 %v374
      %v496 = vunpack.c.l.b16 %v375
      %v497 = vunpack.c.h.b16 %v375
      %v498 = vunpack.c.l.b16 %v376
      %v499 = vunpack.c.h.b16 %v376
      %v500 = vunpack.c.l.b16 %v377
      %v501 = vunpack.c.h.b16 %v377
      %v502 = vunpack.c.l.b16 %v378
      %v503 = vunpack.c.h.b16 %v378
      %v504 = vunpack.c.l.b16 %v379
      %v505 = vunpack.c.h.b16 %v379
      %v506 = vunpack.c.l.b16 %v380
      %v507 = vunpack.c.h.b16 %v380
      %v508 = vunpack.c.l.b16 %v381
      %v509 = vunpack.c.h.b16 %v381
      %v510 = vpack.c.b16 %v448, %v446
      %v511 = vpack.c.b16 %v449, %v447
      %v512 = vpack.c.b16 %v452, %v450
      %v513 = vpack.c.b16 %v453, %v451
      %v514 = vpack.c.b16 %v456, %v454
      %v515 = vpack.c.b16 %v457, %v455
      %v516 = vpack.c.b16 %v460, %v458
      %v517 = vpack.c.b16 %v461, %v459
      %v518 = vpack.c.b16 %v464, %v462
      %v519 = vpack.c.b16 %v465, %v463
      %v520 = vpack.c.b16 %v468, %v466
      %v521 = vpack.c.b16 %v469, %v467
      %v522 = vpack.c.b16 %v472, %v470
      %v523 = vpack.c.b16 %v473, %v471
      %v524 = vpack.c.b16 %v476, %v474
      %v525 = vpack.c.b16 %v477, %v475
      %v526 = vpack.c.b16 %v480, %v478
      %v527 = vpack.c.b16 %v481, %v479
      %v528 = vpack.c.b16 %v484, %v482
      %v529 = vpack.c.b16 %v485, %v483
      %v530 = vpack.c.b16 %v488, %v486
      %v531 = vpack.c.b16 %v489, %v487
      %v532 = vpack.c.b16 %v492, %v490
      %v533 = vpack.c.b16 %v493, %v491
      %v534 = vpack.c.b16 %v496, %v494
      %v535 = vpack.c.b16 %v497, %v495
      %v536 = vpack.c.b16 %v500, %v498
      %v537 = vpack.c.b16 %v501, %v499
      %v538 = vpack.c.b16 %v504, %v502
      %v539 = vpack.c.b16 %v505, %v503
      %v540 = vpack.c.b16 %v508, %v506
      %v541 = vpack.c.b16 %v509, %v507
      %v606 = vunpack.c.l.b16 %v382
      %v607 = vunpack.c.h.b16 %v382
      %v608 = vunpack.c.l.b16 %v383
      %v609 = vunpack.c.h.b16 %v383
      %v610 = vunpack.c.l.b16 %v384
      %v611 = vunpack.c.h.b16 %v384
      %v612 = vunpack.c.l.b16 %v385
      %v613 = vunpack.c.h.b16 %v385
      %v614 = vunpack.c.l.b16 %v386
      %v615 = vunpack.c.h.b16 %v386
      %v616 = vunpack.c.l.b16 %v387
      %v617 = vunpack.c.h.b16 %v387
      %v618 = vunpack.c.l.b16 %v388
      %v619 = vunpack.c.h.b16 %v388
      %v620 = vunpack.c.l.b16 %v389
      %v621 = vunpack.c.h.b16 %v389
      %v622 = vunpack.c.l.b16 %v390
      %v623 = vunpack.c.h.b16 %v390
      %v624 = vunpack.c.l.b16 %v391
      %v625 = vunpack.c.h.b16 %v391
      %v626 = vunpack.c.l.b16 %v392
      %v627 = vunpack.c.h.b16 %v392
      %v628 = vunpack.c.l.b16 %v393
      %v629 = vunpack.c.h.b16 %v393
      %v630 = vunpack.c.l.b16 %v394
      %v631 = vunpack.c.h.b16 %v394
      %v632 = vunpack.c.l.b16 %v395
      %v633 = vunpack.c.h.b16 %v395
      %v634 = vunpack.c.l.b16 %v396
      %v635 = vunpack.c.h.b16 %v396
      %v636 = vunpack.c.l.b16 %v397
      %v637 = vunpack.c.h.b16 %v397
      %v638 = vunpack.c.l.b16 %v398
      %v639 = vunpack.c.h.b16 %v398
      %v640 = vunpack.c.l.b16 %v399
      %v641 = vunpack.c.h.b16 %v399
      %v642 = vunpack.c.l.b16 %v400
      %v643 = vunpack.c.h.b16 %v400
      %v644 = vunpack.c.l.b16 %v401
      %v645 = vunpack.c.h.b16 %v401
      %v646 = vunpack.c.l.b16 %v402
      %v647 = vunpack.c.h.b16 %v402
      %v648 = vunpack.c.l.b16 %v403
      %v649 = vunpack.c.h.b16 %v403
      %v650 = vunpack.c.l.b16 %v404
      %v651 = vunpack.c.h.b16 %v404
      %v652 = vunpack.c.l.b16 %v405
      %v653 = vunpack.c.h.b16 %v405
      %v654 = vunpack.c.l.b16 %v406
      %v655 = vunpack.c.h.b16 %v406
      %v656 = vunpack.c.l.b16 %v407
      %v657 = vunpack.c.h.b16 %v407
      %v658 = vunpack.c.l.b16 %v408
      %v659 = vunpack.c.h.b16 %v408
      %v660 = vunpack.c.l.b16 %v409
      %v661 = vunpack.c.h.b16 %v409
      %v662 = vunpack.c.l.b16 %v410
      %v663 = vunpack.c.h.b16 %v410
      %v664 = vunpack.c.l.b16 %v411
      %v665 = vunpack.c.h.b16 %v411
      %v666 = vunpack.c.l.b16 %v412
      %v667 = vunpack.c.h.b16 %v412
      %v668 = vunpack.c.l.b16 %v413
      %v669 = vunpack.c.h.b16 %v413
      %v670 = vpack.c.b16 %v608, %v606
      %v671 = vpack.c.b16 %v609, %v607
      %v672 = vpack.c.b16 %v612, %v610
      %v673 = vpack.c.b16 %v613, %v611
      %v674 = vpack.c.b16 %v616, %v614
      %v675 = vpack.c.b16 %v617, %v615
      %v676 = vpack.c.b16 %v620, %v618
      %v677 = vpack.c.b16 %v621, %v619
      %v678 = vpack.c.b16 %v624, %v622
      %v679 = vpack.c.b16 %v625, %v623
      %v680 = vpack.c.b16 %v628, %v626
      %v681 = vpack.c.b16 %v629, %v627
      %v682 = vpack.c.b16 %v632, %v630
      %v683 = vpack.c.b16 %v633, %v631
      %v684 = vpack.c.b16 %v636, %v634
      %v685 = vpack.c.b16 %v637, %v635
      %v686 = vpack.c.b16 %v640, %v638
      %v687 = vpack.c.b16 %v641, %v639
      %v688 = vpack.c.b16 %v644, %v642
      %v689 = vpack.c.b16 %v645, %v643
      %v690 = vpack.c.b16 %v648, %v646
      %v691 = vpack.c.b16 %v649, %v647
      %v692 = vpack.c.b16 %v652, %v650
      %v693 = vpack.c.b16 %v653, %v651
      %v694 = vpack.c.b16 %v656, %v654
      %v695 = vpack.c.b16 %v657, %v655
      %v696 = vpack.c.b16 %v660, %v658
      %v697 = vpack.c.b16 %v661, %v659
      %v698 = vpack.c.b16 %v664, %v662
      %v699 = vpack.c.b16 %v665, %v663
      %v700 = vpack.c.b16 %v668, %v666
      %v701 = vpack.c.b16 %v669, %v667
      %734 = vmatprep.subr.bf16.mxu0 %v671
      %735 = vmatpush1.bf16.msra.mxu0 %v670
      %736 = vmatprep.subr.bf16.mxu0 %v673
      %737 = vmatpush1.bf16.msra.mxu0 %v672
      %738 = vmatprep.subr.bf16.mxu0 %v675
      %739 = vmatpush1.bf16.msra.mxu0 %v674
      %740 = vmatprep.subr.bf16.mxu0 %v677
      %741 = vmatpush1.bf16.msra.mxu0 %v676
      %742 = vmatprep.subr.bf16.mxu0 %v679
      %743 = vmatpush1.bf16.msra.mxu0 %v678
      %744 = vmatprep.subr.bf16.mxu0 %v681
      %745 = vmatpush1.bf16.msra.mxu0 %v680
      %746 = vmatprep.subr.bf16.mxu0 %v683
      %747 = vmatpush1.bf16.msra.mxu0 %v682
      %748 = vmatprep.subr.bf16.mxu0 %v685
      %749 = vmatpush1.bf16.msra.mxu0 %v684
      %750 = vmatprep.subr.bf16.mxu0 %v687
      %751 = vmatpush1.bf16.msra.mxu0 %v686
      %752 = vmatprep.subr.bf16.mxu0 %v689
      %753 = vmatpush1.bf16.msra.mxu0 %v688
      %754 = vmatprep.subr.bf16.mxu0 %v691
      %755 = vmatpush1.bf16.msra.mxu0 %v690
      %756 = vmatprep.subr.bf16.mxu0 %v693
      %757 = vmatpush1.bf16.msra.mxu0 %v692
      %758 = vmatprep.subr.bf16.mxu0 %v695
      %759 = vmatpush1.bf16.msra.mxu0 %v694
      %760 = vmatprep.subr.bf16.mxu0 %v697
      %761 = vmatpush1.bf16.msra.mxu0 %v696
      %762 = vmatprep.subr.bf16.mxu0 %v699
      %763 = vmatpush1.bf16.msra.mxu0 %v698
      %764 = vmatprep.subr.bf16.mxu0 %v701
      %765 = vmatpush1.bf16.msra.mxu0 %v700
      %766 = vmatprep.mubr.bf16.mxu0 %v511
      %767 = vmatmul.mubr.bf16.gmra.mrb[0].mxu0 %v510
      %v768 = vpop.f32.mrb[0].mxu0
      %v769 = vadd.f32 0.0, %v768
      %v770 = vpop.f32.mrb[0].mxu0
      %v771 = vadd.f32 0.0, %v770
      %v772 = vpop.f32.mrb[0].mxu0
      %v773 = vadd.f32 0.0, %v772
      %v774 = vpop.f32.mrb[0].mxu0
      %v775 = vadd.f32 0.0, %v774
      %776 = vmatprep.mubr.bf16.mxu0 %v513
      %777 = vmatmul.mubr.bf16.gmra.mrb[0].mxu0 %v512
      %v778 = vpop.f32.mrb[0].mxu0
      %v779 = vadd.f32 0.0, %v778
      %v780 = vpop.f32.mrb[0].mxu0
      %v781 = vadd.f32 0.0, %v780
      %v782 = vpop.f32.mrb[0].mxu0
      %v783 = vadd.f32 0.0, %v782
      %v784 = vpop.f32.mrb[0].mxu0
      %v785 = vadd.f32 0.0, %v784
      %786 = vmatprep.mubr.bf16.mxu0 %v515
      %787 = vmatmul.mubr.bf16.gmra.mrb[0].mxu0 %v514
      %v788 = vpop.f32.mrb[0].mxu0
      %v789 = vadd.f32 0.0, %v788
      %v790 = vpop.f32.mrb[0].mxu0
      %v791 = vadd.f32 0.0, %v790
      %v792 = vpop.f32.mrb[0].mxu0
      %v793 = vadd.f32 0.0, %v792
      %v794 = vpop.f32.mrb[0].mxu0
      %v795 = vadd.f32 0.0, %v794
      %796 = vmatprep.mubr.bf16.mxu0 %v517
      %797 = vmatmul.mubr.bf16.gmra.mrb[0].mxu0 %v516
      %v798 = vpop.f32.mrb[0].mxu0
      %v799 = vadd.f32 0.0, %v798
      %v800 = vpop.f32.mrb[0].mxu0
      %v801 = vadd.f32 0.0, %v800
      %v802 = vpop.f32.mrb[0].mxu0
      %v803 = vadd.f32 0.0, %v802
      %v804 = vpop.f32.mrb[0].mxu0
      %v805 = vadd.f32 0.0, %v804
      %806 = vmatprep.mubr.bf16.mxu0 %v519
      %807 = vmatmul.mubr.bf16.gmra.mrb[0].mxu0 %v518
      %v808 = vpop.f32.mrb[0].mxu0
      %v809 = vadd.f32 0.0, %v808
      %v810 = vpop.f32.mrb[0].mxu0
      %v811 = vadd.f32 0.0, %v810
      %v812 = vpop.f32.mrb[0].mxu0
      %v813 = vadd.f32 0.0, %v812
      %v814 = vpop.f32.mrb[0].mxu0
      %v815 = vadd.f32 0.0, %v814
      %816 = vmatprep.mubr.bf16.mxu0 %v521
      %817 = vmatmul.mubr.bf16.gmra.mrb[0].mxu0 %v520
      %v818 = vpop.f32.mrb[0].mxu0
      %v819 = vadd.f32 0.0, %v818
      %v820 = vpop.f32.mrb[0].mxu0
      %v821 = vadd.f32 0.0, %v820
      %v822 = vpop.f32.mrb[0].mxu0
      %v823 = vadd.f32 0.0, %v822
      %v824 = vpop.f32.mrb[0].mxu0
      %v825 = vadd.f32 0.0, %v824
      %826 = vmatprep.mubr.bf16.mxu0 %v523
      %827 = vmatmul.mubr.bf16.gmra.mrb[0].mxu0 %v522
      %v828 = vpop.f32.mrb[0].mxu0
      %v829 = vadd.f32 0.0, %v828
      %v830 = vpop.f32.mrb[0].mxu0
      %v831 = vadd.f32 0.0, %v830
      %v832 = vpop.f32.mrb[0].mxu0
      %v833 = vadd.f32 0.0, %v832
      %v834 = vpop.f32.mrb[0].mxu0
      %v835 = vadd.f32 0.0, %v834
      %836 = vmatprep.mubr.bf16.mxu0 %v525
      %837 = vmatmul.mubr.bf16.gmra.mrb[0].mxu0 %v524
      %v838 = vpop.f32.mrb[0].mxu0
      %v839 = vadd.f32 0.0, %v838
      %v840 = vpop.f32.mrb[0].mxu0
      %v841 = vadd.f32 0.0, %v840
      %v842 = vpop.f32.mrb[0].mxu0
      %v843 = vadd.f32 0.0, %v842
      %v844 = vpop.f32.mrb[0].mxu0
      %v845 = vadd.f32 0.0, %v844
      %846 = vmatprep.mubr.bf16.mxu0 %v527
      %847 = vmatmul.mubr.bf16.gmra.mrb[0].mxu0 %v526
      %v848 = vpop.f32.mrb[0].mxu0
      %v849 = vadd.f32 0.0, %v848
      %v850 = vpop.f32.mrb[0].mxu0
      %v851 = vadd.f32 0.0, %v850
      %v852 = vpop.f32.mrb[0].mxu0
      %v853 = vadd.f32 0.0, %v852
      %v854 = vpop.f32.mrb[0].mxu0
      %v855 = vadd.f32 0.0, %v854
      %856 = vmatprep.mubr.bf16.mxu0 %v529
      %857 = vmatmul.mubr.bf16.gmra.mrb[0].mxu0 %v528
      %v858 = vpop.f32.mrb[0].mxu0
      %v859 = vadd.f32 0.0, %v858
      %v860 = vpop.f32.mrb[0].mxu0
      %v861 = vadd.f32 0.0, %v860
      %v862 = vpop.f32.mrb[0].mxu0
      %v863 = vadd.f32 0.0, %v862
      %v864 = vpop.f32.mrb[0].mxu0
      %v865 = vadd.f32 0.0, %v864
      %866 = vmatprep.mubr.bf16.mxu0 %v531
      %867 = vmatmul.mubr.bf16.gmra.mrb[0].mxu0 %v530
      %v868 = vpop.f32.mrb[0].mxu0
      %v869 = vadd.f32 0.0, %v868
      %v870 = vpop.f32.mrb[0].mxu0
      %v871 = vadd.f32 0.0, %v870
      %v872 = vpop.f32.mrb[0].mxu0
      %v873 = vadd.f32 0.0, %v872
      %v874 = vpop.f32.mrb[0].mxu0
      %v875 = vadd.f32 0.0, %v874
      %876 = vmatprep.mubr.bf16.mxu0 %v533
      %877 = vmatmul.mubr.bf16.gmra.mrb[0].mxu0 %v532
      %v878 = vpop.f32.mrb[0].mxu0
      %v879 = vadd.f32 0.0, %v878
      %v880 = vpop.f32.mrb[0].mxu0
      %v881 = vadd.f32 0.0, %v880
      %v882 = vpop.f32.mrb[0].mxu0
      %v883 = vadd.f32 0.0, %v882
      %v884 = vpop.f32.mrb[0].mxu0
      %v885 = vadd.f32 0.0, %v884
      %886 = vmatprep.mubr.bf16.mxu0 %v535
      %887 = vmatmul.mubr.bf16.gmra.mrb[0].mxu0 %v534
      %v888 = vpop.f32.mrb[0].mxu0
      %v889 = vadd.f32 0.0, %v888
      %v890 = vpop.f32.mrb[0].mxu0
      %v891 = vadd.f32 0.0, %v890
      %v892 = vpop.f32.mrb[0].mxu0
      %v893 = vadd.f32 0.0, %v892
      %v894 = vpop.f32.mrb[0].mxu0
      %v895 = vadd.f32 0.0, %v894
      %896 = vmatprep.mubr.bf16.mxu0 %v537
      %897 = vmatmul.mubr.bf16.gmra.mrb[0].mxu0 %v536
      %v898 = vpop.f32.mrb[0].mxu0
      %v899 = vadd.f32 0.0, %v898
      %v900 = vpop.f32.mrb[0].mxu0
      %v901 = vadd.f32 0.0, %v900
      %v902 = vpop.f32.mrb[0].mxu0
      %v903 = vadd.f32 0.0, %v902
      %v904 = vpop.f32.mrb[0].mxu0
      %v905 = vadd.f32 0.0, %v904
      %906 = vmatprep.mubr.bf16.mxu0 %v539
      %907 = vmatmul.mubr.bf16.gmra.mrb[0].mxu0 %v538
      %v908 = vpop.f32.mrb[0].mxu0
      %v909 = vadd.f32 0.0, %v908
      %v910 = vpop.f32.mrb[0].mxu0
      %v911 = vadd.f32 0.0, %v910
      %v912 = vpop.f32.mrb[0].mxu0
      %v913 = vadd.f32 0.0, %v912
      %v914 = vpop.f32.mrb[0].mxu0
      %v915 = vadd.f32 0.0, %v914
      %916 = vmatprep.mubr.bf16.mxu0 %v541
      %917 = vmatmul.mubr.bf16.gmra.mrb[0].mxu0 %v540
      %v918 = vpop.f32.mrb[0].mxu0
      %v919 = vadd.f32 0.0, %v918
      %v920 = vpop.f32.mrb[0].mxu0
      %v921 = vadd.f32 0.0, %v920
      %v922 = vpop.f32.mrb[0].mxu0
      %v923 = vadd.f32 0.0, %v922
      %v924 = vpop.f32.mrb[0].mxu0
      %v925 = vadd.f32 0.0, %v924
      %926 = vdwg.mxu0
      %v927 = vadd.f32 %v281, %v769
      %v928 = vadd.f32 %v282, %v771
      %v929 = vadd.f32 %v283, %v773
      %v930 = vadd.f32 %v284, %v775
      %v931 = vadd.f32 %v285, %v779
      %v932 = vadd.f32 %v286, %v781
      %v933 = vadd.f32 %v287, %v783
      %v934 = vadd.f32 %v288, %v785
      %v935 = vadd.f32 %v289, %v789
      %v936 = vadd.f32 %v290, %v791
      %v937 = vadd.f32 %v291, %v793
      %v938 = vadd.f32 %v292, %v795
      %v939 = vadd.f32 %v293, %v799
      %v940 = vadd.f32 %v294, %v801
      %v941 = vadd.f32 %v295, %v803
      %v942 = vadd.f32 %v296, %v805
      %v943 = vadd.f32 %v297, %v809
      %v944 = vadd.f32 %v298, %v811
      %v945 = vadd.f32 %v299, %v813
      %v946 = vadd.f32 %v300, %v815
      %v947 = vadd.f32 %v301, %v819
      %v948 = vadd.f32 %v302, %v821
      %v949 = vadd.f32 %v303, %v823
      %v950 = vadd.f32 %v304, %v825
      %v951 = vadd.f32 %v305, %v829
      %v952 = vadd.f32 %v306, %v831
      %v953 = vadd.f32 %v307, %v833
      %v954 = vadd.f32 %v308, %v835
      %v955 = vadd.f32 %v309, %v839
      %v956 = vadd.f32 %v310, %v841
      %v957 = vadd.f32 %v311, %v843
      %v958 = vadd.f32 %v312, %v845
      %v959 = vadd.f32 %v313, %v849
      %v960 = vadd.f32 %v314, %v851
      %v961 = vadd.f32 %v315, %v853
      %v962 = vadd.f32 %v316, %v855
      %v963 = vadd.f32 %v317, %v859
      %v964 = vadd.f32 %v318, %v861
      %v965 = vadd.f32 %v319, %v863
      %v966 = vadd.f32 %v320, %v865
      %v967 = vadd.f32 %v321, %v869
      %v968 = vadd.f32 %v322, %v871
      %v969 = vadd.f32 %v323, %v873
      %v970 = vadd.f32 %v324, %v875
      %v971 = vadd.f32 %v325, %v879
      %v972 = vadd.f32 %v326, %v881
      %v973 = vadd.f32 %v327, %v883
      %v974 = vadd.f32 %v328, %v885
      %v975 = vadd.f32 %v329, %v889
      %v976 = vadd.f32 %v330, %v891
      %v977 = vadd.f32 %v331, %v893
      %v978 = vadd.f32 %v332, %v895
      %v979 = vadd.f32 %v333, %v899
      %v980 = vadd.f32 %v334, %v901
      %v981 = vadd.f32 %v335, %v903
      %v982 = vadd.f32 %v336, %v905
      %v983 = vadd.f32 %v337, %v909
      %v984 = vadd.f32 %v338, %v911
      %v985 = vadd.f32 %v339, %v913
      %v986 = vadd.f32 %v340, %v915
      %v987 = vadd.f32 %v341, %v919
      %v988 = vadd.f32 %v342, %v921
      %v989 = vadd.f32 %v343, %v923
      %v990 = vadd.f32 %v344, %v925
      %991 = vst [vmem:[%s209] sm:$0xff] %v927
      %992 = vst [vmem:[%s209 + $0x8] sm:$0xff] %v928
      %993 = vst [vmem:[%s209 + $0x10] sm:$0xff] %v929
      %994 = vst [vmem:[%s209 + $0x18] sm:$0xff] %v930
      %995 = vst [vmem:[%s209 + $0x20] sm:$0xff] %v931
      %996 = vst [vmem:[%s209 + $0x28] sm:$0xff] %v932
      %997 = vst [vmem:[%s209 + $0x30] sm:$0xff] %v933
      %998 = vst [vmem:[%s209 + $0x38] sm:$0xff] %v934
      %999 = vst [vmem:[%s209 + $0x40] sm:$0xff] %v935
      %1000 = vst [vmem:[%s209 + $0x48] sm:$0xff] %v936
      %1001 = vst [vmem:[%s209 + $0x50] sm:$0xff] %v937
      %1002 = vst [vmem:[%s209 + $0x58] sm:$0xff] %v938
      %1003 = vst [vmem:[%s209 + $0x60] sm:$0xff] %v939
      %1004 = vst [vmem:[%s209 + $0x68] sm:$0xff] %v940
      %1005 = vst [vmem:[%s209 + $0x70] sm:$0xff] %v941
      %1006 = vst [vmem:[%s209 + $0x78] sm:$0xff] %v942
      %1007 = vst [vmem:[%s209 + $0x80] sm:$0xff] %v943
      %1008 = vst [vmem:[%s209 + $0x88] sm:$0xff] %v944
      %1009 = vst [vmem:[%s209 + $0x90] sm:$0xff] %v945
      %1010 = vst [vmem:[%s209 + $0x98] sm:$0xff] %v946
      %1011 = vst [vmem:[%s209 + $0xa0] sm:$0xff] %v947
      %1012 = vst [vmem:[%s209 + $0xa8] sm:$0xff] %v948
      %1013 = vst [vmem:[%s209 + $0xb0] sm:$0xff] %v949
      %1014 = vst [vmem:[%s209 + $0xb8] sm:$0xff] %v950
      %1015 = vst [vmem:[%s209 + $0xc0] sm:$0xff] %v951
      %1016 = vst [vmem:[%s209 + $0xc8] sm:$0xff] %v952
      %1017 = vst [vmem:[%s209 + $0xd0] sm:$0xff] %v953
      %1018 = vst [vmem:[%s209 + $0xd8] sm:$0xff] %v954
      %1019 = vst [vmem:[%s209 + $0xe0] sm:$0xff] %v955
      %1020 = vst [vmem:[%s209 + $0xe8] sm:$0xff] %v956
      %1021 = vst [vmem:[%s209 + $0xf0] sm:$0xff] %v957
      %1022 = vst [vmem:[%s209 + $0xf8] sm:$0xff] %v958
      %1023 = vst [vmem:[%s209 + $0x100] sm:$0xff] %v959
      %1024 = vst [vmem:[%s209 + $0x108] sm:$0xff] %v960
      %1025 = vst [vmem:[%s209 + $0x110] sm:$0xff] %v961
      %1026 = vst [vmem:[%s209 + $0x118] sm:$0xff] %v962
      %1027 = vst [vmem:[%s209 + $0x120] sm:$0xff] %v963
      %1028 = vst [vmem:[%s209 + $0x128] sm:$0xff] %v964
      %1029 = vst [vmem:[%s209 + $0x130] sm:$0xff] %v965
      %1030 = vst [vmem:[%s209 + $0x138] sm:$0xff] %v966
      %1031 = vst [vmem:[%s209 + $0x140] sm:$0xff] %v967
      %1032 = vst [vmem:[%s209 + $0x148] sm:$0xff] %v968
      %1033 = vst [vmem:[%s209 + $0x150] sm:$0xff] %v969
      %1034 = vst [vmem:[%s209 + $0x158] sm:$0xff] %v970
      %1035 = vst [vmem:[%s209 + $0x160] sm:$0xff] %v971
      %1036 = vst [vmem:[%s209 + $0x168] sm:$0xff] %v972
      %1037 = vst [vmem:[%s209 + $0x170] sm:$0xff] %v973
      %1038 = vst [vmem:[%s209 + $0x178] sm:$0xff] %v974
      %1039 = vst [vmem:[%s209 + $0x180] sm:$0xff] %v975
      %1040 = vst [vmem:[%s209 + $0x188] sm:$0xff] %v976
      %1041 = vst [vmem:[%s209 + $0x190] sm:$0xff] %v977
      %1042 = vst [vmem:[%s209 + $0x198] sm:$0xff] %v978
      %1043 = vst [vmem:[%s209 + $0x1a0] sm:$0xff] %v979
      %1044 = vst [vmem:[%s209 + $0x1a8] sm:$0xff] %v980
      %1045 = vst [vmem:[%s209 + $0x1b0] sm:$0xff] %v981
      %1046 = vst [vmem:[%s209 + $0x1b8] sm:$0xff] %v982
      %1047 = vst [vmem:[%s209 + $0x1c0] sm:$0xff] %v983
      %1048 = vst [vmem:[%s209 + $0x1c8] sm:$0xff] %v984
      %1049 = vst [vmem:[%s209 + $0x1d0] sm:$0xff] %v985
      %1050 = vst [vmem:[%s209 + $0x1d8] sm:$0xff] %v986
      %1051 = vst [vmem:[%s209 + $0x1e0] sm:$0xff] %v987
      %1052 = vst [vmem:[%s209 + $0x1e8] sm:$0xff] %v988
      %1053 = vst [vmem:[%s209 + $0x1f0] sm:$0xff] %v989
      %1054 = vst [vmem:[%s209 + $0x1f8] sm:$0xff] %v990
      %v1055 = vld [vmem:[%s209] sm:$0xff]
      %v1056 = vld [vmem:[%s209 + $0x8] sm:$0xff]
      %v1057 = vld [vmem:[%s209 + $0x10] sm:$0xff]
      %v1058 = vld [vmem:[%s209 + $0x18] sm:$0xff]
      %v1059 = vld [vmem:[%s209 + $0x20] sm:$0xff]
      %v1060 = vld [vmem:[%s209 + $0x28] sm:$0xff]
      %v1061 = vld [vmem:[%s209 + $0x30] sm:$0xff]
      %v1062 = vld [vmem:[%s209 + $0x38] sm:$0xff]
      %v1063 = vld [vmem:[%s209 + $0x40] sm:$0xff]
      %v1064 = vld [vmem:[%s209 + $0x48] sm:$0xff]
      %v1065 = vld [vmem:[%s209 + $0x50] sm:$0xff]
      %v1066 = vld [vmem:[%s209 + $0x58] sm:$0xff]
      %v1067 = vld [vmem:[%s209 + $0x60] sm:$0xff]
      %v1068 = vld [vmem:[%s209 + $0x68] sm:$0xff]
      %v1069 = vld [vmem:[%s209 + $0x70] sm:$0xff]
      %v1070 = vld [vmem:[%s209 + $0x78] sm:$0xff]
      %v1071 = vld [vmem:[%s209 + $0x80] sm:$0xff]
      %v1072 = vld [vmem:[%s209 + $0x88] sm:$0xff]
      %v1073 = vld [vmem:[%s209 + $0x90] sm:$0xff]
      %v1074 = vld [vmem:[%s209 + $0x98] sm:$0xff]
      %v1075 = vld [vmem:[%s209 + $0xa0] sm:$0xff]
      %v1076 = vld [vmem:[%s209 + $0xa8] sm:$0xff]
      %v1077 = vld [vmem:[%s209 + $0xb0] sm:$0xff]
      %v1078 = vld [vmem:[%s209 + $0xb8] sm:$0xff]
      %v1079 = vld [vmem:[%s209 + $0xc0] sm:$0xff]
      %v1080 = vld [vmem:[%s209 + $0xc8] sm:$0xff]
      %v1081 = vld [vmem:[%s209 + $0xd0] sm:$0xff]
      %v1082 = vld [vmem:[%s209 + $0xd8] sm:$0xff]
      %v1083 = vld [vmem:[%s209 + $0xe0] sm:$0xff]
      %v1084 = vld [vmem:[%s209 + $0xe8] sm:$0xff]
      %v1085 = vld [vmem:[%s209 + $0xf0] sm:$0xff]
      %v1086 = vld [vmem:[%s209 + $0xf8] sm:$0xff]
      %v1087 = vld [vmem:[%s209 + $0x100] sm:$0xff]
      %v1088 = vld [vmem:[%s209 + $0x108] sm:$0xff]
      %v1089 = vld [vmem:[%s209 + $0x110] sm:$0xff]
      %v1090 = vld [vmem:[%s209 + $0x118] sm:$0xff]
      %v1091 = vld [vmem:[%s209 + $0x120] sm:$0xff]
      %v1092 = vld [vmem:[%s209 + $0x128] sm:$0xff]
      %v1093 = vld [vmem:[%s209 + $0x130] sm:$0xff]
      %v1094 = vld [vmem:[%s209 + $0x138] sm:$0xff]
      %v1095 = vld [vmem:[%s209 + $0x140] sm:$0xff]
      %v1096 = vld [vmem:[%s209 + $0x148] sm:$0xff]
      %v1097 = vld [vmem:[%s209 + $0x150] sm:$0xff]
      %v1098 = vld [vmem:[%s209 + $0x158] sm:$0xff]
      %v1099 = vld [vmem:[%s209 + $0x160] sm:$0xff]
      %v1100 = vld [vmem:[%s209 + $0x168] sm:$0xff]
      %v1101 = vld [vmem:[%s209 + $0x170] sm:$0xff]
      %v1102 = vld [vmem:[%s209 + $0x178] sm:$0xff]
      %v1103 = vld [vmem:[%s209 + $0x180] sm:$0xff]
      %v1104 = vld [vmem:[%s209 + $0x188] sm:$0xff]
      %v1105 = vld [vmem:[%s209 + $0x190] sm:$0xff]
      %v1106 = vld [vmem:[%s209 + $0x198] sm:$0xff]
      %v1107 = vld [vmem:[%s209 + $0x1a0] sm:$0xff]
      %v1108 = vld [vmem:[%s209 + $0x1a8] sm:$0xff]
      %v1109 = vld [vmem:[%s209 + $0x1b0] sm:$0xff]
      %v1110 = vld [vmem:[%s209 + $0x1b8] sm:$0xff]
      %v1111 = vld [vmem:[%s209 + $0x1c0] sm:$0xff]
      %v1112 = vld [vmem:[%s209 + $0x1c8] sm:$0xff]
      %v1113 = vld [vmem:[%s209 + $0x1d0] sm:$0xff]
      %v1114 = vld [vmem:[%s209 + $0x1d8] sm:$0xff]
      %v1115 = vld [vmem:[%s209 + $0x1e0] sm:$0xff]
      %v1116 = vld [vmem:[%s209 + $0x1e8] sm:$0xff]
      %v1117 = vld [vmem:[%s209 + $0x1f0] sm:$0xff]
      %v1118 = vld [vmem:[%s209 + $0x1f8] sm:$0xff]
      %s1119 = sadd.s32 %s347, 152
      %s1120 = smul.addr %s1119, 4
      %s1121 = scalar_lea.vmem %s0, %s1120
      %v1122 = vld [vmem:[%s1121] sm:$0xff]
      %v1123 = vld [vmem:[%s1121 + $0x8] sm:$0xff]
      %v1124 = vld [vmem:[%s1121 + $0x10] sm:$0xff]
      %v1125 = vld [vmem:[%s1121 + $0x18] sm:$0xff]
      %v1126 = vld [vmem:[%s1121 + $0x20] sm:$0xff]
      %v1127 = vld [vmem:[%s1121 + $0x28] sm:$0xff]
      %v1128 = vld [vmem:[%s1121 + $0x30] sm:$0xff]
      %v1129 = vld [vmem:[%s1121 + $0x38] sm:$0xff]
      %v1130 = vld [vmem:[%s1121 + $0x40] sm:$0xff]
      %v1131 = vld [vmem:[%s1121 + $0x48] sm:$0xff]
      %v1132 = vld [vmem:[%s1121 + $0x50] sm:$0xff]
      %v1133 = vld [vmem:[%s1121 + $0x58] sm:$0xff]
      %v1134 = vld [vmem:[%s1121 + $0x60] sm:$0xff]
      %v1135 = vld [vmem:[%s1121 + $0x68] sm:$0xff]
      %v1136 = vld [vmem:[%s1121 + $0x70] sm:$0xff]
      %v1137 = vld [vmem:[%s1121 + $0x78] sm:$0xff]
      %v1138 = vld [vmem:[%s1121 + $0x80] sm:$0xff]
      %v1139 = vld [vmem:[%s1121 + $0x88] sm:$0xff]
      %v1140 = vld [vmem:[%s1121 + $0x90] sm:$0xff]
      %v1141 = vld [vmem:[%s1121 + $0x98] sm:$0xff]
      %v1142 = vld [vmem:[%s1121 + $0xa0] sm:$0xff]
      %v1143 = vld [vmem:[%s1121 + $0xa8] sm:$0xff]
      %v1144 = vld [vmem:[%s1121 + $0xb0] sm:$0xff]
      %v1145 = vld [vmem:[%s1121 + $0xb8] sm:$0xff]
      %v1146 = vld [vmem:[%s1121 + $0xc0] sm:$0xff]
      %v1147 = vld [vmem:[%s1121 + $0xc8] sm:$0xff]
      %v1148 = vld [vmem:[%s1121 + $0xd0] sm:$0xff]
      %v1149 = vld [vmem:[%s1121 + $0xd8] sm:$0xff]
      %v1150 = vld [vmem:[%s1121 + $0xe0] sm:$0xff]
      %v1151 = vld [vmem:[%s1121 + $0xe8] sm:$0xff]
      %v1152 = vld [vmem:[%s1121 + $0xf0] sm:$0xff]
      %v1153 = vld [vmem:[%s1121 + $0xf8] sm:$0xff]
      %s1154 = scalar_lea.vmem %s1, 256
      %v1155 = vld [vmem:[%s1154] sm:$0xff]
      %v1156 = vld [vmem:[%s1154 + $0x8] sm:$0xff]
      %v1157 = vld [vmem:[%s1154 + $0x10] sm:$0xff]
      %v1158 = vld [vmem:[%s1154 + $0x18] sm:$0xff]
      %v1159 = vld [vmem:[%s1154 + $0x20] sm:$0xff]
      %v1160 = vld [vmem:[%s1154 + $0x28] sm:$0xff]
      %v1161 = vld [vmem:[%s1154 + $0x30] sm:$0xff]
      %v1162 = vld [vmem:[%s1154 + $0x38] sm:$0xff]
      %v1163 = vld [vmem:[%s1154 + $0x40] sm:$0xff]
      %v1164 = vld [vmem:[%s1154 + $0x48] sm:$0xff]
      %v1165 = vld [vmem:[%s1154 + $0x50] sm:$0xff]
      %v1166 = vld [vmem:[%s1154 + $0x58] sm:$0xff]
      %v1167 = vld [vmem:[%s1154 + $0x60] sm:$0xff]
      %v1168 = vld [vmem:[%s1154 + $0x68] sm:$0xff]
      %v1169 = vld [vmem:[%s1154 + $0x70] sm:$0xff]
      %v1170 = vld [vmem:[%s1154 + $0x78] sm:$0xff]
      %v1171 = vld [vmem:[%s1154 + $0x80] sm:$0xff]
      %v1172 = vld [vmem:[%s1154 + $0x88] sm:$0xff]
      %v1173 = vld [vmem:[%s1154 + $0x90] sm:$0xff]
      %v1174 = vld [vmem:[%s1154 + $0x98] sm:$0xff]
      %v1175 = vld [vmem:[%s1154 + $0xa0] sm:$0xff]
      %v1176 = vld [vmem:[%s1154 + $0xa8] sm:$0xff]
      %v1177 = vld [vmem:[%s1154 + $0xb0] sm:$0xff]
      %v1178 = vld [vmem:[%s1154 + $0xb8] sm:$0xff]
      %v1179 = vld [vmem:[%s1154 + $0xc0] sm:$0xff]
      %v1180 = vld [vmem:[%s1154 + $0xc8] sm:$0xff]
      %v1181 = vld [vmem:[%s1154 + $0xd0] sm:$0xff]
      %v1182 = vld [vmem:[%s1154 + $0xd8] sm:$0xff]
      %v1183 = vld [vmem:[%s1154 + $0xe0] sm:$0xff]
      %v1184 = vld [vmem:[%s1154 + $0xe8] sm:$0xff]
      %v1185 = vld [vmem:[%s1154 + $0xf0] sm:$0xff]
      %v1186 = vld [vmem:[%s1154 + $0xf8] sm:$0xff]
      %v1219 = vunpack.c.l.b16 %v1122
      %v1220 = vunpack.c.h.b16 %v1122
      %v1221 = vunpack.c.l.b16 %v1123
      %v1222 = vunpack.c.h.b16 %v1123
      %v1223 = vunpack.c.l.b16 %v1124
      %v1224 = vunpack.c.h.b16 %v1124
      %v1225 = vunpack.c.l.b16 %v1125
      %v1226 = vunpack.c.h.b16 %v1125
      %v1227 = vunpack.c.l.b16 %v1126
      %v1228 = vunpack.c.h.b16 %v1126
      %v1229 = vunpack.c.l.b16 %v1127
      %v1230 = vunpack.c.h.b16 %v1127
      %v1231 = vunpack.c.l.b16 %v1128
      %v1232 = vunpack.c.h.b16 %v1128
      %v1233 = vunpack.c.l.b16 %v1129
      %v1234 = vunpack.c.h.b16 %v1129
      %v1235 = vunpack.c.l.b16 %v1130
      %v1236 = vunpack.c.h.b16 %v1130
      %v1237 = vunpack.c.l.b16 %v1131
      %v1238 = vunpack.c.h.b16 %v1131
      %v1239 = vunpack.c.l.b16 %v1132
      %v1240 = vunpack.c.h.b16 %v1132
      %v1241 = vunpack.c.l.b16 %v1133
      %v1242 = vunpack.c.h.b16 %v1133
      %v1243 = vunpack.c.l.b16 %v1134
      %v1244 = vunpack.c.h.b16 %v1134
      %v1245 = vunpack.c.l.b16 %v1135
      %v1246 = vunpack.c.h.b16 %v1135
      %v1247 = vunpack.c.l.b16 %v1136
      %v1248 = vunpack.c.h.b16 %v1136
      %v1249 = vunpack.c.l.b16 %v1137
      %v1250 = vunpack.c.h.b16 %v1137
      %v1251 = vunpack.c.l.b16 %v1138
      %v1252 = vunpack.c.h.b16 %v1138
      %v1253 = vunpack.c.l.b16 %v1139
      %v1254 = vunpack.c.h.b16 %v1139
      %v1255 = vunpack.c.l.b16 %v1140
      %v1256 = vunpack.c.h.b16 %v1140
      %v1257 = vunpack.c.l.b16 %v1141
      %v1258 = vunpack.c.h.b16 %v1141
      %v1259 = vunpack.c.l.b16 %v1142
      %v1260 = vunpack.c.h.b16 %v1142
      %v1261 = vunpack.c.l.b16 %v1143
      %v1262 = vunpack.c.h.b16 %v1143
      %v1263 = vunpack.c.l.b16 %v1144
      %v1264 = vunpack.c.h.b16 %v1144
      %v1265 = vunpack.c.l.b16 %v1145
      %v1266 = vunpack.c.h.b16 %v1145
      %v1267 = vunpack.c.l.b16 %v1146
      %v1268 = vunpack.c.h.b16 %v1146
      %v1269 = vunpack.c.l.b16 %v1147
      %v1270 = vunpack.c.h.b16 %v1147
      %v1271 = vunpack.c.l.b16 %v1148
      %v1272 = vunpack.c.h.b16 %v1148
      %v1273 = vunpack.c.l.b16 %v1149
      %v1274 = vunpack.c.h.b16 %v1149
      %v1275 = vunpack.c.l.b16 %v1150
      %v1276 = vunpack.c.h.b16 %v1150
      %v1277 = vunpack.c.l.b16 %v1151
      %v1278 = vunpack.c.h.b16 %v1151
      %v1279 = vunpack.c.l.b16 %v1152
      %v1280 = vunpack.c.h.b16 %v1152
      %v1281 = vunpack.c.l.b16 %v1153
      %v1282 = vunpack.c.h.b16 %v1153
      %v1283 = vpack.c.b16 %v1221, %v1219
      %v1284 = vpack.c.b16 %v1222, %v1220
      %v1285 = vpack.c.b16 %v1225, %v1223
      %v1286 = vpack.c.b16 %v1226, %v1224
      %v1287 = vpack.c.b16 %v1229, %v1227
      %v1288 = vpack.c.b16 %v1230, %v1228
      %v1289 = vpack.c.b16 %v1233, %v1231
      %v1290 = vpack.c.b16 %v1234, %v1232
      %v1291 = vpack.c.b16 %v1237, %v1235
      %v1292 = vpack.c.b16 %v1238, %v1236
      %v1293 = vpack.c.b16 %v1241, %v1239
      %v1294 = vpack.c.b16 %v1242, %v1240
      %v1295 = vpack.c.b16 %v1245, %v1243
      %v1296 = vpack.c.b16 %v1246, %v1244
      %v1297 = vpack.c.b16 %v1249, %v1247
      %v1298 = vpack.c.b16 %v1250, %v1248
      %v1299 = vpack.c.b16 %v1253, %v1251
      %v1300 = vpack.c.b16 %v1254, %v1252
      %v1301 = vpack.c.b16 %v1257, %v1255
      %v1302 = vpack.c.b16 %v1258, %v1256
      %v1303 = vpack.c.b16 %v1261, %v1259
      %v1304 = vpack.c.b16 %v1262, %v1260
      %v1305 = vpack.c.b16 %v1265, %v1263
      %v1306 = vpack.c.b16 %v1266, %v1264
      %v1307 = vpack.c.b16 %v1269, %v1267
      %v1308 = vpack.c.b16 %v1270, %v1268
      %v1309 = vpack.c.b16 %v1273, %v1271
      %v1310 = vpack.c.b16 %v1274, %v1272
      %v1311 = vpack.c.b16 %v1277, %v1275
      %v1312 = vpack.c.b16 %v1278, %v1276
      %v1313 = vpack.c.b16 %v1281, %v1279
      %v1314 = vpack.c.b16 %v1282, %v1280
      %v1379 = vunpack.c.l.b16 %v1155
      %v1380 = vunpack.c.h.b16 %v1155
      %v1381 = vunpack.c.l.b16 %v1156
      %v1382 = vunpack.c.h.b16 %v1156
      %v1383 = vunpack.c.l.b16 %v1157
      %v1384 = vunpack.c.h.b16 %v1157
      %v1385 = vunpack.c.l.b16 %v1158
      %v1386 = vunpack.c.h.b16 %v1158
      %v1387 = vunpack.c.l.b16 %v1159
      %v1388 = vunpack.c.h.b16 %v1159
      %v1389 = vunpack.c.l.b16 %v1160
      %v1390 = vunpack.c.h.b16 %v1160
      %v1391 = vunpack.c.l.b16 %v1161
      %v1392 = vunpack.c.h.b16 %v1161
      %v1393 = vunpack.c.l.b16 %v1162
      %v1394 = vunpack.c.h.b16 %v1162
      %v1395 = vunpack.c.l.b16 %v1163
      %v1396 = vunpack.c.h.b16 %v1163
      %v1397 = vunpack.c.l.b16 %v1164
      %v1398 = vunpack.c.h.b16 %v1164
      %v1399 = vunpack.c.l.b16 %v1165
      %v1400 = vunpack.c.h.b16 %v1165
      %v1401 = vunpack.c.l.b16 %v1166
      %v1402 = vunpack.c.h.b16 %v1166
      %v1403 = vunpack.c.l.b16 %v1167
      %v1404 = vunpack.c.h.b16 %v1167
      %v1405 = vunpack.c.l.b16 %v1168
      %v1406 = vunpack.c.h.b16 %v1168
      %v1407 = vunpack.c.l.b16 %v1169
      %v1408 = vunpack.c.h.b16 %v1169
      %v1409 = vunpack.c.l.b16 %v1170
      %v1410 = vunpack.c.h.b16 %v1170
      %v1411 = vunpack.c.l.b16 %v1171
      %v1412 = vunpack.c.h.b16 %v1171
      %v1413 = vunpack.c.l.b16 %v1172
      %v1414 = vunpack.c.h.b16 %v1172
      %v1415 = vunpack.c.l.b16 %v1173
      %v1416 = vunpack.c.h.b16 %v1173
      %v1417 = vunpack.c.l.b16 %v1174
      %v1418 = vunpack.c.h.b16 %v1174
      %v1419 = vunpack.c.l.b16 %v1175
      %v1420 = vunpack.c.h.b16 %v1175
      %v1421 = vunpack.c.l.b16 %v1176
      %v1422 = vunpack.c.h.b16 %v1176
      %v1423 = vunpack.c.l.b16 %v1177
      %v1424 = vunpack.c.h.b16 %v1177
      %v1425 = vunpack.c.l.b16 %v1178
      %v1426 = vunpack.c.h.b16 %v1178
      %v1427 = vunpack.c.l.b16 %v1179
      %v1428 = vunpack.c.h.b16 %v1179
      %v1429 = vunpack.c.l.b16 %v1180
      %v1430 = vunpack.c.h.b16 %v1180
      %v1431 = vunpack.c.l.b16 %v1181
      %v1432 = vunpack.c.h.b16 %v1181
      %v1433 = vunpack.c.l.b16 %v1182
      %v1434 = vunpack.c.h.b16 %v1182
      %v1435 = vunpack.c.l.b16 %v1183
      %v1436 = vunpack.c.h.b16 %v1183
      %v1437 = vunpack.c.l.b16 %v1184
      %v1438 = vunpack.c.h.b16 %v1184
      %v1439 = vunpack.c.l.b16 %v1185
      %v1440 = vunpack.c.h.b16 %v1185
      %v1441 = vunpack.c.l.b16 %v1186
      %v1442 = vunpack.c.h.b16 %v1186
      %v1443 = vpack.c.b16 %v1381, %v1379
      %v1444 = vpack.c.b16 %v1382, %v1380
      %v1445 = vpack.c.b16 %v1385, %v1383
      %v1446 = vpack.c.b16 %v1386, %v1384
      %v1447 = vpack.c.b16 %v1389, %v1387
      %v1448 = vpack.c.b16 %v1390, %v1388
      %v1449 = vpack.c.b16 %v1393, %v1391
      %v1450 = vpack.c.b16 %v1394, %v1392
      %v1451 = vpack.c.b16 %v1397, %v1395
      %v1452 = vpack.c.b16 %v1398, %v1396
      %v1453 = vpack.c.b16 %v1401, %v1399
      %v1454 = vpack.c.b16 %v1402, %v1400
      %v1455 = vpack.c.b16 %v1405, %v1403
      %v1456 = vpack.c.b16 %v1406, %v1404
      %v1457 = vpack.c.b16 %v1409, %v1407
      %v1458 = vpack.c.b16 %v1410, %v1408
      %v1459 = vpack.c.b16 %v1413, %v1411
      %v1460 = vpack.c.b16 %v1414, %v1412
      %v1461 = vpack.c.b16 %v1417, %v1415
      %v1462 = vpack.c.b16 %v1418, %v1416
      %v1463 = vpack.c.b16 %v1421, %v1419
      %v1464 = vpack.c.b16 %v1422, %v1420
      %v1465 = vpack.c.b16 %v1425, %v1423
      %v1466 = vpack.c.b16 %v1426, %v1424
      %v1467 = vpack.c.b16 %v1429, %v1427
      %v1468 = vpack.c.b16 %v1430, %v1428
      %v1469 = vpack.c.b16 %v1433, %v1431
      %v1470 = vpack.c.b16 %v1434, %v1432
      %v1471 = vpack.c.b16 %v1437, %v1435
      %v1472 = vpack.c.b16 %v1438, %v1436
      %v1473 = vpack.c.b16 %v1441, %v1439
      %v1474 = vpack.c.b16 %v1442, %v1440
      %1507 = vmatprep.subr.bf16.mxu0 %v1444
      %1508 = vmatpush1.bf16.msra.mxu0 %v1443
      %1509 = vmatprep.subr.bf16.mxu0 %v1446
      %1510 = vmatpush1.bf16.msra.mxu0 %v1445
      %1511 = vmatprep.subr.bf16.mxu0 %v1448
      %1512 = vmatpush1.bf16.msra.mxu0 %v1447
      %1513 = vmatprep.subr.bf16.mxu0 %v1450
      %1514 = vmatpush1.bf16.msra.mxu0 %v1449
      %1515 = vmatprep.subr.bf16.mxu0 %v1452
      %1516 = vmatpush1.bf16.msra.mxu0 %v1451
      %1517 = vmatprep.subr.bf16.mxu0 %v1454
      %1518 = vmatpush1.bf16.msra.mxu0 %v1453
      %1519 = vmatprep.subr.bf16.mxu0 %v1456
      %1520 = vmatpush1.bf16.msra.mxu0 %v1455
      %1521 = vmatprep.subr.bf16.mxu0 %v1458
      %1522 = vmatpush1.bf16.msra.mxu0 %v1457
      %1523 = vmatprep.subr.bf16.mxu0 %v1460
      %1524 = vmatpush1.bf16.msra.mxu0 %v1459
      %1525 = vmatprep.subr.bf16.mxu0 %v1462
      %1526 = vmatpush1.bf16.msra.mxu0 %v1461
      %1527 = vmatprep.subr.bf16.mxu0 %v1464
      %1528 = vmatpush1.bf16.msra.mxu0 %v1463
      %1529 = vmatprep.subr.bf16.mxu0 %v1466
      %1530 = vmatpush1.bf16.msra.mxu0 %v1465
      %1531 = vmatprep.subr.bf16.mxu0 %v1468
      %1532 = vmatpush1.bf16.msra.mxu0 %v1467
      %1533 = vmatprep.subr.bf16.mxu0 %v1470
      %1534 = vmatpush1.bf16.msra.mxu0 %v1469
      %1535 = vmatprep.subr.bf16.mxu0 %v1472
      %1536 = vmatpush1.bf16.msra.mxu0 %v1471
      %1537 = vmatprep.subr.bf16.mxu0 %v1474
      %1538 = vmatpush1.bf16.msra.mxu0 %v1473
      %1539 = vmatprep.mubr.bf16.mxu0 %v1284
      %1540 = vmatmul.mubr.bf16.gmra.mrb[0].mxu0 %v1283
      %v1541 = vpop.f32.mrb[0].mxu0
      %v1542 = vadd.f32 0.0, %v1541
      %v1543 = vpop.f32.mrb[0].mxu0
      %v1544 = vadd.f32 0.0, %v1543
      %v1545 = vpop.f32.mrb[0].mxu0
      %v1546 = vadd.f32 0.0, %v1545
      %v1547 = vpop.f32.mrb[0].mxu0
      %v1548 = vadd.f32 0.0, %v1547
      %1549 = vmatprep.mubr.bf16.mxu0 %v1286
      %1550 = vmatmul.mubr.bf16.gmra.mrb[0].mxu0 %v1285
      %v1551 = vpop.f32.mrb[0].mxu0
      %v1552 = vadd.f32 0.0, %v1551
      %v1553 = vpop.f32.mrb[0].mxu0
      %v1554 = vadd.f32 0.0, %v1553
      %v1555 = vpop.f32.mrb[0].mxu0
      %v1556 = vadd.f32 0.0, %v1555
      %v1557 = vpop.f32.mrb[0].mxu0
      %v1558 = vadd.f32 0.0, %v1557
      %1559 = vmatprep.mubr.bf16.mxu0 %v1288
      %1560 = vmatmul.mubr.bf16.gmra.mrb[0].mxu0 %v1287
      %v1561 = vpop.f32.mrb[0].mxu0
      %v1562 = vadd.f32 0.0, %v1561
      %v1563 = vpop.f32.mrb[0].mxu0
      %v1564 = vadd.f32 0.0, %v1563
      %v1565 = vpop.f32.mrb[0].mxu0
      %v1566 = vadd.f32 0.0, %v1565
      %v1567 = vpop.f32.mrb[0].mxu0
      %v1568 = vadd.f32 0.0, %v1567
      %1569 = vmatprep.mubr.bf16.mxu0 %v1290
      %1570 = vmatmul.mubr.bf16.gmra.mrb[0].mxu0 %v1289
      %v1571 = vpop.f32.mrb[0].mxu0
      %v1572 = vadd.f32 0.0, %v1571
      %v1573 = vpop.f32.mrb[0].mxu0
      %v1574 = vadd.f32 0.0, %v1573
      %v1575 = vpop.f32.mrb[0].mxu0
      %v1576 = vadd.f32 0.0, %v1575
      %v1577 = vpop.f32.mrb[0].mxu0
      %v1578 = vadd.f32 0.0, %v1577
      %1579 = vmatprep.mubr.bf16.mxu0 %v1292
      %1580 = vmatmul.mubr.bf16.gmra.mrb[0].mxu0 %v1291
      %v1581 = vpop.f32.mrb[0].mxu0
      %v1582 = vadd.f32 0.0, %v1581
      %v1583 = vpop.f32.mrb[0].mxu0
      %v1584 = vadd.f32 0.0, %v1583
      %v1585 = vpop.f32.mrb[0].mxu0
      %v1586 = vadd.f32 0.0, %v1585
      %v1587 = vpop.f32.mrb[0].mxu0
      %v1588 = vadd.f32 0.0, %v1587
      %1589 = vmatprep.mubr.bf16.mxu0 %v1294
      %1590 = vmatmul.mubr.bf16.gmra.mrb[0].mxu0 %v1293
      %v1591 = vpop.f32.mrb[0].mxu0
      %v1592 = vadd.f32 0.0, %v1591
      %v1593 = vpop.f32.mrb[0].mxu0
      %v1594 = vadd.f32 0.0, %v1593
      %v1595 = vpop.f32.mrb[0].mxu0
      %v1596 = vadd.f32 0.0, %v1595
      %v1597 = vpop.f32.mrb[0].mxu0
      %v1598 = vadd.f32 0.0, %v1597
      %1599 = vmatprep.mubr.bf16.mxu0 %v1296
      %1600 = vmatmul.mubr.bf16.gmra.mrb[0].mxu0 %v1295
      %v1601 = vpop.f32.mrb[0].mxu0
      %v1602 = vadd.f32 0.0, %v1601
      %v1603 = vpop.f32.mrb[0].mxu0
      %v1604 = vadd.f32 0.0, %v1603
      %v1605 = vpop.f32.mrb[0].mxu0
      %v1606 = vadd.f32 0.0, %v1605
      %v1607 = vpop.f32.mrb[0].mxu0
      %v1608 = vadd.f32 0.0, %v1607
      %1609 = vmatprep.mubr.bf16.mxu0 %v1298
      %1610 = vmatmul.mubr.bf16.gmra.mrb[0].mxu0 %v1297
      %v1611 = vpop.f32.mrb[0].mxu0
      %v1612 = vadd.f32 0.0, %v1611
      %v1613 = vpop.f32.mrb[0].mxu0
      %v1614 = vadd.f32 0.0, %v1613
      %v1615 = vpop.f32.mrb[0].mxu0
      %v1616 = vadd.f32 0.0, %v1615
      %v1617 = vpop.f32.mrb[0].mxu0
      %v1618 = vadd.f32 0.0, %v1617
      %1619 = vmatprep.mubr.bf16.mxu0 %v1300
      %1620 = vmatmul.mubr.bf16.gmra.mrb[0].mxu0 %v1299
      %v1621 = vpop.f32.mrb[0].mxu0
      %v1622 = vadd.f32 0.0, %v1621
      %v1623 = vpop.f32.mrb[0].mxu0
      %v1624 = vadd.f32 0.0, %v1623
      %v1625 = vpop.f32.mrb[0].mxu0
      %v1626 = vadd.f32 0.0, %v1625
      %v1627 = vpop.f32.mrb[0].mxu0
      %v1628 = vadd.f32 0.0, %v1627
      %1629 = vmatprep.mubr.bf16.mxu0 %v1302
      %1630 = vmatmul.mubr.bf16.gmra.mrb[0].mxu0 %v1301
      %v1631 = vpop.f32.mrb[0].mxu0
      %v1632 = vadd.f32 0.0, %v1631
      %v1633 = vpop.f32.mrb[0].mxu0
      %v1634 = vadd.f32 0.0, %v1633
      %v1635 = vpop.f32.mrb[0].mxu0
      %v1636 = vadd.f32 0.0, %v1635
      %v1637 = vpop.f32.mrb[0].mxu0
      %v1638 = vadd.f32 0.0, %v1637
      %1639 = vmatprep.mubr.bf16.mxu0 %v1304
      %1640 = vmatmul.mubr.bf16.gmra.mrb[0].mxu0 %v1303
      %v1641 = vpop.f32.mrb[0].mxu0
      %v1642 = vadd.f32 0.0, %v1641
      %v1643 = vpop.f32.mrb[0].mxu0
      %v1644 = vadd.f32 0.0, %v1643
      %v1645 = vpop.f32.mrb[0].mxu0
      %v1646 = vadd.f32 0.0, %v1645
      %v1647 = vpop.f32.mrb[0].mxu0
      %v1648 = vadd.f32 0.0, %v1647
      %1649 = vmatprep.mubr.bf16.mxu0 %v1306
      %1650 = vmatmul.mubr.bf16.gmra.mrb[0].mxu0 %v1305
      %v1651 = vpop.f32.mrb[0].mxu0
      %v1652 = vadd.f32 0.0, %v1651
      %v1653 = vpop.f32.mrb[0].mxu0
      %v1654 = vadd.f32 0.0, %v1653
      %v1655 = vpop.f32.mrb[0].mxu0
      %v1656 = vadd.f32 0.0, %v1655
      %v1657 = vpop.f32.mrb[0].mxu0
      %v1658 = vadd.f32 0.0, %v1657
      %1659 = vmatprep.mubr.bf16.mxu0 %v1308
      %1660 = vmatmul.mubr.bf16.gmra.mrb[0].mxu0 %v1307
      %v1661 = vpop.f32.mrb[0].mxu0
      %v1662 = vadd.f32 0.0, %v1661
      %v1663 = vpop.f32.mrb[0].mxu0
      %v1664 = vadd.f32 0.0, %v1663
      %v1665 = vpop.f32.mrb[0].mxu0
      %v1666 = vadd.f32 0.0, %v1665
      %v1667 = vpop.f32.mrb[0].mxu0
      %v1668 = vadd.f32 0.0, %v1667
      %1669 = vmatprep.mubr.bf16.mxu0 %v1310
      %1670 = vmatmul.mubr.bf16.gmra.mrb[0].mxu0 %v1309
      %v1671 = vpop.f32.mrb[0].mxu0
      %v1672 = vadd.f32 0.0, %v1671
      %v1673 = vpop.f32.mrb[0].mxu0
      %v1674 = vadd.f32 0.0, %v1673
      %v1675 = vpop.f32.mrb[0].mxu0
      %v1676 = vadd.f32 0.0, %v1675
      %v1677 = vpop.f32.mrb[0].mxu0
      %v1678 = vadd.f32 0.0, %v1677
      %1679 = vmatprep.mubr.bf16.mxu0 %v1312
      %1680 = vmatmul.mubr.bf16.gmra.mrb[0].mxu0 %v1311
      %v1681 = vpop.f32.mrb[0].mxu0
      %v1682 = vadd.f32 0.0, %v1681
      %v1683 = vpop.f32.mrb[0].mxu0
      %v1684 = vadd.f32 0.0, %v1683
      %v1685 = vpop.f32.mrb[0].mxu0
      %v1686 = vadd.f32 0.0, %v1685
      %v1687 = vpop.f32.mrb[0].mxu0
      %v1688 = vadd.f32 0.0, %v1687
      %1689 = vmatprep.mubr.bf16.mxu0 %v1314
      %1690 = vmatmul.mubr.bf16.gmra.mrb[0].mxu0 %v1313
      %v1691 = vpop.f32.mrb[0].mxu0
      %v1692 = vadd.f32 0.0, %v1691
      %v1693 = vpop.f32.mrb[0].mxu0
      %v1694 = vadd.f32 0.0, %v1693
      %v1695 = vpop.f32.mrb[0].mxu0
      %v1696 = vadd.f32 0.0, %v1695
      %v1697 = vpop.f32.mrb[0].mxu0
      %v1698 = vadd.f32 0.0, %v1697
      %1699 = vdwg.mxu0
      %v1700 = vadd.f32 %v1055, %v1542
      %v1701 = vadd.f32 %v1056, %v1544
      %v1702 = vadd.f32 %v1057, %v1546
      %v1703 = vadd.f32 %v1058, %v1548
      %v1704 = vadd.f32 %v1059, %v1552
      %v1705 = vadd.f32 %v1060, %v1554
      %v1706 = vadd.f32 %v1061, %v1556
      %v1707 = vadd.f32 %v1062, %v1558
      %v1708 = vadd.f32 %v1063, %v1562
      %v1709 = vadd.f32 %v1064, %v1564
      %v1710 = vadd.f32 %v1065, %v1566
      %v1711 = vadd.f32 %v1066, %v1568
      %v1712 = vadd.f32 %v1067, %v1572
      %v1713 = vadd.f32 %v1068, %v1574
      %v1714 = vadd.f32 %v1069, %v1576
      %v1715 = vadd.f32 %v1070, %v1578
      %v1716 = vadd.f32 %v1071, %v1582
      %v1717 = vadd.f32 %v1072, %v1584
      %v1718 = vadd.f32 %v1073, %v1586
      %v1719 = vadd.f32 %v1074, %v1588
      %v1720 = vadd.f32 %v1075, %v1592
      %v1721 = vadd.f32 %v1076, %v1594
      %v1722 = vadd.f32 %v1077, %v1596
      %v1723 = vadd.f32 %v1078, %v1598
      %v1724 = vadd.f32 %v1079, %v1602
      %v1725 = vadd.f32 %v1080, %v1604
      %v1726 = vadd.f32 %v1081, %v1606
      %v1727 = vadd.f32 %v1082, %v1608
      %v1728 = vadd.f32 %v1083, %v1612
      %v1729 = vadd.f32 %v1084, %v1614
      %v1730 = vadd.f32 %v1085, %v1616
      %v1731 = vadd.f32 %v1086, %v1618
      %v1732 = vadd.f32 %v1087, %v1622
      %v1733 = vadd.f32 %v1088, %v1624
      %v1734 = vadd.f32 %v1089, %v1626
      %v1735 = vadd.f32 %v1090, %v1628
      %v1736 = vadd.f32 %v1091, %v1632
      %v1737 = vadd.f32 %v1092, %v1634
      %v1738 = vadd.f32 %v1093, %v1636
      %v1739 = vadd.f32 %v1094, %v1638
      %v1740 = vadd.f32 %v1095, %v1642
      %v1741 = vadd.f32 %v1096, %v1644
      %v1742 = vadd.f32 %v1097, %v1646
      %v1743 = vadd.f32 %v1098, %v1648
      %v1744 = vadd.f32 %v1099, %v1652
      %v1745 = vadd.f32 %v1100, %v1654
      %v1746 = vadd.f32 %v1101, %v1656
      %v1747 = vadd.f32 %v1102, %v1658
      %v1748 = vadd.f32 %v1103, %v1662
      %v1749 = vadd.f32 %v1104, %v1664
      %v1750 = vadd.f32 %v1105, %v1666
      %v1751 = vadd.f32 %v1106, %v1668
      %v1752 = vadd.f32 %v1107, %v1672
      %v1753 = vadd.f32 %v1108, %v1674
      %v1754 = vadd.f32 %v1109, %v1676
      %v1755 = vadd.f32 %v1110, %v1678
      %v1756 = vadd.f32 %v1111, %v1682
      %v1757 = vadd.f32 %v1112, %v1684
      %v1758 = vadd.f32 %v1113, %v1686
      %v1759 = vadd.f32 %v1114, %v1688
      %v1760 = vadd.f32 %v1115, %v1692
      %v1761 = vadd.f32 %v1116, %v1694
      %v1762 = vadd.f32 %v1117, %v1696
      %v1763 = vadd.f32 %v1118, %v1698
      %1764 = vst [vmem:[%s209] sm:$0xff] %v1700
      %1765 = vst [vmem:[%s209 + $0x8] sm:$0xff] %v1701
      %1766 = vst [vmem:[%s209 + $0x10] sm:$0xff] %v1702
      %1767 = vst [vmem:[%s209 + $0x18] sm:$0xff] %v1703
      %1768 = vst [vmem:[%s209 + $0x20] sm:$0xff] %v1704
      %1769 = vst [vmem:[%s209 + $0x28] sm:$0xff] %v1705
      %1770 = vst [vmem:[%s209 + $0x30] sm:$0xff] %v1706
      %1771 = vst [vmem:[%s209 + $0x38] sm:$0xff] %v1707
      %1772 = vst [vmem:[%s209 + $0x40] sm:$0xff] %v1708
      %1773 = vst [vmem:[%s209 + $0x48] sm:$0xff] %v1709
      %1774 = vst [vmem:[%s209 + $0x50] sm:$0xff] %v1710
      %1775 = vst [vmem:[%s209 + $0x58] sm:$0xff] %v1711
      %1776 = vst [vmem:[%s209 + $0x60] sm:$0xff] %v1712
      %1777 = vst [vmem:[%s209 + $0x68] sm:$0xff] %v1713
      %1778 = vst [vmem:[%s209 + $0x70] sm:$0xff] %v1714
      %1779 = vst [vmem:[%s209 + $0x78] sm:$0xff] %v1715
      %1780 = vst [vmem:[%s209 + $0x80] sm:$0xff] %v1716
      %1781 = vst [vmem:[%s209 + $0x88] sm:$0xff] %v1717
      %1782 = vst [vmem:[%s209 + $0x90] sm:$0xff] %v1718
      %1783 = vst [vmem:[%s209 + $0x98] sm:$0xff] %v1719
      %1784 = vst [vmem:[%s209 + $0xa0] sm:$0xff] %v1720
      %1785 = vst [vmem:[%s209 + $0xa8] sm:$0xff] %v1721
      %1786 = vst [vmem:[%s209 + $0xb0] sm:$0xff] %v1722
      %1787 = vst [vmem:[%s209 + $0xb8] sm:$0xff] %v1723
      %1788 = vst [vmem:[%s209 + $0xc0] sm:$0xff] %v1724
      %1789 = vst [vmem:[%s209 + $0xc8] sm:$0xff] %v1725
      %1790 = vst [vmem:[%s209 + $0xd0] sm:$0xff] %v1726
      %1791 = vst [vmem:[%s209 + $0xd8] sm:$0xff] %v1727
      %1792 = vst [vmem:[%s209 + $0xe0] sm:$0xff] %v1728
      %1793 = vst [vmem:[%s209 + $0xe8] sm:$0xff] %v1729
      %1794 = vst [vmem:[%s209 + $0xf0] sm:$0xff] %v1730
      %1795 = vst [vmem:[%s209 + $0xf8] sm:$0xff] %v1731
      %1796 = vst [vmem:[%s209 + $0x100] sm:$0xff] %v1732
      %1797 = vst [vmem:[%s209 + $0x108] sm:$0xff] %v1733
      %1798 = vst [vmem:[%s209 + $0x110] sm:$0xff] %v1734
      %1799 = vst [vmem:[%s209 + $0x118] sm:$0xff] %v1735
      %1800 = vst [vmem:[%s209 + $0x120] sm:$0xff] %v1736
      %1801 = vst [vmem:[%s209 + $0x128] sm:$0xff] %v1737
      %1802 = vst [vmem:[%s209 + $0x130] sm:$0xff] %v1738
      %1803 = vst [vmem:[%s209 + $0x138] sm:$0xff] %v1739
      %1804 = vst [vmem:[%s209 + $0x140] sm:$0xff] %v1740
      %1805 = vst [vmem:[%s209 + $0x148] sm:$0xff] %v1741
      %1806 = vst [vmem:[%s209 + $0x150] sm:$0xff] %v1742
      %1807 = vst [vmem:[%s209 + $0x158] sm:$0xff] %v1743
      %1808 = vst [vmem:[%s209 + $0x160] sm:$0xff] %v1744
      %1809 = vst [vmem:[%s209 + $0x168] sm:$0xff] %v1745
      %1810 = vst [vmem:[%s209 + $0x170] sm:$0xff] %v1746
      %1811 = vst [vmem:[%s209 + $0x178] sm:$0xff] %v1747
      %1812 = vst [vmem:[%s209 + $0x180] sm:$0xff] %v1748
      %1813 = vst [vmem:[%s209 + $0x188] sm:$0xff] %v1749
      %1814 = vst [vmem:[%s209 + $0x190] sm:$0xff] %v1750
      %1815 = vst [vmem:[%s209 + $0x198] sm:$0xff] %v1751
      %1816 = vst [vmem:[%s209 + $0x1a0] sm:$0xff] %v1752
      %1817 = vst [vmem:[%s209 + $0x1a8] sm:$0xff] %v1753
      %1818 = vst [vmem:[%s209 + $0x1b0] sm:$0xff] %v1754
      %1819 = vst [vmem:[%s209 + $0x1b8] sm:$0xff] %v1755
      %1820 = vst [vmem:[%s209 + $0x1c0] sm:$0xff] %v1756
      %1821 = vst [vmem:[%s209 + $0x1c8] sm:$0xff] %v1757
      %1822 = vst [vmem:[%s209 + $0x1d0] sm:$0xff] %v1758
      %1823 = vst [vmem:[%s209 + $0x1d8] sm:$0xff] %v1759
      %1824 = vst [vmem:[%s209 + $0x1e0] sm:$0xff] %v1760
      %1825 = vst [vmem:[%s209 + $0x1e8] sm:$0xff] %v1761
      %1826 = vst [vmem:[%s209 + $0x1f0] sm:$0xff] %v1762
      %1827 = vst [vmem:[%s209 + $0x1f8] sm:$0xff] %v1763
      %v1828 = vld [vmem:[%s209] sm:$0xff]
      %v1829 = vld [vmem:[%s209 + $0x8] sm:$0xff]
      %v1830 = vld [vmem:[%s209 + $0x10] sm:$0xff]
      %v1831 = vld [vmem:[%s209 + $0x18] sm:$0xff]
      %v1832 = vld [vmem:[%s209 + $0x20] sm:$0xff]
      %v1833 = vld [vmem:[%s209 + $0x28] sm:$0xff]
      %v1834 = vld [vmem:[%s209 + $0x30] sm:$0xff]
      %v1835 = vld [vmem:[%s209 + $0x38] sm:$0xff]
      %v1836 = vld [vmem:[%s209 + $0x40] sm:$0xff]
      %v1837 = vld [vmem:[%s209 + $0x48] sm:$0xff]
      %v1838 = vld [vmem:[%s209 + $0x50] sm:$0xff]
      %v1839 = vld [vmem:[%s209 + $0x58] sm:$0xff]
      %v1840 = vld [vmem:[%s209 + $0x60] sm:$0xff]
      %v1841 = vld [vmem:[%s209 + $0x68] sm:$0xff]
      %v1842 = vld [vmem:[%s209 + $0x70] sm:$0xff]
      %v1843 = vld [vmem:[%s209 + $0x78] sm:$0xff]
      %v1844 = vld [vmem:[%s209 + $0x80] sm:$0xff]
      %v1845 = vld [vmem:[%s209 + $0x88] sm:$0xff]
      %v1846 = vld [vmem:[%s209 + $0x90] sm:$0xff]
      %v1847 = vld [vmem:[%s209 + $0x98] sm:$0xff]
      %v1848 = vld [vmem:[%s209 + $0xa0] sm:$0xff]
      %v1849 = vld [vmem:[%s209 + $0xa8] sm:$0xff]
      %v1850 = vld [vmem:[%s209 + $0xb0] sm:$0xff]
      %v1851 = vld [vmem:[%s209 + $0xb8] sm:$0xff]
      %v1852 = vld [vmem:[%s209 + $0xc0] sm:$0xff]
      %v1853 = vld [vmem:[%s209 + $0xc8] sm:$0xff]
      %v1854 = vld [vmem:[%s209 + $0xd0] sm:$0xff]
      %v1855 = vld [vmem:[%s209 + $0xd8] sm:$0xff]
      %v1856 = vld [vmem:[%s209 + $0xe0] sm:$0xff]
      %v1857 = vld [vmem:[%s209 + $0xe8] sm:$0xff]
      %v1858 = vld [vmem:[%s209 + $0xf0] sm:$0xff]
      %v1859 = vld [vmem:[%s209 + $0xf8] sm:$0xff]
      %v1860 = vld [vmem:[%s209 + $0x100] sm:$0xff]
      %v1861 = vld [vmem:[%s209 + $0x108] sm:$0xff]
      %v1862 = vld [vmem:[%s209 + $0x110] sm:$0xff]
      %v1863 = vld [vmem:[%s209 + $0x118] sm:$0xff]
      %v1864 = vld [vmem:[%s209 + $0x120] sm:$0xff]
      %v1865 = vld [vmem:[%s209 + $0x128] sm:$0xff]
      %v1866 = vld [vmem:[%s209 + $0x130] sm:$0xff]
      %v1867 = vld [vmem:[%s209 + $0x138] sm:$0xff]
      %v1868 = vld [vmem:[%s209 + $0x140] sm:$0xff]
      %v1869 = vld [vmem:[%s209 + $0x148] sm:$0xff]
      %v1870 = vld [vmem:[%s209 + $0x150] sm:$0xff]
      %v1871 = vld [vmem:[%s209 + $0x158] sm:$0xff]
      %v1872 = vld [vmem:[%s209 + $0x160] sm:$0xff]
      %v1873 = vld [vmem:[%s209 + $0x168] sm:$0xff]
      %v1874 = vld [vmem:[%s209 + $0x170] sm:$0xff]
      %v1875 = vld [vmem:[%s209 + $0x178] sm:$0xff]
      %v1876 = vld [vmem:[%s209 + $0x180] sm:$0xff]
      %v1877 = vld [vmem:[%s209 + $0x188] sm:$0xff]
      %v1878 = vld [vmem:[%s209 + $0x190] sm:$0xff]
      %v1879 = vld [vmem:[%s209 + $0x198] sm:$0xff]
      %v1880 = vld [vmem:[%s209 + $0x1a0] sm:$0xff]
      %v1881 = vld [vmem:[%s209 + $0x1a8] sm:$0xff]
      %v1882 = vld [vmem:[%s209 + $0x1b0] sm:$0xff]
      %v1883 = vld [vmem:[%s209 + $0x1b8] sm:$0xff]
      %v1884 = vld [vmem:[%s209 + $0x1c0] sm:$0xff]
      %v1885 = vld [vmem:[%s209 + $0x1c8] sm:$0xff]
      %v1886 = vld [vmem:[%s209 + $0x1d0] sm:$0xff]
      %v1887 = vld [vmem:[%s209 + $0x1d8] sm:$0xff]
      %v1888 = vld [vmem:[%s209 + $0x1e0] sm:$0xff]
      %v1889 = vld [vmem:[%s209 + $0x1e8] sm:$0xff]
      %v1890 = vld [vmem:[%s209 + $0x1f0] sm:$0xff]
      %v1891 = vld [vmem:[%s209 + $0x1f8] sm:$0xff]
      %s1892 = sadd.s32 %s347, 304
      %s1893 = smul.addr %s1892, 4
      %s1894 = scalar_lea.vmem %s0, %s1893
      %v1895 = vld [vmem:[%s1894] sm:$0xff]
      %v1896 = vld [vmem:[%s1894 + $0x8] sm:$0xff]
      %v1897 = vld [vmem:[%s1894 + $0x10] sm:$0xff]
      %v1898 = vld [vmem:[%s1894 + $0x18] sm:$0xff]
      %v1899 = vld [vmem:[%s1894 + $0x20] sm:$0xff]
      %v1900 = vld [vmem:[%s1894 + $0x28] sm:$0xff]
      %v1901 = vld [vmem:[%s1894 + $0x30] sm:$0xff]
      %v1902 = vld [vmem:[%s1894 + $0x38] sm:$0xff]
      %v1903 = vld [vmem:[%s1894 + $0x40] sm:$0xff]
      %v1904 = vld [vmem:[%s1894 + $0x48] sm:$0xff]
      %v1905 = vld [vmem:[%s1894 + $0x50] sm:$0xff]
      %v1906 = vld [vmem:[%s1894 + $0x58] sm:$0xff]
      %v1907 = vld [vmem:[%s1894 + $0x60] sm:$0xff]
      %v1908 = vld [vmem:[%s1894 + $0x68] sm:$0xff]
      %v1909 = vld [vmem:[%s1894 + $0x70] sm:$0xff]
      %v1910 = vld [vmem:[%s1894 + $0x78] sm:$0xff]
      %v1911 = vld [vmem:[%s1894 + $0x80] sm:$0xff]
      %v1912 = vld [vmem:[%s1894 + $0x88] sm:$0xff]
      %v1913 = vld [vmem:[%s1894 + $0x90] sm:$0xff]
      %v1914 = vld [vmem:[%s1894 + $0x98] sm:$0xff]
      %v1915 = vld [vmem:[%s1894 + $0xa0] sm:$0xff]
      %v1916 = vld [vmem:[%s1894 + $0xa8] sm:$0xff]
      %v1917 = vld [vmem:[%s1894 + $0xb0] sm:$0xff]
      %v1918 = vld [vmem:[%s1894 + $0xb8] sm:$0xff]
      %v1919 = vld [vmem:[%s1894 + $0xc0] sm:$0xff]
      %v1920 = vld [vmem:[%s1894 + $0xc8] sm:$0xff]
      %v1921 = vld [vmem:[%s1894 + $0xd0] sm:$0xff]
      %v1922 = vld [vmem:[%s1894 + $0xd8] sm:$0xff]
      %v1923 = vld [vmem:[%s1894 + $0xe0] sm:$0xff]
      %v1924 = vld [vmem:[%s1894 + $0xe8] sm:$0xff]
      %v1925 = vld [vmem:[%s1894 + $0xf0] sm:$0xff]
      %v1926 = vld [vmem:[%s1894 + $0xf8] sm:$0xff]
      %s1927 = scalar_lea.vmem %s1, 512
      %v1928 = vld [vmem:[%s1927] sm:$0xff]
      %v1929 = vld [vmem:[%s1927 + $0x8] sm:$0xff]
      %v1930 = vld [vmem:[%s1927 + $0x10] sm:$0xff]
      %v1931 = vld [vmem:[%s1927 + $0x18] sm:$0xff]
      %v1932 = vld [vmem:[%s1927 + $0x20] sm:$0xff]
      %v1933 = vld [vmem:[%s1927 + $0x28] sm:$0xff]
      %v1934 = vld [vmem:[%s1927 + $0x30] sm:$0xff]
      %v1935 = vld [vmem:[%s1927 + $0x38] sm:$0xff]
      %v1936 = vld [vmem:[%s1927 + $0x40] sm:$0xff]
      %v1937 = vld [vmem:[%s1927 + $0x48] sm:$0xff]
      %v1938 = vld [vmem:[%s1927 + $0x50] sm:$0xff]
      %v1939 = vld [vmem:[%s1927 + $0x58] sm:$0xff]
      %v1940 = vld [vmem:[%s1927 + $0x60] sm:$0xff]
      %v1941 = vld [vmem:[%s1927 + $0x68] sm:$0xff]
      %v1942 = vld [vmem:[%s1927 + $0x70] sm:$0xff]
      %v1943 = vld [vmem:[%s1927 + $0x78] sm:$0xff]
      %v1944 = vld [vmem:[%s1927 + $0x80] sm:$0xff]
      %v1945 = vld [vmem:[%s1927 + $0x88] sm:$0xff]
      %v1946 = vld [vmem:[%s1927 + $0x90] sm:$0xff]
      %v1947 = vld [vmem:[%s1927 + $0x98] sm:$0xff]
      %v1948 = vld [vmem:[%s1927 + $0xa0] sm:$0xff]
      %v1949 = vld [vmem:[%s1927 + $0xa8] sm:$0xff]
      %v1950 = vld [vmem:[%s1927 + $0xb0] sm:$0xff]
      %v1951 = vld [vmem:[%s1927 + $0xb8] sm:$0xff]
      %v1952 = vld [vmem:[%s1927 + $0xc0] sm:$0xff]
      %v1953 = vld [vmem:[%s1927 + $0xc8] sm:$0xff]
      %v1954 = vld [vmem:[%s1927 + $0xd0] sm:$0xff]
      %v1955 = vld [vmem:[%s1927 + $0xd8] sm:$0xff]
      %v1956 = vld [vmem:[%s1927 + $0xe0] sm:$0xff]
      %v1957 = vld [vmem:[%s1927 + $0xe8] sm:$0xff]
      %v1958 = vld [vmem:[%s1927 + $0xf0] sm:$0xff]
      %v1959 = vld [vmem:[%s1927 + $0xf8] sm:$0xff]
      %v1992 = vunpack.c.l.b16 %v1895
      %v1993 = vunpack.c.h.b16 %v1895
      %v1994 = vunpack.c.l.b16 %v1896
      %v1995 = vunpack.c.h.b16 %v1896
      %v1996 = vunpack.c.l.b16 %v1897
      %v1997 = vunpack.c.h.b16 %v1897
      %v1998 = vunpack.c.l.b16 %v1898
      %v1999 = vunpack.c.h.b16 %v1898
      %v2000 = vunpack.c.l.b16 %v1899
      %v2001 = vunpack.c.h.b16 %v1899
      %v2002 = vunpack.c.l.b16 %v1900
      %v2003 = vunpack.c.h.b16 %v1900
      %v2004 = vunpack.c.l.b16 %v1901
      %v2005 = vunpack.c.h.b16 %v1901
      %v2006 = vunpack.c.l.b16 %v1902
      %v2007 = vunpack.c.h.b16 %v1902
      %v2008 = vunpack.c.l.b16 %v1903
      %v2009 = vunpack.c.h.b16 %v1903
      %v2010 = vunpack.c.l.b16 %v1904
      %v2011 = vunpack.c.h.b16 %v1904
      %v2012 = vunpack.c.l.b16 %v1905
      %v2013 = vunpack.c.h.b16 %v1905
      %v2014 = vunpack.c.l.b16 %v1906
      %v2015 = vunpack.c.h.b16 %v1906
      %v2016 = vunpack.c.l.b16 %v1907
      %v2017 = vunpack.c.h.b16 %v1907
      %v2018 = vunpack.c.l.b16 %v1908
      %v2019 = vunpack.c.h.b16 %v1908
      %v2020 = vunpack.c.l.b16 %v1909
      %v2021 = vunpack.c.h.b16 %v1909
      %v2022 = vunpack.c.l.b16 %v1910
      %v2023 = vunpack.c.h.b16 %v1910
      %v2024 = vunpack.c.l.b16 %v1911
      %v2025 = vunpack.c.h.b16 %v1911
      %v2026 = vunpack.c.l.b16 %v1912
      %v2027 = vunpack.c.h.b16 %v1912
      %v2028 = vunpack.c.l.b16 %v1913
      %v2029 = vunpack.c.h.b16 %v1913
      %v2030 = vunpack.c.l.b16 %v1914
      %v2031 = vunpack.c.h.b16 %v1914
      %v2032 = vunpack.c.l.b16 %v1915
      %v2033 = vunpack.c.h.b16 %v1915
      %v2034 = vunpack.c.l.b16 %v1916
      %v2035 = vunpack.c.h.b16 %v1916
      %v2036 = vunpack.c.l.b16 %v1917
      %v2037 = vunpack.c.h.b16 %v1917
      %v2038 = vunpack.c.l.b16 %v1918
      %v2039 = vunpack.c.h.b16 %v1918
      %v2040 = vunpack.c.l.b16 %v1919
      %v2041 = vunpack.c.h.b16 %v1919
      %v2042 = vunpack.c.l.b16 %v1920
      %v2043 = vunpack.c.h.b16 %v1920
      %v2044 = vunpack.c.l.b16 %v1921
      %v2045 = vunpack.c.h.b16 %v1921
      %v2046 = vunpack.c.l.b16 %v1922
      %v2047 = vunpack.c.h.b16 %v1922
      %v2048 = vunpack.c.l.b16 %v1923
      %v2049 = vunpack.c.h.b16 %v1923
      %v2050 = vunpack.c.l.b16 %v1924
      %v2051 = vunpack.c.h.b16 %v1924
      %v2052 = vunpack.c.l.b16 %v1925
      %v2053 = vunpack.c.h.b16 %v1925
      %v2054 = vunpack.c.l.b16 %v1926
      %v2055 = vunpack.c.h.b16 %v1926
      %v2056 = vpack.c.b16 %v1994, %v1992
      %v2057 = vpack.c.b16 %v1995, %v1993
      %v2058 = vpack.c.b16 %v1998, %v1996
      %v2059 = vpack.c.b16 %v1999, %v1997
      %v2060 = vpack.c.b16 %v2002, %v2000
      %v2061 = vpack.c.b16 %v2003, %v2001
      %v2062 = vpack.c.b16 %v2006, %v2004
      %v2063 = vpack.c.b16 %v2007, %v2005
      %v2064 = vpack.c.b16 %v2010, %v2008
      %v2065 = vpack.c.b16 %v2011, %v2009
      %v2066 = vpack.c.b16 %v2014, %v2012
      %v2067 = vpack.c.b16 %v2015, %v2013
      %v2068 = vpack.c.b16 %v2018, %v2016
      %v2069 = vpack.c.b16 %v2019, %v2017
      %v2070 = vpack.c.b16 %v2022, %v2020
      %v2071 = vpack.c.b16 %v2023, %v2021
      %v2072 = vpack.c.b16 %v2026, %v2024
      %v2073 = vpack.c.b16 %v2027, %v2025
      %v2074 = vpack.c.b16 %v2030, %v2028
      %v2075 = vpack.c.b16 %v2031, %v2029
      %v2076 = vpack.c.b16 %v2034, %v2032
      %v2077 = vpack.c.b16 %v2035, %v2033
      %v2078 = vpack.c.b16 %v2038, %v2036
      %v2079 = vpack.c.b16 %v2039, %v2037
      %v2080 = vpack.c.b16 %v2042, %v2040
      %v2081 = vpack.c.b16 %v2043, %v2041
      %v2082 = vpack.c.b16 %v2046, %v2044
      %v2083 = vpack.c.b16 %v2047, %v2045
      %v2084 = vpack.c.b16 %v2050, %v2048
      %v2085 = vpack.c.b16 %v2051, %v2049
      %v2086 = vpack.c.b16 %v2054, %v2052
      %v2087 = vpack.c.b16 %v2055, %v2053
      %v2152 = vunpack.c.l.b16 %v1928
      %v2153 = vunpack.c.h.b16 %v1928
      %v2154 = vunpack.c.l.b16 %v1929
      %v2155 = vunpack.c.h.b16 %v1929
      %v2156 = vunpack.c.l.b16 %v1930
      %v2157 = vunpack.c.h.b16 %v1930
      %v2158 = vunpack.c.l.b16 %v1931
      %v2159 = vunpack.c.h.b16 %v1931
      %v2160 = vunpack.c.l.b16 %v1932
      %v2161 = vunpack.c.h.b16 %v1932
      %v2162 = vunpack.c.l.b16 %v1933
      %v2163 = vunpack.c.h.b16 %v1933
      %v2164 = vunpack.c.l.b16 %v1934
      %v2165 = vunpack.c.h.b16 %v1934
      %v2166 = vunpack.c.l.b16 %v1935
      %v2167 = vunpack.c.h.b16 %v1935
      %v2168 = vunpack.c.l.b16 %v1936
      %v2169 = vunpack.c.h.b16 %v1936
      %v2170 = vunpack.c.l.b16 %v1937
      %v2171 = vunpack.c.h.b16 %v1937
      %v2172 = vunpack.c.l.b16 %v1938
      %v2173 = vunpack.c.h.b16 %v1938
      %v2174 = vunpack.c.l.b16 %v1939
      %v2175 = vunpack.c.h.b16 %v1939
      %v2176 = vunpack.c.l.b16 %v1940
      %v2177 = vunpack.c.h.b16 %v1940
      %v2178 = vunpack.c.l.b16 %v1941
      %v2179 = vunpack.c.h.b16 %v1941
      %v2180 = vunpack.c.l.b16 %v1942
      %v2181 = vunpack.c.h.b16 %v1942
      %v2182 = vunpack.c.l.b16 %v1943
      %v2183 = vunpack.c.h.b16 %v1943
      %v2184 = vunpack.c.l.b16 %v1944
      %v2185 = vunpack.c.h.b16 %v1944
      %v2186 = vunpack.c.l.b16 %v1945
      %v2187 = vunpack.c.h.b16 %v1945
      %v2188 = vunpack.c.l.b16 %v1946
      %v2189 = vunpack.c.h.b16 %v1946
      %v2190 = vunpack.c.l.b16 %v1947
      %v2191 = vunpack.c.h.b16 %v1947
      %v2192 = vunpack.c.l.b16 %v1948
      %v2193 = vunpack.c.h.b16 %v1948
      %v2194 = vunpack.c.l.b16 %v1949
      %v2195 = vunpack.c.h.b16 %v1949
      %v2196 = vunpack.c.l.b16 %v1950
      %v2197 = vunpack.c.h.b16 %v1950
      %v2198 = vunpack.c.l.b16 %v1951
      %v2199 = vunpack.c.h.b16 %v1951
      %v2200 = vunpack.c.l.b16 %v1952
      %v2201 = vunpack.c.h.b16 %v1952
      %v2202 = vunpack.c.l.b16 %v1953
      %v2203 = vunpack.c.h.b16 %v1953
      %v2204 = vunpack.c.l.b16 %v1954
      %v2205 = vunpack.c.h.b16 %v1954
      %v2206 = vunpack.c.l.b16 %v1955
      %v2207 = vunpack.c.h.b16 %v1955
      %v2208 = vunpack.c.l.b16 %v1956
      %v2209 = vunpack.c.h.b16 %v1956
      %v2210 = vunpack.c.l.b16 %v1957
      %v2211 = vunpack.c.h.b16 %v1957
      %v2212 = vunpack.c.l.b16 %v1958
      %v2213 = vunpack.c.h.b16 %v1958
      %v2214 = vunpack.c.l.b16 %v1959
      %v2215 = vunpack.c.h.b16 %v1959
      %v2216 = vpack.c.b16 %v2154, %v2152
      %v2217 = vpack.c.b16 %v2155, %v2153
      %v2218 = vpack.c.b16 %v2158, %v2156
      %v2219 = vpack.c.b16 %v2159, %v2157
      %v2220 = vpack.c.b16 %v2162, %v2160
      %v2221 = vpack.c.b16 %v2163, %v2161
      %v2222 = vpack.c.b16 %v2166, %v2164
      %v2223 = vpack.c.b16 %v2167, %v2165
      %v2224 = vpack.c.b16 %v2170, %v2168
      %v2225 = vpack.c.b16 %v2171, %v2169
      %v2226 = vpack.c.b16 %v2174, %v2172
      %v2227 = vpack.c.b16 %v2175, %v2173
      %v2228 = vpack.c.b16 %v2178, %v2176
      %v2229 = vpack.c.b16 %v2179, %v2177
      %v2230 = vpack.c.b16 %v2182, %v2180
      %v2231 = vpack.c.b16 %v2183, %v2181
      %v2232 = vpack.c.b16 %v2186, %v2184
      %v2233 = vpack.c.b16 %v2187, %v2185
      %v2234 = vpack.c.b16 %v2190, %v2188
      %v2235 = vpack.c.b16 %v2191, %v2189
      %v2236 = vpack.c.b16 %v2194, %v2192
      %v2237 = vpack.c.b16 %v2195, %v2193
      %v2238 = vpack.c.b16 %v2198, %v2196
      %v2239 = vpack.c.b16 %v2199, %v2197
      %v2240 = vpack.c.b16 %v2202, %v2200
      %v2241 = vpack.c.b16 %v2203, %v2201
      %v2242 = vpack.c.b16 %v2206, %v2204
      %v2243 = vpack.c.b16 %v2207, %v2205
      %v2244 = vpack.c.b16 %v2210, %v2208
      %v2245 = vpack.c.b16 %v2211, %v2209
      %v2246 = vpack.c.b16 %v2214, %v2212
      %v2247 = vpack.c.b16 %v2215, %v2213
      %2280 = vmatprep.subr.bf16.mxu0 %v2217
      %2281 = vmatpush1.bf16.msra.mxu0 %v2216
      %2282 = vmatprep.subr.bf16.mxu0 %v2219
      %2283 = vmatpush1.bf16.msra.mxu0 %v2218
      %2284 = vmatprep.subr.bf16.mxu0 %v2221
      %2285 = vmatpush1.bf16.msra.mxu0 %v2220
      %2286 = vmatprep.subr.bf16.mxu0 %v2223
      %2287 = vmatpush1.bf16.msra.mxu0 %v2222
      %2288 = vmatprep.subr.bf16.mxu0 %v2225
      %2289 = vmatpush1.bf16.msra.mxu0 %v2224
      %2290 = vmatprep.subr.bf16.mxu0 %v2227
      %2291 = vmatpush1.bf16.msra.mxu0 %v2226
      %2292 = vmatprep.subr.bf16.mxu0 %v2229
      %2293 = vmatpush1.bf16.msra.mxu0 %v2228
      %2294 = vmatprep.subr.bf16.mxu0 %v2231
      %2295 = vmatpush1.bf16.msra.mxu0 %v2230
      %2296 = vmatprep.subr.bf16.mxu0 %v2233
      %2297 = vmatpush1.bf16.msra.mxu0 %v2232
      %2298 = vmatprep.subr.bf16.mxu0 %v2235
      %2299 = vmatpush1.bf16.msra.mxu0 %v2234
      %2300 = vmatprep.subr.bf16.mxu0 %v2237
      %2301 = vmatpush1.bf16.msra.mxu0 %v2236
      %2302 = vmatprep.subr.bf16.mxu0 %v2239
      %2303 = vmatpush1.bf16.msra.mxu0 %v2238
      %2304 = vmatprep.subr.bf16.mxu0 %v2241
      %2305 = vmatpush1.bf16.msra.mxu0 %v2240
      %2306 = vmatprep.subr.bf16.mxu0 %v2243
      %2307 = vmatpush1.bf16.msra.mxu0 %v2242
      %2308 = vmatprep.subr.bf16.mxu0 %v2245
      %2309 = vmatpush1.bf16.msra.mxu0 %v2244
      %2310 = vmatprep.subr.bf16.mxu0 %v2247
      %2311 = vmatpush1.bf16.msra.mxu0 %v2246
      %2312 = vmatprep.mubr.bf16.mxu0 %v2057
      %2313 = vmatmul.mubr.bf16.gmra.mrb[0].mxu0 %v2056
      %v2314 = vpop.f32.mrb[0].mxu0
      %v2315 = vadd.f32 0.0, %v2314
      %v2316 = vpop.f32.mrb[0].mxu0
      %v2317 = vadd.f32 0.0, %v2316
      %v2318 = vpop.f32.mrb[0].mxu0
      %v2319 = vadd.f32 0.0, %v2318
      %v2320 = vpop.f32.mrb[0].mxu0
      %v2321 = vadd.f32 0.0, %v2320
      %2322 = vmatprep.mubr.bf16.mxu0 %v2059
      %2323 = vmatmul.mubr.bf16.gmra.mrb[0].mxu0 %v2058
      %v2324 = vpop.f32.mrb[0].mxu0
      %v2325 = vadd.f32 0.0, %v2324
      %v2326 = vpop.f32.mrb[0].mxu0
      %v2327 = vadd.f32 0.0, %v2326
      %v2328 = vpop.f32.mrb[0].mxu0
      %v2329 = vadd.f32 0.0, %v2328
      %v2330 = vpop.f32.mrb[0].mxu0
      %v2331 = vadd.f32 0.0, %v2330
      %2332 = vmatprep.mubr.bf16.mxu0 %v2061
      %2333 = vmatmul.mubr.bf16.gmra.mrb[0].mxu0 %v2060
      %v2334 = vpop.f32.mrb[0].mxu0
      %v2335 = vadd.f32 0.0, %v2334
      %v2336 = vpop.f32.mrb[0].mxu0
      %v2337 = vadd.f32 0.0, %v2336
      %v2338 = vpop.f32.mrb[0].mxu0
      %v2339 = vadd.f32 0.0, %v2338
      %v2340 = vpop.f32.mrb[0].mxu0
      %v2341 = vadd.f32 0.0, %v2340
      %2342 = vmatprep.mubr.bf16.mxu0 %v2063
      %2343 = vmatmul.mubr.bf16.gmra.mrb[0].mxu0 %v2062
      %v2344 = vpop.f32.mrb[0].mxu0
      %v2345 = vadd.f32 0.0, %v2344
      %v2346 = vpop.f32.mrb[0].mxu0
      %v2347 = vadd.f32 0.0, %v2346
      %v2348 = vpop.f32.mrb[0].mxu0
      %v2349 = vadd.f32 0.0, %v2348
      %v2350 = vpop.f32.mrb[0].mxu0
      %v2351 = vadd.f32 0.0, %v2350
      %2352 = vmatprep.mubr.bf16.mxu0 %v2065
      %2353 = vmatmul.mubr.bf16.gmra.mrb[0].mxu0 %v2064
      %v2354 = vpop.f32.mrb[0].mxu0
      %v2355 = vadd.f32 0.0, %v2354
      %v2356 = vpop.f32.mrb[0].mxu0
      %v2357 = vadd.f32 0.0, %v2356
      %v2358 = vpop.f32.mrb[0].mxu0
      %v2359 = vadd.f32 0.0, %v2358
      %v2360 = vpop.f32.mrb[0].mxu0
      %v2361 = vadd.f32 0.0, %v2360
      %2362 = vmatprep.mubr.bf16.mxu0 %v2067
      %2363 = vmatmul.mubr.bf16.gmra.mrb[0].mxu0 %v2066
      %v2364 = vpop.f32.mrb[0].mxu0
      %v2365 = vadd.f32 0.0, %v2364
      %v2366 = vpop.f32.mrb[0].mxu0
      %v2367 = vadd.f32 0.0, %v2366
      %v2368 = vpop.f32.mrb[0].mxu0
      %v2369 = vadd.f32 0.0, %v2368
      %v2370 = vpop.f32.mrb[0].mxu0
      %v2371 = vadd.f32 0.0, %v2370
      %2372 = vmatprep.mubr.bf16.mxu0 %v2069
      %2373 = vmatmul.mubr.bf16.gmra.mrb[0].mxu0 %v2068
      %v2374 = vpop.f32.mrb[0].mxu0
      %v2375 = vadd.f32 0.0, %v2374
      %v2376 = vpop.f32.mrb[0].mxu0
      %v2377 = vadd.f32 0.0, %v2376
      %v2378 = vpop.f32.mrb[0].mxu0
      %v2379 = vadd.f32 0.0, %v2378
      %v2380 = vpop.f32.mrb[0].mxu0
      %v2381 = vadd.f32 0.0, %v2380
      %2382 = vmatprep.mubr.bf16.mxu0 %v2071
      %2383 = vmatmul.mubr.bf16.gmra.mrb[0].mxu0 %v2070
      %v2384 = vpop.f32.mrb[0].mxu0
      %v2385 = vadd.f32 0.0, %v2384
      %v2386 = vpop.f32.mrb[0].mxu0
      %v2387 = vadd.f32 0.0, %v2386
      %v2388 = vpop.f32.mrb[0].mxu0
      %v2389 = vadd.f32 0.0, %v2388
      %v2390 = vpop.f32.mrb[0].mxu0
      %v2391 = vadd.f32 0.0, %v2390
      %2392 = vmatprep.mubr.bf16.mxu0 %v2073
      %2393 = vmatmul.mubr.bf16.gmra.mrb[0].mxu0 %v2072
      %v2394 = vpop.f32.mrb[0].mxu0
      %v2395 = vadd.f32 0.0, %v2394
      %v2396 = vpop.f32.mrb[0].mxu0
      %v2397 = vadd.f32 0.0, %v2396
      %v2398 = vpop.f32.mrb[0].mxu0
      %v2399 = vadd.f32 0.0, %v2398
      %v2400 = vpop.f32.mrb[0].mxu0
      %v2401 = vadd.f32 0.0, %v2400
      %2402 = vmatprep.mubr.bf16.mxu0 %v2075
      %2403 = vmatmul.mubr.bf16.gmra.mrb[0].mxu0 %v2074
      %v2404 = vpop.f32.mrb[0].mxu0
      %v2405 = vadd.f32 0.0, %v2404
      %v2406 = vpop.f32.mrb[0].mxu0
      %v2407 = vadd.f32 0.0, %v2406
      %v2408 = vpop.f32.mrb[0].mxu0
      %v2409 = vadd.f32 0.0, %v2408
      %v2410 = vpop.f32.mrb[0].mxu0
      %v2411 = vadd.f32 0.0, %v2410
      %2412 = vmatprep.mubr.bf16.mxu0 %v2077
      %2413 = vmatmul.mubr.bf16.gmra.mrb[0].mxu0 %v2076
      %v2414 = vpop.f32.mrb[0].mxu0
      %v2415 = vadd.f32 0.0, %v2414
      %v2416 = vpop.f32.mrb[0].mxu0
      %v2417 = vadd.f32 0.0, %v2416
      %v2418 = vpop.f32.mrb[0].mxu0
      %v2419 = vadd.f32 0.0, %v2418
      %v2420 = vpop.f32.mrb[0].mxu0
      %v2421 = vadd.f32 0.0, %v2420
      %2422 = vmatprep.mubr.bf16.mxu0 %v2079
      %2423 = vmatmul.mubr.bf16.gmra.mrb[0].mxu0 %v2078
      %v2424 = vpop.f32.mrb[0].mxu0
      %v2425 = vadd.f32 0.0, %v2424
      %v2426 = vpop.f32.mrb[0].mxu0
      %v2427 = vadd.f32 0.0, %v2426
      %v2428 = vpop.f32.mrb[0].mxu0
      %v2429 = vadd.f32 0.0, %v2428
      %v2430 = vpop.f32.mrb[0].mxu0
      %v2431 = vadd.f32 0.0, %v2430
      %2432 = vmatprep.mubr.bf16.mxu0 %v2081
      %2433 = vmatmul.mubr.bf16.gmra.mrb[0].mxu0 %v2080
      %v2434 = vpop.f32.mrb[0].mxu0
      %v2435 = vadd.f32 0.0, %v2434
      %v2436 = vpop.f32.mrb[0].mxu0
      %v2437 = vadd.f32 0.0, %v2436
      %v2438 = vpop.f32.mrb[0].mxu0
      %v2439 = vadd.f32 0.0, %v2438
      %v2440 = vpop.f32.mrb[0].mxu0
      %v2441 = vadd.f32 0.0, %v2440
      %2442 = vmatprep.mubr.bf16.mxu0 %v2083
      %2443 = vmatmul.mubr.bf16.gmra.mrb[0].mxu0 %v2082
      %v2444 = vpop.f32.mrb[0].mxu0
      %v2445 = vadd.f32 0.0, %v2444
      %v2446 = vpop.f32.mrb[0].mxu0
      %v2447 = vadd.f32 0.0, %v2446
      %v2448 = vpop.f32.mrb[0].mxu0
      %v2449 = vadd.f32 0.0, %v2448
      %v2450 = vpop.f32.mrb[0].mxu0
      %v2451 = vadd.f32 0.0, %v2450
      %2452 = vmatprep.mubr.bf16.mxu0 %v2085
      %2453 = vmatmul.mubr.bf16.gmra.mrb[0].mxu0 %v2084
      %v2454 = vpop.f32.mrb[0].mxu0
      %v2455 = vadd.f32 0.0, %v2454
      %v2456 = vpop.f32.mrb[0].mxu0
      %v2457 = vadd.f32 0.0, %v2456
      %v2458 = vpop.f32.mrb[0].mxu0
      %v2459 = vadd.f32 0.0, %v2458
      %v2460 = vpop.f32.mrb[0].mxu0
      %v2461 = vadd.f32 0.0, %v2460
      %2462 = vmatprep.mubr.bf16.mxu0 %v2087
      %2463 = vmatmul.mubr.bf16.gmra.mrb[0].mxu0 %v2086
      %v2464 = vpop.f32.mrb[0].mxu0
      %v2465 = vadd.f32 0.0, %v2464
      %v2466 = vpop.f32.mrb[0].mxu0
      %v2467 = vadd.f32 0.0, %v2466
      %v2468 = vpop.f32.mrb[0].mxu0
      %v2469 = vadd.f32 0.0, %v2468
      %v2470 = vpop.f32.mrb[0].mxu0
      %v2471 = vadd.f32 0.0, %v2470
      %2472 = vdwg.mxu0
      %v2473 = vadd.f32 %v1828, %v2315
      %v2474 = vadd.f32 %v1829, %v2317
      %v2475 = vadd.f32 %v1830, %v2319
      %v2476 = vadd.f32 %v1831, %v2321
      %v2477 = vadd.f32 %v1832, %v2325
      %v2478 = vadd.f32 %v1833, %v2327
      %v2479 = vadd.f32 %v1834, %v2329
      %v2480 = vadd.f32 %v1835, %v2331
      %v2481 = vadd.f32 %v1836, %v2335
      %v2482 = vadd.f32 %v1837, %v2337
      %v2483 = vadd.f32 %v1838, %v2339
      %v2484 = vadd.f32 %v1839, %v2341
      %v2485 = vadd.f32 %v1840, %v2345
      %v2486 = vadd.f32 %v1841, %v2347
      %v2487 = vadd.f32 %v1842, %v2349
      %v2488 = vadd.f32 %v1843, %v2351
      %v2489 = vadd.f32 %v1844, %v2355
      %v2490 = vadd.f32 %v1845, %v2357
      %v2491 = vadd.f32 %v1846, %v2359
      %v2492 = vadd.f32 %v1847, %v2361
      %v2493 = vadd.f32 %v1848, %v2365
      %v2494 = vadd.f32 %v1849, %v2367
      %v2495 = vadd.f32 %v1850, %v2369
      %v2496 = vadd.f32 %v1851, %v2371
      %v2497 = vadd.f32 %v1852, %v2375
      %v2498 = vadd.f32 %v1853, %v2377
      %v2499 = vadd.f32 %v1854, %v2379
      %v2500 = vadd.f32 %v1855, %v2381
      %v2501 = vadd.f32 %v1856, %v2385
      %v2502 = vadd.f32 %v1857, %v2387
      %v2503 = vadd.f32 %v1858, %v2389
      %v2504 = vadd.f32 %v1859, %v2391
      %v2505 = vadd.f32 %v1860, %v2395
      %v2506 = vadd.f32 %v1861, %v2397
      %v2507 = vadd.f32 %v1862, %v2399
      %v2508 = vadd.f32 %v1863, %v2401
      %v2509 = vadd.f32 %v1864, %v2405
      %v2510 = vadd.f32 %v1865, %v2407
      %v2511 = vadd.f32 %v1866, %v2409
      %v2512 = vadd.f32 %v1867, %v2411
      %v2513 = vadd.f32 %v1868, %v2415
      %v2514 = vadd.f32 %v1869, %v2417
      %v2515 = vadd.f32 %v1870, %v2419
      %v2516 = vadd.f32 %v1871, %v2421
      %v2517 = vadd.f32 %v1872, %v2425
      %v2518 = vadd.f32 %v1873, %v2427
      %v2519 = vadd.f32 %v1874, %v2429
      %v2520 = vadd.f32 %v1875, %v2431
      %v2521 = vadd.f32 %v1876, %v2435
      %v2522 = vadd.f32 %v1877, %v2437
      %v2523 = vadd.f32 %v1878, %v2439
      %v2524 = vadd.f32 %v1879, %v2441
      %v2525 = vadd.f32 %v1880, %v2445
      %v2526 = vadd.f32 %v1881, %v2447
      %v2527 = vadd.f32 %v1882, %v2449
      %v2528 = vadd.f32 %v1883, %v2451
      %v2529 = vadd.f32 %v1884, %v2455
      %v2530 = vadd.f32 %v1885, %v2457
      %v2531 = vadd.f32 %v1886, %v2459
      %v2532 = vadd.f32 %v1887, %v2461
      %v2533 = vadd.f32 %v1888, %v2465
      %v2534 = vadd.f32 %v1889, %v2467
      %v2535 = vadd.f32 %v1890, %v2469
      %v2536 = vadd.f32 %v1891, %v2471
      %2537 = vst [vmem:[%s209] sm:$0xff] %v2473
      %2538 = vst [vmem:[%s209 + $0x8] sm:$0xff] %v2474
      %2539 = vst [vmem:[%s209 + $0x10] sm:$0xff] %v2475
      %2540 = vst [vmem:[%s209 + $0x18] sm:$0xff] %v2476
      %2541 = vst [vmem:[%s209 + $0x20] sm:$0xff] %v2477
      %2542 = vst [vmem:[%s209 + $0x28] sm:$0xff] %v2478
      %2543 = vst [vmem:[%s209 + $0x30] sm:$0xff] %v2479
      %2544 = vst [vmem:[%s209 + $0x38] sm:$0xff] %v2480
      %2545 = vst [vmem:[%s209 + $0x40] sm:$0xff] %v2481
      %2546 = vst [vmem:[%s209 + $0x48] sm:$0xff] %v2482
      %2547 = vst [vmem:[%s209 + $0x50] sm:$0xff] %v2483
      %2548 = vst [vmem:[%s209 + $0x58] sm:$0xff] %v2484
      %2549 = vst [vmem:[%s209 + $0x60] sm:$0xff] %v2485
      %2550 = vst [vmem:[%s209 + $0x68] sm:$0xff] %v2486
      %2551 = vst [vmem:[%s209 + $0x70] sm:$0xff] %v2487
      %2552 = vst [vmem:[%s209 + $0x78] sm:$0xff] %v2488
      %2553 = vst [vmem:[%s209 + $0x80] sm:$0xff] %v2489
      %2554 = vst [vmem:[%s209 + $0x88] sm:$0xff] %v2490
      %2555 = vst [vmem:[%s209 + $0x90] sm:$0xff] %v2491
      %2556 = vst [vmem:[%s209 + $0x98] sm:$0xff] %v2492
      %2557 = vst [vmem:[%s209 + $0xa0] sm:$0xff] %v2493
      %2558 = vst [vmem:[%s209 + $0xa8] sm:$0xff] %v2494
      %2559 = vst [vmem:[%s209 + $0xb0] sm:$0xff] %v2495
      %2560 = vst [vmem:[%s209 + $0xb8] sm:$0xff] %v2496
      %2561 = vst [vmem:[%s209 + $0xc0] sm:$0xff] %v2497
      %2562 = vst [vmem:[%s209 + $0xc8] sm:$0xff] %v2498
      %2563 = vst [vmem:[%s209 + $0xd0] sm:$0xff] %v2499
      %2564 = vst [vmem:[%s209 + $0xd8] sm:$0xff] %v2500
      %2565 = vst [vmem:[%s209 + $0xe0] sm:$0xff] %v2501
      %2566 = vst [vmem:[%s209 + $0xe8] sm:$0xff] %v2502
      %2567 = vst [vmem:[%s209 + $0xf0] sm:$0xff] %v2503
      %2568 = vst [vmem:[%s209 + $0xf8] sm:$0xff] %v2504
      %2569 = vst [vmem:[%s209 + $0x100] sm:$0xff] %v2505
      %2570 = vst [vmem:[%s209 + $0x108] sm:$0xff] %v2506
      %2571 = vst [vmem:[%s209 + $0x110] sm:$0xff] %v2507
      %2572 = vst [vmem:[%s209 + $0x118] sm:$0xff] %v2508
      %2573 = vst [vmem:[%s209 + $0x120] sm:$0xff] %v2509
      %2574 = vst [vmem:[%s209 + $0x128] sm:$0xff] %v2510
      %2575 = vst [vmem:[%s209 + $0x130] sm:$0xff] %v2511
      %2576 = vst [vmem:[%s209 + $0x138] sm:$0xff] %v2512
      %2577 = vst [vmem:[%s209 + $0x140] sm:$0xff] %v2513
      %2578 = vst [vmem:[%s209 + $0x148] sm:$0xff] %v2514
      %2579 = vst [vmem:[%s209 + $0x150] sm:$0xff] %v2515
      %2580 = vst [vmem:[%s209 + $0x158] sm:$0xff] %v2516
      %2581 = vst [vmem:[%s209 + $0x160] sm:$0xff] %v2517
      %2582 = vst [vmem:[%s209 + $0x168] sm:$0xff] %v2518
      %2583 = vst [vmem:[%s209 + $0x170] sm:$0xff] %v2519
      %2584 = vst [vmem:[%s209 + $0x178] sm:$0xff] %v2520
      %2585 = vst [vmem:[%s209 + $0x180] sm:$0xff] %v2521
      %2586 = vst [vmem:[%s209 + $0x188] sm:$0xff] %v2522
      %2587 = vst [vmem:[%s209 + $0x190] sm:$0xff] %v2523
      %2588 = vst [vmem:[%s209 + $0x198] sm:$0xff] %v2524
      %2589 = vst [vmem:[%s209 + $0x1a0] sm:$0xff] %v2525
      %2590 = vst [vmem:[%s209 + $0x1a8] sm:$0xff] %v2526
      %2591 = vst [vmem:[%s209 + $0x1b0] sm:$0xff] %v2527
      %2592 = vst [vmem:[%s209 + $0x1b8] sm:$0xff] %v2528
      %2593 = vst [vmem:[%s209 + $0x1c0] sm:$0xff] %v2529
      %2594 = vst [vmem:[%s209 + $0x1c8] sm:$0xff] %v2530
      %2595 = vst [vmem:[%s209 + $0x1d0] sm:$0xff] %v2531
      %2596 = vst [vmem:[%s209 + $0x1d8] sm:$0xff] %v2532
      %2597 = vst [vmem:[%s209 + $0x1e0] sm:$0xff] %v2533
      %2598 = vst [vmem:[%s209 + $0x1e8] sm:$0xff] %v2534
      %2599 = vst [vmem:[%s209 + $0x1f0] sm:$0xff] %v2535
      %2600 = vst [vmem:[%s209 + $0x1f8] sm:$0xff] %v2536
      %s2601 = sadd.s32 %s216, 48
      %v2602 = vld [vmem:[%s209] sm:$0xff]
      %v2603 = vld [vmem:[%s209 + $0x8] sm:$0xff]
      %v2604 = vld [vmem:[%s209 + $0x10] sm:$0xff]
      %v2605 = vld [vmem:[%s209 + $0x18] sm:$0xff]
      %v2606 = vld [vmem:[%s209 + $0x20] sm:$0xff]
      %v2607 = vld [vmem:[%s209 + $0x28] sm:$0xff]
      %v2608 = vld [vmem:[%s209 + $0x30] sm:$0xff]
      %v2609 = vld [vmem:[%s209 + $0x38] sm:$0xff]
      %v2610 = vld [vmem:[%s209 + $0x40] sm:$0xff]
      %v2611 = vld [vmem:[%s209 + $0x48] sm:$0xff]
      %v2612 = vld [vmem:[%s209 + $0x50] sm:$0xff]
      %v2613 = vld [vmem:[%s209 + $0x58] sm:$0xff]
      %v2614 = vld [vmem:[%s209 + $0x60] sm:$0xff]
      %v2615 = vld [vmem:[%s209 + $0x68] sm:$0xff]
      %v2616 = vld [vmem:[%s209 + $0x70] sm:$0xff]
      %v2617 = vld [vmem:[%s209 + $0x78] sm:$0xff]
      %v2618 = vld [vmem:[%s209 + $0x80] sm:$0xff]
      %v2619 = vld [vmem:[%s209 + $0x88] sm:$0xff]
      %v2620 = vld [vmem:[%s209 + $0x90] sm:$0xff]
      %v2621 = vld [vmem:[%s209 + $0x98] sm:$0xff]
      %v2622 = vld [vmem:[%s209 + $0xa0] sm:$0xff]
      %v2623 = vld [vmem:[%s209 + $0xa8] sm:$0xff]
      %v2624 = vld [vmem:[%s209 + $0xb0] sm:$0xff]
      %v2625 = vld [vmem:[%s209 + $0xb8] sm:$0xff]
      %v2626 = vld [vmem:[%s209 + $0xc0] sm:$0xff]
      %v2627 = vld [vmem:[%s209 + $0xc8] sm:$0xff]
      %v2628 = vld [vmem:[%s209 + $0xd0] sm:$0xff]
      %v2629 = vld [vmem:[%s209 + $0xd8] sm:$0xff]
      %v2630 = vld [vmem:[%s209 + $0xe0] sm:$0xff]
      %v2631 = vld [vmem:[%s209 + $0xe8] sm:$0xff]
      %v2632 = vld [vmem:[%s209 + $0xf0] sm:$0xff]
      %v2633 = vld [vmem:[%s209 + $0xf8] sm:$0xff]
      %v2634 = vld [vmem:[%s209 + $0x100] sm:$0xff]
      %v2635 = vld [vmem:[%s209 + $0x108] sm:$0xff]
      %v2636 = vld [vmem:[%s209 + $0x110] sm:$0xff]
      %v2637 = vld [vmem:[%s209 + $0x118] sm:$0xff]
      %v2638 = vld [vmem:[%s209 + $0x120] sm:$0xff]
      %v2639 = vld [vmem:[%s209 + $0x128] sm:$0xff]
      %v2640 = vld [vmem:[%s209 + $0x130] sm:$0xff]
      %v2641 = vld [vmem:[%s209 + $0x138] sm:$0xff]
      %v2642 = vld [vmem:[%s209 + $0x140] sm:$0xff]
      %v2643 = vld [vmem:[%s209 + $0x148] sm:$0xff]
      %v2644 = vld [vmem:[%s209 + $0x150] sm:$0xff]
      %v2645 = vld [vmem:[%s209 + $0x158] sm:$0xff]
      %v2646 = vld [vmem:[%s209 + $0x160] sm:$0xff]
      %v2647 = vld [vmem:[%s209 + $0x168] sm:$0xff]
      %v2648 = vld [vmem:[%s209 + $0x170] sm:$0xff]
      %v2649 = vld [vmem:[%s209 + $0x178] sm:$0xff]
      %v2650 = vld [vmem:[%s209 + $0x180] sm:$0xff]
      %v2651 = vld [vmem:[%s209 + $0x188] sm:$0xff]
      %v2652 = vld [vmem:[%s209 + $0x190] sm:$0xff]
      %v2653 = vld [vmem:[%s209 + $0x198] sm:$0xff]
      %v2654 = vld [vmem:[%s209 + $0x1a0] sm:$0xff]
      %v2655 = vld [vmem:[%s209 + $0x1a8] sm:$0xff]
      %v2656 = vld [vmem:[%s209 + $0x1b0] sm:$0xff]
      %v2657 = vld [vmem:[%s209 + $0x1b8] sm:$0xff]
      %v2658 = vld [vmem:[%s209 + $0x1c0] sm:$0xff]
      %v2659 = vld [vmem:[%s209 + $0x1c8] sm:$0xff]
      %v2660 = vld [vmem:[%s209 + $0x1d0] sm:$0xff]
      %v2661 = vld [vmem:[%s209 + $0x1d8] sm:$0xff]
      %v2662 = vld [vmem:[%s209 + $0x1e0] sm:$0xff]
      %v2663 = vld [vmem:[%s209 + $0x1e8] sm:$0xff]
      %v2664 = vld [vmem:[%s209 + $0x1f0] sm:$0xff]
      %v2665 = vld [vmem:[%s209 + $0x1f8] sm:$0xff]
      %s2666 = sshra.s32 %s2601, 3
      %s2667 = sand.u32 %s2601, 7
      %s2668 = smul.u32 %s2666, 2
      %s2669 = smul.addr %s2668, 4
      %s2670 = scalar_lea.vmem %s0, %s2669
      %v2671 = vld [vmem:[%s2670] sm:$0xff]
      %v2672 = vld [vmem:[%s2670 + $0x8] sm:$0xff]
      %v2673 = vld [vmem:[%s2670 + $0x10] sm:$0xff]
      %v2674 = vld [vmem:[%s2670 + $0x18] sm:$0xff]
      %v2675 = vld [vmem:[%s2670 + $0x20] sm:$0xff]
      %v2676 = vld [vmem:[%s2670 + $0x28] sm:$0xff]
      %v2677 = vld [vmem:[%s2670 + $0x30] sm:$0xff]
      %v2678 = vld [vmem:[%s2670 + $0x38] sm:$0xff]
      %v2679 = vld [vmem:[%s2670 + $0x40] sm:$0xff]
      %v2680 = vld [vmem:[%s2670 + $0x48] sm:$0xff]
      %v2681 = vld [vmem:[%s2670 + $0x50] sm:$0xff]
      %v2682 = vld [vmem:[%s2670 + $0x58] sm:$0xff]
      %v2683 = vld [vmem:[%s2670 + $0x60] sm:$0xff]
      %v2684 = vld [vmem:[%s2670 + $0x68] sm:$0xff]
      %v2685 = vld [vmem:[%s2670 + $0x70] sm:$0xff]
      %v2686 = vld [vmem:[%s2670 + $0x78] sm:$0xff]
      %v2687 = vld [vmem:[%s2670 + $0x80] sm:$0xff]
      %v2688 = vld [vmem:[%s2670 + $0x88] sm:$0xff]
      %v2689 = vld [vmem:[%s2670 + $0x90] sm:$0xff]
      %v2690 = vld [vmem:[%s2670 + $0x98] sm:$0xff]
      %v2691 = vld [vmem:[%s2670 + $0xa0] sm:$0xff]
      %v2692 = vld [vmem:[%s2670 + $0xa8] sm:$0xff]
      %v2693 = vld [vmem:[%s2670 + $0xb0] sm:$0xff]
      %v2694 = vld [vmem:[%s2670 + $0xb8] sm:$0xff]
      %v2695 = vld [vmem:[%s2670 + $0xc0] sm:$0xff]
      %v2696 = vld [vmem:[%s2670 + $0xc8] sm:$0xff]
      %v2697 = vld [vmem:[%s2670 + $0xd0] sm:$0xff]
      %v2698 = vld [vmem:[%s2670 + $0xd8] sm:$0xff]
      %v2699 = vld [vmem:[%s2670 + $0xe0] sm:$0xff]
      %v2700 = vld [vmem:[%s2670 + $0xe8] sm:$0xff]
      %v2701 = vld [vmem:[%s2670 + $0xf0] sm:$0xff]
      %v2702 = vld [vmem:[%s2670 + $0xf8] sm:$0xff]
      %s2703 = scalar_lea.vmem %s1, 768
      %v2704 = vld [vmem:[%s2703] sm:$0xff]
      %v2705 = vld [vmem:[%s2703 + $0x8] sm:$0xff]
      %v2706 = vld [vmem:[%s2703 + $0x10] sm:$0xff]
      %v2707 = vld [vmem:[%s2703 + $0x18] sm:$0xff]
      %v2708 = vld [vmem:[%s2703 + $0x20] sm:$0xff]
      %v2709 = vld [vmem:[%s2703 + $0x28] sm:$0xff]
      %v2710 = vld [vmem:[%s2703 + $0x30] sm:$0xff]
      %v2711 = vld [vmem:[%s2703 + $0x38] sm:$0xff]
      %v2712 = vld [vmem:[%s2703 + $0x40] sm:$0xff]
      %v2713 = vld [vmem:[%s2703 + $0x48] sm:$0xff]
      %v2714 = vld [vmem:[%s2703 + $0x50] sm:$0xff]
      %v2715 = vld [vmem:[%s2703 + $0x58] sm:$0xff]
      %v2716 = vld [vmem:[%s2703 + $0x60] sm:$0xff]
      %v2717 = vld [vmem:[%s2703 + $0x68] sm:$0xff]
      %v2718 = vld [vmem:[%s2703 + $0x70] sm:$0xff]
      %v2719 = vld [vmem:[%s2703 + $0x78] sm:$0xff]
      %v2720 = vld [vmem:[%s2703 + $0x80] sm:$0xff]
      %v2721 = vld [vmem:[%s2703 + $0x88] sm:$0xff]
      %v2722 = vld [vmem:[%s2703 + $0x90] sm:$0xff]
      %v2723 = vld [vmem:[%s2703 + $0x98] sm:$0xff]
      %v2724 = vld [vmem:[%s2703 + $0xa0] sm:$0xff]
      %v2725 = vld [vmem:[%s2703 + $0xa8] sm:$0xff]
      %v2726 = vld [vmem:[%s2703 + $0xb0] sm:$0xff]
      %v2727 = vld [vmem:[%s2703 + $0xb8] sm:$0xff]
      %v2728 = vld [vmem:[%s2703 + $0xc0] sm:$0xff]
      %v2729 = vld [vmem:[%s2703 + $0xc8] sm:$0xff]
      %v2730 = vld [vmem:[%s2703 + $0xd0] sm:$0xff]
      %v2731 = vld [vmem:[%s2703 + $0xd8] sm:$0xff]
      %v2732 = vld [vmem:[%s2703 + $0xe0] sm:$0xff]
      %v2733 = vld [vmem:[%s2703 + $0xe8] sm:$0xff]
      %v2734 = vld [vmem:[%s2703 + $0xf0] sm:$0xff]
      %v2735 = vld [vmem:[%s2703 + $0xf8] sm:$0xff]
      %v2768 = vunpack.c.l.b16 %v2671
      %v2769 = vunpack.c.h.b16 %v2671
      %v2770 = vunpack.c.l.b16 %v2672
      %v2771 = vunpack.c.h.b16 %v2672
      %v2772 = vunpack.c.l.b16 %v2673
      %v2773 = vunpack.c.h.b16 %v2673
      %v2774 = vunpack.c.l.b16 %v2674
      %v2775 = vunpack.c.h.b16 %v2674
      %v2776 = vunpack.c.l.b16 %v2675
      %v2777 = vunpack.c.h.b16 %v2675
      %v2778 = vunpack.c.l.b16 %v2676
      %v2779 = vunpack.c.h.b16 %v2676
      %v2780 = vunpack.c.l.b16 %v2677
      %v2781 = vunpack.c.h.b16 %v2677
      %v2782 = vunpack.c.l.b16 %v2678
      %v2783 = vunpack.c.h.b16 %v2678
      %v2784 = vunpack.c.l.b16 %v2679
      %v2785 = vunpack.c.h.b16 %v2679
      %v2786 = vunpack.c.l.b16 %v2680
      %v2787 = vunpack.c.h.b16 %v2680
      %v2788 = vunpack.c.l.b16 %v2681
      %v2789 = vunpack.c.h.b16 %v2681
      %v2790 = vunpack.c.l.b16 %v2682
      %v2791 = vunpack.c.h.b16 %v2682
      %v2792 = vunpack.c.l.b16 %v2683
      %v2793 = vunpack.c.h.b16 %v2683
      %v2794 = vunpack.c.l.b16 %v2684
      %v2795 = vunpack.c.h.b16 %v2684
      %v2796 = vunpack.c.l.b16 %v2685
      %v2797 = vunpack.c.h.b16 %v2685
      %v2798 = vunpack.c.l.b16 %v2686
      %v2799 = vunpack.c.h.b16 %v2686
      %v2800 = vunpack.c.l.b16 %v2687
      %v2801 = vunpack.c.h.b16 %v2687
      %v2802 = vunpack.c.l.b16 %v2688
      %v2803 = vunpack.c.h.b16 %v2688
      %v2804 = vunpack.c.l.b16 %v2689
      %v2805 = vunpack.c.h.b16 %v2689
      %v2806 = vunpack.c.l.b16 %v2690
      %v2807 = vunpack.c.h.b16 %v2690
      %v2808 = vunpack.c.l.b16 %v2691
      %v2809 = vunpack.c.h.b16 %v2691
      %v2810 = vunpack.c.l.b16 %v2692
      %v2811 = vunpack.c.h.b16 %v2692
      %v2812 = vunpack.c.l.b16 %v2693
      %v2813 = vunpack.c.h.b16 %v2693
      %v2814 = vunpack.c.l.b16 %v2694
      %v2815 = vunpack.c.h.b16 %v2694
      %v2816 = vunpack.c.l.b16 %v2695
      %v2817 = vunpack.c.h.b16 %v2695
      %v2818 = vunpack.c.l.b16 %v2696
      %v2819 = vunpack.c.h.b16 %v2696
      %v2820 = vunpack.c.l.b16 %v2697
      %v2821 = vunpack.c.h.b16 %v2697
      %v2822 = vunpack.c.l.b16 %v2698
      %v2823 = vunpack.c.h.b16 %v2698
      %v2824 = vunpack.c.l.b16 %v2699
      %v2825 = vunpack.c.h.b16 %v2699
      %v2826 = vunpack.c.l.b16 %v2700
      %v2827 = vunpack.c.h.b16 %v2700
      %v2828 = vunpack.c.l.b16 %v2701
      %v2829 = vunpack.c.h.b16 %v2701
      %v2830 = vunpack.c.l.b16 %v2702
      %v2831 = vunpack.c.h.b16 %v2702
      %v2832 = vpack.c.b16 %v2770, %v2768
      %v2833 = vpack.c.b16 %v2771, %v2769
      %v2834 = vpack.c.b16 %v2774, %v2772
      %v2835 = vpack.c.b16 %v2775, %v2773
      %v2836 = vpack.c.b16 %v2778, %v2776
      %v2837 = vpack.c.b16 %v2779, %v2777
      %v2838 = vpack.c.b16 %v2782, %v2780
      %v2839 = vpack.c.b16 %v2783, %v2781
      %v2840 = vpack.c.b16 %v2786, %v2784
      %v2841 = vpack.c.b16 %v2787, %v2785
      %v2842 = vpack.c.b16 %v2790, %v2788
      %v2843 = vpack.c.b16 %v2791, %v2789
      %v2844 = vpack.c.b16 %v2794, %v2792
      %v2845 = vpack.c.b16 %v2795, %v2793
      %v2846 = vpack.c.b16 %v2798, %v2796
      %v2847 = vpack.c.b16 %v2799, %v2797
      %v2848 = vpack.c.b16 %v2802, %v2800
      %v2849 = vpack.c.b16 %v2803, %v2801
      %v2850 = vpack.c.b16 %v2806, %v2804
      %v2851 = vpack.c.b16 %v2807, %v2805
      %v2852 = vpack.c.b16 %v2810, %v2808
      %v2853 = vpack.c.b16 %v2811, %v2809
      %v2854 = vpack.c.b16 %v2814, %v2812
      %v2855 = vpack.c.b16 %v2815, %v2813
      %v2856 = vpack.c.b16 %v2818, %v2816
      %v2857 = vpack.c.b16 %v2819, %v2817
      %v2858 = vpack.c.b16 %v2822, %v2820
      %v2859 = vpack.c.b16 %v2823, %v2821
      %v2860 = vpack.c.b16 %v2826, %v2824
      %v2861 = vpack.c.b16 %v2827, %v2825
      %v2862 = vpack.c.b16 %v2830, %v2828
      %v2863 = vpack.c.b16 %v2831, %v2829
      %v2928 = vunpack.c.l.b16 %v2704
      %v2929 = vunpack.c.h.b16 %v2704
      %v2930 = vunpack.c.l.b16 %v2705
      %v2931 = vunpack.c.h.b16 %v2705
      %v2932 = vunpack.c.l.b16 %v2706
      %v2933 = vunpack.c.h.b16 %v2706
      %v2934 = vunpack.c.l.b16 %v2707
      %v2935 = vunpack.c.h.b16 %v2707
      %v2936 = vunpack.c.l.b16 %v2708
      %v2937 = vunpack.c.h.b16 %v2708
      %v2938 = vunpack.c.l.b16 %v2709
      %v2939 = vunpack.c.h.b16 %v2709
      %v2940 = vunpack.c.l.b16 %v2710
      %v2941 = vunpack.c.h.b16 %v2710
      %v2942 = vunpack.c.l.b16 %v2711
      %v2943 = vunpack.c.h.b16 %v2711
      %v2944 = vunpack.c.l.b16 %v2712
      %v2945 = vunpack.c.h.b16 %v2712
      %v2946 = vunpack.c.l.b16 %v2713
      %v2947 = vunpack.c.h.b16 %v2713
      %v2948 = vunpack.c.l.b16 %v2714
      %v2949 = vunpack.c.h.b16 %v2714
      %v2950 = vunpack.c.l.b16 %v2715
      %v2951 = vunpack.c.h.b16 %v2715
      %v2952 = vunpack.c.l.b16 %v2716
      %v2953 = vunpack.c.h.b16 %v2716
      %v2954 = vunpack.c.l.b16 %v2717
      %v2955 = vunpack.c.h.b16 %v2717
      %v2956 = vunpack.c.l.b16 %v2718
      %v2957 = vunpack.c.h.b16 %v2718
      %v2958 = vunpack.c.l.b16 %v2719
      %v2959 = vunpack.c.h.b16 %v2719
      %v2960 = vunpack.c.l.b16 %v2720
      %v2961 = vunpack.c.h.b16 %v2720
      %v2962 = vunpack.c.l.b16 %v2721
      %v2963 = vunpack.c.h.b16 %v2721
      %v2964 = vunpack.c.l.b16 %v2722
      %v2965 = vunpack.c.h.b16 %v2722
      %v2966 = vunpack.c.l.b16 %v2723
      %v2967 = vunpack.c.h.b16 %v2723
      %v2968 = vunpack.c.l.b16 %v2724
      %v2969 = vunpack.c.h.b16 %v2724
      %v2970 = vunpack.c.l.b16 %v2725
      %v2971 = vunpack.c.h.b16 %v2725
      %v2972 = vunpack.c.l.b16 %v2726
      %v2973 = vunpack.c.h.b16 %v2726
      %v2974 = vunpack.c.l.b16 %v2727
      %v2975 = vunpack.c.h.b16 %v2727
      %v2976 = vunpack.c.l.b16 %v2728
      %v2977 = vunpack.c.h.b16 %v2728
      %v2978 = vunpack.c.l.b16 %v2729
      %v2979 = vunpack.c.h.b16 %v2729
      %v2980 = vunpack.c.l.b16 %v2730
      %v2981 = vunpack.c.h.b16 %v2730
      %v2982 = vunpack.c.l.b16 %v2731
      %v2983 = vunpack.c.h.b16 %v2731
      %v2984 = vunpack.c.l.b16 %v2732
      %v2985 = vunpack.c.h.b16 %v2732
      %v2986 = vunpack.c.l.b16 %v2733
      %v2987 = vunpack.c.h.b16 %v2733
      %v2988 = vunpack.c.l.b16 %v2734
      %v2989 = vunpack.c.h.b16 %v2734
      %v2990 = vunpack.c.l.b16 %v2735
      %v2991 = vunpack.c.h.b16 %v2735
      %v2992 = vpack.c.b16 %v2930, %v2928
      %v2993 = vpack.c.b16 %v2931, %v2929
      %v2994 = vpack.c.b16 %v2934, %v2932
      %v2995 = vpack.c.b16 %v2935, %v2933
      %v2996 = vpack.c.b16 %v2938, %v2936
      %v2997 = vpack.c.b16 %v2939, %v2937
      %v2998 = vpack.c.b16 %v2942, %v2940
      %v2999 = vpack.c.b16 %v2943, %v2941
      %v3000 = vpack.c.b16 %v2946, %v2944
      %v3001 = vpack.c.b16 %v2947, %v2945
      %v3002 = vpack.c.b16 %v2950, %v2948
      %v3003 = vpack.c.b16 %v2951, %v2949
      %v3004 = vpack.c.b16 %v2954, %v2952
      %v3005 = vpack.c.b16 %v2955, %v2953
      %v3006 = vpack.c.b16 %v2958, %v2956
      %v3007 = vpack.c.b16 %v2959, %v2957
      %v3008 = vpack.c.b16 %v2962, %v2960
      %v3009 = vpack.c.b16 %v2963, %v2961
      %v3010 = vpack.c.b16 %v2966, %v2964
      %v3011 = vpack.c.b16 %v2967, %v2965
      %v3012 = vpack.c.b16 %v2970, %v2968
      %v3013 = vpack.c.b16 %v2971, %v2969
      %v3014 = vpack.c.b16 %v2974, %v2972
      %v3015 = vpack.c.b16 %v2975, %v2973
      %v3016 = vpack.c.b16 %v2978, %v2976
      %v3017 = vpack.c.b16 %v2979, %v2977
      %v3018 = vpack.c.b16 %v2982, %v2980
      %v3019 = vpack.c.b16 %v2983, %v2981
      %v3020 = vpack.c.b16 %v2986, %v2984
      %v3021 = vpack.c.b16 %v2987, %v2985
      %v3022 = vpack.c.b16 %v2990, %v2988
      %v3023 = vpack.c.b16 %v2991, %v2989
      %3056 = vmatprep.subr.bf16.mxu0 %v2993
      %3057 = vmatpush1.bf16.msra.mxu0 %v2992
      %3058 = vmatprep.subr.bf16.mxu0 %v2995
      %3059 = vmatpush1.bf16.msra.mxu0 %v2994
      %3060 = vmatprep.subr.bf16.mxu0 %v2997
      %3061 = vmatpush1.bf16.msra.mxu0 %v2996
      %3062 = vmatprep.subr.bf16.mxu0 %v2999
      %3063 = vmatpush1.bf16.msra.mxu0 %v2998
      %3064 = vmatprep.subr.bf16.mxu0 %v3001
      %3065 = vmatpush1.bf16.msra.mxu0 %v3000
      %3066 = vmatprep.subr.bf16.mxu0 %v3003
      %3067 = vmatpush1.bf16.msra.mxu0 %v3002
      %3068 = vmatprep.subr.bf16.mxu0 %v3005
      %3069 = vmatpush1.bf16.msra.mxu0 %v3004
      %3070 = vmatprep.subr.bf16.mxu0 %v3007
      %3071 = vmatpush1.bf16.msra.mxu0 %v3006
      %3072 = vmatprep.subr.bf16.mxu0 %v3009
      %3073 = vmatpush1.bf16.msra.mxu0 %v3008
      %3074 = vmatprep.subr.bf16.mxu0 %v3011
      %3075 = vmatpush1.bf16.msra.mxu0 %v3010
      %3076 = vmatprep.subr.bf16.mxu0 %v3013
      %3077 = vmatpush1.bf16.msra.mxu0 %v3012
      %3078 = vmatprep.subr.bf16.mxu0 %v3015
      %3079 = vmatpush1.bf16.msra.mxu0 %v3014
      %3080 = vmatprep.subr.bf16.mxu0 %v3017
      %3081 = vmatpush1.bf16.msra.mxu0 %v3016
      %3082 = vmatprep.subr.bf16.mxu0 %v3019
      %3083 = vmatpush1.bf16.msra.mxu0 %v3018
      %3084 = vmatprep.subr.bf16.mxu0 %v3021
      %3085 = vmatpush1.bf16.msra.mxu0 %v3020
      %3086 = vmatprep.subr.bf16.mxu0 %v3023
      %3087 = vmatpush1.bf16.msra.mxu0 %v3022
      %3088 = vmatprep.mubr.bf16.mxu0 %v2833
      %3089 = vmatmul.mubr.bf16.gmra.mrb[0].mxu0 %v2832
      %v3090 = vpop.f32.mrb[0].mxu0
      %v3091 = vadd.f32 0.0, %v3090
      %v3092 = vpop.f32.mrb[0].mxu0
      %v3093 = vadd.f32 0.0, %v3092
      %v3094 = vpop.f32.mrb[0].mxu0
      %v3095 = vadd.f32 0.0, %v3094
      %v3096 = vpop.f32.mrb[0].mxu0
      %v3097 = vadd.f32 0.0, %v3096
      %3098 = vmatprep.mubr.bf16.mxu0 %v2835
      %3099 = vmatmul.mubr.bf16.gmra.mrb[0].mxu0 %v2834
      %v3100 = vpop.f32.mrb[0].mxu0
      %v3101 = vadd.f32 0.0, %v3100
      %v3102 = vpop.f32.mrb[0].mxu0
      %v3103 = vadd.f32 0.0, %v3102
      %v3104 = vpop.f32.mrb[0].mxu0
      %v3105 = vadd.f32 0.0, %v3104
      %v3106 = vpop.f32.mrb[0].mxu0
      %v3107 = vadd.f32 0.0, %v3106
      %3108 = vmatprep.mubr.bf16.mxu0 %v2837
      %3109 = vmatmul.mubr.bf16.gmra.mrb[0].mxu0 %v2836
      %v3110 = vpop.f32.mrb[0].mxu0
      %v3111 = vadd.f32 0.0, %v3110
      %v3112 = vpop.f32.mrb[0].mxu0
      %v3113 = vadd.f32 0.0, %v3112
      %v3114 = vpop.f32.mrb[0].mxu0
      %v3115 = vadd.f32 0.0, %v3114
      %v3116 = vpop.f32.mrb[0].mxu0
      %v3117 = vadd.f32 0.0, %v3116
      %3118 = vmatprep.mubr.bf16.mxu0 %v2839
      %3119 = vmatmul.mubr.bf16.gmra.mrb[0].mxu0 %v2838
      %v3120 = vpop.f32.mrb[0].mxu0
      %v3121 = vadd.f32 0.0, %v3120
      %v3122 = vpop.f32.mrb[0].mxu0
      %v3123 = vadd.f32 0.0, %v3122
      %v3124 = vpop.f32.mrb[0].mxu0
      %v3125 = vadd.f32 0.0, %v3124
      %v3126 = vpop.f32.mrb[0].mxu0
      %v3127 = vadd.f32 0.0, %v3126
      %3128 = vmatprep.mubr.bf16.mxu0 %v2841
      %3129 = vmatmul.mubr.bf16.gmra.mrb[0].mxu0 %v2840
      %v3130 = vpop.f32.mrb[0].mxu0
      %v3131 = vadd.f32 0.0, %v3130
      %v3132 = vpop.f32.mrb[0].mxu0
      %v3133 = vadd.f32 0.0, %v3132
      %v3134 = vpop.f32.mrb[0].mxu0
      %v3135 = vadd.f32 0.0, %v3134
      %v3136 = vpop.f32.mrb[0].mxu0
      %v3137 = vadd.f32 0.0, %v3136
      %3138 = vmatprep.mubr.bf16.mxu0 %v2843
      %3139 = vmatmul.mubr.bf16.gmra.mrb[0].mxu0 %v2842
      %v3140 = vpop.f32.mrb[0].mxu0
      %v3141 = vadd.f32 0.0, %v3140
      %v3142 = vpop.f32.mrb[0].mxu0
      %v3143 = vadd.f32 0.0, %v3142
      %v3144 = vpop.f32.mrb[0].mxu0
      %v3145 = vadd.f32 0.0, %v3144
      %v3146 = vpop.f32.mrb[0].mxu0
      %v3147 = vadd.f32 0.0, %v3146
      %3148 = vmatprep.mubr.bf16.mxu0 %v2845
      %3149 = vmatmul.mubr.bf16.gmra.mrb[0].mxu0 %v2844
      %v3150 = vpop.f32.mrb[0].mxu0
      %v3151 = vadd.f32 0.0, %v3150
      %v3152 = vpop.f32.mrb[0].mxu0
      %v3153 = vadd.f32 0.0, %v3152
      %v3154 = vpop.f32.mrb[0].mxu0
      %v3155 = vadd.f32 0.0, %v3154
      %v3156 = vpop.f32.mrb[0].mxu0
      %v3157 = vadd.f32 0.0, %v3156
      %3158 = vmatprep.mubr.bf16.mxu0 %v2847
      %3159 = vmatmul.mubr.bf16.gmra.mrb[0].mxu0 %v2846
      %v3160 = vpop.f32.mrb[0].mxu0
      %v3161 = vadd.f32 0.0, %v3160
      %v3162 = vpop.f32.mrb[0].mxu0
      %v3163 = vadd.f32 0.0, %v3162
      %v3164 = vpop.f32.mrb[0].mxu0
      %v3165 = vadd.f32 0.0, %v3164
      %v3166 = vpop.f32.mrb[0].mxu0
      %v3167 = vadd.f32 0.0, %v3166
      %3168 = vmatprep.mubr.bf16.mxu0 %v2849
      %3169 = vmatmul.mubr.bf16.gmra.mrb[0].mxu0 %v2848
      %v3170 = vpop.f32.mrb[0].mxu0
      %v3171 = vadd.f32 0.0, %v3170
      %v3172 = vpop.f32.mrb[0].mxu0
      %v3173 = vadd.f32 0.0, %v3172
      %v3174 = vpop.f32.mrb[0].mxu0
      %v3175 = vadd.f32 0.0, %v3174
      %v3176 = vpop.f32.mrb[0].mxu0
      %v3177 = vadd.f32 0.0, %v3176
      %3178 = vmatprep.mubr.bf16.mxu0 %v2851
      %3179 = vmatmul.mubr.bf16.gmra.mrb[0].mxu0 %v2850
      %v3180 = vpop.f32.mrb[0].mxu0
      %v3181 = vadd.f32 0.0, %v3180
      %v3182 = vpop.f32.mrb[0].mxu0
      %v3183 = vadd.f32 0.0, %v3182
      %v3184 = vpop.f32.mrb[0].mxu0
      %v3185 = vadd.f32 0.0, %v3184
      %v3186 = vpop.f32.mrb[0].mxu0
      %v3187 = vadd.f32 0.0, %v3186
      %3188 = vmatprep.mubr.bf16.mxu0 %v2853
      %3189 = vmatmul.mubr.bf16.gmra.mrb[0].mxu0 %v2852
      %v3190 = vpop.f32.mrb[0].mxu0
      %v3191 = vadd.f32 0.0, %v3190
      %v3192 = vpop.f32.mrb[0].mxu0
      %v3193 = vadd.f32 0.0, %v3192
      %v3194 = vpop.f32.mrb[0].mxu0
      %v3195 = vadd.f32 0.0, %v3194
      %v3196 = vpop.f32.mrb[0].mxu0
      %v3197 = vadd.f32 0.0, %v3196
      %3198 = vmatprep.mubr.bf16.mxu0 %v2855
      %3199 = vmatmul.mubr.bf16.gmra.mrb[0].mxu0 %v2854
      %v3200 = vpop.f32.mrb[0].mxu0
      %v3201 = vadd.f32 0.0, %v3200
      %v3202 = vpop.f32.mrb[0].mxu0
      %v3203 = vadd.f32 0.0, %v3202
      %v3204 = vpop.f32.mrb[0].mxu0
      %v3205 = vadd.f32 0.0, %v3204
      %v3206 = vpop.f32.mrb[0].mxu0
      %v3207 = vadd.f32 0.0, %v3206
      %3208 = vmatprep.mubr.bf16.mxu0 %v2857
      %3209 = vmatmul.mubr.bf16.gmra.mrb[0].mxu0 %v2856
      %v3210 = vpop.f32.mrb[0].mxu0
      %v3211 = vadd.f32 0.0, %v3210
      %v3212 = vpop.f32.mrb[0].mxu0
      %v3213 = vadd.f32 0.0, %v3212
      %v3214 = vpop.f32.mrb[0].mxu0
      %v3215 = vadd.f32 0.0, %v3214
      %v3216 = vpop.f32.mrb[0].mxu0
      %v3217 = vadd.f32 0.0, %v3216
      %3218 = vmatprep.mubr.bf16.mxu0 %v2859
      %3219 = vmatmul.mubr.bf16.gmra.mrb[0].mxu0 %v2858
      %v3220 = vpop.f32.mrb[0].mxu0
      %v3221 = vadd.f32 0.0, %v3220
      %v3222 = vpop.f32.mrb[0].mxu0
      %v3223 = vadd.f32 0.0, %v3222
      %v3224 = vpop.f32.mrb[0].mxu0
      %v3225 = vadd.f32 0.0, %v3224
      %v3226 = vpop.f32.mrb[0].mxu0
      %v3227 = vadd.f32 0.0, %v3226
      %3228 = vmatprep.mubr.bf16.mxu0 %v2861
      %3229 = vmatmul.mubr.bf16.gmra.mrb[0].mxu0 %v2860
      %v3230 = vpop.f32.mrb[0].mxu0
      %v3231 = vadd.f32 0.0, %v3230
      %v3232 = vpop.f32.mrb[0].mxu0
      %v3233 = vadd.f32 0.0, %v3232
      %v3234 = vpop.f32.mrb[0].mxu0
      %v3235 = vadd.f32 0.0, %v3234
      %v3236 = vpop.f32.mrb[0].mxu0
      %v3237 = vadd.f32 0.0, %v3236
      %3238 = vmatprep.mubr.bf16.mxu0 %v2863
      %3239 = vmatmul.mubr.bf16.gmra.mrb[0].mxu0 %v2862
      %v3240 = vpop.f32.mrb[0].mxu0
      %v3241 = vadd.f32 0.0, %v3240
      %v3242 = vpop.f32.mrb[0].mxu0
      %v3243 = vadd.f32 0.0, %v3242
      %v3244 = vpop.f32.mrb[0].mxu0
      %v3245 = vadd.f32 0.0, %v3244
      %v3246 = vpop.f32.mrb[0].mxu0
      %v3247 = vadd.f32 0.0, %v3246
      %3248 = vdwg.mxu0
      %v3249 = vadd.f32 %v2602, %v3091
      %v3250 = vadd.f32 %v2603, %v3093
      %v3251 = vadd.f32 %v2604, %v3095
      %v3252 = vadd.f32 %v2605, %v3097
      %v3253 = vadd.f32 %v2606, %v3101
      %v3254 = vadd.f32 %v2607, %v3103
      %v3255 = vadd.f32 %v2608, %v3105
      %v3256 = vadd.f32 %v2609, %v3107
      %v3257 = vadd.f32 %v2610, %v3111
      %v3258 = vadd.f32 %v2611, %v3113
      %v3259 = vadd.f32 %v2612, %v3115
      %v3260 = vadd.f32 %v2613, %v3117
      %v3261 = vadd.f32 %v2614, %v3121
      %v3262 = vadd.f32 %v2615, %v3123
      %v3263 = vadd.f32 %v2616, %v3125
      %v3264 = vadd.f32 %v2617, %v3127
      %v3265 = vadd.f32 %v2618, %v3131
      %v3266 = vadd.f32 %v2619, %v3133
      %v3267 = vadd.f32 %v2620, %v3135
      %v3268 = vadd.f32 %v2621, %v3137
      %v3269 = vadd.f32 %v2622, %v3141
      %v3270 = vadd.f32 %v2623, %v3143
      %v3271 = vadd.f32 %v2624, %v3145
      %v3272 = vadd.f32 %v2625, %v3147
      %v3273 = vadd.f32 %v2626, %v3151
      %v3274 = vadd.f32 %v2627, %v3153
      %v3275 = vadd.f32 %v2628, %v3155
      %v3276 = vadd.f32 %v2629, %v3157
      %v3277 = vadd.f32 %v2630, %v3161
      %v3278 = vadd.f32 %v2631, %v3163
      %v3279 = vadd.f32 %v2632, %v3165
      %v3280 = vadd.f32 %v2633, %v3167
      %v3281 = vadd.f32 %v2634, %v3171
      %v3282 = vadd.f32 %v2635, %v3173
      %v3283 = vadd.f32 %v2636, %v3175
      %v3284 = vadd.f32 %v2637, %v3177
      %v3285 = vadd.f32 %v2638, %v3181
      %v3286 = vadd.f32 %v2639, %v3183
      %v3287 = vadd.f32 %v2640, %v3185
      %v3288 = vadd.f32 %v2641, %v3187
      %v3289 = vadd.f32 %v2642, %v3191
      %v3290 = vadd.f32 %v2643, %v3193
      %v3291 = vadd.f32 %v2644, %v3195
      %v3292 = vadd.f32 %v2645, %v3197
      %v3293 = vadd.f32 %v2646, %v3201
      %v3294 = vadd.f32 %v2647, %v3203
      %v3295 = vadd.f32 %v2648, %v3205
      %v3296 = vadd.f32 %v2649, %v3207
      %v3297 = vadd.f32 %v2650, %v3211
      %v3298 = vadd.f32 %v2651, %v3213
      %v3299 = vadd.f32 %v2652, %v3215
      %v3300 = vadd.f32 %v2653, %v3217
      %v3301 = vadd.f32 %v2654, %v3221
      %v3302 = vadd.f32 %v2655, %v3223
      %v3303 = vadd.f32 %v2656, %v3225
      %v3304 = vadd.f32 %v2657, %v3227
      %v3305 = vadd.f32 %v2658, %v3231
      %v3306 = vadd.f32 %v2659, %v3233
      %v3307 = vadd.f32 %v2660, %v3235
      %v3308 = vadd.f32 %v2661, %v3237
      %v3309 = vadd.f32 %v2662, %v3241
      %v3310 = vadd.f32 %v2663, %v3243
      %v3311 = vadd.f32 %v2664, %v3245
      %v3312 = vadd.f32 %v2665, %v3247
      %3313 = vst [vmem:[%s209] sm:$0xff] %v3249
      %3314 = vst [vmem:[%s209 + $0x8] sm:$0xff] %v3250
      %3315 = vst [vmem:[%s209 + $0x10] sm:$0xff] %v3251
      %3316 = vst [vmem:[%s209 + $0x18] sm:$0xff] %v3252
      %3317 = vst [vmem:[%s209 + $0x20] sm:$0xff] %v3253
      %3318 = vst [vmem:[%s209 + $0x28] sm:$0xff] %v3254
      %3319 = vst [vmem:[%s209 + $0x30] sm:$0xff] %v3255
      %3320 = vst [vmem:[%s209 + $0x38] sm:$0xff] %v3256
      %3321 = vst [vmem:[%s209 + $0x40] sm:$0xff] %v3257
      %3322 = vst [vmem:[%s209 + $0x48] sm:$0xff] %v3258
      %3323 = vst [vmem:[%s209 + $0x50] sm:$0xff] %v3259
      %3324 = vst [vmem:[%s209 + $0x58] sm:$0xff] %v3260
      %3325 = vst [vmem:[%s209 + $0x60] sm:$0xff] %v3261
      %3326 = vst [vmem:[%s209 + $0x68] sm:$0xff] %v3262
      %3327 = vst [vmem:[%s209 + $0x70] sm:$0xff] %v3263
      %3328 = vst [vmem:[%s209 + $0x78] sm:$0xff] %v3264
      %3329 = vst [vmem:[%s209 + $0x80] sm:$0xff] %v3265
      %3330 = vst [vmem:[%s209 + $0x88] sm:$0xff] %v3266
      %3331 = vst [vmem:[%s209 + $0x90] sm:$0xff] %v3267
      %3332 = vst [vmem:[%s209 + $0x98] sm:$0xff] %v3268
      %3333 = vst [vmem:[%s209 + $0xa0] sm:$0xff] %v3269
      %3334 = vst [vmem:[%s209 + $0xa8] sm:$0xff] %v3270
      %3335 = vst [vmem:[%s209 + $0xb0] sm:$0xff] %v3271
      %3336 = vst [vmem:[%s209 + $0xb8] sm:$0xff] %v3272
      %3337 = vst [vmem:[%s209 + $0xc0] sm:$0xff] %v3273
      %3338 = vst [vmem:[%s209 + $0xc8] sm:$0xff] %v3274
      %3339 = vst [vmem:[%s209 + $0xd0] sm:$0xff] %v3275
      %3340 = vst [vmem:[%s209 + $0xd8] sm:$0xff] %v3276
      %3341 = vst [vmem:[%s209 + $0xe0] sm:$0xff] %v3277
      %3342 = vst [vmem:[%s209 + $0xe8] sm:$0xff] %v3278
      %3343 = vst [vmem:[%s209 + $0xf0] sm:$0xff] %v3279
      %3344 = vst [vmem:[%s209 + $0xf8] sm:$0xff] %v3280
      %3345 = vst [vmem:[%s209 + $0x100] sm:$0xff] %v3281
      %3346 = vst [vmem:[%s209 + $0x108] sm:$0xff] %v3282
      %3347 = vst [vmem:[%s209 + $0x110] sm:$0xff] %v3283
      %3348 = vst [vmem:[%s209 + $0x118] sm:$0xff] %v3284
      %3349 = vst [vmem:[%s209 + $0x120] sm:$0xff] %v3285
      %3350 = vst [vmem:[%s209 + $0x128] sm:$0xff] %v3286
      %3351 = vst [vmem:[%s209 + $0x130] sm:$0xff] %v3287
      %3352 = vst [vmem:[%s209 + $0x138] sm:$0xff] %v3288
      %3353 = vst [vmem:[%s209 + $0x140] sm:$0xff] %v3289
      %3354 = vst [vmem:[%s209 + $0x148] sm:$0xff] %v3290
      %3355 = vst [vmem:[%s209 + $0x150] sm:$0xff] %v3291
      %3356 = vst [vmem:[%s209 + $0x158] sm:$0xff] %v3292
      %3357 = vst [vmem:[%s209 + $0x160] sm:$0xff] %v3293
      %3358 = vst [vmem:[%s209 + $0x168] sm:$0xff] %v3294
      %3359 = vst [vmem:[%s209 + $0x170] sm:$0xff] %v3295
      %3360 = vst [vmem:[%s209 + $0x178] sm:$0xff] %v3296
      %3361 = vst [vmem:[%s209 + $0x180] sm:$0xff] %v3297
      %3362 = vst [vmem:[%s209 + $0x188] sm:$0xff] %v3298
      %3363 = vst [vmem:[%s209 + $0x190] sm:$0xff] %v3299
      %3364 = vst [vmem:[%s209 + $0x198] sm:$0xff] %v3300
      %3365 = vst [vmem:[%s209 + $0x1a0] sm:$0xff] %v3301
      %3366 = vst [vmem:[%s209 + $0x1a8] sm:$0xff] %v3302
      %3367 = vst [vmem:[%s209 + $0x1b0] sm:$0xff] %v3303
      %3368 = vst [vmem:[%s209 + $0x1b8] sm:$0xff] %v3304
      %3369 = vst [vmem:[%s209 + $0x1c0] sm:$0xff] %v3305
      %3370 = vst [vmem:[%s209 + $0x1c8] sm:$0xff] %v3306
      %3371 = vst [vmem:[%s209 + $0x1d0] sm:$0xff] %v3307
      %3372 = vst [vmem:[%s209 + $0x1d8] sm:$0xff] %v3308
      %3373 = vst [vmem:[%s209 + $0x1e0] sm:$0xff] %v3309
      %3374 = vst [vmem:[%s209 + $0x1e8] sm:$0xff] %v3310
      %3375 = vst [vmem:[%s209 + $0x1f0] sm:$0xff] %v3311
      %3376 = vst [vmem:[%s209 + $0x1f8] sm:$0xff] %v3312
      %v3377 = vld [vmem:[%s209] sm:$0xff]
      %v3378 = vld [vmem:[%s209 + $0x8] sm:$0xff]
      %v3379 = vld [vmem:[%s209 + $0x10] sm:$0xff]
      %v3380 = vld [vmem:[%s209 + $0x18] sm:$0xff]
      %v3381 = vld [vmem:[%s209 + $0x20] sm:$0xff]
      %v3382 = vld [vmem:[%s209 + $0x28] sm:$0xff]
      %v3383 = vld [vmem:[%s209 + $0x30] sm:$0xff]
      %v3384 = vld [vmem:[%s209 + $0x38] sm:$0xff]
      %v3385 = vld [vmem:[%s209 + $0x40] sm:$0xff]
      %v3386 = vld [vmem:[%s209 + $0x48] sm:$0xff]
      %v3387 = vld [vmem:[%s209 + $0x50] sm:$0xff]
      %v3388 = vld [vmem:[%s209 + $0x58] sm:$0xff]
      %v3389 = vld [vmem:[%s209 + $0x60] sm:$0xff]
      %v3390 = vld [vmem:[%s209 + $0x68] sm:$0xff]
      %v3391 = vld [vmem:[%s209 + $0x70] sm:$0xff]
      %v3392 = vld [vmem:[%s209 + $0x78] sm:$0xff]
      %v3393 = vld [vmem:[%s209 + $0x80] sm:$0xff]
      %v3394 = vld [vmem:[%s209 + $0x88] sm:$0xff]
      %v3395 = vld [vmem:[%s209 + $0x90] sm:$0xff]
      %v3396 = vld [vmem:[%s209 + $0x98] sm:$0xff]
      %v3397 = vld [vmem:[%s209 + $0xa0] sm:$0xff]
      %v3398 = vld [vmem:[%s209 + $0xa8] sm:$0xff]
      %v3399 = vld [vmem:[%s209 + $0xb0] sm:$0xff]
      %v3400 = vld [vmem:[%s209 + $0xb8] sm:$0xff]
      %v3401 = vld [vmem:[%s209 + $0xc0] sm:$0xff]
      %v3402 = vld [vmem:[%s209 + $0xc8] sm:$0xff]
      %v3403 = vld [vmem:[%s209 + $0xd0] sm:$0xff]
      %v3404 = vld [vmem:[%s209 + $0xd8] sm:$0xff]
      %v3405 = vld [vmem:[%s209 + $0xe0] sm:$0xff]
      %v3406 = vld [vmem:[%s209 + $0xe8] sm:$0xff]
      %v3407 = vld [vmem:[%s209 + $0xf0] sm:$0xff]
      %v3408 = vld [vmem:[%s209 + $0xf8] sm:$0xff]
      %v3409 = vld [vmem:[%s209 + $0x100] sm:$0xff]
      %v3410 = vld [vmem:[%s209 + $0x108] sm:$0xff]
      %v3411 = vld [vmem:[%s209 + $0x110] sm:$0xff]
      %v3412 = vld [vmem:[%s209 + $0x118] sm:$0xff]
      %v3413 = vld [vmem:[%s209 + $0x120] sm:$0xff]
      %v3414 = vld [vmem:[%s209 + $0x128] sm:$0xff]
      %v3415 = vld [vmem:[%s209 + $0x130] sm:$0xff]
      %v3416 = vld [vmem:[%s209 + $0x138] sm:$0xff]
      %v3417 = vld [vmem:[%s209 + $0x140] sm:$0xff]
      %v3418 = vld [vmem:[%s209 + $0x148] sm:$0xff]
      %v3419 = vld [vmem:[%s209 + $0x150] sm:$0xff]
      %v3420 = vld [vmem:[%s209 + $0x158] sm:$0xff]
      %v3421 = vld [vmem:[%s209 + $0x160] sm:$0xff]
      %v3422 = vld [vmem:[%s209 + $0x168] sm:$0xff]
      %v3423 = vld [vmem:[%s209 + $0x170] sm:$0xff]
      %v3424 = vld [vmem:[%s209 + $0x178] sm:$0xff]
      %v3425 = vld [vmem:[%s209 + $0x180] sm:$0xff]
      %v3426 = vld [vmem:[%s209 + $0x188] sm:$0xff]
      %v3427 = vld [vmem:[%s209 + $0x190] sm:$0xff]
      %v3428 = vld [vmem:[%s209 + $0x198] sm:$0xff]
      %v3429 = vld [vmem:[%s209 + $0x1a0] sm:$0xff]
      %v3430 = vld [vmem:[%s209 + $0x1a8] sm:$0xff]
      %v3431 = vld [vmem:[%s209 + $0x1b0] sm:$0xff]
      %v3432 = vld [vmem:[%s209 + $0x1b8] sm:$0xff]
      %v3433 = vld [vmem:[%s209 + $0x1c0] sm:$0xff]
      %v3434 = vld [vmem:[%s209 + $0x1c8] sm:$0xff]
      %v3435 = vld [vmem:[%s209 + $0x1d0] sm:$0xff]
      %v3436 = vld [vmem:[%s209 + $0x1d8] sm:$0xff]
      %v3437 = vld [vmem:[%s209 + $0x1e0] sm:$0xff]
      %v3438 = vld [vmem:[%s209 + $0x1e8] sm:$0xff]
      %v3439 = vld [vmem:[%s209 + $0x1f0] sm:$0xff]
      %v3440 = vld [vmem:[%s209 + $0x1f8] sm:$0xff]
      %s3441 = sadd.s32 %s2668, 152
      %s3442 = smul.addr %s3441, 4
      %s3443 = scalar_lea.vmem %s0, %s3442
      %v3444 = vld [vmem:[%s3443] sm:$0xff]
      %v3445 = vld [vmem:[%s3443 + $0x8] sm:$0xff]
      %v3446 = vld [vmem:[%s3443 + $0x10] sm:$0xff]
      %v3447 = vld [vmem:[%s3443 + $0x18] sm:$0xff]
      %v3448 = vld [vmem:[%s3443 + $0x20] sm:$0xff]
      %v3449 = vld [vmem:[%s3443 + $0x28] sm:$0xff]
      %v3450 = vld [vmem:[%s3443 + $0x30] sm:$0xff]
      %v3451 = vld [vmem:[%s3443 + $0x38] sm:$0xff]
      %v3452 = vld [vmem:[%s3443 + $0x40] sm:$0xff]
      %v3453 = vld [vmem:[%s3443 + $0x48] sm:$0xff]
      %v3454 = vld [vmem:[%s3443 + $0x50] sm:$0xff]
      %v3455 = vld [vmem:[%s3443 + $0x58] sm:$0xff]
      %v3456 = vld [vmem:[%s3443 + $0x60] sm:$0xff]
      %v3457 = vld [vmem:[%s3443 + $0x68] sm:$0xff]
      %v3458 = vld [vmem:[%s3443 + $0x70] sm:$0xff]
      %v3459 = vld [vmem:[%s3443 + $0x78] sm:$0xff]
      %v3460 = vld [vmem:[%s3443 + $0x80] sm:$0xff]
      %v3461 = vld [vmem:[%s3443 + $0x88] sm:$0xff]
      %v3462 = vld [vmem:[%s3443 + $0x90] sm:$0xff]
      %v3463 = vld [vmem:[%s3443 + $0x98] sm:$0xff]
      %v3464 = vld [vmem:[%s3443 + $0xa0] sm:$0xff]
      %v3465 = vld [vmem:[%s3443 + $0xa8] sm:$0xff]
      %v3466 = vld [vmem:[%s3443 + $0xb0] sm:$0xff]
      %v3467 = vld [vmem:[%s3443 + $0xb8] sm:$0xff]
      %v3468 = vld [vmem:[%s3443 + $0xc0] sm:$0xff]
      %v3469 = vld [vmem:[%s3443 + $0xc8] sm:$0xff]
      %v3470 = vld [vmem:[%s3443 + $0xd0] sm:$0xff]
      %v3471 = vld [vmem:[%s3443 + $0xd8] sm:$0xff]
      %v3472 = vld [vmem:[%s3443 + $0xe0] sm:$0xff]
      %v3473 = vld [vmem:[%s3443 + $0xe8] sm:$0xff]
      %v3474 = vld [vmem:[%s3443 + $0xf0] sm:$0xff]
      %v3475 = vld [vmem:[%s3443 + $0xf8] sm:$0xff]
      %s3476 = scalar_lea.vmem %s1, 1024
      %v3477 = vld [vmem:[%s3476] sm:$0xff]
      %v3478 = vld [vmem:[%s3476 + $0x8] sm:$0xff]
      %v3479 = vld [vmem:[%s3476 + $0x10] sm:$0xff]
      %v3480 = vld [vmem:[%s3476 + $0x18] sm:$0xff]
      %v3481 = vld [vmem:[%s3476 + $0x20] sm:$0xff]
      %v3482 = vld [vmem:[%s3476 + $0x28] sm:$0xff]
      %v3483 = vld [vmem:[%s3476 + $0x30] sm:$0xff]
      %v3484 = vld [vmem:[%s3476 + $0x38] sm:$0xff]
      %v3485 = vld [vmem:[%s3476 + $0x40] sm:$0xff]
      %v3486 = vld [vmem:[%s3476 + $0x48] sm:$0xff]
      %v3487 = vld [vmem:[%s3476 + $0x50] sm:$0xff]
      %v3488 = vld [vmem:[%s3476 + $0x58] sm:$0xff]
      %v3489 = vld [vmem:[%s3476 + $0x60] sm:$0xff]
      %v3490 = vld [vmem:[%s3476 + $0x68] sm:$0xff]
      %v3491 = vld [vmem:[%s3476 + $0x70] sm:$0xff]
      %v3492 = vld [vmem:[%s3476 + $0x78] sm:$0xff]
      %v3493 = vld [vmem:[%s3476 + $0x80] sm:$0xff]
      %v3494 = vld [vmem:[%s3476 + $0x88] sm:$0xff]
      %v3495 = vld [vmem:[%s3476 + $0x90] sm:$0xff]
      %v3496 = vld [vmem:[%s3476 + $0x98] sm:$0xff]
      %v3497 = vld [vmem:[%s3476 + $0xa0] sm:$0xff]
      %v3498 = vld [vmem:[%s3476 + $0xa8] sm:$0xff]
      %v3499 = vld [vmem:[%s3476 + $0xb0] sm:$0xff]
      %v3500 = vld [vmem:[%s3476 + $0xb8] sm:$0xff]
      %v3501 = vld [vmem:[%s3476 + $0xc0] sm:$0xff]
      %v3502 = vld [vmem:[%s3476 + $0xc8] sm:$0xff]
      %v3503 = vld [vmem:[%s3476 + $0xd0] sm:$0xff]
      %v3504 = vld [vmem:[%s3476 + $0xd8] sm:$0xff]
      %v3505 = vld [vmem:[%s3476 + $0xe0] sm:$0xff]
      %v3506 = vld [vmem:[%s3476 + $0xe8] sm:$0xff]
      %v3507 = vld [vmem:[%s3476 + $0xf0] sm:$0xff]
      %v3508 = vld [vmem:[%s3476 + $0xf8] sm:$0xff]
      %v3541 = vunpack.c.l.b16 %v3444
      %v3542 = vunpack.c.h.b16 %v3444
      %v3543 = vunpack.c.l.b16 %v3445
      %v3544 = vunpack.c.h.b16 %v3445
      %v3545 = vunpack.c.l.b16 %v3446
      %v3546 = vunpack.c.h.b16 %v3446
      %v3547 = vunpack.c.l.b16 %v3447
      %v3548 = vunpack.c.h.b16 %v3447
      %v3549 = vunpack.c.l.b16 %v3448
      %v3550 = vunpack.c.h.b16 %v3448
      %v3551 = vunpack.c.l.b16 %v3449
      %v3552 = vunpack.c.h.b16 %v3449
      %v3553 = vunpack.c.l.b16 %v3450
      %v3554 = vunpack.c.h.b16 %v3450
      %v3555 = vunpack.c.l.b16 %v3451
      %v3556 = vunpack.c.h.b16 %v3451
      %v3557 = vunpack.c.l.b16 %v3452
      %v3558 = vunpack.c.h.b16 %v3452
      %v3559 = vunpack.c.l.b16 %v3453
      %v3560 = vunpack.c.h.b16 %v3453
      %v3561 = vunpack.c.l.b16 %v3454
      %v3562 = vunpack.c.h.b16 %v3454
      %v3563 = vunpack.c.l.b16 %v3455
      %v3564 = vunpack.c.h.b16 %v3455
      %v3565 = vunpack.c.l.b16 %v3456
      %v3566 = vunpack.c.h.b16 %v3456
      %v3567 = vunpack.c.l.b16 %v3457
      %v3568 = vunpack.c.h.b16 %v3457
      %v3569 = vunpack.c.l.b16 %v3458
      %v3570 = vunpack.c.h.b16 %v3458
      %v3571 = vunpack.c.l.b16 %v3459
      %v3572 = vunpack.c.h.b16 %v3459
      %v3573 = vunpack.c.l.b16 %v3460
      %v3574 = vunpack.c.h.b16 %v3460
      %v3575 = vunpack.c.l.b16 %v3461
      %v3576 = vunpack.c.h.b16 %v3461
      %v3577 = vunpack.c.l.b16 %v3462
      %v3578 = vunpack.c.h.b16 %v3462
      %v3579 = vunpack.c.l.b16 %v3463
      %v3580 = vunpack.c.h.b16 %v3463
      %v3581 = vunpack.c.l.b16 %v3464
      %v3582 = vunpack.c.h.b16 %v3464
      %v3583 = vunpack.c.l.b16 %v3465
      %v3584 = vunpack.c.h.b16 %v3465
      %v3585 = vunpack.c.l.b16 %v3466
      %v3586 = vunpack.c.h.b16 %v3466
      %v3587 = vunpack.c.l.b16 %v3467
      %v3588 = vunpack.c.h.b16 %v3467
      %v3589 = vunpack.c.l.b16 %v3468
      %v3590 = vunpack.c.h.b16 %v3468
      %v3591 = vunpack.c.l.b16 %v3469
      %v3592 = vunpack.c.h.b16 %v3469
      %v3593 = vunpack.c.l.b16 %v3470
      %v3594 = vunpack.c.h.b16 %v3470
      %v3595 = vunpack.c.l.b16 %v3471
      %v3596 = vunpack.c.h.b16 %v3471
      %v3597 = vunpack.c.l.b16 %v3472
      %v3598 = vunpack.c.h.b16 %v3472
      %v3599 = vunpack.c.l.b16 %v3473
      %v3600 = vunpack.c.h.b16 %v3473
      %v3601 = vunpack.c.l.b16 %v3474
      %v3602 = vunpack.c.h.b16 %v3474
      %v3603 = vunpack.c.l.b16 %v3475
      %v3604 = vunpack.c.h.b16 %v3475
      %v3605 = vpack.c.b16 %v3543, %v3541
      %v3606 = vpack.c.b16 %v3544, %v3542
      %v3607 = vpack.c.b16 %v3547, %v3545
      %v3608 = vpack.c.b16 %v3548, %v3546
      %v3609 = vpack.c.b16 %v3551, %v3549
      %v3610 = vpack.c.b16 %v3552, %v3550
      %v3611 = vpack.c.b16 %v3555, %v3553
      %v3612 = vpack.c.b16 %v3556, %v3554
      %v3613 = vpack.c.b16 %v3559, %v3557
      %v3614 = vpack.c.b16 %v3560, %v3558
      %v3615 = vpack.c.b16 %v3563, %v3561
      %v3616 = vpack.c.b16 %v3564, %v3562
      %v3617 = vpack.c.b16 %v3567, %v3565
      %v3618 = vpack.c.b16 %v3568, %v3566
      %v3619 = vpack.c.b16 %v3571, %v3569
      %v3620 = vpack.c.b16 %v3572, %v3570
      %v3621 = vpack.c.b16 %v3575, %v3573
      %v3622 = vpack.c.b16 %v3576, %v3574
      %v3623 = vpack.c.b16 %v3579, %v3577
      %v3624 = vpack.c.b16 %v3580, %v3578
      %v3625 = vpack.c.b16 %v3583, %v3581
      %v3626 = vpack.c.b16 %v3584, %v3582
      %v3627 = vpack.c.b16 %v3587, %v3585
      %v3628 = vpack.c.b16 %v3588, %v3586
      %v3629 = vpack.c.b16 %v3591, %v3589
      %v3630 = vpack.c.b16 %v3592, %v3590
      %v3631 = vpack.c.b16 %v3595, %v3593
      %v3632 = vpack.c.b16 %v3596, %v3594
      %v3633 = vpack.c.b16 %v3599, %v3597
      %v3634 = vpack.c.b16 %v3600, %v3598
      %v3635 = vpack.c.b16 %v3603, %v3601
      %v3636 = vpack.c.b16 %v3604, %v3602
      %v3701 = vunpack.c.l.b16 %v3477
      %v3702 = vunpack.c.h.b16 %v3477
      %v3703 = vunpack.c.l.b16 %v3478
      %v3704 = vunpack.c.h.b16 %v3478
      %v3705 = vunpack.c.l.b16 %v3479
      %v3706 = vunpack.c.h.b16 %v3479
      %v3707 = vunpack.c.l.b16 %v3480
      %v3708 = vunpack.c.h.b16 %v3480
      %v3709 = vunpack.c.l.b16 %v3481
      %v3710 = vunpack.c.h.b16 %v3481
      %v3711 = vunpack.c.l.b16 %v3482
      %v3712 = vunpack.c.h.b16 %v3482
      %v3713 = vunpack.c.l.b16 %v3483
      %v3714 = vunpack.c.h.b16 %v3483
      %v3715 = vunpack.c.l.b16 %v3484
      %v3716 = vunpack.c.h.b16 %v3484
      %v3717 = vunpack.c.l.b16 %v3485
      %v3718 = vunpack.c.h.b16 %v3485
      %v3719 = vunpack.c.l.b16 %v3486
      %v3720 = vunpack.c.h.b16 %v3486
      %v3721 = vunpack.c.l.b16 %v3487
      %v3722 = vunpack.c.h.b16 %v3487
      %v3723 = vunpack.c.l.b16 %v3488
      %v3724 = vunpack.c.h.b16 %v3488
      %v3725 = vunpack.c.l.b16 %v3489
      %v3726 = vunpack.c.h.b16 %v3489
      %v3727 = vunpack.c.l.b16 %v3490
      %v3728 = vunpack.c.h.b16 %v3490
      %v3729 = vunpack.c.l.b16 %v3491
      %v3730 = vunpack.c.h.b16 %v3491
      %v3731 = vunpack.c.l.b16 %v3492
      %v3732 = vunpack.c.h.b16 %v3492
      %v3733 = vunpack.c.l.b16 %v3493
      %v3734 = vunpack.c.h.b16 %v3493
      %v3735 = vunpack.c.l.b16 %v3494
      %v3736 = vunpack.c.h.b16 %v3494
      %v3737 = vunpack.c.l.b16 %v3495
      %v3738 = vunpack.c.h.b16 %v3495
      %v3739 = vunpack.c.l.b16 %v3496
      %v3740 = vunpack.c.h.b16 %v3496
      %v3741 = vunpack.c.l.b16 %v3497
      %v3742 = vunpack.c.h.b16 %v3497
      %v3743 = vunpack.c.l.b16 %v3498
      %v3744 = vunpack.c.h.b16 %v3498
      %v3745 = vunpack.c.l.b16 %v3499
      %v3746 = vunpack.c.h.b16 %v3499
      %v3747 = vunpack.c.l.b16 %v3500
      %v3748 = vunpack.c.h.b16 %v3500
      %v3749 = vunpack.c.l.b16 %v3501
      %v3750 = vunpack.c.h.b16 %v3501
      %v3751 = vunpack.c.l.b16 %v3502
      %v3752 = vunpack.c.h.b16 %v3502
      %v3753 = vunpack.c.l.b16 %v3503
      %v3754 = vunpack.c.h.b16 %v3503
      %v3755 = vunpack.c.l.b16 %v3504
      %v3756 = vunpack.c.h.b16 %v3504
      %v3757 = vunpack.c.l.b16 %v3505
      %v3758 = vunpack.c.h.b16 %v3505
      %v3759 = vunpack.c.l.b16 %v3506
      %v3760 = vunpack.c.h.b16 %v3506
      %v3761 = vunpack.c.l.b16 %v3507
      %v3762 = vunpack.c.h.b16 %v3507
      %v3763 = vunpack.c.l.b16 %v3508
      %v3764 = vunpack.c.h.b16 %v3508
      %v3765 = vpack.c.b16 %v3703, %v3701
      %v3766 = vpack.c.b16 %v3704, %v3702
      %v3767 = vpack.c.b16 %v3707, %v3705
      %v3768 = vpack.c.b16 %v3708, %v3706
      %v3769 = vpack.c.b16 %v3711, %v3709
      %v3770 = vpack.c.b16 %v3712, %v3710
      %v3771 = vpack.c.b16 %v3715, %v3713
      %v3772 = vpack.c.b16 %v3716, %v3714
      %v3773 = vpack.c.b16 %v3719, %v3717
      %v3774 = vpack.c.b16 %v3720, %v3718
      %v3775 = vpack.c.b16 %v3723, %v3721
      %v3776 = vpack.c.b16 %v3724, %v3722
      %v3777 = vpack.c.b16 %v3727, %v3725
      %v3778 = vpack.c.b16 %v3728, %v3726
      %v3779 = vpack.c.b16 %v3731, %v3729
      %v3780 = vpack.c.b16 %v3732, %v3730
      %v3781 = vpack.c.b16 %v3735, %v3733
      %v3782 = vpack.c.b16 %v3736, %v3734
      %v3783 = vpack.c.b16 %v3739, %v3737
      %v3784 = vpack.c.b16 %v3740, %v3738
      %v3785 = vpack.c.b16 %v3743, %v3741
      %v3786 = vpack.c.b16 %v3744, %v3742
      %v3787 = vpack.c.b16 %v3747, %v3745
      %v3788 = vpack.c.b16 %v3748, %v3746
      %v3789 = vpack.c.b16 %v3751, %v3749
      %v3790 = vpack.c.b16 %v3752, %v3750
      %v3791 = vpack.c.b16 %v3755, %v3753
      %v3792 = vpack.c.b16 %v3756, %v3754
      %v3793 = vpack.c.b16 %v3759, %v3757
      %v3794 = vpack.c.b16 %v3760, %v3758
      %v3795 = vpack.c.b16 %v3763, %v3761
      %v3796 = vpack.c.b16 %v3764, %v3762
      %3829 = vmatprep.subr.bf16.mxu0 %v3766
      %3830 = vmatpush1.bf16.msra.mxu0 %v3765
      %3831 = vmatprep.subr.bf16.mxu0 %v3768
      %3832 = vmatpush1.bf16.msra.mxu0 %v3767
      %3833 = vmatprep.subr.bf16.mxu0 %v3770
      %3834 = vmatpush1.bf16.msra.mxu0 %v3769
      %3835 = vmatprep.subr.bf16.mxu0 %v3772
      %3836 = vmatpush1.bf16.msra.mxu0 %v3771
      %3837 = vmatprep.subr.bf16.mxu0 %v3774
      %3838 = vmatpush1.bf16.msra.mxu0 %v3773
      %3839 = vmatprep.subr.bf16.mxu0 %v3776
      %3840 = vmatpush1.bf16.msra.mxu0 %v3775
      %3841 = vmatprep.subr.bf16.mxu0 %v3778
      %3842 = vmatpush1.bf16.msra.mxu0 %v3777
      %3843 = vmatprep.subr.bf16.mxu0 %v3780
      %3844 = vmatpush1.bf16.msra.mxu0 %v3779
      %3845 = vmatprep.subr.bf16.mxu0 %v3782
      %3846 = vmatpush1.bf16.msra.mxu0 %v3781
      %3847 = vmatprep.subr.bf16.mxu0 %v3784
      %3848 = vmatpush1.bf16.msra.mxu0 %v3783
      %3849 = vmatprep.subr.bf16.mxu0 %v3786
      %3850 = vmatpush1.bf16.msra.mxu0 %v3785
      %3851 = vmatprep.subr.bf16.mxu0 %v3788
      %3852 = vmatpush1.bf16.msra.mxu0 %v3787
      %3853 = vmatprep.subr.bf16.mxu0 %v3790
      %3854 = vmatpush1.bf16.msra.mxu0 %v3789
      %3855 = vmatprep.subr.bf16.mxu0 %v3792
      %3856 = vmatpush1.bf16.msra.mxu0 %v3791
      %3857 = vmatprep.subr.bf16.mxu0 %v3794
      %3858 = vmatpush1.bf16.msra.mxu0 %v3793
      %3859 = vmatprep.subr.bf16.mxu0 %v3796
      %3860 = vmatpush1.bf16.msra.mxu0 %v3795
      %3861 = vmatprep.mubr.bf16.mxu0 %v3606
      %3862 = vmatmul.mubr.bf16.gmra.mrb[0].mxu0 %v3605
      %v3863 = vpop.f32.mrb[0].mxu0
      %v3864 = vadd.f32 0.0, %v3863
      %v3865 = vpop.f32.mrb[0].mxu0
      %v3866 = vadd.f32 0.0, %v3865
      %v3867 = vpop.f32.mrb[0].mxu0
      %v3868 = vadd.f32 0.0, %v3867
      %v3869 = vpop.f32.mrb[0].mxu0
      %v3870 = vadd.f32 0.0, %v3869
      %3871 = vmatprep.mubr.bf16.mxu0 %v3608
      %3872 = vmatmul.mubr.bf16.gmra.mrb[0].mxu0 %v3607
      %v3873 = vpop.f32.mrb[0].mxu0
      %v3874 = vadd.f32 0.0, %v3873
      %v3875 = vpop.f32.mrb[0].mxu0
      %v3876 = vadd.f32 0.0, %v3875
      %v3877 = vpop.f32.mrb[0].mxu0
      %v3878 = vadd.f32 0.0, %v3877
      %v3879 = vpop.f32.mrb[0].mxu0
      %v3880 = vadd.f32 0.0, %v3879
      %3881 = vmatprep.mubr.bf16.mxu0 %v3610
      %3882 = vmatmul.mubr.bf16.gmra.mrb[0].mxu0 %v3609
      %v3883 = vpop.f32.mrb[0].mxu0
      %v3884 = vadd.f32 0.0, %v3883
      %v3885 = vpop.f32.mrb[0].mxu0
      %v3886 = vadd.f32 0.0, %v3885
      %v3887 = vpop.f32.mrb[0].mxu0
      %v3888 = vadd.f32 0.0, %v3887
      %v3889 = vpop.f32.mrb[0].mxu0
      %v3890 = vadd.f32 0.0, %v3889
      %3891 = vmatprep.mubr.bf16.mxu0 %v3612
      %3892 = vmatmul.mubr.bf16.gmra.mrb[0].mxu0 %v3611
      %v3893 = vpop.f32.mrb[0].mxu0
      %v3894 = vadd.f32 0.0, %v3893
      %v3895 = vpop.f32.mrb[0].mxu0
      %v3896 = vadd.f32 0.0, %v3895
      %v3897 = vpop.f32.mrb[0].mxu0
      %v3898 = vadd.f32 0.0, %v3897
      %v3899 = vpop.f32.mrb[0].mxu0
      %v3900 = vadd.f32 0.0, %v3899
      %3901 = vmatprep.mubr.bf16.mxu0 %v3614
      %3902 = vmatmul.mubr.bf16.gmra.mrb[0].mxu0 %v3613
      %v3903 = vpop.f32.mrb[0].mxu0
      %v3904 = vadd.f32 0.0, %v3903
      %v3905 = vpop.f32.mrb[0].mxu0
      %v3906 = vadd.f32 0.0, %v3905
      %v3907 = vpop.f32.mrb[0].mxu0
      %v3908 = vadd.f32 0.0, %v3907
      %v3909 = vpop.f32.mrb[0].mxu0
      %v3910 = vadd.f32 0.0, %v3909
      %3911 = vmatprep.mubr.bf16.mxu0 %v3616
      %3912 = vmatmul.mubr.bf16.gmra.mrb[0].mxu0 %v3615
      %v3913 = vpop.f32.mrb[0].mxu0
      %v3914 = vadd.f32 0.0, %v3913
      %v3915 = vpop.f32.mrb[0].mxu0
      %v3916 = vadd.f32 0.0, %v3915
      %v3917 = vpop.f32.mrb[0].mxu0
      %v3918 = vadd.f32 0.0, %v3917
      %v3919 = vpop.f32.mrb[0].mxu0
      %v3920 = vadd.f32 0.0, %v3919
      %3921 = vmatprep.mubr.bf16.mxu0 %v3618
      %3922 = vmatmul.mubr.bf16.gmra.mrb[0].mxu0 %v3617
      %v3923 = vpop.f32.mrb[0].mxu0
      %v3924 = vadd.f32 0.0, %v3923
      %v3925 = vpop.f32.mrb[0].mxu0
      %v3926 = vadd.f32 0.0, %v3925
      %v3927 = vpop.f32.mrb[0].mxu0
      %v3928 = vadd.f32 0.0, %v3927
      %v3929 = vpop.f32.mrb[0].mxu0
      %v3930 = vadd.f32 0.0, %v3929
      %3931 = vmatprep.mubr.bf16.mxu0 %v3620
      %3932 = vmatmul.mubr.bf16.gmra.mrb[0].mxu0 %v3619
      %v3933 = vpop.f32.mrb[0].mxu0
      %v3934 = vadd.f32 0.0, %v3933
      %v3935 = vpop.f32.mrb[0].mxu0
      %v3936 = vadd.f32 0.0, %v3935
      %v3937 = vpop.f32.mrb[0].mxu0
      %v3938 = vadd.f32 0.0, %v3937
      %v3939 = vpop.f32.mrb[0].mxu0
      %v3940 = vadd.f32 0.0, %v3939
      %3941 = vmatprep.mubr.bf16.mxu0 %v3622
      %3942 = vmatmul.mubr.bf16.gmra.mrb[0].mxu0 %v3621
      %v3943 = vpop.f32.mrb[0].mxu0
      %v3944 = vadd.f32 0.0, %v3943
      %v3945 = vpop.f32.mrb[0].mxu0
      %v3946 = vadd.f32 0.0, %v3945
      %v3947 = vpop.f32.mrb[0].mxu0
      %v3948 = vadd.f32 0.0, %v3947
      %v3949 = vpop.f32.mrb[0].mxu0
      %v3950 = vadd.f32 0.0, %v3949
      %3951 = vmatprep.mubr.bf16.mxu0 %v3624
      %3952 = vmatmul.mubr.bf16.gmra.mrb[0].mxu0 %v3623
      %v3953 = vpop.f32.mrb[0].mxu0
      %v3954 = vadd.f32 0.0, %v3953
      %v3955 = vpop.f32.mrb[0].mxu0
      %v3956 = vadd.f32 0.0, %v3955
      %v3957 = vpop.f32.mrb[0].mxu0
      %v3958 = vadd.f32 0.0, %v3957
      %v3959 = vpop.f32.mrb[0].mxu0
      %v3960 = vadd.f32 0.0, %v3959
      %3961 = vmatprep.mubr.bf16.mxu0 %v3626
      %3962 = vmatmul.mubr.bf16.gmra.mrb[0].mxu0 %v3625
      %v3963 = vpop.f32.mrb[0].mxu0
      %v3964 = vadd.f32 0.0, %v3963
      %v3965 = vpop.f32.mrb[0].mxu0
      %v3966 = vadd.f32 0.0, %v3965
      %v3967 = vpop.f32.mrb[0].mxu0
      %v3968 = vadd.f32 0.0, %v3967
      %v3969 = vpop.f32.mrb[0].mxu0
      %v3970 = vadd.f32 0.0, %v3969
      %3971 = vmatprep.mubr.bf16.mxu0 %v3628
      %3972 = vmatmul.mubr.bf16.gmra.mrb[0].mxu0 %v3627
      %v3973 = vpop.f32.mrb[0].mxu0
      %v3974 = vadd.f32 0.0, %v3973
      %v3975 = vpop.f32.mrb[0].mxu0
      %v3976 = vadd.f32 0.0, %v3975
      %v3977 = vpop.f32.mrb[0].mxu0
      %v3978 = vadd.f32 0.0, %v3977
      %v3979 = vpop.f32.mrb[0].mxu0
      %v3980 = vadd.f32 0.0, %v3979
      %3981 = vmatprep.mubr.bf16.mxu0 %v3630
      %3982 = vmatmul.mubr.bf16.gmra.mrb[0].mxu0 %v3629
      %v3983 = vpop.f32.mrb[0].mxu0
      %v3984 = vadd.f32 0.0, %v3983
      %v3985 = vpop.f32.mrb[0].mxu0
      %v3986 = vadd.f32 0.0, %v3985
      %v3987 = vpop.f32.mrb[0].mxu0
      %v3988 = vadd.f32 0.0, %v3987
      %v3989 = vpop.f32.mrb[0].mxu0
      %v3990 = vadd.f32 0.0, %v3989
      %3991 = vmatprep.mubr.bf16.mxu0 %v3632
      %3992 = vmatmul.mubr.bf16.gmra.mrb[0].mxu0 %v3631
      %v3993 = vpop.f32.mrb[0].mxu0
      %v3994 = vadd.f32 0.0, %v3993
      %v3995 = vpop.f32.mrb[0].mxu0
      %v3996 = vadd.f32 0.0, %v3995
      %v3997 = vpop.f32.mrb[0].mxu0
      %v3998 = vadd.f32 0.0, %v3997
      %v3999 = vpop.f32.mrb[0].mxu0
      %v4000 = vadd.f32 0.0, %v3999
      %4001 = vmatprep.mubr.bf16.mxu0 %v3634
      %4002 = vmatmul.mubr.bf16.gmra.mrb[0].mxu0 %v3633
      %v4003 = vpop.f32.mrb[0].mxu0
      %v4004 = vadd.f32 0.0, %v4003
      %v4005 = vpop.f32.mrb[0].mxu0
      %v4006 = vadd.f32 0.0, %v4005
      %v4007 = vpop.f32.mrb[0].mxu0
      %v4008 = vadd.f32 0.0, %v4007
      %v4009 = vpop.f32.mrb[0].mxu0
      %v4010 = vadd.f32 0.0, %v4009
      %4011 = vmatprep.mubr.bf16.mxu0 %v3636
      %4012 = vmatmul.mubr.bf16.gmra.mrb[0].mxu0 %v3635
      %v4013 = vpop.f32.mrb[0].mxu0
      %v4014 = vadd.f32 0.0, %v4013
      %v4015 = vpop.f32.mrb[0].mxu0
      %v4016 = vadd.f32 0.0, %v4015
      %v4017 = vpop.f32.mrb[0].mxu0
      %v4018 = vadd.f32 0.0, %v4017
      %v4019 = vpop.f32.mrb[0].mxu0
      %v4020 = vadd.f32 0.0, %v4019
      %4021 = vdwg.mxu0
      %v4022 = vadd.f32 %v3377, %v3864
      %v4023 = vadd.f32 %v3378, %v3866
      %v4024 = vadd.f32 %v3379, %v3868
      %v4025 = vadd.f32 %v3380, %v3870
      %v4026 = vadd.f32 %v3381, %v3874
      %v4027 = vadd.f32 %v3382, %v3876
      %v4028 = vadd.f32 %v3383, %v3878
      %v4029 = vadd.f32 %v3384, %v3880
      %v4030 = vadd.f32 %v3385, %v3884
      %v4031 = vadd.f32 %v3386, %v3886
      %v4032 = vadd.f32 %v3387, %v3888
      %v4033 = vadd.f32 %v3388, %v3890
      %v4034 = vadd.f32 %v3389, %v3894
      %v4035 = vadd.f32 %v3390, %v3896
      %v4036 = vadd.f32 %v3391, %v3898
      %v4037 = vadd.f32 %v3392, %v3900
      %v4038 = vadd.f32 %v3393, %v3904
      %v4039 = vadd.f32 %v3394, %v3906
      %v4040 = vadd.f32 %v3395, %v3908
      %v4041 = vadd.f32 %v3396, %v3910
      %v4042 = vadd.f32 %v3397, %v3914
      %v4043 = vadd.f32 %v3398, %v3916
      %v4044 = vadd.f32 %v3399, %v3918
      %v4045 = vadd.f32 %v3400, %v3920
      %v4046 = vadd.f32 %v3401, %v3924
      %v4047 = vadd.f32 %v3402, %v3926
      %v4048 = vadd.f32 %v3403, %v3928
      %v4049 = vadd.f32 %v3404, %v3930
      %v4050 = vadd.f32 %v3405, %v3934
      %v4051 = vadd.f32 %v3406, %v3936
      %v4052 = vadd.f32 %v3407, %v3938
      %v4053 = vadd.f32 %v3408, %v3940
      %v4054 = vadd.f32 %v3409, %v3944
      %v4055 = vadd.f32 %v3410, %v3946
      %v4056 = vadd.f32 %v3411, %v3948
      %v4057 = vadd.f32 %v3412, %v3950
      %v4058 = vadd.f32 %v3413, %v3954
      %v4059 = vadd.f32 %v3414, %v3956
      %v4060 = vadd.f32 %v3415, %v3958
      %v4061 = vadd.f32 %v3416, %v3960
      %v4062 = vadd.f32 %v3417, %v3964
      %v4063 = vadd.f32 %v3418, %v3966
      %v4064 = vadd.f32 %v3419, %v3968
      %v4065 = vadd.f32 %v3420, %v3970
      %v4066 = vadd.f32 %v3421, %v3974
      %v4067 = vadd.f32 %v3422, %v3976
      %v4068 = vadd.f32 %v3423, %v3978
      %v4069 = vadd.f32 %v3424, %v3980
      %v4070 = vadd.f32 %v3425, %v3984
      %v4071 = vadd.f32 %v3426, %v3986
      %v4072 = vadd.f32 %v3427, %v3988
      %v4073 = vadd.f32 %v3428, %v3990
      %v4074 = vadd.f32 %v3429, %v3994
      %v4075 = vadd.f32 %v3430, %v3996
      %v4076 = vadd.f32 %v3431, %v3998
      %v4077 = vadd.f32 %v3432, %v4000
      %v4078 = vadd.f32 %v3433, %v4004
      %v4079 = vadd.f32 %v3434, %v4006
      %v4080 = vadd.f32 %v3435, %v4008
      %v4081 = vadd.f32 %v3436, %v4010
      %v4082 = vadd.f32 %v3437, %v4014
      %v4083 = vadd.f32 %v3438, %v4016
      %v4084 = vadd.f32 %v3439, %v4018
      %v4085 = vadd.f32 %v3440, %v4020
      %4086 = vst [vmem:[%s209] sm:$0xff] %v4022
      %4087 = vst [vmem:[%s209 + $0x8] sm:$0xff] %v4023
      %4088 = vst [vmem:[%s209 + $0x10] sm:$0xff] %v4024
      %4089 = vst [vmem:[%s209 + $0x18] sm:$0xff] %v4025
      %4090 = vst [vmem:[%s209 + $0x20] sm:$0xff] %v4026
      %4091 = vst [vmem:[%s209 + $0x28] sm:$0xff] %v4027
      %4092 = vst [vmem:[%s209 + $0x30] sm:$0xff] %v4028
      %4093 = vst [vmem:[%s209 + $0x38] sm:$0xff] %v4029
      %4094 = vst [vmem:[%s209 + $0x40] sm:$0xff] %v4030
      %4095 = vst [vmem:[%s209 + $0x48] sm:$0xff] %v4031
      %4096 = vst [vmem:[%s209 + $0x50] sm:$0xff] %v4032
      %4097 = vst [vmem:[%s209 + $0x58] sm:$0xff] %v4033
      %4098 = vst [vmem:[%s209 + $0x60] sm:$0xff] %v4034
      %4099 = vst [vmem:[%s209 + $0x68] sm:$0xff] %v4035
      %4100 = vst [vmem:[%s209 + $0x70] sm:$0xff] %v4036
      %4101 = vst [vmem:[%s209 + $0x78] sm:$0xff] %v4037
      %4102 = vst [vmem:[%s209 + $0x80] sm:$0xff] %v4038
      %4103 = vst [vmem:[%s209 + $0x88] sm:$0xff] %v4039
      %4104 = vst [vmem:[%s209 + $0x90] sm:$0xff] %v4040
      %4105 = vst [vmem:[%s209 + $0x98] sm:$0xff] %v4041
      %4106 = vst [vmem:[%s209 + $0xa0] sm:$0xff] %v4042
      %4107 = vst [vmem:[%s209 + $0xa8] sm:$0xff] %v4043
      %4108 = vst [vmem:[%s209 + $0xb0] sm:$0xff] %v4044
      %4109 = vst [vmem:[%s209 + $0xb8] sm:$0xff] %v4045
      %4110 = vst [vmem:[%s209 + $0xc0] sm:$0xff] %v4046
      %4111 = vst [vmem:[%s209 + $0xc8] sm:$0xff] %v4047
      %4112 = vst [vmem:[%s209 + $0xd0] sm:$0xff] %v4048
      %4113 = vst [vmem:[%s209 + $0xd8] sm:$0xff] %v4049
      %4114 = vst [vmem:[%s209 + $0xe0] sm:$0xff] %v4050
      %4115 = vst [vmem:[%s209 + $0xe8] sm:$0xff] %v4051
      %4116 = vst [vmem:[%s209 + $0xf0] sm:$0xff] %v4052
      %4117 = vst [vmem:[%s209 + $0xf8] sm:$0xff] %v4053
      %4118 = vst [vmem:[%s209 + $0x100] sm:$0xff] %v4054
      %4119 = vst [vmem:[%s209 + $0x108] sm:$0xff] %v4055
      %4120 = vst [vmem:[%s209 + $0x110] sm:$0xff] %v4056
      %4121 = vst [vmem:[%s209 + $0x118] sm:$0xff] %v4057
      %4122 = vst [vmem:[%s209 + $0x120] sm:$0xff] %v4058
      %4123 = vst [vmem:[%s209 + $0x128] sm:$0xff] %v4059
      %4124 = vst [vmem:[%s209 + $0x130] sm:$0xff] %v4060
      %4125 = vst [vmem:[%s209 + $0x138] sm:$0xff] %v4061
      %4126 = vst [vmem:[%s209 + $0x140] sm:$0xff] %v4062
      %4127 = vst [vmem:[%s209 + $0x148] sm:$0xff] %v4063
      %4128 = vst [vmem:[%s209 + $0x150] sm:$0xff] %v4064
      %4129 = vst [vmem:[%s209 + $0x158] sm:$0xff] %v4065
      %4130 = vst [vmem:[%s209 + $0x160] sm:$0xff] %v4066
      %4131 = vst [vmem:[%s209 + $0x168] sm:$0xff] %v4067
      %4132 = vst [vmem:[%s209 + $0x170] sm:$0xff] %v4068
      %4133 = vst [vmem:[%s209 + $0x178] sm:$0xff] %v4069
      %4134 = vst [vmem:[%s209 + $0x180] sm:$0xff] %v4070
      %4135 = vst [vmem:[%s209 + $0x188] sm:$0xff] %v4071
      %4136 = vst [vmem:[%s209 + $0x190] sm:$0xff] %v4072
      %4137 = vst [vmem:[%s209 + $0x198] sm:$0xff] %v4073
      %4138 = vst [vmem:[%s209 + $0x1a0] sm:$0xff] %v4074
      %4139 = vst [vmem:[%s209 + $0x1a8] sm:$0xff] %v4075
      %4140 = vst [vmem:[%s209 + $0x1b0] sm:$0xff] %v4076
      %4141 = vst [vmem:[%s209 + $0x1b8] sm:$0xff] %v4077
      %4142 = vst [vmem:[%s209 + $0x1c0] sm:$0xff] %v4078
      %4143 = vst [vmem:[%s209 + $0x1c8] sm:$0xff] %v4079
      %4144 = vst [vmem:[%s209 + $0x1d0] sm:$0xff] %v4080
      %4145 = vst [vmem:[%s209 + $0x1d8] sm:$0xff] %v4081
      %4146 = vst [vmem:[%s209 + $0x1e0] sm:$0xff] %v4082
      %4147 = vst [vmem:[%s209 + $0x1e8] sm:$0xff] %v4083
      %4148 = vst [vmem:[%s209 + $0x1f0] sm:$0xff] %v4084
      %4149 = vst [vmem:[%s209 + $0x1f8] sm:$0xff] %v4085
      %v4150 = vld [vmem:[%s209] sm:$0xff]
      %v4151 = vld [vmem:[%s209 + $0x8] sm:$0xff]
      %v4152 = vld [vmem:[%s209 + $0x10] sm:$0xff]
      %v4153 = vld [vmem:[%s209 + $0x18] sm:$0xff]
      %v4154 = vld [vmem:[%s209 + $0x20] sm:$0xff]
      %v4155 = vld [vmem:[%s209 + $0x28] sm:$0xff]
      %v4156 = vld [vmem:[%s209 + $0x30] sm:$0xff]
      %v4157 = vld [vmem:[%s209 + $0x38] sm:$0xff]
      %v4158 = vld [vmem:[%s209 + $0x40] sm:$0xff]
      %v4159 = vld [vmem:[%s209 + $0x48] sm:$0xff]
      %v4160 = vld [vmem:[%s209 + $0x50] sm:$0xff]
      %v4161 = vld [vmem:[%s209 + $0x58] sm:$0xff]
      %v4162 = vld [vmem:[%s209 + $0x60] sm:$0xff]
      %v4163 = vld [vmem:[%s209 + $0x68] sm:$0xff]
      %v4164 = vld [vmem:[%s209 + $0x70] sm:$0xff]
      %v4165 = vld [vmem:[%s209 + $0x78] sm:$0xff]
      %v4166 = vld [vmem:[%s209 + $0x80] sm:$0xff]
      %v4167 = vld [vmem:[%s209 + $0x88] sm:$0xff]
      %v4168 = vld [vmem:[%s209 + $0x90] sm:$0xff]
      %v4169 = vld [vmem:[%s209 + $0x98] sm:$0xff]
      %v4170 = vld [vmem:[%s209 + $0xa0] sm:$0xff]
      %v4171 = vld [vmem:[%s209 + $0xa8] sm:$0xff]
      %v4172 = vld [vmem:[%s209 + $0xb0] sm:$0xff]
      %v4173 = vld [vmem:[%s209 + $0xb8] sm:$0xff]
      %v4174 = vld [vmem:[%s209 + $0xc0] sm:$0xff]
      %v4175 = vld [vmem:[%s209 + $0xc8] sm:$0xff]
      %v4176 = vld [vmem:[%s209 + $0xd0] sm:$0xff]
      %v4177 = vld [vmem:[%s209 + $0xd8] sm:$0xff]
      %v4178 = vld [vmem:[%s209 + $0xe0] sm:$0xff]
      %v4179 = vld [vmem:[%s209 + $0xe8] sm:$0xff]
      %v4180 = vld [vmem:[%s209 + $0xf0] sm:$0xff]
      %v4181 = vld [vmem:[%s209 + $0xf8] sm:$0xff]
      %v4182 = vld [vmem:[%s209 + $0x100] sm:$0xff]
      %v4183 = vld [vmem:[%s209 + $0x108] sm:$0xff]
      %v4184 = vld [vmem:[%s209 + $0x110] sm:$0xff]
      %v4185 = vld [vmem:[%s209 + $0x118] sm:$0xff]
      %v4186 = vld [vmem:[%s209 + $0x120] sm:$0xff]
      %v4187 = vld [vmem:[%s209 + $0x128] sm:$0xff]
      %v4188 = vld [vmem:[%s209 + $0x130] sm:$0xff]
      %v4189 = vld [vmem:[%s209 + $0x138] sm:$0xff]
      %v4190 = vld [vmem:[%s209 + $0x140] sm:$0xff]
      %v4191 = vld [vmem:[%s209 + $0x148] sm:$0xff]
      %v4192 = vld [vmem:[%s209 + $0x150] sm:$0xff]
      %v4193 = vld [vmem:[%s209 + $0x158] sm:$0xff]
      %v4194 = vld [vmem:[%s209 + $0x160] sm:$0xff]
      %v4195 = vld [vmem:[%s209 + $0x168] sm:$0xff]
      %v4196 = vld [vmem:[%s209 + $0x170] sm:$0xff]
      %v4197 = vld [vmem:[%s209 + $0x178] sm:$0xff]
      %v4198 = vld [vmem:[%s209 + $0x180] sm:$0xff]
      %v4199 = vld [vmem:[%s209 + $0x188] sm:$0xff]
      %v4200 = vld [vmem:[%s209 + $0x190] sm:$0xff]
      %v4201 = vld [vmem:[%s209 + $0x198] sm:$0xff]
      %v4202 = vld [vmem:[%s209 + $0x1a0] sm:$0xff]
      %v4203 = vld [vmem:[%s209 + $0x1a8] sm:$0xff]
      %v4204 = vld [vmem:[%s209 + $0x1b0] sm:$0xff]
      %v4205 = vld [vmem:[%s209 + $0x1b8] sm:$0xff]
      %v4206 = vld [vmem:[%s209 + $0x1c0] sm:$0xff]
      %v4207 = vld [vmem:[%s209 + $0x1c8] sm:$0xff]
      %v4208 = vld [vmem:[%s209 + $0x1d0] sm:$0xff]
      %v4209 = vld [vmem:[%s209 + $0x1d8] sm:$0xff]
      %v4210 = vld [vmem:[%s209 + $0x1e0] sm:$0xff]
      %v4211 = vld [vmem:[%s209 + $0x1e8] sm:$0xff]
      %v4212 = vld [vmem:[%s209 + $0x1f0] sm:$0xff]
      %v4213 = vld [vmem:[%s209 + $0x1f8] sm:$0xff]
      %s4214 = sadd.s32 %s2668, 304
      %s4215 = smul.addr %s4214, 4
      %s4216 = scalar_lea.vmem %s0, %s4215
      %v4217 = vld [vmem:[%s4216] sm:$0xff]
      %v4218 = vld [vmem:[%s4216 + $0x8] sm:$0xff]
      %v4219 = vld [vmem:[%s4216 + $0x10] sm:$0xff]
      %v4220 = vld [vmem:[%s4216 + $0x18] sm:$0xff]
      %v4221 = vld [vmem:[%s4216 + $0x20] sm:$0xff]
      %v4222 = vld [vmem:[%s4216 + $0x28] sm:$0xff]
      %v4223 = vld [vmem:[%s4216 + $0x30] sm:$0xff]
      %v4224 = vld [vmem:[%s4216 + $0x38] sm:$0xff]
      %v4225 = vld [vmem:[%s4216 + $0x40] sm:$0xff]
      %v4226 = vld [vmem:[%s4216 + $0x48] sm:$0xff]
      %v4227 = vld [vmem:[%s4216 + $0x50] sm:$0xff]
      %v4228 = vld [vmem:[%s4216 + $0x58] sm:$0xff]
      %v4229 = vld [vmem:[%s4216 + $0x60] sm:$0xff]
      %v4230 = vld [vmem:[%s4216 + $0x68] sm:$0xff]
      %v4231 = vld [vmem:[%s4216 + $0x70] sm:$0xff]
      %v4232 = vld [vmem:[%s4216 + $0x78] sm:$0xff]
      %v4233 = vld [vmem:[%s4216 + $0x80] sm:$0xff]
      %v4234 = vld [vmem:[%s4216 + $0x88] sm:$0xff]
      %v4235 = vld [vmem:[%s4216 + $0x90] sm:$0xff]
      %v4236 = vld [vmem:[%s4216 + $0x98] sm:$0xff]
      %v4237 = vld [vmem:[%s4216 + $0xa0] sm:$0xff]
      %v4238 = vld [vmem:[%s4216 + $0xa8] sm:$0xff]
      %v4239 = vld [vmem:[%s4216 + $0xb0] sm:$0xff]
      %v4240 = vld [vmem:[%s4216 + $0xb8] sm:$0xff]
      %v4241 = vld [vmem:[%s4216 + $0xc0] sm:$0xff]
      %v4242 = vld [vmem:[%s4216 + $0xc8] sm:$0xff]
      %v4243 = vld [vmem:[%s4216 + $0xd0] sm:$0xff]
      %v4244 = vld [vmem:[%s4216 + $0xd8] sm:$0xff]
      %v4245 = vld [vmem:[%s4216 + $0xe0] sm:$0xff]
      %v4246 = vld [vmem:[%s4216 + $0xe8] sm:$0xff]
      %v4247 = vld [vmem:[%s4216 + $0xf0] sm:$0xff]
      %v4248 = vld [vmem:[%s4216 + $0xf8] sm:$0xff]
      %s4249 = scalar_lea.vmem %s1, 1280
      %v4250 = vld [vmem:[%s4249] sm:$0xff]
      %v4251 = vld [vmem:[%s4249 + $0x8] sm:$0xff]
      %v4252 = vld [vmem:[%s4249 + $0x10] sm:$0xff]
      %v4253 = vld [vmem:[%s4249 + $0x18] sm:$0xff]
      %v4254 = vld [vmem:[%s4249 + $0x20] sm:$0xff]
      %v4255 = vld [vmem:[%s4249 + $0x28] sm:$0xff]
      %v4256 = vld [vmem:[%s4249 + $0x30] sm:$0xff]
      %v4257 = vld [vmem:[%s4249 + $0x38] sm:$0xff]
      %v4258 = vld [vmem:[%s4249 + $0x40] sm:$0xff]
      %v4259 = vld [vmem:[%s4249 + $0x48] sm:$0xff]
      %v4260 = vld [vmem:[%s4249 + $0x50] sm:$0xff]
      %v4261 = vld [vmem:[%s4249 + $0x58] sm:$0xff]
      %v4262 = vld [vmem:[%s4249 + $0x60] sm:$0xff]
      %v4263 = vld [vmem:[%s4249 + $0x68] sm:$0xff]
      %v4264 = vld [vmem:[%s4249 + $0x70] sm:$0xff]
      %v4265 = vld [vmem:[%s4249 + $0x78] sm:$0xff]
      %v4266 = vld [vmem:[%s4249 + $0x80] sm:$0xff]
      %v4267 = vld [vmem:[%s4249 + $0x88] sm:$0xff]
      %v4268 = vld [vmem:[%s4249 + $0x90] sm:$0xff]
      %v4269 = vld [vmem:[%s4249 + $0x98] sm:$0xff]
      %v4270 = vld [vmem:[%s4249 + $0xa0] sm:$0xff]
      %v4271 = vld [vmem:[%s4249 + $0xa8] sm:$0xff]
      %v4272 = vld [vmem:[%s4249 + $0xb0] sm:$0xff]
      %v4273 = vld [vmem:[%s4249 + $0xb8] sm:$0xff]
      %v4274 = vld [vmem:[%s4249 + $0xc0] sm:$0xff]
      %v4275 = vld [vmem:[%s4249 + $0xc8] sm:$0xff]
      %v4276 = vld [vmem:[%s4249 + $0xd0] sm:$0xff]
      %v4277 = vld [vmem:[%s4249 + $0xd8] sm:$0xff]
      %v4278 = vld [vmem:[%s4249 + $0xe0] sm:$0xff]
      %v4279 = vld [vmem:[%s4249 + $0xe8] sm:$0xff]
      %v4280 = vld [vmem:[%s4249 + $0xf0] sm:$0xff]
      %v4281 = vld [vmem:[%s4249 + $0xf8] sm:$0xff]
      %v4314 = vunpack.c.l.b16 %v4217
      %v4315 = vunpack.c.h.b16 %v4217
      %v4316 = vunpack.c.l.b16 %v4218
      %v4317 = vunpack.c.h.b16 %v4218
      %v4318 = vunpack.c.l.b16 %v4219
      %v4319 = vunpack.c.h.b16 %v4219
      %v4320 = vunpack.c.l.b16 %v4220
      %v4321 = vunpack.c.h.b16 %v4220
      %v4322 = vunpack.c.l.b16 %v4221
      %v4323 = vunpack.c.h.b16 %v4221
      %v4324 = vunpack.c.l.b16 %v4222
      %v4325 = vunpack.c.h.b16 %v4222
      %v4326 = vunpack.c.l.b16 %v4223
      %v4327 = vunpack.c.h.b16 %v4223
      %v4328 = vunpack.c.l.b16 %v4224
      %v4329 = vunpack.c.h.b16 %v4224
      %v4330 = vunpack.c.l.b16 %v4225
      %v4331 = vunpack.c.h.b16 %v4225
      %v4332 = vunpack.c.l.b16 %v4226
      %v4333 = vunpack.c.h.b16 %v4226
      %v4334 = vunpack.c.l.b16 %v4227
      %v4335 = vunpack.c.h.b16 %v4227
      %v4336 = vunpack.c.l.b16 %v4228
      %v4337 = vunpack.c.h.b16 %v4228
      %v4338 = vunpack.c.l.b16 %v4229
      %v4339 = vunpack.c.h.b16 %v4229
      %v4340 = vunpack.c.l.b16 %v4230
      %v4341 = vunpack.c.h.b16 %v4230
      %v4342 = vunpack.c.l.b16 %v4231
      %v4343 = vunpack.c.h.b16 %v4231
      %v4344 = vunpack.c.l.b16 %v4232
      %v4345 = vunpack.c.h.b16 %v4232
      %v4346 = vunpack.c.l.b16 %v4233
      %v4347 = vunpack.c.h.b16 %v4233
      %v4348 = vunpack.c.l.b16 %v4234
      %v4349 = vunpack.c.h.b16 %v4234
      %v4350 = vunpack.c.l.b16 %v4235
      %v4351 = vunpack.c.h.b16 %v4235
      %v4352 = vunpack.c.l.b16 %v4236
      %v4353 = vunpack.c.h.b16 %v4236
      %v4354 = vunpack.c.l.b16 %v4237
      %v4355 = vunpack.c.h.b16 %v4237
      %v4356 = vunpack.c.l.b16 %v4238
      %v4357 = vunpack.c.h.b16 %v4238
      %v4358 = vunpack.c.l.b16 %v4239
      %v4359 = vunpack.c.h.b16 %v4239
      %v4360 = vunpack.c.l.b16 %v4240
      %v4361 = vunpack.c.h.b16 %v4240
      %v4362 = vunpack.c.l.b16 %v4241
      %v4363 = vunpack.c.h.b16 %v4241
      %v4364 = vunpack.c.l.b16 %v4242
      %v4365 = vunpack.c.h.b16 %v4242
      %v4366 = vunpack.c.l.b16 %v4243
      %v4367 = vunpack.c.h.b16 %v4243
      %v4368 = vunpack.c.l.b16 %v4244
      %v4369 = vunpack.c.h.b16 %v4244
      %v4370 = vunpack.c.l.b16 %v4245
      %v4371 = vunpack.c.h.b16 %v4245
      %v4372 = vunpack.c.l.b16 %v4246
      %v4373 = vunpack.c.h.b16 %v4246
      %v4374 = vunpack.c.l.b16 %v4247
      %v4375 = vunpack.c.h.b16 %v4247
      %v4376 = vunpack.c.l.b16 %v4248
      %v4377 = vunpack.c.h.b16 %v4248
      %v4378 = vpack.c.b16 %v4316, %v4314
      %v4379 = vpack.c.b16 %v4317, %v4315
      %v4380 = vpack.c.b16 %v4320, %v4318
      %v4381 = vpack.c.b16 %v4321, %v4319
      %v4382 = vpack.c.b16 %v4324, %v4322
      %v4383 = vpack.c.b16 %v4325, %v4323
      %v4384 = vpack.c.b16 %v4328, %v4326
      %v4385 = vpack.c.b16 %v4329, %v4327
      %v4386 = vpack.c.b16 %v4332, %v4330
      %v4387 = vpack.c.b16 %v4333, %v4331
      %v4388 = vpack.c.b16 %v4336, %v4334
      %v4389 = vpack.c.b16 %v4337, %v4335
      %v4390 = vpack.c.b16 %v4340, %v4338
      %v4391 = vpack.c.b16 %v4341, %v4339
      %v4392 = vpack.c.b16 %v4344, %v4342
      %v4393 = vpack.c.b16 %v4345, %v4343
      %v4394 = vpack.c.b16 %v4348, %v4346
      %v4395 = vpack.c.b16 %v4349, %v4347
      %v4396 = vpack.c.b16 %v4352, %v4350
      %v4397 = vpack.c.b16 %v4353, %v4351
      %v4398 = vpack.c.b16 %v4356, %v4354
      %v4399 = vpack.c.b16 %v4357, %v4355
      %v4400 = vpack.c.b16 %v4360, %v4358
      %v4401 = vpack.c.b16 %v4361, %v4359
      %v4402 = vpack.c.b16 %v4364, %v4362
      %v4403 = vpack.c.b16 %v4365, %v4363
      %v4404 = vpack.c.b16 %v4368, %v4366
      %v4405 = vpack.c.b16 %v4369, %v4367
      %v4406 = vpack.c.b16 %v4372, %v4370
      %v4407 = vpack.c.b16 %v4373, %v4371
      %v4408 = vpack.c.b16 %v4376, %v4374
      %v4409 = vpack.c.b16 %v4377, %v4375
      %v4474 = vunpack.c.l.b16 %v4250
      %v4475 = vunpack.c.h.b16 %v4250
      %v4476 = vunpack.c.l.b16 %v4251
      %v4477 = vunpack.c.h.b16 %v4251
      %v4478 = vunpack.c.l.b16 %v4252
      %v4479 = vunpack.c.h.b16 %v4252
      %v4480 = vunpack.c.l.b16 %v4253
      %v4481 = vunpack.c.h.b16 %v4253
      %v4482 = vunpack.c.l.b16 %v4254
      %v4483 = vunpack.c.h.b16 %v4254
      %v4484 = vunpack.c.l.b16 %v4255
      %v4485 = vunpack.c.h.b16 %v4255
      %v4486 = vunpack.c.l.b16 %v4256
      %v4487 = vunpack.c.h.b16 %v4256
      %v4488 = vunpack.c.l.b16 %v4257
      %v4489 = vunpack.c.h.b16 %v4257
      %v4490 = vunpack.c.l.b16 %v4258
      %v4491 = vunpack.c.h.b16 %v4258
      %v4492 = vunpack.c.l.b16 %v4259
      %v4493 = vunpack.c.h.b16 %v4259
      %v4494 = vunpack.c.l.b16 %v4260
      %v4495 = vunpack.c.h.b16 %v4260
      %v4496 = vunpack.c.l.b16 %v4261
      %v4497 = vunpack.c.h.b16 %v4261
      %v4498 = vunpack.c.l.b16 %v4262
      %v4499 = vunpack.c.h.b16 %v4262
      %v4500 = vunpack.c.l.b16 %v4263
      %v4501 = vunpack.c.h.b16 %v4263
      %v4502 = vunpack.c.l.b16 %v4264
      %v4503 = vunpack.c.h.b16 %v4264
      %v4504 = vunpack.c.l.b16 %v4265
      %v4505 = vunpack.c.h.b16 %v4265
      %v4506 = vunpack.c.l.b16 %v4266
      %v4507 = vunpack.c.h.b16 %v4266
      %v4508 = vunpack.c.l.b16 %v4267
      %v4509 = vunpack.c.h.b16 %v4267
      %v4510 = vunpack.c.l.b16 %v4268
      %v4511 = vunpack.c.h.b16 %v4268
      %v4512 = vunpack.c.l.b16 %v4269
      %v4513 = vunpack.c.h.b16 %v4269
      %v4514 = vunpack.c.l.b16 %v4270
      %v4515 = vunpack.c.h.b16 %v4270
      %v4516 = vunpack.c.l.b16 %v4271
      %v4517 = vunpack.c.h.b16 %v4271
      %v4518 = vunpack.c.l.b16 %v4272
      %v4519 = vunpack.c.h.b16 %v4272
      %v4520 = vunpack.c.l.b16 %v4273
      %v4521 = vunpack.c.h.b16 %v4273
      %v4522 = vunpack.c.l.b16 %v4274
      %v4523 = vunpack.c.h.b16 %v4274
      %v4524 = vunpack.c.l.b16 %v4275
      %v4525 = vunpack.c.h.b16 %v4275
      %v4526 = vunpack.c.l.b16 %v4276
      %v4527 = vunpack.c.h.b16 %v4276
      %v4528 = vunpack.c.l.b16 %v4277
      %v4529 = vunpack.c.h.b16 %v4277
      %v4530 = vunpack.c.l.b16 %v4278
      %v4531 = vunpack.c.h.b16 %v4278
      %v4532 = vunpack.c.l.b16 %v4279
      %v4533 = vunpack.c.h.b16 %v4279
      %v4534 = vunpack.c.l.b16 %v4280
      %v4535 = vunpack.c.h.b16 %v4280
      %v4536 = vunpack.c.l.b16 %v4281
      %v4537 = vunpack.c.h.b16 %v4281
      %v4538 = vpack.c.b16 %v4476, %v4474
      %v4539 = vpack.c.b16 %v4477, %v4475
      %v4540 = vpack.c.b16 %v4480, %v4478
      %v4541 = vpack.c.b16 %v4481, %v4479
      %v4542 = vpack.c.b16 %v4484, %v4482
      %v4543 = vpack.c.b16 %v4485, %v4483
      %v4544 = vpack.c.b16 %v4488, %v4486
      %v4545 = vpack.c.b16 %v4489, %v4487
      %v4546 = vpack.c.b16 %v4492, %v4490
      %v4547 = vpack.c.b16 %v4493, %v4491
      %v4548 = vpack.c.b16 %v4496, %v4494
      %v4549 = vpack.c.b16 %v4497, %v4495
      %v4550 = vpack.c.b16 %v4500, %v4498
      %v4551 = vpack.c.b16 %v4501, %v4499
      %v4552 = vpack.c.b16 %v4504, %v4502
      %v4553 = vpack.c.b16 %v4505, %v4503
      %v4554 = vpack.c.b16 %v4508, %v4506
      %v4555 = vpack.c.b16 %v4509, %v4507
      %v4556 = vpack.c.b16 %v4512, %v4510
      %v4557 = vpack.c.b16 %v4513, %v4511
      %v4558 = vpack.c.b16 %v4516, %v4514
      %v4559 = vpack.c.b16 %v4517, %v4515
      %v4560 = vpack.c.b16 %v4520, %v4518
      %v4561 = vpack.c.b16 %v4521, %v4519
      %v4562 = vpack.c.b16 %v4524, %v4522
      %v4563 = vpack.c.b16 %v4525, %v4523
      %v4564 = vpack.c.b16 %v4528, %v4526
      %v4565 = vpack.c.b16 %v4529, %v4527
      %v4566 = vpack.c.b16 %v4532, %v4530
      %v4567 = vpack.c.b16 %v4533, %v4531
      %v4568 = vpack.c.b16 %v4536, %v4534
      %v4569 = vpack.c.b16 %v4537, %v4535
      %4602 = vmatprep.subr.bf16.mxu0 %v4539
      %4603 = vmatpush1.bf16.msra.mxu0 %v4538
      %4604 = vmatprep.subr.bf16.mxu0 %v4541
      %4605 = vmatpush1.bf16.msra.mxu0 %v4540
      %4606 = vmatprep.subr.bf16.mxu0 %v4543
      %4607 = vmatpush1.bf16.msra.mxu0 %v4542
      %4608 = vmatprep.subr.bf16.mxu0 %v4545
      %4609 = vmatpush1.bf16.msra.mxu0 %v4544
      %4610 = vmatprep.subr.bf16.mxu0 %v4547
      %4611 = vmatpush1.bf16.msra.mxu0 %v4546
      %4612 = vmatprep.subr.bf16.mxu0 %v4549
      %4613 = vmatpush1.bf16.msra.mxu0 %v4548
      %4614 = vmatprep.subr.bf16.mxu0 %v4551
      %4615 = vmatpush1.bf16.msra.mxu0 %v4550
      %4616 = vmatprep.subr.bf16.mxu0 %v4553
      %4617 = vmatpush1.bf16.msra.mxu0 %v4552
      %4618 = vmatprep.subr.bf16.mxu0 %v4555
      %4619 = vmatpush1.bf16.msra.mxu0 %v4554
      %4620 = vmatprep.subr.bf16.mxu0 %v4557
      %4621 = vmatpush1.bf16.msra.mxu0 %v4556
      %4622 = vmatprep.subr.bf16.mxu0 %v4559
      %4623 = vmatpush1.bf16.msra.mxu0 %v4558
      %4624 = vmatprep.subr.bf16.mxu0 %v4561
      %4625 = vmatpush1.bf16.msra.mxu0 %v4560
      %4626 = vmatprep.subr.bf16.mxu0 %v4563
      %4627 = vmatpush1.bf16.msra.mxu0 %v4562
      %4628 = vmatprep.subr.bf16.mxu0 %v4565
      %4629 = vmatpush1.bf16.msra.mxu0 %v4564
      %4630 = vmatprep.subr.bf16.mxu0 %v4567
      %4631 = vmatpush1.bf16.msra.mxu0 %v4566
      %4632 = vmatprep.subr.bf16.mxu0 %v4569
      %4633 = vmatpush1.bf16.msra.mxu0 %v4568
      %4634 = vmatprep.mubr.bf16.mxu0 %v4379
      %4635 = vmatmul.mubr.bf16.gmra.mrb[0].mxu0 %v4378
      %v4636 = vpop.f32.mrb[0].mxu0
      %v4637 = vadd.f32 0.0, %v4636
      %v4638 = vpop.f32.mrb[0].mxu0
      %v4639 = vadd.f32 0.0, %v4638
      %v4640 = vpop.f32.mrb[0].mxu0
      %v4641 = vadd.f32 0.0, %v4640
      %v4642 = vpop.f32.mrb[0].mxu0
      %v4643 = vadd.f32 0.0, %v4642
      %4644 = vmatprep.mubr.bf16.mxu0 %v4381
      %4645 = vmatmul.mubr.bf16.gmra.mrb[0].mxu0 %v4380
      %v4646 = vpop.f32.mrb[0].mxu0
      %v4647 = vadd.f32 0.0, %v4646
      %v4648 = vpop.f32.mrb[0].mxu0
      %v4649 = vadd.f32 0.0, %v4648
      %v4650 = vpop.f32.mrb[0].mxu0
      %v4651 = vadd.f32 0.0, %v4650
      %v4652 = vpop.f32.mrb[0].mxu0
      %v4653 = vadd.f32 0.0, %v4652
      %4654 = vmatprep.mubr.bf16.mxu0 %v4383
      %4655 = vmatmul.mubr.bf16.gmra.mrb[0].mxu0 %v4382
      %v4656 = vpop.f32.mrb[0].mxu0
      %v4657 = vadd.f32 0.0, %v4656
      %v4658 = vpop.f32.mrb[0].mxu0
      %v4659 = vadd.f32 0.0, %v4658
      %v4660 = vpop.f32.mrb[0].mxu0
      %v4661 = vadd.f32 0.0, %v4660
      %v4662 = vpop.f32.mrb[0].mxu0
      %v4663 = vadd.f32 0.0, %v4662
      %4664 = vmatprep.mubr.bf16.mxu0 %v4385
      %4665 = vmatmul.mubr.bf16.gmra.mrb[0].mxu0 %v4384
      %v4666 = vpop.f32.mrb[0].mxu0
      %v4667 = vadd.f32 0.0, %v4666
      %v4668 = vpop.f32.mrb[0].mxu0
      %v4669 = vadd.f32 0.0, %v4668
      %v4670 = vpop.f32.mrb[0].mxu0
      %v4671 = vadd.f32 0.0, %v4670
      %v4672 = vpop.f32.mrb[0].mxu0
      %v4673 = vadd.f32 0.0, %v4672
      %4674 = vmatprep.mubr.bf16.mxu0 %v4387
      %4675 = vmatmul.mubr.bf16.gmra.mrb[0].mxu0 %v4386
      %v4676 = vpop.f32.mrb[0].mxu0
      %v4677 = vadd.f32 0.0, %v4676
      %v4678 = vpop.f32.mrb[0].mxu0
      %v4679 = vadd.f32 0.0, %v4678
      %v4680 = vpop.f32.mrb[0].mxu0
      %v4681 = vadd.f32 0.0, %v4680
      %v4682 = vpop.f32.mrb[0].mxu0
      %v4683 = vadd.f32 0.0, %v4682
      %4684 = vmatprep.mubr.bf16.mxu0 %v4389
      %4685 = vmatmul.mubr.bf16.gmra.mrb[0].mxu0 %v4388
      %v4686 = vpop.f32.mrb[0].mxu0
      %v4687 = vadd.f32 0.0, %v4686
      %v4688 = vpop.f32.mrb[0].mxu0
      %v4689 = vadd.f32 0.0, %v4688
      %v4690 = vpop.f32.mrb[0].mxu0
      %v4691 = vadd.f32 0.0, %v4690
      %v4692 = vpop.f32.mrb[0].mxu0
      %v4693 = vadd.f32 0.0, %v4692
      %4694 = vmatprep.mubr.bf16.mxu0 %v4391
      %4695 = vmatmul.mubr.bf16.gmra.mrb[0].mxu0 %v4390
      %v4696 = vpop.f32.mrb[0].mxu0
      %v4697 = vadd.f32 0.0, %v4696
      %v4698 = vpop.f32.mrb[0].mxu0
      %v4699 = vadd.f32 0.0, %v4698
      %v4700 = vpop.f32.mrb[0].mxu0
      %v4701 = vadd.f32 0.0, %v4700
      %v4702 = vpop.f32.mrb[0].mxu0
      %v4703 = vadd.f32 0.0, %v4702
      %4704 = vmatprep.mubr.bf16.mxu0 %v4393
      %4705 = vmatmul.mubr.bf16.gmra.mrb[0].mxu0 %v4392
      %v4706 = vpop.f32.mrb[0].mxu0
      %v4707 = vadd.f32 0.0, %v4706
      %v4708 = vpop.f32.mrb[0].mxu0
      %v4709 = vadd.f32 0.0, %v4708
      %v4710 = vpop.f32.mrb[0].mxu0
      %v4711 = vadd.f32 0.0, %v4710
      %v4712 = vpop.f32.mrb[0].mxu0
      %v4713 = vadd.f32 0.0, %v4712
      %4714 = vmatprep.mubr.bf16.mxu0 %v4395
      %4715 = vmatmul.mubr.bf16.gmra.mrb[0].mxu0 %v4394
      %v4716 = vpop.f32.mrb[0].mxu0
      %v4717 = vadd.f32 0.0, %v4716
      %v4718 = vpop.f32.mrb[0].mxu0
      %v4719 = vadd.f32 0.0, %v4718
      %v4720 = vpop.f32.mrb[0].mxu0
      %v4721 = vadd.f32 0.0, %v4720
      %v4722 = vpop.f32.mrb[0].mxu0
      %v4723 = vadd.f32 0.0, %v4722
      %4724 = vmatprep.mubr.bf16.mxu0 %v4397
      %4725 = vmatmul.mubr.bf16.gmra.mrb[0].mxu0 %v4396
      %v4726 = vpop.f32.mrb[0].mxu0
      %v4727 = vadd.f32 0.0, %v4726
      %v4728 = vpop.f32.mrb[0].mxu0
      %v4729 = vadd.f32 0.0, %v4728
      %v4730 = vpop.f32.mrb[0].mxu0
      %v4731 = vadd.f32 0.0, %v4730
      %v4732 = vpop.f32.mrb[0].mxu0
      %v4733 = vadd.f32 0.0, %v4732
      %4734 = vmatprep.mubr.bf16.mxu0 %v4399
      %4735 = vmatmul.mubr.bf16.gmra.mrb[0].mxu0 %v4398
      %v4736 = vpop.f32.mrb[0].mxu0
      %v4737 = vadd.f32 0.0, %v4736
      %v4738 = vpop.f32.mrb[0].mxu0
      %v4739 = vadd.f32 0.0, %v4738
      %v4740 = vpop.f32.mrb[0].mxu0
      %v4741 = vadd.f32 0.0, %v4740
      %v4742 = vpop.f32.mrb[0].mxu0
      %v4743 = vadd.f32 0.0, %v4742
      %4744 = vmatprep.mubr.bf16.mxu0 %v4401
      %4745 = vmatmul.mubr.bf16.gmra.mrb[0].mxu0 %v4400
      %v4746 = vpop.f32.mrb[0].mxu0
      %v4747 = vadd.f32 0.0, %v4746
      %v4748 = vpop.f32.mrb[0].mxu0
      %v4749 = vadd.f32 0.0, %v4748
      %v4750 = vpop.f32.mrb[0].mxu0
      %v4751 = vadd.f32 0.0, %v4750
      %v4752 = vpop.f32.mrb[0].mxu0
      %v4753 = vadd.f32 0.0, %v4752
      %4754 = vmatprep.mubr.bf16.mxu0 %v4403
      %4755 = vmatmul.mubr.bf16.gmra.mrb[0].mxu0 %v4402
      %v4756 = vpop.f32.mrb[0].mxu0
      %v4757 = vadd.f32 0.0, %v4756
      %v4758 = vpop.f32.mrb[0].mxu0
      %v4759 = vadd.f32 0.0, %v4758
      %v4760 = vpop.f32.mrb[0].mxu0
      %v4761 = vadd.f32 0.0, %v4760
      %v4762 = vpop.f32.mrb[0].mxu0
      %v4763 = vadd.f32 0.0, %v4762
      %4764 = vmatprep.mubr.bf16.mxu0 %v4405
      %4765 = vmatmul.mubr.bf16.gmra.mrb[0].mxu0 %v4404
      %v4766 = vpop.f32.mrb[0].mxu0
      %v4767 = vadd.f32 0.0, %v4766
      %v4768 = vpop.f32.mrb[0].mxu0
      %v4769 = vadd.f32 0.0, %v4768
      %v4770 = vpop.f32.mrb[0].mxu0
      %v4771 = vadd.f32 0.0, %v4770
      %v4772 = vpop.f32.mrb[0].mxu0
      %v4773 = vadd.f32 0.0, %v4772
      %4774 = vmatprep.mubr.bf16.mxu0 %v4407
      %4775 = vmatmul.mubr.bf16.gmra.mrb[0].mxu0 %v4406
      %v4776 = vpop.f32.mrb[0].mxu0
      %v4777 = vadd.f32 0.0, %v4776
      %v4778 = vpop.f32.mrb[0].mxu0
      %v4779 = vadd.f32 0.0, %v4778
      %v4780 = vpop.f32.mrb[0].mxu0
      %v4781 = vadd.f32 0.0, %v4780
      %v4782 = vpop.f32.mrb[0].mxu0
      %v4783 = vadd.f32 0.0, %v4782
      %4784 = vmatprep.mubr.bf16.mxu0 %v4409
      %4785 = vmatmul.mubr.bf16.gmra.mrb[0].mxu0 %v4408
      %v4786 = vpop.f32.mrb[0].mxu0
      %v4787 = vadd.f32 0.0, %v4786
      %v4788 = vpop.f32.mrb[0].mxu0
      %v4789 = vadd.f32 0.0, %v4788
      %v4790 = vpop.f32.mrb[0].mxu0
      %v4791 = vadd.f32 0.0, %v4790
      %v4792 = vpop.f32.mrb[0].mxu0
      %v4793 = vadd.f32 0.0, %v4792
      %4794 = vdwg.mxu0
      %v4795 = vadd.f32 %v4150, %v4637
      %v4796 = vadd.f32 %v4151, %v4639
      %v4797 = vadd.f32 %v4152, %v4641
      %v4798 = vadd.f32 %v4153, %v4643
      %v4799 = vadd.f32 %v4154, %v4647
      %v4800 = vadd.f32 %v4155, %v4649
      %v4801 = vadd.f32 %v4156, %v4651
      %v4802 = vadd.f32 %v4157, %v4653
      %v4803 = vadd.f32 %v4158, %v4657
      %v4804 = vadd.f32 %v4159, %v4659
      %v4805 = vadd.f32 %v4160, %v4661
      %v4806 = vadd.f32 %v4161, %v4663
      %v4807 = vadd.f32 %v4162, %v4667
      %v4808 = vadd.f32 %v4163, %v4669
      %v4809 = vadd.f32 %v4164, %v4671
      %v4810 = vadd.f32 %v4165, %v4673
      %v4811 = vadd.f32 %v4166, %v4677
      %v4812 = vadd.f32 %v4167, %v4679
      %v4813 = vadd.f32 %v4168, %v4681
      %v4814 = vadd.f32 %v4169, %v4683
      %v4815 = vadd.f32 %v4170, %v4687
      %v4816 = vadd.f32 %v4171, %v4689
      %v4817 = vadd.f32 %v4172, %v4691
      %v4818 = vadd.f32 %v4173, %v4693
      %v4819 = vadd.f32 %v4174, %v4697
      %v4820 = vadd.f32 %v4175, %v4699
      %v4821 = vadd.f32 %v4176, %v4701
      %v4822 = vadd.f32 %v4177, %v4703
      %v4823 = vadd.f32 %v4178, %v4707
      %v4824 = vadd.f32 %v4179, %v4709
      %v4825 = vadd.f32 %v4180, %v4711
      %v4826 = vadd.f32 %v4181, %v4713
      %v4827 = vadd.f32 %v4182, %v4717
      %v4828 = vadd.f32 %v4183, %v4719
      %v4829 = vadd.f32 %v4184, %v4721
      %v4830 = vadd.f32 %v4185, %v4723
      %v4831 = vadd.f32 %v4186, %v4727
      %v4832 = vadd.f32 %v4187, %v4729
      %v4833 = vadd.f32 %v4188, %v4731
      %v4834 = vadd.f32 %v4189, %v4733
      %v4835 = vadd.f32 %v4190, %v4737
      %v4836 = vadd.f32 %v4191, %v4739
      %v4837 = vadd.f32 %v4192, %v4741
      %v4838 = vadd.f32 %v4193, %v4743
      %v4839 = vadd.f32 %v4194, %v4747
      %v4840 = vadd.f32 %v4195, %v4749
      %v4841 = vadd.f32 %v4196, %v4751
      %v4842 = vadd.f32 %v4197, %v4753
      %v4843 = vadd.f32 %v4198, %v4757
      %v4844 = vadd.f32 %v4199, %v4759
      %v4845 = vadd.f32 %v4200, %v4761
      %v4846 = vadd.f32 %v4201, %v4763
      %v4847 = vadd.f32 %v4202, %v4767
      %v4848 = vadd.f32 %v4203, %v4769
      %v4849 = vadd.f32 %v4204, %v4771
      %v4850 = vadd.f32 %v4205, %v4773
      %v4851 = vadd.f32 %v4206, %v4777
      %v4852 = vadd.f32 %v4207, %v4779
      %v4853 = vadd.f32 %v4208, %v4781
      %v4854 = vadd.f32 %v4209, %v4783
      %v4855 = vadd.f32 %v4210, %v4787
      %v4856 = vadd.f32 %v4211, %v4789
      %v4857 = vadd.f32 %v4212, %v4791
      %v4858 = vadd.f32 %v4213, %v4793
      %4859 = vst [vmem:[%s209] sm:$0xff] %v4795
      %4860 = vst [vmem:[%s209 + $0x8] sm:$0xff] %v4796
      %4861 = vst [vmem:[%s209 + $0x10] sm:$0xff] %v4797
      %4862 = vst [vmem:[%s209 + $0x18] sm:$0xff] %v4798
      %4863 = vst [vmem:[%s209 + $0x20] sm:$0xff] %v4799
      %4864 = vst [vmem:[%s209 + $0x28] sm:$0xff] %v4800
      %4865 = vst [vmem:[%s209 + $0x30] sm:$0xff] %v4801
      %4866 = vst [vmem:[%s209 + $0x38] sm:$0xff] %v4802
      %4867 = vst [vmem:[%s209 + $0x40] sm:$0xff] %v4803
      %4868 = vst [vmem:[%s209 + $0x48] sm:$0xff] %v4804
      %4869 = vst [vmem:[%s209 + $0x50] sm:$0xff] %v4805
      %4870 = vst [vmem:[%s209 + $0x58] sm:$0xff] %v4806
      %4871 = vst [vmem:[%s209 + $0x60] sm:$0xff] %v4807
      %4872 = vst [vmem:[%s209 + $0x68] sm:$0xff] %v4808
      %4873 = vst [vmem:[%s209 + $0x70] sm:$0xff] %v4809
      %4874 = vst [vmem:[%s209 + $0x78] sm:$0xff] %v4810
      %4875 = vst [vmem:[%s209 + $0x80] sm:$0xff] %v4811
      %4876 = vst [vmem:[%s209 + $0x88] sm:$0xff] %v4812
      %4877 = vst [vmem:[%s209 + $0x90] sm:$0xff] %v4813
      %4878 = vst [vmem:[%s209 + $0x98] sm:$0xff] %v4814
      %4879 = vst [vmem:[%s209 + $0xa0] sm:$0xff] %v4815
      %4880 = vst [vmem:[%s209 + $0xa8] sm:$0xff] %v4816
      %4881 = vst [vmem:[%s209 + $0xb0] sm:$0xff] %v4817
      %4882 = vst [vmem:[%s209 + $0xb8] sm:$0xff] %v4818
      %4883 = vst [vmem:[%s209 + $0xc0] sm:$0xff] %v4819
      %4884 = vst [vmem:[%s209 + $0xc8] sm:$0xff] %v4820
      %4885 = vst [vmem:[%s209 + $0xd0] sm:$0xff] %v4821
      %4886 = vst [vmem:[%s209 + $0xd8] sm:$0xff] %v4822
      %4887 = vst [vmem:[%s209 + $0xe0] sm:$0xff] %v4823
      %4888 = vst [vmem:[%s209 + $0xe8] sm:$0xff] %v4824
      %4889 = vst [vmem:[%s209 + $0xf0] sm:$0xff] %v4825
      %4890 = vst [vmem:[%s209 + $0xf8] sm:$0xff] %v4826
      %4891 = vst [vmem:[%s209 + $0x100] sm:$0xff] %v4827
      %4892 = vst [vmem:[%s209 + $0x108] sm:$0xff] %v4828
      %4893 = vst [vmem:[%s209 + $0x110] sm:$0xff] %v4829
      %4894 = vst [vmem:[%s209 + $0x118] sm:$0xff] %v4830
      %4895 = vst [vmem:[%s209 + $0x120] sm:$0xff] %v4831
      %4896 = vst [vmem:[%s209 + $0x128] sm:$0xff] %v4832
      %4897 = vst [vmem:[%s209 + $0x130] sm:$0xff] %v4833
      %4898 = vst [vmem:[%s209 + $0x138] sm:$0xff] %v4834
      %4899 = vst [vmem:[%s209 + $0x140] sm:$0xff] %v4835
      %4900 = vst [vmem:[%s209 + $0x148] sm:$0xff] %v4836
      %4901 = vst [vmem:[%s209 + $0x150] sm:$0xff] %v4837
      %4902 = vst [vmem:[%s209 + $0x158] sm:$0xff] %v4838
      %4903 = vst [vmem:[%s209 + $0x160] sm:$0xff] %v4839
      %4904 = vst [vmem:[%s209 + $0x168] sm:$0xff] %v4840
      %4905 = vst [vmem:[%s209 + $0x170] sm:$0xff] %v4841
      %4906 = vst [vmem:[%s209 + $0x178] sm:$0xff] %v4842
      %4907 = vst [vmem:[%s209 + $0x180] sm:$0xff] %v4843
      %4908 = vst [vmem:[%s209 + $0x188] sm:$0xff] %v4844
      %4909 = vst [vmem:[%s209 + $0x190] sm:$0xff] %v4845
      %4910 = vst [vmem:[%s209 + $0x198] sm:$0xff] %v4846
      %4911 = vst [vmem:[%s209 + $0x1a0] sm:$0xff] %v4847
      %4912 = vst [vmem:[%s209 + $0x1a8] sm:$0xff] %v4848
      %4913 = vst [vmem:[%s209 + $0x1b0] sm:$0xff] %v4849
      %4914 = vst [vmem:[%s209 + $0x1b8] sm:$0xff] %v4850
      %4915 = vst [vmem:[%s209 + $0x1c0] sm:$0xff] %v4851
      %4916 = vst [vmem:[%s209 + $0x1c8] sm:$0xff] %v4852
      %4917 = vst [vmem:[%s209 + $0x1d0] sm:$0xff] %v4853
      %4918 = vst [vmem:[%s209 + $0x1d8] sm:$0xff] %v4854
      %4919 = vst [vmem:[%s209 + $0x1e0] sm:$0xff] %v4855
      %4920 = vst [vmem:[%s209 + $0x1e8] sm:$0xff] %v4856
      %4921 = vst [vmem:[%s209 + $0x1f0] sm:$0xff] %v4857
      %4922 = vst [vmem:[%s209 + $0x1f8] sm:$0xff] %v4858
      %s4923 = sadd.s32 %s216, 96
      %v4924 = vld [vmem:[%s209] sm:$0xff]
      %v4925 = vld [vmem:[%s209 + $0x8] sm:$0xff]
      %v4926 = vld [vmem:[%s209 + $0x10] sm:$0xff]
      %v4927 = vld [vmem:[%s209 + $0x18] sm:$0xff]
      %v4928 = vld [vmem:[%s209 + $0x20] sm:$0xff]
      %v4929 = vld [vmem:[%s209 + $0x28] sm:$0xff]
      %v4930 = vld [vmem:[%s209 + $0x30] sm:$0xff]
      %v4931 = vld [vmem:[%s209 + $0x38] sm:$0xff]
      %v4932 = vld [vmem:[%s209 + $0x40] sm:$0xff]
      %v4933 = vld [vmem:[%s209 + $0x48] sm:$0xff]
      %v4934 = vld [vmem:[%s209 + $0x50] sm:$0xff]
      %v4935 = vld [vmem:[%s209 + $0x58] sm:$0xff]
      %v4936 = vld [vmem:[%s209 + $0x60] sm:$0xff]
      %v4937 = vld [vmem:[%s209 + $0x68] sm:$0xff]
      %v4938 = vld [vmem:[%s209 + $0x70] sm:$0xff]
      %v4939 = vld [vmem:[%s209 + $0x78] sm:$0xff]
      %v4940 = vld [vmem:[%s209 + $0x80] sm:$0xff]
      %v4941 = vld [vmem:[%s209 + $0x88] sm:$0xff]
      %v4942 = vld [vmem:[%s209 + $0x90] sm:$0xff]
      %v4943 = vld [vmem:[%s209 + $0x98] sm:$0xff]
      %v4944 = vld [vmem:[%s209 + $0xa0] sm:$0xff]
      %v4945 = vld [vmem:[%s209 + $0xa8] sm:$0xff]
      %v4946 = vld [vmem:[%s209 + $0xb0] sm:$0xff]
      %v4947 = vld [vmem:[%s209 + $0xb8] sm:$0xff]
      %v4948 = vld [vmem:[%s209 + $0xc0] sm:$0xff]
      %v4949 = vld [vmem:[%s209 + $0xc8] sm:$0xff]
      %v4950 = vld [vmem:[%s209 + $0xd0] sm:$0xff]
      %v4951 = vld [vmem:[%s209 + $0xd8] sm:$0xff]
      %v4952 = vld [vmem:[%s209 + $0xe0] sm:$0xff]
      %v4953 = vld [vmem:[%s209 + $0xe8] sm:$0xff]
      %v4954 = vld [vmem:[%s209 + $0xf0] sm:$0xff]
      %v4955 = vld [vmem:[%s209 + $0xf8] sm:$0xff]
      %v4956 = vld [vmem:[%s209 + $0x100] sm:$0xff]
      %v4957 = vld [vmem:[%s209 + $0x108] sm:$0xff]
      %v4958 = vld [vmem:[%s209 + $0x110] sm:$0xff]
      %v4959 = vld [vmem:[%s209 + $0x118] sm:$0xff]
      %v4960 = vld [vmem:[%s209 + $0x120] sm:$0xff]
      %v4961 = vld [vmem:[%s209 + $0x128] sm:$0xff]
      %v4962 = vld [vmem:[%s209 + $0x130] sm:$0xff]
      %v4963 = vld [vmem:[%s209 + $0x138] sm:$0xff]
      %v4964 = vld [vmem:[%s209 + $0x140] sm:$0xff]
      %v4965 = vld [vmem:[%s209 + $0x148] sm:$0xff]
      %v4966 = vld [vmem:[%s209 + $0x150] sm:$0xff]
      %v4967 = vld [vmem:[%s209 + $0x158] sm:$0xff]
      %v4968 = vld [vmem:[%s209 + $0x160] sm:$0xff]
      %v4969 = vld [vmem:[%s209 + $0x168] sm:$0xff]
      %v4970 = vld [vmem:[%s209 + $0x170] sm:$0xff]
      %v4971 = vld [vmem:[%s209 + $0x178] sm:$0xff]
      %v4972 = vld [vmem:[%s209 + $0x180] sm:$0xff]
      %v4973 = vld [vmem:[%s209 + $0x188] sm:$0xff]
      %v4974 = vld [vmem:[%s209 + $0x190] sm:$0xff]
      %v4975 = vld [vmem:[%s209 + $0x198] sm:$0xff]
      %v4976 = vld [vmem:[%s209 + $0x1a0] sm:$0xff]
      %v4977 = vld [vmem:[%s209 + $0x1a8] sm:$0xff]
      %v4978 = vld [vmem:[%s209 + $0x1b0] sm:$0xff]
      %v4979 = vld [vmem:[%s209 + $0x1b8] sm:$0xff]
      %v4980 = vld [vmem:[%s209 + $0x1c0] sm:$0xff]
      %v4981 = vld [vmem:[%s209 + $0x1c8] sm:$0xff]
      %v4982 = vld [vmem:[%s209 + $0x1d0] sm:$0xff]
      %v4983 = vld [vmem:[%s209 + $0x1d8] sm:$0xff]
      %v4984 = vld [vmem:[%s209 + $0x1e0] sm:$0xff]
      %v4985 = vld [vmem:[%s209 + $0x1e8] sm:$0xff]
      %v4986 = vld [vmem:[%s209 + $0x1f0] sm:$0xff]
      %v4987 = vld [vmem:[%s209 + $0x1f8] sm:$0xff]
      %s4988 = sshra.s32 %s4923, 3
      %s4989 = sand.u32 %s4923, 7
      %s4990 = smul.u32 %s4988, 2
      %s4991 = smul.addr %s4990, 4
      %s4992 = scalar_lea.vmem %s0, %s4991
      %v4993 = vld [vmem:[%s4992] sm:$0xff]
      %v4994 = vld [vmem:[%s4992 + $0x8] sm:$0xff]
      %v4995 = vld [vmem:[%s4992 + $0x10] sm:$0xff]
      %v4996 = vld [vmem:[%s4992 + $0x18] sm:$0xff]
      %v4997 = vld [vmem:[%s4992 + $0x20] sm:$0xff]
      %v4998 = vld [vmem:[%s4992 + $0x28] sm:$0xff]
      %v4999 = vld [vmem:[%s4992 + $0x30] sm:$0xff]
      %v5000 = vld [vmem:[%s4992 + $0x38] sm:$0xff]
      %v5001 = vld [vmem:[%s4992 + $0x40] sm:$0xff]
      %v5002 = vld [vmem:[%s4992 + $0x48] sm:$0xff]
      %v5003 = vld [vmem:[%s4992 + $0x50] sm:$0xff]
      %v5004 = vld [vmem:[%s4992 + $0x58] sm:$0xff]
      %v5005 = vld [vmem:[%s4992 + $0x60] sm:$0xff]
      %v5006 = vld [vmem:[%s4992 + $0x68] sm:$0xff]
      %v5007 = vld [vmem:[%s4992 + $0x70] sm:$0xff]
      %v5008 = vld [vmem:[%s4992 + $0x78] sm:$0xff]
      %v5009 = vld [vmem:[%s4992 + $0x80] sm:$0xff]
      %v5010 = vld [vmem:[%s4992 + $0x88] sm:$0xff]
      %v5011 = vld [vmem:[%s4992 + $0x90] sm:$0xff]
      %v5012 = vld [vmem:[%s4992 + $0x98] sm:$0xff]
      %v5013 = vld [vmem:[%s4992 + $0xa0] sm:$0xff]
      %v5014 = vld [vmem:[%s4992 + $0xa8] sm:$0xff]
      %v5015 = vld [vmem:[%s4992 + $0xb0] sm:$0xff]
      %v5016 = vld [vmem:[%s4992 + $0xb8] sm:$0xff]
      %v5017 = vld [vmem:[%s4992 + $0xc0] sm:$0xff]
      %v5018 = vld [vmem:[%s4992 + $0xc8] sm:$0xff]
      %v5019 = vld [vmem:[%s4992 + $0xd0] sm:$0xff]
      %v5020 = vld [vmem:[%s4992 + $0xd8] sm:$0xff]
      %v5021 = vld [vmem:[%s4992 + $0xe0] sm:$0xff]
      %v5022 = vld [vmem:[%s4992 + $0xe8] sm:$0xff]
      %v5023 = vld [vmem:[%s4992 + $0xf0] sm:$0xff]
      %v5024 = vld [vmem:[%s4992 + $0xf8] sm:$0xff]
      %s5025 = scalar_lea.vmem %s1, 1536
      %v5026 = vld [vmem:[%s5025] sm:$0xff]
      %v5027 = vld [vmem:[%s5025 + $0x8] sm:$0xff]
      %v5028 = vld [vmem:[%s5025 + $0x10] sm:$0xff]
      %v5029 = vld [vmem:[%s5025 + $0x18] sm:$0xff]
      %v5030 = vld [vmem:[%s5025 + $0x20] sm:$0xff]
      %v5031 = vld [vmem:[%s5025 + $0x28] sm:$0xff]
      %v5032 = vld [vmem:[%s5025 + $0x30] sm:$0xff]
      %v5033 = vld [vmem:[%s5025 + $0x38] sm:$0xff]
      %v5034 = vld [vmem:[%s5025 + $0x40] sm:$0xff]
      %v5035 = vld [vmem:[%s5025 + $0x48] sm:$0xff]
      %v5036 = vld [vmem:[%s5025 + $0x50] sm:$0xff]
      %v5037 = vld [vmem:[%s5025 + $0x58] sm:$0xff]
      %v5038 = vld [vmem:[%s5025 + $0x60] sm:$0xff]
      %v5039 = vld [vmem:[%s5025 + $0x68] sm:$0xff]
      %v5040 = vld [vmem:[%s5025 + $0x70] sm:$0xff]
      %v5041 = vld [vmem:[%s5025 + $0x78] sm:$0xff]
      %v5042 = vld [vmem:[%s5025 + $0x80] sm:$0xff]
      %v5043 = vld [vmem:[%s5025 + $0x88] sm:$0xff]
      %v5044 = vld [vmem:[%s5025 + $0x90] sm:$0xff]
      %v5045 = vld [vmem:[%s5025 + $0x98] sm:$0xff]
      %v5046 = vld [vmem:[%s5025 + $0xa0] sm:$0xff]
      %v5047 = vld [vmem:[%s5025 + $0xa8] sm:$0xff]
      %v5048 = vld [vmem:[%s5025 + $0xb0] sm:$0xff]
      %v5049 = vld [vmem:[%s5025 + $0xb8] sm:$0xff]
      %v5050 = vld [vmem:[%s5025 + $0xc0] sm:$0xff]
      %v5051 = vld [vmem:[%s5025 + $0xc8] sm:$0xff]
      %v5052 = vld [vmem:[%s5025 + $0xd0] sm:$0xff]
      %v5053 = vld [vmem:[%s5025 + $0xd8] sm:$0xff]
      %v5054 = vld [vmem:[%s5025 + $0xe0] sm:$0xff]
      %v5055 = vld [vmem:[%s5025 + $0xe8] sm:$0xff]
      %v5056 = vld [vmem:[%s5025 + $0xf0] sm:$0xff]
      %v5057 = vld [vmem:[%s5025 + $0xf8] sm:$0xff]
      %v5090 = vunpack.c.l.b16 %v4993
      %v5091 = vunpack.c.h.b16 %v4993
      %v5092 = vunpack.c.l.b16 %v4994
      %v5093 = vunpack.c.h.b16 %v4994
      %v5094 = vunpack.c.l.b16 %v4995
      %v5095 = vunpack.c.h.b16 %v4995
      %v5096 = vunpack.c.l.b16 %v4996
      %v5097 = vunpack.c.h.b16 %v4996
      %v5098 = vunpack.c.l.b16 %v4997
      %v5099 = vunpack.c.h.b16 %v4997
      %v5100 = vunpack.c.l.b16 %v4998
      %v5101 = vunpack.c.h.b16 %v4998
      %v5102 = vunpack.c.l.b16 %v4999
      %v5103 = vunpack.c.h.b16 %v4999
      %v5104 = vunpack.c.l.b16 %v5000
      %v5105 = vunpack.c.h.b16 %v5000
      %v5106 = vunpack.c.l.b16 %v5001
      %v5107 = vunpack.c.h.b16 %v5001
      %v5108 = vunpack.c.l.b16 %v5002
      %v5109 = vunpack.c.h.b16 %v5002
      %v5110 = vunpack.c.l.b16 %v5003
      %v5111 = vunpack.c.h.b16 %v5003
      %v5112 = vunpack.c.l.b16 %v5004
      %v5113 = vunpack.c.h.b16 %v5004
      %v5114 = vunpack.c.l.b16 %v5005
      %v5115 = vunpack.c.h.b16 %v5005
      %v5116 = vunpack.c.l.b16 %v5006
      %v5117 = vunpack.c.h.b16 %v5006
      %v5118 = vunpack.c.l.b16 %v5007
      %v5119 = vunpack.c.h.b16 %v5007
      %v5120 = vunpack.c.l.b16 %v5008
      %v5121 = vunpack.c.h.b16 %v5008
      %v5122 = vunpack.c.l.b16 %v5009
      %v5123 = vunpack.c.h.b16 %v5009
      %v5124 = vunpack.c.l.b16 %v5010
      %v5125 = vunpack.c.h.b16 %v5010
      %v5126 = vunpack.c.l.b16 %v5011
      %v5127 = vunpack.c.h.b16 %v5011
      %v5128 = vunpack.c.l.b16 %v5012
      %v5129 = vunpack.c.h.b16 %v5012
      %v5130 = vunpack.c.l.b16 %v5013
      %v5131 = vunpack.c.h.b16 %v5013
      %v5132 = vunpack.c.l.b16 %v5014
      %v5133 = vunpack.c.h.b16 %v5014
      %v5134 = vunpack.c.l.b16 %v5015
      %v5135 = vunpack.c.h.b16 %v5015
      %v5136 = vunpack.c.l.b16 %v5016
      %v5137 = vunpack.c.h.b16 %v5016
      %v5138 = vunpack.c.l.b16 %v5017
      %v5139 = vunpack.c.h.b16 %v5017
      %v5140 = vunpack.c.l.b16 %v5018
      %v5141 = vunpack.c.h.b16 %v5018
      %v5142 = vunpack.c.l.b16 %v5019
      %v5143 = vunpack.c.h.b16 %v5019
      %v5144 = vunpack.c.l.b16 %v5020
      %v5145 = vunpack.c.h.b16 %v5020
      %v5146 = vunpack.c.l.b16 %v5021
      %v5147 = vunpack.c.h.b16 %v5021
      %v5148 = vunpack.c.l.b16 %v5022
      %v5149 = vunpack.c.h.b16 %v5022
      %v5150 = vunpack.c.l.b16 %v5023
      %v5151 = vunpack.c.h.b16 %v5023
      %v5152 = vunpack.c.l.b16 %v5024
      %v5153 = vunpack.c.h.b16 %v5024
      %v5154 = vpack.c.b16 %v5092, %v5090
      %v5155 = vpack.c.b16 %v5093, %v5091
      %v5156 = vpack.c.b16 %v5096, %v5094
      %v5157 = vpack.c.b16 %v5097, %v5095
      %v5158 = vpack.c.b16 %v5100, %v5098
      %v5159 = vpack.c.b16 %v5101, %v5099
      %v5160 = vpack.c.b16 %v5104, %v5102
      %v5161 = vpack.c.b16 %v5105, %v5103
      %v5162 = vpack.c.b16 %v5108, %v5106
      %v5163 = vpack.c.b16 %v5109, %v5107
      %v5164 = vpack.c.b16 %v5112, %v5110
      %v5165 = vpack.c.b16 %v5113, %v5111
      %v5166 = vpack.c.b16 %v5116, %v5114
      %v5167 = vpack.c.b16 %v5117, %v5115
      %v5168 = vpack.c.b16 %v5120, %v5118
      %v5169 = vpack.c.b16 %v5121, %v5119
      %v5170 = vpack.c.b16 %v5124, %v5122
      %v5171 = vpack.c.b16 %v5125, %v5123
      %v5172 = vpack.c.b16 %v5128, %v5126
      %v5173 = vpack.c.b16 %v5129, %v5127
      %v5174 = vpack.c.b16 %v5132, %v5130
      %v5175 = vpack.c.b16 %v5133, %v5131
      %v5176 = vpack.c.b16 %v5136, %v5134
      %v5177 = vpack.c.b16 %v5137, %v5135
      %v5178 = vpack.c.b16 %v5140, %v5138
      %v5179 = vpack.c.b16 %v5141, %v5139
      %v5180 = vpack.c.b16 %v5144, %v5142
      %v5181 = vpack.c.b16 %v5145, %v5143
      %v5182 = vpack.c.b16 %v5148, %v5146
      %v5183 = vpack.c.b16 %v5149, %v5147
      %v5184 = vpack.c.b16 %v5152, %v5150
      %v5185 = vpack.c.b16 %v5153, %v5151
      %v5250 = vunpack.c.l.b16 %v5026
      %v5251 = vunpack.c.h.b16 %v5026
      %v5252 = vunpack.c.l.b16 %v5027
      %v5253 = vunpack.c.h.b16 %v5027
      %v5254 = vunpack.c.l.b16 %v5028
      %v5255 = vunpack.c.h.b16 %v5028
      %v5256 = vunpack.c.l.b16 %v5029
      %v5257 = vunpack.c.h.b16 %v5029
      %v5258 = vunpack.c.l.b16 %v5030
      %v5259 = vunpack.c.h.b16 %v5030
      %v5260 = vunpack.c.l.b16 %v5031
      %v5261 = vunpack.c.h.b16 %v5031
      %v5262 = vunpack.c.l.b16 %v5032
      %v5263 = vunpack.c.h.b16 %v5032
      %v5264 = vunpack.c.l.b16 %v5033
      %v5265 = vunpack.c.h.b16 %v5033
      %v5266 = vunpack.c.l.b16 %v5034
      %v5267 = vunpack.c.h.b16 %v5034
      %v5268 = vunpack.c.l.b16 %v5035
      %v5269 = vunpack.c.h.b16 %v5035
      %v5270 = vunpack.c.l.b16 %v5036
      %v5271 = vunpack.c.h.b16 %v5036
      %v5272 = vunpack.c.l.b16 %v5037
      %v5273 = vunpack.c.h.b16 %v5037
      %v5274 = vunpack.c.l.b16 %v5038
      %v5275 = vunpack.c.h.b16 %v5038
      %v5276 = vunpack.c.l.b16 %v5039
      %v5277 = vunpack.c.h.b16 %v5039
      %v5278 = vunpack.c.l.b16 %v5040
      %v5279 = vunpack.c.h.b16 %v5040
      %v5280 = vunpack.c.l.b16 %v5041
      %v5281 = vunpack.c.h.b16 %v5041
      %v5282 = vunpack.c.l.b16 %v5042
      %v5283 = vunpack.c.h.b16 %v5042
      %v5284 = vunpack.c.l.b16 %v5043
      %v5285 = vunpack.c.h.b16 %v5043
      %v5286 = vunpack.c.l.b16 %v5044
      %v5287 = vunpack.c.h.b16 %v5044
      %v5288 = vunpack.c.l.b16 %v5045
      %v5289 = vunpack.c.h.b16 %v5045
      %v5290 = vunpack.c.l.b16 %v5046
      %v5291 = vunpack.c.h.b16 %v5046
      %v5292 = vunpack.c.l.b16 %v5047
      %v5293 = vunpack.c.h.b16 %v5047
      %v5294 = vunpack.c.l.b16 %v5048
      %v5295 = vunpack.c.h.b16 %v5048
      %v5296 = vunpack.c.l.b16 %v5049
      %v5297 = vunpack.c.h.b16 %v5049
      %v5298 = vunpack.c.l.b16 %v5050
      %v5299 = vunpack.c.h.b16 %v5050
      %v5300 = vunpack.c.l.b16 %v5051
      %v5301 = vunpack.c.h.b16 %v5051
      %v5302 = vunpack.c.l.b16 %v5052
      %v5303 = vunpack.c.h.b16 %v5052
      %v5304 = vunpack.c.l.b16 %v5053
      %v5305 = vunpack.c.h.b16 %v5053
      %v5306 = vunpack.c.l.b16 %v5054
      %v5307 = vunpack.c.h.b16 %v5054
      %v5308 = vunpack.c.l.b16 %v5055
      %v5309 = vunpack.c.h.b16 %v5055
      %v5310 = vunpack.c.l.b16 %v5056
      %v5311 = vunpack.c.h.b16 %v5056
      %v5312 = vunpack.c.l.b16 %v5057
      %v5313 = vunpack.c.h.b16 %v5057
      %v5314 = vpack.c.b16 %v5252, %v5250
      %v5315 = vpack.c.b16 %v5253, %v5251
      %v5316 = vpack.c.b16 %v5256, %v5254
      %v5317 = vpack.c.b16 %v5257, %v5255
      %v5318 = vpack.c.b16 %v5260, %v5258
      %v5319 = vpack.c.b16 %v5261, %v5259
      %v5320 = vpack.c.b16 %v5264, %v5262
      %v5321 = vpack.c.b16 %v5265, %v5263
      %v5322 = vpack.c.b16 %v5268, %v5266
      %v5323 = vpack.c.b16 %v5269, %v5267
      %v5324 = vpack.c.b16 %v5272, %v5270
      %v5325 = vpack.c.b16 %v5273, %v5271
      %v5326 = vpack.c.b16 %v5276, %v5274
      %v5327 = vpack.c.b16 %v5277, %v5275
      %v5328 = vpack.c.b16 %v5280, %v5278
      %v5329 = vpack.c.b16 %v5281, %v5279
      %v5330 = vpack.c.b16 %v5284, %v5282
      %v5331 = vpack.c.b16 %v5285, %v5283
      %v5332 = vpack.c.b16 %v5288, %v5286
      %v5333 = vpack.c.b16 %v5289, %v5287
      %v5334 = vpack.c.b16 %v5292, %v5290
      %v5335 = vpack.c.b16 %v5293, %v5291
      %v5336 = vpack.c.b16 %v5296, %v5294
      %v5337 = vpack.c.b16 %v5297, %v5295
      %v5338 = vpack.c.b16 %v5300, %v5298
      %v5339 = vpack.c.b16 %v5301, %v5299
      %v5340 = vpack.c.b16 %v5304, %v5302
      %v5341 = vpack.c.b16 %v5305, %v5303
      %v5342 = vpack.c.b16 %v5308, %v5306
      %v5343 = vpack.c.b16 %v5309, %v5307
      %v5344 = vpack.c.b16 %v5312, %v5310
      %v5345 = vpack.c.b16 %v5313, %v5311
      %5378 = vmatprep.subr.bf16.mxu0 %v5315
      %5379 = vmatpush1.bf16.msra.mxu0 %v5314
      %5380 = vmatprep.subr.bf16.mxu0 %v5317
      %5381 = vmatpush1.bf16.msra.mxu0 %v5316
      %5382 = vmatprep.subr.bf16.mxu0 %v5319
      %5383 = vmatpush1.bf16.msra.mxu0 %v5318
      %5384 = vmatprep.subr.bf16.mxu0 %v5321
      %5385 = vmatpush1.bf16.msra.mxu0 %v5320
      %5386 = vmatprep.subr.bf16.mxu0 %v5323
      %5387 = vmatpush1.bf16.msra.mxu0 %v5322
      %5388 = vmatprep.subr.bf16.mxu0 %v5325
      %5389 = vmatpush1.bf16.msra.mxu0 %v5324
      %5390 = vmatprep.subr.bf16.mxu0 %v5327
      %5391 = vmatpush1.bf16.msra.mxu0 %v5326
      %5392 = vmatprep.subr.bf16.mxu0 %v5329
      %5393 = vmatpush1.bf16.msra.mxu0 %v5328
      %5394 = vmatprep.subr.bf16.mxu0 %v5331
      %5395 = vmatpush1.bf16.msra.mxu0 %v5330
      %5396 = vmatprep.subr.bf16.mxu0 %v5333
      %5397 = vmatpush1.bf16.msra.mxu0 %v5332
      %5398 = vmatprep.subr.bf16.mxu0 %v5335
      %5399 = vmatpush1.bf16.msra.mxu0 %v5334
      %5400 = vmatprep.subr.bf16.mxu0 %v5337
      %5401 = vmatpush1.bf16.msra.mxu0 %v5336
      %5402 = vmatprep.subr.bf16.mxu0 %v5339
      %5403 = vmatpush1.bf16.msra.mxu0 %v5338
      %5404 = vmatprep.subr.bf16.mxu0 %v5341
      %5405 = vmatpush1.bf16.msra.mxu0 %v5340
      %5406 = vmatprep.subr.bf16.mxu0 %v5343
      %5407 = vmatpush1.bf16.msra.mxu0 %v5342
      %5408 = vmatprep.subr.bf16.mxu0 %v5345
      %5409 = vmatpush1.bf16.msra.mxu0 %v5344
      %5410 = vmatprep.mubr.bf16.mxu0 %v5155
      %5411 = vmatmul.mubr.bf16.gmra.mrb[0].mxu0 %v5154
      %v5412 = vpop.f32.mrb[0].mxu0
      %v5413 = vadd.f32 0.0, %v5412
      %v5414 = vpop.f32.mrb[0].mxu0
      %v5415 = vadd.f32 0.0, %v5414
      %v5416 = vpop.f32.mrb[0].mxu0
      %v5417 = vadd.f32 0.0, %v5416
      %v5418 = vpop.f32.mrb[0].mxu0
      %v5419 = vadd.f32 0.0, %v5418
      %5420 = vmatprep.mubr.bf16.mxu0 %v5157
      %5421 = vmatmul.mubr.bf16.gmra.mrb[0].mxu0 %v5156
      %v5422 = vpop.f32.mrb[0].mxu0
      %v5423 = vadd.f32 0.0, %v5422
      %v5424 = vpop.f32.mrb[0].mxu0
      %v5425 = vadd.f32 0.0, %v5424
      %v5426 = vpop.f32.mrb[0].mxu0
      %v5427 = vadd.f32 0.0, %v5426
      %v5428 = vpop.f32.mrb[0].mxu0
      %v5429 = vadd.f32 0.0, %v5428
      %5430 = vmatprep.mubr.bf16.mxu0 %v5159
      %5431 = vmatmul.mubr.bf16.gmra.mrb[0].mxu0 %v5158
      %v5432 = vpop.f32.mrb[0].mxu0
      %v5433 = vadd.f32 0.0, %v5432
      %v5434 = vpop.f32.mrb[0].mxu0
      %v5435 = vadd.f32 0.0, %v5434
      %v5436 = vpop.f32.mrb[0].mxu0
      %v5437 = vadd.f32 0.0, %v5436
      %v5438 = vpop.f32.mrb[0].mxu0
      %v5439 = vadd.f32 0.0, %v5438
      %5440 = vmatprep.mubr.bf16.mxu0 %v5161
      %5441 = vmatmul.mubr.bf16.gmra.mrb[0].mxu0 %v5160
      %v5442 = vpop.f32.mrb[0].mxu0
      %v5443 = vadd.f32 0.0, %v5442
      %v5444 = vpop.f32.mrb[0].mxu0
      %v5445 = vadd.f32 0.0, %v5444
      %v5446 = vpop.f32.mrb[0].mxu0
      %v5447 = vadd.f32 0.0, %v5446
      %v5448 = vpop.f32.mrb[0].mxu0
      %v5449 = vadd.f32 0.0, %v5448
      %5450 = vmatprep.mubr.bf16.mxu0 %v5163
      %5451 = vmatmul.mubr.bf16.gmra.mrb[0].mxu0 %v5162
      %v5452 = vpop.f32.mrb[0].mxu0
      %v5453 = vadd.f32 0.0, %v5452
      %v5454 = vpop.f32.mrb[0].mxu0
      %v5455 = vadd.f32 0.0, %v5454
      %v5456 = vpop.f32.mrb[0].mxu0
      %v5457 = vadd.f32 0.0, %v5456
      %v5458 = vpop.f32.mrb[0].mxu0
      %v5459 = vadd.f32 0.0, %v5458
      %5460 = vmatprep.mubr.bf16.mxu0 %v5165
      %5461 = vmatmul.mubr.bf16.gmra.mrb[0].mxu0 %v5164
      %v5462 = vpop.f32.mrb[0].mxu0
      %v5463 = vadd.f32 0.0, %v5462
      %v5464 = vpop.f32.mrb[0].mxu0
      %v5465 = vadd.f32 0.0, %v5464
      %v5466 = vpop.f32.mrb[0].mxu0
      %v5467 = vadd.f32 0.0, %v5466
      %v5468 = vpop.f32.mrb[0].mxu0
      %v5469 = vadd.f32 0.0, %v5468
      %5470 = vmatprep.mubr.bf16.mxu0 %v5167
      %5471 = vmatmul.mubr.bf16.gmra.mrb[0].mxu0 %v5166
      %v5472 = vpop.f32.mrb[0].mxu0
      %v5473 = vadd.f32 0.0, %v5472
      %v5474 = vpop.f32.mrb[0].mxu0
      %v5475 = vadd.f32 0.0, %v5474
      %v5476 = vpop.f32.mrb[0].mxu0
      %v5477 = vadd.f32 0.0, %v5476
      %v5478 = vpop.f32.mrb[0].mxu0
      %v5479 = vadd.f32 0.0, %v5478
      %5480 = vmatprep.mubr.bf16.mxu0 %v5169
      %5481 = vmatmul.mubr.bf16.gmra.mrb[0].mxu0 %v5168
      %v5482 = vpop.f32.mrb[0].mxu0
      %v5483 = vadd.f32 0.0, %v5482
      %v5484 = vpop.f32.mrb[0].mxu0
      %v5485 = vadd.f32 0.0, %v5484
      %v5486 = vpop.f32.mrb[0].mxu0
      %v5487 = vadd.f32 0.0, %v5486
      %v5488 = vpop.f32.mrb[0].mxu0
      %v5489 = vadd.f32 0.0, %v5488
      %5490 = vmatprep.mubr.bf16.mxu0 %v5171
      %5491 = vmatmul.mubr.bf16.gmra.mrb[0].mxu0 %v5170
      %v5492 = vpop.f32.mrb[0].mxu0
      %v5493 = vadd.f32 0.0, %v5492
      %v5494 = vpop.f32.mrb[0].mxu0
      %v5495 = vadd.f32 0.0, %v5494
      %v5496 = vpop.f32.mrb[0].mxu0
      %v5497 = vadd.f32 0.0, %v5496
      %v5498 = vpop.f32.mrb[0].mxu0
      %v5499 = vadd.f32 0.0, %v5498
      %5500 = vmatprep.mubr.bf16.mxu0 %v5173
      %5501 = vmatmul.mubr.bf16.gmra.mrb[0].mxu0 %v5172
      %v5502 = vpop.f32.mrb[0].mxu0
      %v5503 = vadd.f32 0.0, %v5502
      %v5504 = vpop.f32.mrb[0].mxu0
      %v5505 = vadd.f32 0.0, %v5504
      %v5506 = vpop.f32.mrb[0].mxu0
      %v5507 = vadd.f32 0.0, %v5506
      %v5508 = vpop.f32.mrb[0].mxu0
      %v5509 = vadd.f32 0.0, %v5508
      %5510 = vmatprep.mubr.bf16.mxu0 %v5175
      %5511 = vmatmul.mubr.bf16.gmra.mrb[0].mxu0 %v5174
      %v5512 = vpop.f32.mrb[0].mxu0
      %v5513 = vadd.f32 0.0, %v5512
      %v5514 = vpop.f32.mrb[0].mxu0
      %v5515 = vadd.f32 0.0, %v5514
      %v5516 = vpop.f32.mrb[0].mxu0
      %v5517 = vadd.f32 0.0, %v5516
      %v5518 = vpop.f32.mrb[0].mxu0
      %v5519 = vadd.f32 0.0, %v5518
      %5520 = vmatprep.mubr.bf16.mxu0 %v5177
      %5521 = vmatmul.mubr.bf16.gmra.mrb[0].mxu0 %v5176
      %v5522 = vpop.f32.mrb[0].mxu0
      %v5523 = vadd.f32 0.0, %v5522
      %v5524 = vpop.f32.mrb[0].mxu0
      %v5525 = vadd.f32 0.0, %v5524
      %v5526 = vpop.f32.mrb[0].mxu0
      %v5527 = vadd.f32 0.0, %v5526
      %v5528 = vpop.f32.mrb[0].mxu0
      %v5529 = vadd.f32 0.0, %v5528
      %5530 = vmatprep.mubr.bf16.mxu0 %v5179
      %5531 = vmatmul.mubr.bf16.gmra.mrb[0].mxu0 %v5178
      %v5532 = vpop.f32.mrb[0].mxu0
      %v5533 = vadd.f32 0.0, %v5532
      %v5534 = vpop.f32.mrb[0].mxu0
      %v5535 = vadd.f32 0.0, %v5534
      %v5536 = vpop.f32.mrb[0].mxu0
      %v5537 = vadd.f32 0.0, %v5536
      %v5538 = vpop.f32.mrb[0].mxu0
      %v5539 = vadd.f32 0.0, %v5538
      %5540 = vmatprep.mubr.bf16.mxu0 %v5181
      %5541 = vmatmul.mubr.bf16.gmra.mrb[0].mxu0 %v5180
      %v5542 = vpop.f32.mrb[0].mxu0
      %v5543 = vadd.f32 0.0, %v5542
      %v5544 = vpop.f32.mrb[0].mxu0
      %v5545 = vadd.f32 0.0, %v5544
      %v5546 = vpop.f32.mrb[0].mxu0
      %v5547 = vadd.f32 0.0, %v5546
      %v5548 = vpop.f32.mrb[0].mxu0
      %v5549 = vadd.f32 0.0, %v5548
      %5550 = vmatprep.mubr.bf16.mxu0 %v5183
      %5551 = vmatmul.mubr.bf16.gmra.mrb[0].mxu0 %v5182
      %v5552 = vpop.f32.mrb[0].mxu0
      %v5553 = vadd.f32 0.0, %v5552
      %v5554 = vpop.f32.mrb[0].mxu0
      %v5555 = vadd.f32 0.0, %v5554
      %v5556 = vpop.f32.mrb[0].mxu0
      %v5557 = vadd.f32 0.0, %v5556
      %v5558 = vpop.f32.mrb[0].mxu0
      %v5559 = vadd.f32 0.0, %v5558
      %5560 = vmatprep.mubr.bf16.mxu0 %v5185
      %5561 = vmatmul.mubr.bf16.gmra.mrb[0].mxu0 %v5184
      %v5562 = vpop.f32.mrb[0].mxu0
      %v5563 = vadd.f32 0.0, %v5562
      %v5564 = vpop.f32.mrb[0].mxu0
      %v5565 = vadd.f32 0.0, %v5564
      %v5566 = vpop.f32.mrb[0].mxu0
      %v5567 = vadd.f32 0.0, %v5566
      %v5568 = vpop.f32.mrb[0].mxu0
      %v5569 = vadd.f32 0.0, %v5568
      %5570 = vdwg.mxu0
      %v5571 = vadd.f32 %v4924, %v5413
      %v5572 = vadd.f32 %v4925, %v5415
      %v5573 = vadd.f32 %v4926, %v5417
      %v5574 = vadd.f32 %v4927, %v5419
      %v5575 = vadd.f32 %v4928, %v5423
      %v5576 = vadd.f32 %v4929, %v5425
      %v5577 = vadd.f32 %v4930, %v5427
      %v5578 = vadd.f32 %v4931, %v5429
      %v5579 = vadd.f32 %v4932, %v5433
      %v5580 = vadd.f32 %v4933, %v5435
      %v5581 = vadd.f32 %v4934, %v5437
      %v5582 = vadd.f32 %v4935, %v5439
      %v5583 = vadd.f32 %v4936, %v5443
      %v5584 = vadd.f32 %v4937, %v5445
      %v5585 = vadd.f32 %v4938, %v5447
      %v5586 = vadd.f32 %v4939, %v5449
      %v5587 = vadd.f32 %v4940, %v5453
      %v5588 = vadd.f32 %v4941, %v5455
      %v5589 = vadd.f32 %v4942, %v5457
      %v5590 = vadd.f32 %v4943, %v5459
      %v5591 = vadd.f32 %v4944, %v5463
      %v5592 = vadd.f32 %v4945, %v5465
      %v5593 = vadd.f32 %v4946, %v5467
      %v5594 = vadd.f32 %v4947, %v5469
      %v5595 = vadd.f32 %v4948, %v5473
      %v5596 = vadd.f32 %v4949, %v5475
      %v5597 = vadd.f32 %v4950, %v5477
      %v5598 = vadd.f32 %v4951, %v5479
      %v5599 = vadd.f32 %v4952, %v5483
      %v5600 = vadd.f32 %v4953, %v5485
      %v5601 = vadd.f32 %v4954, %v5487
      %v5602 = vadd.f32 %v4955, %v5489
      %v5603 = vadd.f32 %v4956, %v5493
      %v5604 = vadd.f32 %v4957, %v5495
      %v5605 = vadd.f32 %v4958, %v5497
      %v5606 = vadd.f32 %v4959, %v5499
      %v5607 = vadd.f32 %v4960, %v5503
      %v5608 = vadd.f32 %v4961, %v5505
      %v5609 = vadd.f32 %v4962, %v5507
      %v5610 = vadd.f32 %v4963, %v5509
      %v5611 = vadd.f32 %v4964, %v5513
      %v5612 = vadd.f32 %v4965, %v5515
      %v5613 = vadd.f32 %v4966, %v5517
      %v5614 = vadd.f32 %v4967, %v5519
      %v5615 = vadd.f32 %v4968, %v5523
      %v5616 = vadd.f32 %v4969, %v5525
      %v5617 = vadd.f32 %v4970, %v5527
      %v5618 = vadd.f32 %v4971, %v5529
      %v5619 = vadd.f32 %v4972, %v5533
      %v5620 = vadd.f32 %v4973, %v5535
      %v5621 = vadd.f32 %v4974, %v5537
      %v5622 = vadd.f32 %v4975, %v5539
      %v5623 = vadd.f32 %v4976, %v5543
      %v5624 = vadd.f32 %v4977, %v5545
      %v5625 = vadd.f32 %v4978, %v5547
      %v5626 = vadd.f32 %v4979, %v5549
      %v5627 = vadd.f32 %v4980, %v5553
      %v5628 = vadd.f32 %v4981, %v5555
      %v5629 = vadd.f32 %v4982, %v5557
      %v5630 = vadd.f32 %v4983, %v5559
      %v5631 = vadd.f32 %v4984, %v5563
      %v5632 = vadd.f32 %v4985, %v5565
      %v5633 = vadd.f32 %v4986, %v5567
      %v5634 = vadd.f32 %v4987, %v5569
      %5635 = vst [vmem:[%s209] sm:$0xff] %v5571
      %5636 = vst [vmem:[%s209 + $0x8] sm:$0xff] %v5572
      %5637 = vst [vmem:[%s209 + $0x10] sm:$0xff] %v5573
      %5638 = vst [vmem:[%s209 + $0x18] sm:$0xff] %v5574
      %5639 = vst [vmem:[%s209 + $0x20] sm:$0xff] %v5575
      %5640 = vst [vmem:[%s209 + $0x28] sm:$0xff] %v5576
      %5641 = vst [vmem:[%s209 + $0x30] sm:$0xff] %v5577
      %5642 = vst [vmem:[%s209 + $0x38] sm:$0xff] %v5578
      %5643 = vst [vmem:[%s209 + $0x40] sm:$0xff] %v5579
      %5644 = vst [vmem:[%s209 + $0x48] sm:$0xff] %v5580
      %5645 = vst [vmem:[%s209 + $0x50] sm:$0xff] %v5581
      %5646 = vst [vmem:[%s209 + $0x58] sm:$0xff] %v5582
      %5647 = vst [vmem:[%s209 + $0x60] sm:$0xff] %v5583
      %5648 = vst [vmem:[%s209 + $0x68] sm:$0xff] %v5584
      %5649 = vst [vmem:[%s209 + $0x70] sm:$0xff] %v5585
      %5650 = vst [vmem:[%s209 + $0x78] sm:$0xff] %v5586
      %5651 = vst [vmem:[%s209 + $0x80] sm:$0xff] %v5587
      %5652 = vst [vmem:[%s209 + $0x88] sm:$0xff] %v5588
      %5653 = vst [vmem:[%s209 + $0x90] sm:$0xff] %v5589
      %5654 = vst [vmem:[%s209 + $0x98] sm:$0xff] %v5590
      %5655 = vst [vmem:[%s209 + $0xa0] sm:$0xff] %v5591
      %5656 = vst [vmem:[%s209 + $0xa8] sm:$0xff] %v5592
      %5657 = vst [vmem:[%s209 + $0xb0] sm:$0xff] %v5593
      %5658 = vst [vmem:[%s209 + $0xb8] sm:$0xff] %v5594
      %5659 = vst [vmem:[%s209 + $0xc0] sm:$0xff] %v5595
      %5660 = vst [vmem:[%s209 + $0xc8] sm:$0xff] %v5596
      %5661 = vst [vmem:[%s209 + $0xd0] sm:$0xff] %v5597
      %5662 = vst [vmem:[%s209 + $0xd8] sm:$0xff] %v5598
      %5663 = vst [vmem:[%s209 + $0xe0] sm:$0xff] %v5599
      %5664 = vst [vmem:[%s209 + $0xe8] sm:$0xff] %v5600
      %5665 = vst [vmem:[%s209 + $0xf0] sm:$0xff] %v5601
      %5666 = vst [vmem:[%s209 + $0xf8] sm:$0xff] %v5602
      %5667 = vst [vmem:[%s209 + $0x100] sm:$0xff] %v5603
      %5668 = vst [vmem:[%s209 + $0x108] sm:$0xff] %v5604
      %5669 = vst [vmem:[%s209 + $0x110] sm:$0xff] %v5605
      %5670 = vst [vmem:[%s209 + $0x118] sm:$0xff] %v5606
      %5671 = vst [vmem:[%s209 + $0x120] sm:$0xff] %v5607
      %5672 = vst [vmem:[%s209 + $0x128] sm:$0xff] %v5608
      %5673 = vst [vmem:[%s209 + $0x130] sm:$0xff] %v5609
      %5674 = vst [vmem:[%s209 + $0x138] sm:$0xff] %v5610
      %5675 = vst [vmem:[%s209 + $0x140] sm:$0xff] %v5611
      %5676 = vst [vmem:[%s209 + $0x148] sm:$0xff] %v5612
      %5677 = vst [vmem:[%s209 + $0x150] sm:$0xff] %v5613
      %5678 = vst [vmem:[%s209 + $0x158] sm:$0xff] %v5614
      %5679 = vst [vmem:[%s209 + $0x160] sm:$0xff] %v5615
      %5680 = vst [vmem:[%s209 + $0x168] sm:$0xff] %v5616
      %5681 = vst [vmem:[%s209 + $0x170] sm:$0xff] %v5617
      %5682 = vst [vmem:[%s209 + $0x178] sm:$0xff] %v5618
      %5683 = vst [vmem:[%s209 + $0x180] sm:$0xff] %v5619
      %5684 = vst [vmem:[%s209 + $0x188] sm:$0xff] %v5620
      %5685 = vst [vmem:[%s209 + $0x190] sm:$0xff] %v5621
      %5686 = vst [vmem:[%s209 + $0x198] sm:$0xff] %v5622
      %5687 = vst [vmem:[%s209 + $0x1a0] sm:$0xff] %v5623
      %5688 = vst [vmem:[%s209 + $0x1a8] sm:$0xff] %v5624
      %5689 = vst [vmem:[%s209 + $0x1b0] sm:$0xff] %v5625
      %5690 = vst [vmem:[%s209 + $0x1b8] sm:$0xff] %v5626
      %5691 = vst [vmem:[%s209 + $0x1c0] sm:$0xff] %v5627
      %5692 = vst [vmem:[%s209 + $0x1c8] sm:$0xff] %v5628
      %5693 = vst [vmem:[%s209 + $0x1d0] sm:$0xff] %v5629
      %5694 = vst [vmem:[%s209 + $0x1d8] sm:$0xff] %v5630
      %5695 = vst [vmem:[%s209 + $0x1e0] sm:$0xff] %v5631
      %5696 = vst [vmem:[%s209 + $0x1e8] sm:$0xff] %v5632
      %5697 = vst [vmem:[%s209 + $0x1f0] sm:$0xff] %v5633
      %5698 = vst [vmem:[%s209 + $0x1f8] sm:$0xff] %v5634
      %v5699 = vld [vmem:[%s209] sm:$0xff]
      %v5700 = vld [vmem:[%s209 + $0x8] sm:$0xff]
      %v5701 = vld [vmem:[%s209 + $0x10] sm:$0xff]
      %v5702 = vld [vmem:[%s209 + $0x18] sm:$0xff]
      %v5703 = vld [vmem:[%s209 + $0x20] sm:$0xff]
      %v5704 = vld [vmem:[%s209 + $0x28] sm:$0xff]
      %v5705 = vld [vmem:[%s209 + $0x30] sm:$0xff]
      %v5706 = vld [vmem:[%s209 + $0x38] sm:$0xff]
      %v5707 = vld [vmem:[%s209 + $0x40] sm:$0xff]
      %v5708 = vld [vmem:[%s209 + $0x48] sm:$0xff]
      %v5709 = vld [vmem:[%s209 + $0x50] sm:$0xff]
      %v5710 = vld [vmem:[%s209 + $0x58] sm:$0xff]
      %v5711 = vld [vmem:[%s209 + $0x60] sm:$0xff]
      %v5712 = vld [vmem:[%s209 + $0x68] sm:$0xff]
      %v5713 = vld [vmem:[%s209 + $0x70] sm:$0xff]
      %v5714 = vld [vmem:[%s209 + $0x78] sm:$0xff]
      %v5715 = vld [vmem:[%s209 + $0x80] sm:$0xff]
      %v5716 = vld [vmem:[%s209 + $0x88] sm:$0xff]
      %v5717 = vld [vmem:[%s209 + $0x90] sm:$0xff]
      %v5718 = vld [vmem:[%s209 + $0x98] sm:$0xff]
      %v5719 = vld [vmem:[%s209 + $0xa0] sm:$0xff]
      %v5720 = vld [vmem:[%s209 + $0xa8] sm:$0xff]
      %v5721 = vld [vmem:[%s209 + $0xb0] sm:$0xff]
      %v5722 = vld [vmem:[%s209 + $0xb8] sm:$0xff]
      %v5723 = vld [vmem:[%s209 + $0xc0] sm:$0xff]
      %v5724 = vld [vmem:[%s209 + $0xc8] sm:$0xff]
      %v5725 = vld [vmem:[%s209 + $0xd0] sm:$0xff]
      %v5726 = vld [vmem:[%s209 + $0xd8] sm:$0xff]
      %v5727 = vld [vmem:[%s209 + $0xe0] sm:$0xff]
      %v5728 = vld [vmem:[%s209 + $0xe8] sm:$0xff]
      %v5729 = vld [vmem:[%s209 + $0xf0] sm:$0xff]
      %v5730 = vld [vmem:[%s209 + $0xf8] sm:$0xff]
      %v5731 = vld [vmem:[%s209 + $0x100] sm:$0xff]
      %v5732 = vld [vmem:[%s209 + $0x108] sm:$0xff]
      %v5733 = vld [vmem:[%s209 + $0x110] sm:$0xff]
      %v5734 = vld [vmem:[%s209 + $0x118] sm:$0xff]
      %v5735 = vld [vmem:[%s209 + $0x120] sm:$0xff]
      %v5736 = vld [vmem:[%s209 + $0x128] sm:$0xff]
      %v5737 = vld [vmem:[%s209 + $0x130] sm:$0xff]
      %v5738 = vld [vmem:[%s209 + $0x138] sm:$0xff]
      %v5739 = vld [vmem:[%s209 + $0x140] sm:$0xff]
      %v5740 = vld [vmem:[%s209 + $0x148] sm:$0xff]
      %v5741 = vld [vmem:[%s209 + $0x150] sm:$0xff]
      %v5742 = vld [vmem:[%s209 + $0x158] sm:$0xff]
      %v5743 = vld [vmem:[%s209 + $0x160] sm:$0xff]
      %v5744 = vld [vmem:[%s209 + $0x168] sm:$0xff]
      %v5745 = vld [vmem:[%s209 + $0x170] sm:$0xff]
      %v5746 = vld [vmem:[%s209 + $0x178] sm:$0xff]
      %v5747 = vld [vmem:[%s209 + $0x180] sm:$0xff]
      %v5748 = vld [vmem:[%s209 + $0x188] sm:$0xff]
      %v5749 = vld [vmem:[%s209 + $0x190] sm:$0xff]
      %v5750 = vld [vmem:[%s209 + $0x198] sm:$0xff]
      %v5751 = vld [vmem:[%s209 + $0x1a0] sm:$0xff]
      %v5752 = vld [vmem:[%s209 + $0x1a8] sm:$0xff]
      %v5753 = vld [vmem:[%s209 + $0x1b0] sm:$0xff]
      %v5754 = vld [vmem:[%s209 + $0x1b8] sm:$0xff]
      %v5755 = vld [vmem:[%s209 + $0x1c0] sm:$0xff]
      %v5756 = vld [vmem:[%s209 + $0x1c8] sm:$0xff]
      %v5757 = vld [vmem:[%s209 + $0x1d0] sm:$0xff]
      %v5758 = vld [vmem:[%s209 + $0x1d8] sm:$0xff]
      %v5759 = vld [vmem:[%s209 + $0x1e0] sm:$0xff]
      %v5760 = vld [vmem:[%s209 + $0x1e8] sm:$0xff]
      %v5761 = vld [vmem:[%s209 + $0x1f0] sm:$0xff]
      %v5762 = vld [vmem:[%s209 + $0x1f8] sm:$0xff]
      %s5763 = sadd.s32 %s4990, 152
      %s5764 = smul.addr %s5763, 4
      %s5765 = scalar_lea.vmem %s0, %s5764
      %v5766 = vld [vmem:[%s5765] sm:$0xff]
      %v5767 = vld [vmem:[%s5765 + $0x8] sm:$0xff]
      %v5768 = vld [vmem:[%s5765 + $0x10] sm:$0xff]
      %v5769 = vld [vmem:[%s5765 + $0x18] sm:$0xff]
      %v5770 = vld [vmem:[%s5765 + $0x20] sm:$0xff]
      %v5771 = vld [vmem:[%s5765 + $0x28] sm:$0xff]
      %v5772 = vld [vmem:[%s5765 + $0x30] sm:$0xff]
      %v5773 = vld [vmem:[%s5765 + $0x38] sm:$0xff]
      %v5774 = vld [vmem:[%s5765 + $0x40] sm:$0xff]
      %v5775 = vld [vmem:[%s5765 + $0x48] sm:$0xff]
      %v5776 = vld [vmem:[%s5765 + $0x50] sm:$0xff]
      %v5777 = vld [vmem:[%s5765 + $0x58] sm:$0xff]
      %v5778 = vld [vmem:[%s5765 + $0x60] sm:$0xff]
      %v5779 = vld [vmem:[%s5765 + $0x68] sm:$0xff]
      %v5780 = vld [vmem:[%s5765 + $0x70] sm:$0xff]
      %v5781 = vld [vmem:[%s5765 + $0x78] sm:$0xff]
      %v5782 = vld [vmem:[%s5765 + $0x80] sm:$0xff]
      %v5783 = vld [vmem:[%s5765 + $0x88] sm:$0xff]
      %v5784 = vld [vmem:[%s5765 + $0x90] sm:$0xff]
      %v5785 = vld [vmem:[%s5765 + $0x98] sm:$0xff]
      %v5786 = vld [vmem:[%s5765 + $0xa0] sm:$0xff]
      %v5787 = vld [vmem:[%s5765 + $0xa8] sm:$0xff]
      %v5788 = vld [vmem:[%s5765 + $0xb0] sm:$0xff]
      %v5789 = vld [vmem:[%s5765 + $0xb8] sm:$0xff]
      %v5790 = vld [vmem:[%s5765 + $0xc0] sm:$0xff]
      %v5791 = vld [vmem:[%s5765 + $0xc8] sm:$0xff]
      %v5792 = vld [vmem:[%s5765 + $0xd0] sm:$0xff]
      %v5793 = vld [vmem:[%s5765 + $0xd8] sm:$0xff]
      %v5794 = vld [vmem:[%s5765 + $0xe0] sm:$0xff]
      %v5795 = vld [vmem:[%s5765 + $0xe8] sm:$0xff]
      %v5796 = vld [vmem:[%s5765 + $0xf0] sm:$0xff]
      %v5797 = vld [vmem:[%s5765 + $0xf8] sm:$0xff]
      %s5798 = scalar_lea.vmem %s1, 1792
      %v5799 = vld [vmem:[%s5798] sm:$0xff]
      %v5800 = vld [vmem:[%s5798 + $0x8] sm:$0xff]
      %v5801 = vld [vmem:[%s5798 + $0x10] sm:$0xff]
      %v5802 = vld [vmem:[%s5798 + $0x18] sm:$0xff]
      %v5803 = vld [vmem:[%s5798 + $0x20] sm:$0xff]
      %v5804 = vld [vmem:[%s5798 + $0x28] sm:$0xff]
      %v5805 = vld [vmem:[%s5798 + $0x30] sm:$0xff]
      %v5806 = vld [vmem:[%s5798 + $0x38] sm:$0xff]
      %v5807 = vld [vmem:[%s5798 + $0x40] sm:$0xff]
      %v5808 = vld [vmem:[%s5798 + $0x48] sm:$0xff]
      %v5809 = vld [vmem:[%s5798 + $0x50] sm:$0xff]
      %v5810 = vld [vmem:[%s5798 + $0x58] sm:$0xff]
      %v5811 = vld [vmem:[%s5798 + $0x60] sm:$0xff]
      %v5812 = vld [vmem:[%s5798 + $0x68] sm:$0xff]
      %v5813 = vld [vmem:[%s5798 + $0x70] sm:$0xff]
      %v5814 = vld [vmem:[%s5798 + $0x78] sm:$0xff]
      %v5815 = vld [vmem:[%s5798 + $0x80] sm:$0xff]
      %v5816 = vld [vmem:[%s5798 + $0x88] sm:$0xff]
      %v5817 = vld [vmem:[%s5798 + $0x90] sm:$0xff]
      %v5818 = vld [vmem:[%s5798 + $0x98] sm:$0xff]
      %v5819 = vld [vmem:[%s5798 + $0xa0] sm:$0xff]
      %v5820 = vld [vmem:[%s5798 + $0xa8] sm:$0xff]
      %v5821 = vld [vmem:[%s5798 + $0xb0] sm:$0xff]
      %v5822 = vld [vmem:[%s5798 + $0xb8] sm:$0xff]
      %v5823 = vld [vmem:[%s5798 + $0xc0] sm:$0xff]
      %v5824 = vld [vmem:[%s5798 + $0xc8] sm:$0xff]
      %v5825 = vld [vmem:[%s5798 + $0xd0] sm:$0xff]
      %v5826 = vld [vmem:[%s5798 + $0xd8] sm:$0xff]
      %v5827 = vld [vmem:[%s5798 + $0xe0] sm:$0xff]
      %v5828 = vld [vmem:[%s5798 + $0xe8] sm:$0xff]
      %v5829 = vld [vmem:[%s5798 + $0xf0] sm:$0xff]
      %v5830 = vld [vmem:[%s5798 + $0xf8] sm:$0xff]
      %v5863 = vunpack.c.l.b16 %v5766
      %v5864 = vunpack.c.h.b16 %v5766
      %v5865 = vunpack.c.l.b16 %v5767
      %v5866 = vunpack.c.h.b16 %v5767
      %v5867 = vunpack.c.l.b16 %v5768
      %v5868 = vunpack.c.h.b16 %v5768
      %v5869 = vunpack.c.l.b16 %v5769
      %v5870 = vunpack.c.h.b16 %v5769
      %v5871 = vunpack.c.l.b16 %v5770
      %v5872 = vunpack.c.h.b16 %v5770
      %v5873 = vunpack.c.l.b16 %v5771
      %v5874 = vunpack.c.h.b16 %v5771
      %v5875 = vunpack.c.l.b16 %v5772
      %v5876 = vunpack.c.h.b16 %v5772
      %v5877 = vunpack.c.l.b16 %v5773
      %v5878 = vunpack.c.h.b16 %v5773
      %v5879 = vunpack.c.l.b16 %v5774
      %v5880 = vunpack.c.h.b16 %v5774
      %v5881 = vunpack.c.l.b16 %v5775
      %v5882 = vunpack.c.h.b16 %v5775
      %v5883 = vunpack.c.l.b16 %v5776
      %v5884 = vunpack.c.h.b16 %v5776
      %v5885 = vunpack.c.l.b16 %v5777
      %v5886 = vunpack.c.h.b16 %v5777
      %v5887 = vunpack.c.l.b16 %v5778
      %v5888 = vunpack.c.h.b16 %v5778
      %v5889 = vunpack.c.l.b16 %v5779
      %v5890 = vunpack.c.h.b16 %v5779
      %v5891 = vunpack.c.l.b16 %v5780
      %v5892 = vunpack.c.h.b16 %v5780
      %v5893 = vunpack.c.l.b16 %v5781
      %v5894 = vunpack.c.h.b16 %v5781
      %v5895 = vunpack.c.l.b16 %v5782
      %v5896 = vunpack.c.h.b16 %v5782
      %v5897 = vunpack.c.l.b16 %v5783
      %v5898 = vunpack.c.h.b16 %v5783
      %v5899 = vunpack.c.l.b16 %v5784
      %v5900 = vunpack.c.h.b16 %v5784
      %v5901 = vunpack.c.l.b16 %v5785
      %v5902 = vunpack.c.h.b16 %v5785
      %v5903 = vunpack.c.l.b16 %v5786
      %v5904 = vunpack.c.h.b16 %v5786
      %v5905 = vunpack.c.l.b16 %v5787
      %v5906 = vunpack.c.h.b16 %v5787
      %v5907 = vunpack.c.l.b16 %v5788
      %v5908 = vunpack.c.h.b16 %v5788
      %v5909 = vunpack.c.l.b16 %v5789
      %v5910 = vunpack.c.h.b16 %v5789
      %v5911 = vunpack.c.l.b16 %v5790
      %v5912 = vunpack.c.h.b16 %v5790
      %v5913 = vunpack.c.l.b16 %v5791
      %v5914 = vunpack.c.h.b16 %v5791
      %v5915 = vunpack.c.l.b16 %v5792
      %v5916 = vunpack.c.h.b16 %v5792
      %v5917 = vunpack.c.l.b16 %v5793
      %v5918 = vunpack.c.h.b16 %v5793
      %v5919 = vunpack.c.l.b16 %v5794
      %v5920 = vunpack.c.h.b16 %v5794
      %v5921 = vunpack.c.l.b16 %v5795
      %v5922 = vunpack.c.h.b16 %v5795
      %v5923 = vunpack.c.l.b16 %v5796
      %v5924 = vunpack.c.h.b16 %v5796
      %v5925 = vunpack.c.l.b16 %v5797
      %v5926 = vunpack.c.h.b16 %v5797
      %v5927 = vpack.c.b16 %v5865, %v5863
      %v5928 = vpack.c.b16 %v5866, %v5864
      %v5929 = vpack.c.b16 %v5869, %v5867
      %v5930 = vpack.c.b16 %v5870, %v5868
      %v5931 = vpack.c.b16 %v5873, %v5871
      %v5932 = vpack.c.b16 %v5874, %v5872
      %v5933 = vpack.c.b16 %v5877, %v5875
      %v5934 = vpack.c.b16 %v5878, %v5876
      %v5935 = vpack.c.b16 %v5881, %v5879
      %v5936 = vpack.c.b16 %v5882, %v5880
      %v5937 = vpack.c.b16 %v5885, %v5883
      %v5938 = vpack.c.b16 %v5886, %v5884
      %v5939 = vpack.c.b16 %v5889, %v5887
      %v5940 = vpack.c.b16 %v5890, %v5888
      %v5941 = vpack.c.b16 %v5893, %v5891
      %v5942 = vpack.c.b16 %v5894, %v5892
      %v5943 = vpack.c.b16 %v5897, %v5895
      %v5944 = vpack.c.b16 %v5898, %v5896
      %v5945 = vpack.c.b16 %v5901, %v5899
      %v5946 = vpack.c.b16 %v5902, %v5900
      %v5947 = vpack.c.b16 %v5905, %v5903
      %v5948 = vpack.c.b16 %v5906, %v5904
      %v5949 = vpack.c.b16 %v5909, %v5907
      %v5950 = vpack.c.b16 %v5910, %v5908
      %v5951 = vpack.c.b16 %v5913, %v5911
      %v5952 = vpack.c.b16 %v5914, %v5912
      %v5953 = vpack.c.b16 %v5917, %v5915
      %v5954 = vpack.c.b16 %v5918, %v5916
      %v5955 = vpack.c.b16 %v5921, %v5919
      %v5956 = vpack.c.b16 %v5922, %v5920
      %v5957 = vpack.c.b16 %v5925, %v5923
      %v5958 = vpack.c.b16 %v5926, %v5924
      %v6023 = vunpack.c.l.b16 %v5799
      %v6024 = vunpack.c.h.b16 %v5799
      %v6025 = vunpack.c.l.b16 %v5800
      %v6026 = vunpack.c.h.b16 %v5800
      %v6027 = vunpack.c.l.b16 %v5801
      %v6028 = vunpack.c.h.b16 %v5801
      %v6029 = vunpack.c.l.b16 %v5802
      %v6030 = vunpack.c.h.b16 %v5802
      %v6031 = vunpack.c.l.b16 %v5803
      %v6032 = vunpack.c.h.b16 %v5803
      %v6033 = vunpack.c.l.b16 %v5804
      %v6034 = vunpack.c.h.b16 %v5804
      %v6035 = vunpack.c.l.b16 %v5805
      %v6036 = vunpack.c.h.b16 %v5805
      %v6037 = vunpack.c.l.b16 %v5806
      %v6038 = vunpack.c.h.b16 %v5806
      %v6039 = vunpack.c.l.b16 %v5807
      %v6040 = vunpack.c.h.b16 %v5807
      %v6041 = vunpack.c.l.b16 %v5808
      %v6042 = vunpack.c.h.b16 %v5808
      %v6043 = vunpack.c.l.b16 %v5809
      %v6044 = vunpack.c.h.b16 %v5809
      %v6045 = vunpack.c.l.b16 %v5810
      %v6046 = vunpack.c.h.b16 %v5810
      %v6047 = vunpack.c.l.b16 %v5811
      %v6048 = vunpack.c.h.b16 %v5811
      %v6049 = vunpack.c.l.b16 %v5812
      %v6050 = vunpack.c.h.b16 %v5812
      %v6051 = vunpack.c.l.b16 %v5813
      %v6052 = vunpack.c.h.b16 %v5813
      %v6053 = vunpack.c.l.b16 %v5814
      %v6054 = vunpack.c.h.b16 %v5814
      %v6055 = vunpack.c.l.b16 %v5815
      %v6056 = vunpack.c.h.b16 %v5815
      %v6057 = vunpack.c.l.b16 %v5816
      %v6058 = vunpack.c.h.b16 %v5816
      %v6059 = vunpack.c.l.b16 %v5817
      %v6060 = vunpack.c.h.b16 %v5817
      %v6061 = vunpack.c.l.b16 %v5818
      %v6062 = vunpack.c.h.b16 %v5818
      %v6063 = vunpack.c.l.b16 %v5819
      %v6064 = vunpack.c.h.b16 %v5819
      %v6065 = vunpack.c.l.b16 %v5820
      %v6066 = vunpack.c.h.b16 %v5820
      %v6067 = vunpack.c.l.b16 %v5821
      %v6068 = vunpack.c.h.b16 %v5821
      %v6069 = vunpack.c.l.b16 %v5822
      %v6070 = vunpack.c.h.b16 %v5822
      %v6071 = vunpack.c.l.b16 %v5823
      %v6072 = vunpack.c.h.b16 %v5823
      %v6073 = vunpack.c.l.b16 %v5824
      %v6074 = vunpack.c.h.b16 %v5824
      %v6075 = vunpack.c.l.b16 %v5825
      %v6076 = vunpack.c.h.b16 %v5825
      %v6077 = vunpack.c.l.b16 %v5826
      %v6078 = vunpack.c.h.b16 %v5826
      %v6079 = vunpack.c.l.b16 %v5827
      %v6080 = vunpack.c.h.b16 %v5827
      %v6081 = vunpack.c.l.b16 %v5828
      %v6082 = vunpack.c.h.b16 %v5828
      %v6083 = vunpack.c.l.b16 %v5829
      %v6084 = vunpack.c.h.b16 %v5829
      %v6085 = vunpack.c.l.b16 %v5830
      %v6086 = vunpack.c.h.b16 %v5830
      %v6087 = vpack.c.b16 %v6025, %v6023
      %v6088 = vpack.c.b16 %v6026, %v6024
      %v6089 = vpack.c.b16 %v6029, %v6027
      %v6090 = vpack.c.b16 %v6030, %v6028
      %v6091 = vpack.c.b16 %v6033, %v6031
      %v6092 = vpack.c.b16 %v6034, %v6032
      %v6093 = vpack.c.b16 %v6037, %v6035
      %v6094 = vpack.c.b16 %v6038, %v6036
      %v6095 = vpack.c.b16 %v6041, %v6039
      %v6096 = vpack.c.b16 %v6042, %v6040
      %v6097 = vpack.c.b16 %v6045, %v6043
      %v6098 = vpack.c.b16 %v6046, %v6044
      %v6099 = vpack.c.b16 %v6049, %v6047
      %v6100 = vpack.c.b16 %v6050, %v6048
      %v6101 = vpack.c.b16 %v6053, %v6051
      %v6102 = vpack.c.b16 %v6054, %v6052
      %v6103 = vpack.c.b16 %v6057, %v6055
      %v6104 = vpack.c.b16 %v6058, %v6056
      %v6105 = vpack.c.b16 %v6061, %v6059
      %v6106 = vpack.c.b16 %v6062, %v6060
      %v6107 = vpack.c.b16 %v6065, %v6063
      %v6108 = vpack.c.b16 %v6066, %v6064
      %v6109 = vpack.c.b16 %v6069, %v6067
      %v6110 = vpack.c.b16 %v6070, %v6068
      %v6111 = vpack.c.b16 %v6073, %v6071
      %v6112 = vpack.c.b16 %v6074, %v6072
      %v6113 = vpack.c.b16 %v6077, %v6075
      %v6114 = vpack.c.b16 %v6078, %v6076
      %v6115 = vpack.c.b16 %v6081, %v6079
      %v6116 = vpack.c.b16 %v6082, %v6080
      %v6117 = vpack.c.b16 %v6085, %v6083
      %v6118 = vpack.c.b16 %v6086, %v6084
      %6151 = vmatprep.subr.bf16.mxu0 %v6088
      %6152 = vmatpush1.bf16.msra.mxu0 %v6087
      %6153 = vmatprep.subr.bf16.mxu0 %v6090
      %6154 = vmatpush1.bf16.msra.mxu0 %v6089
      %6155 = vmatprep.subr.bf16.mxu0 %v6092
      %6156 = vmatpush1.bf16.msra.mxu0 %v6091
      %6157 = vmatprep.subr.bf16.mxu0 %v6094
      %6158 = vmatpush1.bf16.msra.mxu0 %v6093
      %6159 = vmatprep.subr.bf16.mxu0 %v6096
      %6160 = vmatpush1.bf16.msra.mxu0 %v6095
      %6161 = vmatprep.subr.bf16.mxu0 %v6098
      %6162 = vmatpush1.bf16.msra.mxu0 %v6097
      %6163 = vmatprep.subr.bf16.mxu0 %v6100
      %6164 = vmatpush1.bf16.msra.mxu0 %v6099
      %6165 = vmatprep.subr.bf16.mxu0 %v6102
      %6166 = vmatpush1.bf16.msra.mxu0 %v6101
      %6167 = vmatprep.subr.bf16.mxu0 %v6104
      %6168 = vmatpush1.bf16.msra.mxu0 %v6103
      %6169 = vmatprep.subr.bf16.mxu0 %v6106
      %6170 = vmatpush1.bf16.msra.mxu0 %v6105
      %6171 = vmatprep.subr.bf16.mxu0 %v6108
      %6172 = vmatpush1.bf16.msra.mxu0 %v6107
      %6173 = vmatprep.subr.bf16.mxu0 %v6110
      %6174 = vmatpush1.bf16.msra.mxu0 %v6109
      %6175 = vmatprep.subr.bf16.mxu0 %v6112
      %6176 = vmatpush1.bf16.msra.mxu0 %v6111
      %6177 = vmatprep.subr.bf16.mxu0 %v6114
      %6178 = vmatpush1.bf16.msra.mxu0 %v6113
      %6179 = vmatprep.subr.bf16.mxu0 %v6116
      %6180 = vmatpush1.bf16.msra.mxu0 %v6115
      %6181 = vmatprep.subr.bf16.mxu0 %v6118
      %6182 = vmatpush1.bf16.msra.mxu0 %v6117
      %6183 = vmatprep.mubr.bf16.mxu0 %v5928
      %6184 = vmatmul.mubr.bf16.gmra.mrb[0].mxu0 %v5927
      %v6185 = vpop.f32.mrb[0].mxu0
      %v6186 = vadd.f32 0.0, %v6185
      %v6187 = vpop.f32.mrb[0].mxu0
      %v6188 = vadd.f32 0.0, %v6187
      %v6189 = vpop.f32.mrb[0].mxu0
      %v6190 = vadd.f32 0.0, %v6189
      %v6191 = vpop.f32.mrb[0].mxu0
      %v6192 = vadd.f32 0.0, %v6191
      %6193 = vmatprep.mubr.bf16.mxu0 %v5930
      %6194 = vmatmul.mubr.bf16.gmra.mrb[0].mxu0 %v5929
      %v6195 = vpop.f32.mrb[0].mxu0
      %v6196 = vadd.f32 0.0, %v6195
      %v6197 = vpop.f32.mrb[0].mxu0
      %v6198 = vadd.f32 0.0, %v6197
      %v6199 = vpop.f32.mrb[0].mxu0
      %v6200 = vadd.f32 0.0, %v6199
      %v6201 = vpop.f32.mrb[0].mxu0
      %v6202 = vadd.f32 0.0, %v6201
      %6203 = vmatprep.mubr.bf16.mxu0 %v5932
      %6204 = vmatmul.mubr.bf16.gmra.mrb[0].mxu0 %v5931
      %v6205 = vpop.f32.mrb[0].mxu0
      %v6206 = vadd.f32 0.0, %v6205
      %v6207 = vpop.f32.mrb[0].mxu0
      %v6208 = vadd.f32 0.0, %v6207
      %v6209 = vpop.f32.mrb[0].mxu0
      %v6210 = vadd.f32 0.0, %v6209
      %v6211 = vpop.f32.mrb[0].mxu0
      %v6212 = vadd.f32 0.0, %v6211
      %6213 = vmatprep.mubr.bf16.mxu0 %v5934
      %6214 = vmatmul.mubr.bf16.gmra.mrb[0].mxu0 %v5933
      %v6215 = vpop.f32.mrb[0].mxu0
      %v6216 = vadd.f32 0.0, %v6215
      %v6217 = vpop.f32.mrb[0].mxu0
      %v6218 = vadd.f32 0.0, %v6217
      %v6219 = vpop.f32.mrb[0].mxu0
      %v6220 = vadd.f32 0.0, %v6219
      %v6221 = vpop.f32.mrb[0].mxu0
      %v6222 = vadd.f32 0.0, %v6221
      %6223 = vmatprep.mubr.bf16.mxu0 %v5936
      %6224 = vmatmul.mubr.bf16.gmra.mrb[0].mxu0 %v5935
      %v6225 = vpop.f32.mrb[0].mxu0
      %v6226 = vadd.f32 0.0, %v6225
      %v6227 = vpop.f32.mrb[0].mxu0
      %v6228 = vadd.f32 0.0, %v6227
      %v6229 = vpop.f32.mrb[0].mxu0
      %v6230 = vadd.f32 0.0, %v6229
      %v6231 = vpop.f32.mrb[0].mxu0
      %v6232 = vadd.f32 0.0, %v6231
      %6233 = vmatprep.mubr.bf16.mxu0 %v5938
      %6234 = vmatmul.mubr.bf16.gmra.mrb[0].mxu0 %v5937
      %v6235 = vpop.f32.mrb[0].mxu0
      %v6236 = vadd.f32 0.0, %v6235
      %v6237 = vpop.f32.mrb[0].mxu0
      %v6238 = vadd.f32 0.0, %v6237
      %v6239 = vpop.f32.mrb[0].mxu0
      %v6240 = vadd.f32 0.0, %v6239
      %v6241 = vpop.f32.mrb[0].mxu0
      %v6242 = vadd.f32 0.0, %v6241
      %6243 = vmatprep.mubr.bf16.mxu0 %v5940
      %6244 = vmatmul.mubr.bf16.gmra.mrb[0].mxu0 %v5939
      %v6245 = vpop.f32.mrb[0].mxu0
      %v6246 = vadd.f32 0.0, %v6245
      %v6247 = vpop.f32.mrb[0].mxu0
      %v6248 = vadd.f32 0.0, %v6247
      %v6249 = vpop.f32.mrb[0].mxu0
      %v6250 = vadd.f32 0.0, %v6249
      %v6251 = vpop.f32.mrb[0].mxu0
      %v6252 = vadd.f32 0.0, %v6251
      %6253 = vmatprep.mubr.bf16.mxu0 %v5942
      %6254 = vmatmul.mubr.bf16.gmra.mrb[0].mxu0 %v5941
      %v6255 = vpop.f32.mrb[0].mxu0
      %v6256 = vadd.f32 0.0, %v6255
      %v6257 = vpop.f32.mrb[0].mxu0
      %v6258 = vadd.f32 0.0, %v6257
      %v6259 = vpop.f32.mrb[0].mxu0
      %v6260 = vadd.f32 0.0, %v6259
      %v6261 = vpop.f32.mrb[0].mxu0
      %v6262 = vadd.f32 0.0, %v6261
      %6263 = vmatprep.mubr.bf16.mxu0 %v5944
      %6264 = vmatmul.mubr.bf16.gmra.mrb[0].mxu0 %v5943
      %v6265 = vpop.f32.mrb[0].mxu0
      %v6266 = vadd.f32 0.0, %v6265
      %v6267 = vpop.f32.mrb[0].mxu0
      %v6268 = vadd.f32 0.0, %v6267
      %v6269 = vpop.f32.mrb[0].mxu0
      %v6270 = vadd.f32 0.0, %v6269
      %v6271 = vpop.f32.mrb[0].mxu0
      %v6272 = vadd.f32 0.0, %v6271
      %6273 = vmatprep.mubr.bf16.mxu0 %v5946
      %6274 = vmatmul.mubr.bf16.gmra.mrb[0].mxu0 %v5945
      %v6275 = vpop.f32.mrb[0].mxu0
      %v6276 = vadd.f32 0.0, %v6275
      %v6277 = vpop.f32.mrb[0].mxu0
      %v6278 = vadd.f32 0.0, %v6277
      %v6279 = vpop.f32.mrb[0].mxu0
      %v6280 = vadd.f32 0.0, %v6279
      %v6281 = vpop.f32.mrb[0].mxu0
      %v6282 = vadd.f32 0.0, %v6281
      %6283 = vmatprep.mubr.bf16.mxu0 %v5948
      %6284 = vmatmul.mubr.bf16.gmra.mrb[0].mxu0 %v5947
      %v6285 = vpop.f32.mrb[0].mxu0
      %v6286 = vadd.f32 0.0, %v6285
      %v6287 = vpop.f32.mrb[0].mxu0
      %v6288 = vadd.f32 0.0, %v6287
      %v6289 = vpop.f32.mrb[0].mxu0
      %v6290 = vadd.f32 0.0, %v6289
      %v6291 = vpop.f32.mrb[0].mxu0
      %v6292 = vadd.f32 0.0, %v6291
      %6293 = vmatprep.mubr.bf16.mxu0 %v5950
      %6294 = vmatmul.mubr.bf16.gmra.mrb[0].mxu0 %v5949
      %v6295 = vpop.f32.mrb[0].mxu0
      %v6296 = vadd.f32 0.0, %v6295
      %v6297 = vpop.f32.mrb[0].mxu0
      %v6298 = vadd.f32 0.0, %v6297
      %v6299 = vpop.f32.mrb[0].mxu0
      %v6300 = vadd.f32 0.0, %v6299
      %v6301 = vpop.f32.mrb[0].mxu0
      %v6302 = vadd.f32 0.0, %v6301
      %6303 = vmatprep.mubr.bf16.mxu0 %v5952
      %6304 = vmatmul.mubr.bf16.gmra.mrb[0].mxu0 %v5951
      %v6305 = vpop.f32.mrb[0].mxu0
      %v6306 = vadd.f32 0.0, %v6305
      %v6307 = vpop.f32.mrb[0].mxu0
      %v6308 = vadd.f32 0.0, %v6307
      %v6309 = vpop.f32.mrb[0].mxu0
      %v6310 = vadd.f32 0.0, %v6309
      %v6311 = vpop.f32.mrb[0].mxu0
      %v6312 = vadd.f32 0.0, %v6311
      %6313 = vmatprep.mubr.bf16.mxu0 %v5954
      %6314 = vmatmul.mubr.bf16.gmra.mrb[0].mxu0 %v5953
      %v6315 = vpop.f32.mrb[0].mxu0
      %v6316 = vadd.f32 0.0, %v6315
      %v6317 = vpop.f32.mrb[0].mxu0
      %v6318 = vadd.f32 0.0, %v6317
      %v6319 = vpop.f32.mrb[0].mxu0
      %v6320 = vadd.f32 0.0, %v6319
      %v6321 = vpop.f32.mrb[0].mxu0
      %v6322 = vadd.f32 0.0, %v6321
      %6323 = vmatprep.mubr.bf16.mxu0 %v5956
      %6324 = vmatmul.mubr.bf16.gmra.mrb[0].mxu0 %v5955
      %v6325 = vpop.f32.mrb[0].mxu0
      %v6326 = vadd.f32 0.0, %v6325
      %v6327 = vpop.f32.mrb[0].mxu0
      %v6328 = vadd.f32 0.0, %v6327
      %v6329 = vpop.f32.mrb[0].mxu0
      %v6330 = vadd.f32 0.0, %v6329
      %v6331 = vpop.f32.mrb[0].mxu0
      %v6332 = vadd.f32 0.0, %v6331
      %6333 = vmatprep.mubr.bf16.mxu0 %v5958
      %6334 = vmatmul.mubr.bf16.gmra.mrb[0].mxu0 %v5957
      %v6335 = vpop.f32.mrb[0].mxu0
      %v6336 = vadd.f32 0.0, %v6335
      %v6337 = vpop.f32.mrb[0].mxu0
      %v6338 = vadd.f32 0.0, %v6337
      %v6339 = vpop.f32.mrb[0].mxu0
      %v6340 = vadd.f32 0.0, %v6339
      %v6341 = vpop.f32.mrb[0].mxu0
      %v6342 = vadd.f32 0.0, %v6341
      %6343 = vdwg.mxu0
      %v6344 = vadd.f32 %v5699, %v6186
      %v6345 = vadd.f32 %v5700, %v6188
      %v6346 = vadd.f32 %v5701, %v6190
      %v6347 = vadd.f32 %v5702, %v6192
      %v6348 = vadd.f32 %v5703, %v6196
      %v6349 = vadd.f32 %v5704, %v6198
      %v6350 = vadd.f32 %v5705, %v6200
      %v6351 = vadd.f32 %v5706, %v6202
      %v6352 = vadd.f32 %v5707, %v6206
      %v6353 = vadd.f32 %v5708, %v6208
      %v6354 = vadd.f32 %v5709, %v6210
      %v6355 = vadd.f32 %v5710, %v6212
      %v6356 = vadd.f32 %v5711, %v6216
      %v6357 = vadd.f32 %v5712, %v6218
      %v6358 = vadd.f32 %v5713, %v6220
      %v6359 = vadd.f32 %v5714, %v6222
      %v6360 = vadd.f32 %v5715, %v6226
      %v6361 = vadd.f32 %v5716, %v6228
      %v6362 = vadd.f32 %v5717, %v6230
      %v6363 = vadd.f32 %v5718, %v6232
      %v6364 = vadd.f32 %v5719, %v6236
      %v6365 = vadd.f32 %v5720, %v6238
      %v6366 = vadd.f32 %v5721, %v6240
      %v6367 = vadd.f32 %v5722, %v6242
      %v6368 = vadd.f32 %v5723, %v6246
      %v6369 = vadd.f32 %v5724, %v6248
      %v6370 = vadd.f32 %v5725, %v6250
      %v6371 = vadd.f32 %v5726, %v6252
      %v6372 = vadd.f32 %v5727, %v6256
      %v6373 = vadd.f32 %v5728, %v6258
      %v6374 = vadd.f32 %v5729, %v6260
      %v6375 = vadd.f32 %v5730, %v6262
      %v6376 = vadd.f32 %v5731, %v6266
      %v6377 = vadd.f32 %v5732, %v6268
      %v6378 = vadd.f32 %v5733, %v6270
      %v6379 = vadd.f32 %v5734, %v6272
      %v6380 = vadd.f32 %v5735, %v6276
      %v6381 = vadd.f32 %v5736, %v6278
      %v6382 = vadd.f32 %v5737, %v6280
      %v6383 = vadd.f32 %v5738, %v6282
      %v6384 = vadd.f32 %v5739, %v6286
      %v6385 = vadd.f32 %v5740, %v6288
      %v6386 = vadd.f32 %v5741, %v6290
      %v6387 = vadd.f32 %v5742, %v6292
      %v6388 = vadd.f32 %v5743, %v6296
      %v6389 = vadd.f32 %v5744, %v6298
      %v6390 = vadd.f32 %v5745, %v6300
      %v6391 = vadd.f32 %v5746, %v6302
      %v6392 = vadd.f32 %v5747, %v6306
      %v6393 = vadd.f32 %v5748, %v6308
      %v6394 = vadd.f32 %v5749, %v6310
      %v6395 = vadd.f32 %v5750, %v6312
      %v6396 = vadd.f32 %v5751, %v6316
      %v6397 = vadd.f32 %v5752, %v6318
      %v6398 = vadd.f32 %v5753, %v6320
      %v6399 = vadd.f32 %v5754, %v6322
      %v6400 = vadd.f32 %v5755, %v6326
      %v6401 = vadd.f32 %v5756, %v6328
      %v6402 = vadd.f32 %v5757, %v6330
      %v6403 = vadd.f32 %v5758, %v6332
      %v6404 = vadd.f32 %v5759, %v6336
      %v6405 = vadd.f32 %v5760, %v6338
      %v6406 = vadd.f32 %v5761, %v6340
      %v6407 = vadd.f32 %v5762, %v6342
      %6408 = vst [vmem:[%s209] sm:$0xff] %v6344
      %6409 = vst [vmem:[%s209 + $0x8] sm:$0xff] %v6345
      %6410 = vst [vmem:[%s209 + $0x10] sm:$0xff] %v6346
      %6411 = vst [vmem:[%s209 + $0x18] sm:$0xff] %v6347
      %6412 = vst [vmem:[%s209 + $0x20] sm:$0xff] %v6348
      %6413 = vst [vmem:[%s209 + $0x28] sm:$0xff] %v6349
      %6414 = vst [vmem:[%s209 + $0x30] sm:$0xff] %v6350
      %6415 = vst [vmem:[%s209 + $0x38] sm:$0xff] %v6351
      %6416 = vst [vmem:[%s209 + $0x40] sm:$0xff] %v6352
      %6417 = vst [vmem:[%s209 + $0x48] sm:$0xff] %v6353
      %6418 = vst [vmem:[%s209 + $0x50] sm:$0xff] %v6354
      %6419 = vst [vmem:[%s209 + $0x58] sm:$0xff] %v6355
      %6420 = vst [vmem:[%s209 + $0x60] sm:$0xff] %v6356
      %6421 = vst [vmem:[%s209 + $0x68] sm:$0xff] %v6357
      %6422 = vst [vmem:[%s209 + $0x70] sm:$0xff] %v6358
      %6423 = vst [vmem:[%s209 + $0x78] sm:$0xff] %v6359
      %6424 = vst [vmem:[%s209 + $0x80] sm:$0xff] %v6360
      %6425 = vst [vmem:[%s209 + $0x88] sm:$0xff] %v6361
      %6426 = vst [vmem:[%s209 + $0x90] sm:$0xff] %v6362
      %6427 = vst [vmem:[%s209 + $0x98] sm:$0xff] %v6363
      %6428 = vst [vmem:[%s209 + $0xa0] sm:$0xff] %v6364
      %6429 = vst [vmem:[%s209 + $0xa8] sm:$0xff] %v6365
      %6430 = vst [vmem:[%s209 + $0xb0] sm:$0xff] %v6366
      %6431 = vst [vmem:[%s209 + $0xb8] sm:$0xff] %v6367
      %6432 = vst [vmem:[%s209 + $0xc0] sm:$0xff] %v6368
      %6433 = vst [vmem:[%s209 + $0xc8] sm:$0xff] %v6369
      %6434 = vst [vmem:[%s209 + $0xd0] sm:$0xff] %v6370
      %6435 = vst [vmem:[%s209 + $0xd8] sm:$0xff] %v6371
      %6436 = vst [vmem:[%s209 + $0xe0] sm:$0xff] %v6372
      %6437 = vst [vmem:[%s209 + $0xe8] sm:$0xff] %v6373
      %6438 = vst [vmem:[%s209 + $0xf0] sm:$0xff] %v6374
      %6439 = vst [vmem:[%s209 + $0xf8] sm:$0xff] %v6375
      %6440 = vst [vmem:[%s209 + $0x100] sm:$0xff] %v6376
      %6441 = vst [vmem:[%s209 + $0x108] sm:$0xff] %v6377
      %6442 = vst [vmem:[%s209 + $0x110] sm:$0xff] %v6378
      %6443 = vst [vmem:[%s209 + $0x118] sm:$0xff] %v6379
      %6444 = vst [vmem:[%s209 + $0x120] sm:$0xff] %v6380
      %6445 = vst [vmem:[%s209 + $0x128] sm:$0xff] %v6381
      %6446 = vst [vmem:[%s209 + $0x130] sm:$0xff] %v6382
      %6447 = vst [vmem:[%s209 + $0x138] sm:$0xff] %v6383
      %6448 = vst [vmem:[%s209 + $0x140] sm:$0xff] %v6384
      %6449 = vst [vmem:[%s209 + $0x148] sm:$0xff] %v6385
      %6450 = vst [vmem:[%s209 + $0x150] sm:$0xff] %v6386
      %6451 = vst [vmem:[%s209 + $0x158] sm:$0xff] %v6387
      %6452 = vst [vmem:[%s209 + $0x160] sm:$0xff] %v6388
      %6453 = vst [vmem:[%s209 + $0x168] sm:$0xff] %v6389
      %6454 = vst [vmem:[%s209 + $0x170] sm:$0xff] %v6390
      %6455 = vst [vmem:[%s209 + $0x178] sm:$0xff] %v6391
      %6456 = vst [vmem:[%s209 + $0x180] sm:$0xff] %v6392
      %6457 = vst [vmem:[%s209 + $0x188] sm:$0xff] %v6393
      %6458 = vst [vmem:[%s209 + $0x190] sm:$0xff] %v6394
      %6459 = vst [vmem:[%s209 + $0x198] sm:$0xff] %v6395
      %6460 = vst [vmem:[%s209 + $0x1a0] sm:$0xff] %v6396
      %6461 = vst [vmem:[%s209 + $0x1a8] sm:$0xff] %v6397
      %6462 = vst [vmem:[%s209 + $0x1b0] sm:$0xff] %v6398
      %6463 = vst [vmem:[%s209 + $0x1b8] sm:$0xff] %v6399
      %6464 = vst [vmem:[%s209 + $0x1c0] sm:$0xff] %v6400
      %6465 = vst [vmem:[%s209 + $0x1c8] sm:$0xff] %v6401
      %6466 = vst [vmem:[%s209 + $0x1d0] sm:$0xff] %v6402
      %6467 = vst [vmem:[%s209 + $0x1d8] sm:$0xff] %v6403
      %6468 = vst [vmem:[%s209 + $0x1e0] sm:$0xff] %v6404
      %6469 = vst [vmem:[%s209 + $0x1e8] sm:$0xff] %v6405
      %6470 = vst [vmem:[%s209 + $0x1f0] sm:$0xff] %v6406
      %6471 = vst [vmem:[%s209 + $0x1f8] sm:$0xff] %v6407
      %v6472 = vld [vmem:[%s209] sm:$0xff]
      %v6473 = vld [vmem:[%s209 + $0x8] sm:$0xff]
      %v6474 = vld [vmem:[%s209 + $0x10] sm:$0xff]
      %v6475 = vld [vmem:[%s209 + $0x18] sm:$0xff]
      %v6476 = vld [vmem:[%s209 + $0x20] sm:$0xff]
      %v6477 = vld [vmem:[%s209 + $0x28] sm:$0xff]
      %v6478 = vld [vmem:[%s209 + $0x30] sm:$0xff]
      %v6479 = vld [vmem:[%s209 + $0x38] sm:$0xff]
      %v6480 = vld [vmem:[%s209 + $0x40] sm:$0xff]
      %v6481 = vld [vmem:[%s209 + $0x48] sm:$0xff]
      %v6482 = vld [vmem:[%s209 + $0x50] sm:$0xff]
      %v6483 = vld [vmem:[%s209 + $0x58] sm:$0xff]
      %v6484 = vld [vmem:[%s209 + $0x60] sm:$0xff]
      %v6485 = vld [vmem:[%s209 + $0x68] sm:$0xff]
      %v6486 = vld [vmem:[%s209 + $0x70] sm:$0xff]
      %v6487 = vld [vmem:[%s209 + $0x78] sm:$0xff]
      %v6488 = vld [vmem:[%s209 + $0x80] sm:$0xff]
      %v6489 = vld [vmem:[%s209 + $0x88] sm:$0xff]
      %v6490 = vld [vmem:[%s209 + $0x90] sm:$0xff]
      %v6491 = vld [vmem:[%s209 + $0x98] sm:$0xff]
      %v6492 = vld [vmem:[%s209 + $0xa0] sm:$0xff]
      %v6493 = vld [vmem:[%s209 + $0xa8] sm:$0xff]
      %v6494 = vld [vmem:[%s209 + $0xb0] sm:$0xff]
      %v6495 = vld [vmem:[%s209 + $0xb8] sm:$0xff]
      %v6496 = vld [vmem:[%s209 + $0xc0] sm:$0xff]
      %v6497 = vld [vmem:[%s209 + $0xc8] sm:$0xff]
      %v6498 = vld [vmem:[%s209 + $0xd0] sm:$0xff]
      %v6499 = vld [vmem:[%s209 + $0xd8] sm:$0xff]
      %v6500 = vld [vmem:[%s209 + $0xe0] sm:$0xff]
      %v6501 = vld [vmem:[%s209 + $0xe8] sm:$0xff]
      %v6502 = vld [vmem:[%s209 + $0xf0] sm:$0xff]
      %v6503 = vld [vmem:[%s209 + $0xf8] sm:$0xff]
      %v6504 = vld [vmem:[%s209 + $0x100] sm:$0xff]
      %v6505 = vld [vmem:[%s209 + $0x108] sm:$0xff]
      %v6506 = vld [vmem:[%s209 + $0x110] sm:$0xff]
      %v6507 = vld [vmem:[%s209 + $0x118] sm:$0xff]
      %v6508 = vld [vmem:[%s209 + $0x120] sm:$0xff]
      %v6509 = vld [vmem:[%s209 + $0x128] sm:$0xff]
      %v6510 = vld [vmem:[%s209 + $0x130] sm:$0xff]
      %v6511 = vld [vmem:[%s209 + $0x138] sm:$0xff]
      %v6512 = vld [vmem:[%s209 + $0x140] sm:$0xff]
      %v6513 = vld [vmem:[%s209 + $0x148] sm:$0xff]
      %v6514 = vld [vmem:[%s209 + $0x150] sm:$0xff]
      %v6515 = vld [vmem:[%s209 + $0x158] sm:$0xff]
      %v6516 = vld [vmem:[%s209 + $0x160] sm:$0xff]
      %v6517 = vld [vmem:[%s209 + $0x168] sm:$0xff]
      %v6518 = vld [vmem:[%s209 + $0x170] sm:$0xff]
      %v6519 = vld [vmem:[%s209 + $0x178] sm:$0xff]
      %v6520 = vld [vmem:[%s209 + $0x180] sm:$0xff]
      %v6521 = vld [vmem:[%s209 + $0x188] sm:$0xff]
      %v6522 = vld [vmem:[%s209 + $0x190] sm:$0xff]
      %v6523 = vld [vmem:[%s209 + $0x198] sm:$0xff]
      %v6524 = vld [vmem:[%s209 + $0x1a0] sm:$0xff]
      %v6525 = vld [vmem:[%s209 + $0x1a8] sm:$0xff]
      %v6526 = vld [vmem:[%s209 + $0x1b0] sm:$0xff]
      %v6527 = vld [vmem:[%s209 + $0x1b8] sm:$0xff]
      %v6528 = vld [vmem:[%s209 + $0x1c0] sm:$0xff]
      %v6529 = vld [vmem:[%s209 + $0x1c8] sm:$0xff]
      %v6530 = vld [vmem:[%s209 + $0x1d0] sm:$0xff]
      %v6531 = vld [vmem:[%s209 + $0x1d8] sm:$0xff]
      %v6532 = vld [vmem:[%s209 + $0x1e0] sm:$0xff]
      %v6533 = vld [vmem:[%s209 + $0x1e8] sm:$0xff]
      %v6534 = vld [vmem:[%s209 + $0x1f0] sm:$0xff]
      %v6535 = vld [vmem:[%s209 + $0x1f8] sm:$0xff]
      %s6536 = sadd.s32 %s4990, 304
      %s6537 = smul.addr %s6536, 4
      %s6538 = scalar_lea.vmem %s0, %s6537
      %v6539 = vld [vmem:[%s6538] sm:$0xff]
      %v6540 = vld [vmem:[%s6538 + $0x8] sm:$0xff]
      %v6541 = vld [vmem:[%s6538 + $0x10] sm:$0xff]
      %v6542 = vld [vmem:[%s6538 + $0x18] sm:$0xff]
      %v6543 = vld [vmem:[%s6538 + $0x20] sm:$0xff]
      %v6544 = vld [vmem:[%s6538 + $0x28] sm:$0xff]
      %v6545 = vld [vmem:[%s6538 + $0x30] sm:$0xff]
      %v6546 = vld [vmem:[%s6538 + $0x38] sm:$0xff]
      %v6547 = vld [vmem:[%s6538 + $0x40] sm:$0xff]
      %v6548 = vld [vmem:[%s6538 + $0x48] sm:$0xff]
      %v6549 = vld [vmem:[%s6538 + $0x50] sm:$0xff]
      %v6550 = vld [vmem:[%s6538 + $0x58] sm:$0xff]
      %v6551 = vld [vmem:[%s6538 + $0x60] sm:$0xff]
      %v6552 = vld [vmem:[%s6538 + $0x68] sm:$0xff]
      %v6553 = vld [vmem:[%s6538 + $0x70] sm:$0xff]
      %v6554 = vld [vmem:[%s6538 + $0x78] sm:$0xff]
      %v6555 = vld [vmem:[%s6538 + $0x80] sm:$0xff]
      %v6556 = vld [vmem:[%s6538 + $0x88] sm:$0xff]
      %v6557 = vld [vmem:[%s6538 + $0x90] sm:$0xff]
      %v6558 = vld [vmem:[%s6538 + $0x98] sm:$0xff]
      %v6559 = vld [vmem:[%s6538 + $0xa0] sm:$0xff]
      %v6560 = vld [vmem:[%s6538 + $0xa8] sm:$0xff]
      %v6561 = vld [vmem:[%s6538 + $0xb0] sm:$0xff]
      %v6562 = vld [vmem:[%s6538 + $0xb8] sm:$0xff]
      %v6563 = vld [vmem:[%s6538 + $0xc0] sm:$0xff]
      %v6564 = vld [vmem:[%s6538 + $0xc8] sm:$0xff]
      %v6565 = vld [vmem:[%s6538 + $0xd0] sm:$0xff]
      %v6566 = vld [vmem:[%s6538 + $0xd8] sm:$0xff]
      %v6567 = vld [vmem:[%s6538 + $0xe0] sm:$0xff]
      %v6568 = vld [vmem:[%s6538 + $0xe8] sm:$0xff]
      %v6569 = vld [vmem:[%s6538 + $0xf0] sm:$0xff]
      %v6570 = vld [vmem:[%s6538 + $0xf8] sm:$0xff]
      %s6571 = scalar_lea.vmem %s1, 2048
      %v6572 = vld [vmem:[%s6571] sm:$0xff]
      %v6573 = vld [vmem:[%s6571 + $0x8] sm:$0xff]
      %v6574 = vld [vmem:[%s6571 + $0x10] sm:$0xff]
      %v6575 = vld [vmem:[%s6571 + $0x18] sm:$0xff]
      %v6576 = vld [vmem:[%s6571 + $0x20] sm:$0xff]
      %v6577 = vld [vmem:[%s6571 + $0x28] sm:$0xff]
      %v6578 = vld [vmem:[%s6571 + $0x30] sm:$0xff]
      %v6579 = vld [vmem:[%s6571 + $0x38] sm:$0xff]
      %v6580 = vld [vmem:[%s6571 + $0x40] sm:$0xff]
      %v6581 = vld [vmem:[%s6571 + $0x48] sm:$0xff]
      %v6582 = vld [vmem:[%s6571 + $0x50] sm:$0xff]
      %v6583 = vld [vmem:[%s6571 + $0x58] sm:$0xff]
      %v6584 = vld [vmem:[%s6571 + $0x60] sm:$0xff]
      %v6585 = vld [vmem:[%s6571 + $0x68] sm:$0xff]
      %v6586 = vld [vmem:[%s6571 + $0x70] sm:$0xff]
      %v6587 = vld [vmem:[%s6571 + $0x78] sm:$0xff]
      %v6588 = vld [vmem:[%s6571 + $0x80] sm:$0xff]
      %v6589 = vld [vmem:[%s6571 + $0x88] sm:$0xff]
      %v6590 = vld [vmem:[%s6571 + $0x90] sm:$0xff]
      %v6591 = vld [vmem:[%s6571 + $0x98] sm:$0xff]
      %v6592 = vld [vmem:[%s6571 + $0xa0] sm:$0xff]
      %v6593 = vld [vmem:[%s6571 + $0xa8] sm:$0xff]
      %v6594 = vld [vmem:[%s6571 + $0xb0] sm:$0xff]
      %v6595 = vld [vmem:[%s6571 + $0xb8] sm:$0xff]
      %v6596 = vld [vmem:[%s6571 + $0xc0] sm:$0xff]
      %v6597 = vld [vmem:[%s6571 + $0xc8] sm:$0xff]
      %v6598 = vld [vmem:[%s6571 + $0xd0] sm:$0xff]
      %v6599 = vld [vmem:[%s6571 + $0xd8] sm:$0xff]
      %v6600 = vld [vmem:[%s6571 + $0xe0] sm:$0xff]
      %v6601 = vld [vmem:[%s6571 + $0xe8] sm:$0xff]
      %v6602 = vld [vmem:[%s6571 + $0xf0] sm:$0xff]
      %v6603 = vld [vmem:[%s6571 + $0xf8] sm:$0xff]
      %v6636 = vunpack.c.l.b16 %v6539
      %v6637 = vunpack.c.h.b16 %v6539
      %v6638 = vunpack.c.l.b16 %v6540
      %v6639 = vunpack.c.h.b16 %v6540
      %v6640 = vunpack.c.l.b16 %v6541
      %v6641 = vunpack.c.h.b16 %v6541
      %v6642 = vunpack.c.l.b16 %v6542
      %v6643 = vunpack.c.h.b16 %v6542
      %v6644 = vunpack.c.l.b16 %v6543
      %v6645 = vunpack.c.h.b16 %v6543
      %v6646 = vunpack.c.l.b16 %v6544
      %v6647 = vunpack.c.h.b16 %v6544
      %v6648 = vunpack.c.l.b16 %v6545
      %v6649 = vunpack.c.h.b16 %v6545
      %v6650 = vunpack.c.l.b16 %v6546
      %v6651 = vunpack.c.h.b16 %v6546
      %v6652 = vunpack.c.l.b16 %v6547
      %v6653 = vunpack.c.h.b16 %v6547
      %v6654 = vunpack.c.l.b16 %v6548
      %v6655 = vunpack.c.h.b16 %v6548
      %v6656 = vunpack.c.l.b16 %v6549
      %v6657 = vunpack.c.h.b16 %v6549
      %v6658 = vunpack.c.l.b16 %v6550
      %v6659 = vunpack.c.h.b16 %v6550
      %v6660 = vunpack.c.l.b16 %v6551
      %v6661 = vunpack.c.h.b16 %v6551
      %v6662 = vunpack.c.l.b16 %v6552
      %v6663 = vunpack.c.h.b16 %v6552
      %v6664 = vunpack.c.l.b16 %v6553
      %v6665 = vunpack.c.h.b16 %v6553
      %v6666 = vunpack.c.l.b16 %v6554
      %v6667 = vunpack.c.h.b16 %v6554
      %v6668 = vunpack.c.l.b16 %v6555
      %v6669 = vunpack.c.h.b16 %v6555
      %v6670 = vunpack.c.l.b16 %v6556
      %v6671 = vunpack.c.h.b16 %v6556
      %v6672 = vunpack.c.l.b16 %v6557
      %v6673 = vunpack.c.h.b16 %v6557
      %v6674 = vunpack.c.l.b16 %v6558
      %v6675 = vunpack.c.h.b16 %v6558
      %v6676 = vunpack.c.l.b16 %v6559
      %v6677 = vunpack.c.h.b16 %v6559
      %v6678 = vunpack.c.l.b16 %v6560
      %v6679 = vunpack.c.h.b16 %v6560
      %v6680 = vunpack.c.l.b16 %v6561
      %v6681 = vunpack.c.h.b16 %v6561
      %v6682 = vunpack.c.l.b16 %v6562
      %v6683 = vunpack.c.h.b16 %v6562
      %v6684 = vunpack.c.l.b16 %v6563
      %v6685 = vunpack.c.h.b16 %v6563
      %v6686 = vunpack.c.l.b16 %v6564
      %v6687 = vunpack.c.h.b16 %v6564
      %v6688 = vunpack.c.l.b16 %v6565
      %v6689 = vunpack.c.h.b16 %v6565
      %v6690 = vunpack.c.l.b16 %v6566
      %v6691 = vunpack.c.h.b16 %v6566
      %v6692 = vunpack.c.l.b16 %v6567
      %v6693 = vunpack.c.h.b16 %v6567
      %v6694 = vunpack.c.l.b16 %v6568
      %v6695 = vunpack.c.h.b16 %v6568
      %v6696 = vunpack.c.l.b16 %v6569
      %v6697 = vunpack.c.h.b16 %v6569
      %v6698 = vunpack.c.l.b16 %v6570
      %v6699 = vunpack.c.h.b16 %v6570
      %v6700 = vpack.c.b16 %v6638, %v6636
      %v6701 = vpack.c.b16 %v6639, %v6637
      %v6702 = vpack.c.b16 %v6642, %v6640
      %v6703 = vpack.c.b16 %v6643, %v6641
      %v6704 = vpack.c.b16 %v6646, %v6644
      %v6705 = vpack.c.b16 %v6647, %v6645
      %v6706 = vpack.c.b16 %v6650, %v6648
      %v6707 = vpack.c.b16 %v6651, %v6649
      %v6708 = vpack.c.b16 %v6654, %v6652
      %v6709 = vpack.c.b16 %v6655, %v6653
      %v6710 = vpack.c.b16 %v6658, %v6656
      %v6711 = vpack.c.b16 %v6659, %v6657
      %v6712 = vpack.c.b16 %v6662, %v6660
      %v6713 = vpack.c.b16 %v6663, %v6661
      %v6714 = vpack.c.b16 %v6666, %v6664
      %v6715 = vpack.c.b16 %v6667, %v6665
      %v6716 = vpack.c.b16 %v6670, %v6668
      %v6717 = vpack.c.b16 %v6671, %v6669
      %v6718 = vpack.c.b16 %v6674, %v6672
      %v6719 = vpack.c.b16 %v6675, %v6673
      %v6720 = vpack.c.b16 %v6678, %v6676
      %v6721 = vpack.c.b16 %v6679, %v6677
      %v6722 = vpack.c.b16 %v6682, %v6680
      %v6723 = vpack.c.b16 %v6683, %v6681
      %v6724 = vpack.c.b16 %v6686, %v6684
      %v6725 = vpack.c.b16 %v6687, %v6685
      %v6726 = vpack.c.b16 %v6690, %v6688
      %v6727 = vpack.c.b16 %v6691, %v6689
      %v6728 = vpack.c.b16 %v6694, %v6692
      %v6729 = vpack.c.b16 %v6695, %v6693
      %v6730 = vpack.c.b16 %v6698, %v6696
      %v6731 = vpack.c.b16 %v6699, %v6697
      %v6796 = vunpack.c.l.b16 %v6572
      %v6797 = vunpack.c.h.b16 %v6572
      %v6798 = vunpack.c.l.b16 %v6573
      %v6799 = vunpack.c.h.b16 %v6573
      %v6800 = vunpack.c.l.b16 %v6574
      %v6801 = vunpack.c.h.b16 %v6574
      %v6802 = vunpack.c.l.b16 %v6575
      %v6803 = vunpack.c.h.b16 %v6575
      %v6804 = vunpack.c.l.b16 %v6576
      %v6805 = vunpack.c.h.b16 %v6576
      %v6806 = vunpack.c.l.b16 %v6577
      %v6807 = vunpack.c.h.b16 %v6577
      %v6808 = vunpack.c.l.b16 %v6578
      %v6809 = vunpack.c.h.b16 %v6578
      %v6810 = vunpack.c.l.b16 %v6579
      %v6811 = vunpack.c.h.b16 %v6579
      %v6812 = vunpack.c.l.b16 %v6580
      %v6813 = vunpack.c.h.b16 %v6580
      %v6814 = vunpack.c.l.b16 %v6581
      %v6815 = vunpack.c.h.b16 %v6581
      %v6816 = vunpack.c.l.b16 %v6582
      %v6817 = vunpack.c.h.b16 %v6582
      %v6818 = vunpack.c.l.b16 %v6583
      %v6819 = vunpack.c.h.b16 %v6583
      %v6820 = vunpack.c.l.b16 %v6584
      %v6821 = vunpack.c.h.b16 %v6584
      %v6822 = vunpack.c.l.b16 %v6585
      %v6823 = vunpack.c.h.b16 %v6585
      %v6824 = vunpack.c.l.b16 %v6586
      %v6825 = vunpack.c.h.b16 %v6586
      %v6826 = vunpack.c.l.b16 %v6587
      %v6827 = vunpack.c.h.b16 %v6587
      %v6828 = vunpack.c.l.b16 %v6588
      %v6829 = vunpack.c.h.b16 %v6588
      %v6830 = vunpack.c.l.b16 %v6589
      %v6831 = vunpack.c.h.b16 %v6589
      %v6832 = vunpack.c.l.b16 %v6590
      %v6833 = vunpack.c.h.b16 %v6590
      %v6834 = vunpack.c.l.b16 %v6591
      %v6835 = vunpack.c.h.b16 %v6591
      %v6836 = vunpack.c.l.b16 %v6592
      %v6837 = vunpack.c.h.b16 %v6592
      %v6838 = vunpack.c.l.b16 %v6593
      %v6839 = vunpack.c.h.b16 %v6593
      %v6840 = vunpack.c.l.b16 %v6594
      %v6841 = vunpack.c.h.b16 %v6594
      %v6842 = vunpack.c.l.b16 %v6595
      %v6843 = vunpack.c.h.b16 %v6595
      %v6844 = vunpack.c.l.b16 %v6596
      %v6845 = vunpack.c.h.b16 %v6596
      %v6846 = vunpack.c.l.b16 %v6597
      %v6847 = vunpack.c.h.b16 %v6597
      %v6848 = vunpack.c.l.b16 %v6598
      %v6849 = vunpack.c.h.b16 %v6598
      %v6850 = vunpack.c.l.b16 %v6599
      %v6851 = vunpack.c.h.b16 %v6599
      %v6852 = vunpack.c.l.b16 %v6600
      %v6853 = vunpack.c.h.b16 %v6600
      %v6854 = vunpack.c.l.b16 %v6601
      %v6855 = vunpack.c.h.b16 %v6601
      %v6856 = vunpack.c.l.b16 %v6602
      %v6857 = vunpack.c.h.b16 %v6602
      %v6858 = vunpack.c.l.b16 %v6603
      %v6859 = vunpack.c.h.b16 %v6603
      %v6860 = vpack.c.b16 %v6798, %v6796
      %v6861 = vpack.c.b16 %v6799, %v6797
      %v6862 = vpack.c.b16 %v6802, %v6800
      %v6863 = vpack.c.b16 %v6803, %v6801
      %v6864 = vpack.c.b16 %v6806, %v6804
      %v6865 = vpack.c.b16 %v6807, %v6805
      %v6866 = vpack.c.b16 %v6810, %v6808
      %v6867 = vpack.c.b16 %v6811, %v6809
      %v6868 = vpack.c.b16 %v6814, %v6812
      %v6869 = vpack.c.b16 %v6815, %v6813
      %v6870 = vpack.c.b16 %v6818, %v6816
      %v6871 = vpack.c.b16 %v6819, %v6817
      %v6872 = vpack.c.b16 %v6822, %v6820
      %v6873 = vpack.c.b16 %v6823, %v6821
      %v6874 = vpack.c.b16 %v6826, %v6824
      %v6875 = vpack.c.b16 %v6827, %v6825
      %v6876 = vpack.c.b16 %v6830, %v6828
      %v6877 = vpack.c.b16 %v6831, %v6829
      %v6878 = vpack.c.b16 %v6834, %v6832
      %v6879 = vpack.c.b16 %v6835, %v6833
      %v6880 = vpack.c.b16 %v6838, %v6836
      %v6881 = vpack.c.b16 %v6839, %v6837
      %v6882 = vpack.c.b16 %v6842, %v6840
      %v6883 = vpack.c.b16 %v6843, %v6841
      %v6884 = vpack.c.b16 %v6846, %v6844
      %v6885 = vpack.c.b16 %v6847, %v6845
      %v6886 = vpack.c.b16 %v6850, %v6848
      %v6887 = vpack.c.b16 %v6851, %v6849
      %v6888 = vpack.c.b16 %v6854, %v6852
      %v6889 = vpack.c.b16 %v6855, %v6853
      %v6890 = vpack.c.b16 %v6858, %v6856
      %v6891 = vpack.c.b16 %v6859, %v6857
      %6924 = vmatprep.subr.bf16.mxu0 %v6861
      %6925 = vmatpush1.bf16.msra.mxu0 %v6860
      %6926 = vmatprep.subr.bf16.mxu0 %v6863
      %6927 = vmatpush1.bf16.msra.mxu0 %v6862
      %6928 = vmatprep.subr.bf16.mxu0 %v6865
      %6929 = vmatpush1.bf16.msra.mxu0 %v6864
      %6930 = vmatprep.subr.bf16.mxu0 %v6867
      %6931 = vmatpush1.bf16.msra.mxu0 %v6866
      %6932 = vmatprep.subr.bf16.mxu0 %v6869
      %6933 = vmatpush1.bf16.msra.mxu0 %v6868
      %6934 = vmatprep.subr.bf16.mxu0 %v6871
      %6935 = vmatpush1.bf16.msra.mxu0 %v6870
      %6936 = vmatprep.subr.bf16.mxu0 %v6873
      %6937 = vmatpush1.bf16.msra.mxu0 %v6872
      %6938 = vmatprep.subr.bf16.mxu0 %v6875
      %6939 = vmatpush1.bf16.msra.mxu0 %v6874
      %6940 = vmatprep.subr.bf16.mxu0 %v6877
      %6941 = vmatpush1.bf16.msra.mxu0 %v6876
      %6942 = vmatprep.subr.bf16.mxu0 %v6879
      %6943 = vmatpush1.bf16.msra.mxu0 %v6878
      %6944 = vmatprep.subr.bf16.mxu0 %v6881
      %6945 = vmatpush1.bf16.msra.mxu0 %v6880
      %6946 = vmatprep.subr.bf16.mxu0 %v6883
      %6947 = vmatpush1.bf16.msra.mxu0 %v6882
      %6948 = vmatprep.subr.bf16.mxu0 %v6885
      %6949 = vmatpush1.bf16.msra.mxu0 %v6884
      %6950 = vmatprep.subr.bf16.mxu0 %v6887
      %6951 = vmatpush1.bf16.msra.mxu0 %v6886
      %6952 = vmatprep.subr.bf16.mxu0 %v6889
      %6953 = vmatpush1.bf16.msra.mxu0 %v6888
      %6954 = vmatprep.subr.bf16.mxu0 %v6891
      %6955 = vmatpush1.bf16.msra.mxu0 %v6890
      %6956 = vmatprep.mubr.bf16.mxu0 %v6701
      %6957 = vmatmul.mubr.bf16.gmra.mrb[0].mxu0 %v6700
      %v6958 = vpop.f32.mrb[0].mxu0
      %v6959 = vadd.f32 0.0, %v6958
      %v6960 = vpop.f32.mrb[0].mxu0
      %v6961 = vadd.f32 0.0, %v6960
      %v6962 = vpop.f32.mrb[0].mxu0
      %v6963 = vadd.f32 0.0, %v6962
      %v6964 = vpop.f32.mrb[0].mxu0
      %v6965 = vadd.f32 0.0, %v6964
      %6966 = vmatprep.mubr.bf16.mxu0 %v6703
      %6967 = vmatmul.mubr.bf16.gmra.mrb[0].mxu0 %v6702
      %v6968 = vpop.f32.mrb[0].mxu0
      %v6969 = vadd.f32 0.0, %v6968
      %v6970 = vpop.f32.mrb[0].mxu0
      %v6971 = vadd.f32 0.0, %v6970
      %v6972 = vpop.f32.mrb[0].mxu0
      %v6973 = vadd.f32 0.0, %v6972
      %v6974 = vpop.f32.mrb[0].mxu0
      %v6975 = vadd.f32 0.0, %v6974
      %6976 = vmatprep.mubr.bf16.mxu0 %v6705
      %6977 = vmatmul.mubr.bf16.gmra.mrb[0].mxu0 %v6704
      %v6978 = vpop.f32.mrb[0].mxu0
      %v6979 = vadd.f32 0.0, %v6978
      %v6980 = vpop.f32.mrb[0].mxu0
      %v6981 = vadd.f32 0.0, %v6980
      %v6982 = vpop.f32.mrb[0].mxu0
      %v6983 = vadd.f32 0.0, %v6982
      %v6984 = vpop.f32.mrb[0].mxu0
      %v6985 = vadd.f32 0.0, %v6984
      %6986 = vmatprep.mubr.bf16.mxu0 %v6707
      %6987 = vmatmul.mubr.bf16.gmra.mrb[0].mxu0 %v6706
      %v6988 = vpop.f32.mrb[0].mxu0
      %v6989 = vadd.f32 0.0, %v6988
      %v6990 = vpop.f32.mrb[0].mxu0
      %v6991 = vadd.f32 0.0, %v6990
      %v6992 = vpop.f32.mrb[0].mxu0
      %v6993 = vadd.f32 0.0, %v6992
      %v6994 = vpop.f32.mrb[0].mxu0
      %v6995 = vadd.f32 0.0, %v6994
      %6996 = vmatprep.mubr.bf16.mxu0 %v6709
      %6997 = vmatmul.mubr.bf16.gmra.mrb[0].mxu0 %v6708
      %v6998 = vpop.f32.mrb[0].mxu0
      %v6999 = vadd.f32 0.0, %v6998
      %v7000 = vpop.f32.mrb[0].mxu0
      %v7001 = vadd.f32 0.0, %v7000
      %v7002 = vpop.f32.mrb[0].mxu0
      %v7003 = vadd.f32 0.0, %v7002
      %v7004 = vpop.f32.mrb[0].mxu0
      %v7005 = vadd.f32 0.0, %v7004
      %7006 = vmatprep.mubr.bf16.mxu0 %v6711
      %7007 = vmatmul.mubr.bf16.gmra.mrb[0].mxu0 %v6710
      %v7008 = vpop.f32.mrb[0].mxu0
      %v7009 = vadd.f32 0.0, %v7008
      %v7010 = vpop.f32.mrb[0].mxu0
      %v7011 = vadd.f32 0.0, %v7010
      %v7012 = vpop.f32.mrb[0].mxu0
      %v7013 = vadd.f32 0.0, %v7012
      %v7014 = vpop.f32.mrb[0].mxu0
      %v7015 = vadd.f32 0.0, %v7014
      %7016 = vmatprep.mubr.bf16.mxu0 %v6713
      %7017 = vmatmul.mubr.bf16.gmra.mrb[0].mxu0 %v6712
      %v7018 = vpop.f32.mrb[0].mxu0
      %v7019 = vadd.f32 0.0, %v7018
      %v7020 = vpop.f32.mrb[0].mxu0
      %v7021 = vadd.f32 0.0, %v7020
      %v7022 = vpop.f32.mrb[0].mxu0
      %v7023 = vadd.f32 0.0, %v7022
      %v7024 = vpop.f32.mrb[0].mxu0
      %v7025 = vadd.f32 0.0, %v7024
      %7026 = vmatprep.mubr.bf16.mxu0 %v6715
      %7027 = vmatmul.mubr.bf16.gmra.mrb[0].mxu0 %v6714
      %v7028 = vpop.f32.mrb[0].mxu0
      %v7029 = vadd.f32 0.0, %v7028
      %v7030 = vpop.f32.mrb[0].mxu0
      %v7031 = vadd.f32 0.0, %v7030
      %v7032 = vpop.f32.mrb[0].mxu0
      %v7033 = vadd.f32 0.0, %v7032
      %v7034 = vpop.f32.mrb[0].mxu0
      %v7035 = vadd.f32 0.0, %v7034
      %7036 = vmatprep.mubr.bf16.mxu0 %v6717
      %7037 = vmatmul.mubr.bf16.gmra.mrb[0].mxu0 %v6716
      %v7038 = vpop.f32.mrb[0].mxu0
      %v7039 = vadd.f32 0.0, %v7038
      %v7040 = vpop.f32.mrb[0].mxu0
      %v7041 = vadd.f32 0.0, %v7040
      %v7042 = vpop.f32.mrb[0].mxu0
      %v7043 = vadd.f32 0.0, %v7042
      %v7044 = vpop.f32.mrb[0].mxu0
      %v7045 = vadd.f32 0.0, %v7044
      %7046 = vmatprep.mubr.bf16.mxu0 %v6719
      %7047 = vmatmul.mubr.bf16.gmra.mrb[0].mxu0 %v6718
      %v7048 = vpop.f32.mrb[0].mxu0
      %v7049 = vadd.f32 0.0, %v7048
      %v7050 = vpop.f32.mrb[0].mxu0
      %v7051 = vadd.f32 0.0, %v7050
      %v7052 = vpop.f32.mrb[0].mxu0
      %v7053 = vadd.f32 0.0, %v7052
      %v7054 = vpop.f32.mrb[0].mxu0
      %v7055 = vadd.f32 0.0, %v7054
      %7056 = vmatprep.mubr.bf16.mxu0 %v6721
      %7057 = vmatmul.mubr.bf16.gmra.mrb[0].mxu0 %v6720
      %v7058 = vpop.f32.mrb[0].mxu0
      %v7059 = vadd.f32 0.0, %v7058
      %v7060 = vpop.f32.mrb[0].mxu0
      %v7061 = vadd.f32 0.0, %v7060
      %v7062 = vpop.f32.mrb[0].mxu0
      %v7063 = vadd.f32 0.0, %v7062
      %v7064 = vpop.f32.mrb[0].mxu0
      %v7065 = vadd.f32 0.0, %v7064
      %7066 = vmatprep.mubr.bf16.mxu0 %v6723
      %7067 = vmatmul.mubr.bf16.gmra.mrb[0].mxu0 %v6722
      %v7068 = vpop.f32.mrb[0].mxu0
      %v7069 = vadd.f32 0.0, %v7068
      %v7070 = vpop.f32.mrb[0].mxu0
      %v7071 = vadd.f32 0.0, %v7070
      %v7072 = vpop.f32.mrb[0].mxu0
      %v7073 = vadd.f32 0.0, %v7072
      %v7074 = vpop.f32.mrb[0].mxu0
      %v7075 = vadd.f32 0.0, %v7074
      %7076 = vmatprep.mubr.bf16.mxu0 %v6725
      %7077 = vmatmul.mubr.bf16.gmra.mrb[0].mxu0 %v6724
      %v7078 = vpop.f32.mrb[0].mxu0
      %v7079 = vadd.f32 0.0, %v7078
      %v7080 = vpop.f32.mrb[0].mxu0
      %v7081 = vadd.f32 0.0, %v7080
      %v7082 = vpop.f32.mrb[0].mxu0
      %v7083 = vadd.f32 0.0, %v7082
      %v7084 = vpop.f32.mrb[0].mxu0
      %v7085 = vadd.f32 0.0, %v7084
      %7086 = vmatprep.mubr.bf16.mxu0 %v6727
      %7087 = vmatmul.mubr.bf16.gmra.mrb[0].mxu0 %v6726
      %v7088 = vpop.f32.mrb[0].mxu0
      %v7089 = vadd.f32 0.0, %v7088
      %v7090 = vpop.f32.mrb[0].mxu0
      %v7091 = vadd.f32 0.0, %v7090
      %v7092 = vpop.f32.mrb[0].mxu0
      %v7093 = vadd.f32 0.0, %v7092
      %v7094 = vpop.f32.mrb[0].mxu0
      %v7095 = vadd.f32 0.0, %v7094
      %7096 = vmatprep.mubr.bf16.mxu0 %v6729
      %7097 = vmatmul.mubr.bf16.gmra.mrb[0].mxu0 %v6728
      %v7098 = vpop.f32.mrb[0].mxu0
      %v7099 = vadd.f32 0.0, %v7098
      %v7100 = vpop.f32.mrb[0].mxu0
      %v7101 = vadd.f32 0.0, %v7100
      %v7102 = vpop.f32.mrb[0].mxu0
      %v7103 = vadd.f32 0.0, %v7102
      %v7104 = vpop.f32.mrb[0].mxu0
      %v7105 = vadd.f32 0.0, %v7104
      %7106 = vmatprep.mubr.bf16.mxu0 %v6731
      %7107 = vmatmul.mubr.bf16.gmra.mrb[0].mxu0 %v6730
      %v7108 = vpop.f32.mrb[0].mxu0
      %v7109 = vadd.f32 0.0, %v7108
      %v7110 = vpop.f32.mrb[0].mxu0
      %v7111 = vadd.f32 0.0, %v7110
      %v7112 = vpop.f32.mrb[0].mxu0
      %v7113 = vadd.f32 0.0, %v7112
      %v7114 = vpop.f32.mrb[0].mxu0
      %v7115 = vadd.f32 0.0, %v7114
      %7116 = vdwg.mxu0
      %v7117 = vadd.f32 %v6472, %v6959
      %v7118 = vadd.f32 %v6473, %v6961
      %v7119 = vadd.f32 %v6474, %v6963
      %v7120 = vadd.f32 %v6475, %v6965
      %v7121 = vadd.f32 %v6476, %v6969
      %v7122 = vadd.f32 %v6477, %v6971
      %v7123 = vadd.f32 %v6478, %v6973
      %v7124 = vadd.f32 %v6479, %v6975
      %v7125 = vadd.f32 %v6480, %v6979
      %v7126 = vadd.f32 %v6481, %v6981
      %v7127 = vadd.f32 %v6482, %v6983
      %v7128 = vadd.f32 %v6483, %v6985
      %v7129 = vadd.f32 %v6484, %v6989
      %v7130 = vadd.f32 %v6485, %v6991
      %v7131 = vadd.f32 %v6486, %v6993
      %v7132 = vadd.f32 %v6487, %v6995
      %v7133 = vadd.f32 %v6488, %v6999
      %v7134 = vadd.f32 %v6489, %v7001
      %v7135 = vadd.f32 %v6490, %v7003
      %v7136 = vadd.f32 %v6491, %v7005
      %v7137 = vadd.f32 %v6492, %v7009
      %v7138 = vadd.f32 %v6493, %v7011
      %v7139 = vadd.f32 %v6494, %v7013
      %v7140 = vadd.f32 %v6495, %v7015
      %v7141 = vadd.f32 %v6496, %v7019
      %v7142 = vadd.f32 %v6497, %v7021
      %v7143 = vadd.f32 %v6498, %v7023
      %v7144 = vadd.f32 %v6499, %v7025
      %v7145 = vadd.f32 %v6500, %v7029
      %v7146 = vadd.f32 %v6501, %v7031
      %v7147 = vadd.f32 %v6502, %v7033
      %v7148 = vadd.f32 %v6503, %v7035
      %v7149 = vadd.f32 %v6504, %v7039
      %v7150 = vadd.f32 %v6505, %v7041
      %v7151 = vadd.f32 %v6506, %v7043
      %v7152 = vadd.f32 %v6507, %v7045
      %v7153 = vadd.f32 %v6508, %v7049
      %v7154 = vadd.f32 %v6509, %v7051
      %v7155 = vadd.f32 %v6510, %v7053
      %v7156 = vadd.f32 %v6511, %v7055
      %v7157 = vadd.f32 %v6512, %v7059
      %v7158 = vadd.f32 %v6513, %v7061
      %v7159 = vadd.f32 %v6514, %v7063
      %v7160 = vadd.f32 %v6515, %v7065
      %v7161 = vadd.f32 %v6516, %v7069
      %v7162 = vadd.f32 %v6517, %v7071
      %v7163 = vadd.f32 %v6518, %v7073
      %v7164 = vadd.f32 %v6519, %v7075
      %v7165 = vadd.f32 %v6520, %v7079
      %v7166 = vadd.f32 %v6521, %v7081
      %v7167 = vadd.f32 %v6522, %v7083
      %v7168 = vadd.f32 %v6523, %v7085
      %v7169 = vadd.f32 %v6524, %v7089
      %v7170 = vadd.f32 %v6525, %v7091
      %v7171 = vadd.f32 %v6526, %v7093
      %v7172 = vadd.f32 %v6527, %v7095
      %v7173 = vadd.f32 %v6528, %v7099
      %v7174 = vadd.f32 %v6529, %v7101
      %v7175 = vadd.f32 %v6530, %v7103
      %v7176 = vadd.f32 %v6531, %v7105
      %v7177 = vadd.f32 %v6532, %v7109
      %v7178 = vadd.f32 %v6533, %v7111
      %v7179 = vadd.f32 %v6534, %v7113
      %v7180 = vadd.f32 %v6535, %v7115
      %7181 = vst [vmem:[%s209] sm:$0xff] %v7117
      %7182 = vst [vmem:[%s209 + $0x8] sm:$0xff] %v7118
      %7183 = vst [vmem:[%s209 + $0x10] sm:$0xff] %v7119
      %7184 = vst [vmem:[%s209 + $0x18] sm:$0xff] %v7120
      %7185 = vst [vmem:[%s209 + $0x20] sm:$0xff] %v7121
      %7186 = vst [vmem:[%s209 + $0x28] sm:$0xff] %v7122
      %7187 = vst [vmem:[%s209 + $0x30] sm:$0xff] %v7123
      %7188 = vst [vmem:[%s209 + $0x38] sm:$0xff] %v7124
      %7189 = vst [vmem:[%s209 + $0x40] sm:$0xff] %v7125
      %7190 = vst [vmem:[%s209 + $0x48] sm:$0xff] %v7126
      %7191 = vst [vmem:[%s209 + $0x50] sm:$0xff] %v7127
      %7192 = vst [vmem:[%s209 + $0x58] sm:$0xff] %v7128
      %7193 = vst [vmem:[%s209 + $0x60] sm:$0xff] %v7129
      %7194 = vst [vmem:[%s209 + $0x68] sm:$0xff] %v7130
      %7195 = vst [vmem:[%s209 + $0x70] sm:$0xff] %v7131
      %7196 = vst [vmem:[%s209 + $0x78] sm:$0xff] %v7132
      %7197 = vst [vmem:[%s209 + $0x80] sm:$0xff] %v7133
      %7198 = vst [vmem:[%s209 + $0x88] sm:$0xff] %v7134
      %7199 = vst [vmem:[%s209 + $0x90] sm:$0xff] %v7135
      %7200 = vst [vmem:[%s209 + $0x98] sm:$0xff] %v7136
      %7201 = vst [vmem:[%s209 + $0xa0] sm:$0xff] %v7137
      %7202 = vst [vmem:[%s209 + $0xa8] sm:$0xff] %v7138
      %7203 = vst [vmem:[%s209 + $0xb0] sm:$0xff] %v7139
      %7204 = vst [vmem:[%s209 + $0xb8] sm:$0xff] %v7140
      %7205 = vst [vmem:[%s209 + $0xc0] sm:$0xff] %v7141
      %7206 = vst [vmem:[%s209 + $0xc8] sm:$0xff] %v7142
      %7207 = vst [vmem:[%s209 + $0xd0] sm:$0xff] %v7143
      %7208 = vst [vmem:[%s209 + $0xd8] sm:$0xff] %v7144
      %7209 = vst [vmem:[%s209 + $0xe0] sm:$0xff] %v7145
      %7210 = vst [vmem:[%s209 + $0xe8] sm:$0xff] %v7146
      %7211 = vst [vmem:[%s209 + $0xf0] sm:$0xff] %v7147
      %7212 = vst [vmem:[%s209 + $0xf8] sm:$0xff] %v7148
      %7213 = vst [vmem:[%s209 + $0x100] sm:$0xff] %v7149
      %7214 = vst [vmem:[%s209 + $0x108] sm:$0xff] %v7150
      %7215 = vst [vmem:[%s209 + $0x110] sm:$0xff] %v7151
      %7216 = vst [vmem:[%s209 + $0x118] sm:$0xff] %v7152
      %7217 = vst [vmem:[%s209 + $0x120] sm:$0xff] %v7153
      %7218 = vst [vmem:[%s209 + $0x128] sm:$0xff] %v7154
      %7219 = vst [vmem:[%s209 + $0x130] sm:$0xff] %v7155
      %7220 = vst [vmem:[%s209 + $0x138] sm:$0xff] %v7156
      %7221 = vst [vmem:[%s209 + $0x140] sm:$0xff] %v7157
      %7222 = vst [vmem:[%s209 + $0x148] sm:$0xff] %v7158
      %7223 = vst [vmem:[%s209 + $0x150] sm:$0xff] %v7159
      %7224 = vst [vmem:[%s209 + $0x158] sm:$0xff] %v7160
      %7225 = vst [vmem:[%s209 + $0x160] sm:$0xff] %v7161
      %7226 = vst [vmem:[%s209 + $0x168] sm:$0xff] %v7162
      %7227 = vst [vmem:[%s209 + $0x170] sm:$0xff] %v7163
      %7228 = vst [vmem:[%s209 + $0x178] sm:$0xff] %v7164
      %7229 = vst [vmem:[%s209 + $0x180] sm:$0xff] %v7165
      %7230 = vst [vmem:[%s209 + $0x188] sm:$0xff] %v7166
      %7231 = vst [vmem:[%s209 + $0x190] sm:$0xff] %v7167
      %7232 = vst [vmem:[%s209 + $0x198] sm:$0xff] %v7168
      %7233 = vst [vmem:[%s209 + $0x1a0] sm:$0xff] %v7169
      %7234 = vst [vmem:[%s209 + $0x1a8] sm:$0xff] %v7170
      %7235 = vst [vmem:[%s209 + $0x1b0] sm:$0xff] %v7171
      %7236 = vst [vmem:[%s209 + $0x1b8] sm:$0xff] %v7172
      %7237 = vst [vmem:[%s209 + $0x1c0] sm:$0xff] %v7173
      %7238 = vst [vmem:[%s209 + $0x1c8] sm:$0xff] %v7174
      %7239 = vst [vmem:[%s209 + $0x1d0] sm:$0xff] %v7175
      %7240 = vst [vmem:[%s209 + $0x1d8] sm:$0xff] %v7176
      %7241 = vst [vmem:[%s209 + $0x1e0] sm:$0xff] %v7177
      %7242 = vst [vmem:[%s209 + $0x1e8] sm:$0xff] %v7178
      %7243 = vst [vmem:[%s209 + $0x1f0] sm:$0xff] %v7179
      %7244 = vst [vmem:[%s209 + $0x1f8] sm:$0xff] %v7180
      %v7245 = vld [vmem:[%s209] sm:$0xff]
      %v7246 = vld [vmem:[%s209 + $0x8] sm:$0xff]
      %v7247 = vld [vmem:[%s209 + $0x10] sm:$0xff]
      %v7248 = vld [vmem:[%s209 + $0x18] sm:$0xff]
      %v7249 = vld [vmem:[%s209 + $0x20] sm:$0xff]
      %v7250 = vld [vmem:[%s209 + $0x28] sm:$0xff]
      %v7251 = vld [vmem:[%s209 + $0x30] sm:$0xff]
      %v7252 = vld [vmem:[%s209 + $0x38] sm:$0xff]
      %v7253 = vld [vmem:[%s209 + $0x40] sm:$0xff]
      %v7254 = vld [vmem:[%s209 + $0x48] sm:$0xff]
      %v7255 = vld [vmem:[%s209 + $0x50] sm:$0xff]
      %v7256 = vld [vmem:[%s209 + $0x58] sm:$0xff]
      %v7257 = vld [vmem:[%s209 + $0x60] sm:$0xff]
      %v7258 = vld [vmem:[%s209 + $0x68] sm:$0xff]
      %v7259 = vld [vmem:[%s209 + $0x70] sm:$0xff]
      %v7260 = vld [vmem:[%s209 + $0x78] sm:$0xff]
      %v7261 = vld [vmem:[%s209 + $0x80] sm:$0xff]
      %v7262 = vld [vmem:[%s209 + $0x88] sm:$0xff]
      %v7263 = vld [vmem:[%s209 + $0x90] sm:$0xff]
      %v7264 = vld [vmem:[%s209 + $0x98] sm:$0xff]
      %v7265 = vld [vmem:[%s209 + $0xa0] sm:$0xff]
      %v7266 = vld [vmem:[%s209 + $0xa8] sm:$0xff]
      %v7267 = vld [vmem:[%s209 + $0xb0] sm:$0xff]
      %v7268 = vld [vmem:[%s209 + $0xb8] sm:$0xff]
      %v7269 = vld [vmem:[%s209 + $0xc0] sm:$0xff]
      %v7270 = vld [vmem:[%s209 + $0xc8] sm:$0xff]
      %v7271 = vld [vmem:[%s209 + $0xd0] sm:$0xff]
      %v7272 = vld [vmem:[%s209 + $0xd8] sm:$0xff]
      %v7273 = vld [vmem:[%s209 + $0xe0] sm:$0xff]
      %v7274 = vld [vmem:[%s209 + $0xe8] sm:$0xff]
      %v7275 = vld [vmem:[%s209 + $0xf0] sm:$0xff]
      %v7276 = vld [vmem:[%s209 + $0xf8] sm:$0xff]
      %v7277 = vld [vmem:[%s209 + $0x100] sm:$0xff]
      %v7278 = vld [vmem:[%s209 + $0x108] sm:$0xff]
      %v7279 = vld [vmem:[%s209 + $0x110] sm:$0xff]
      %v7280 = vld [vmem:[%s209 + $0x118] sm:$0xff]
      %v7281 = vld [vmem:[%s209 + $0x120] sm:$0xff]
      %v7282 = vld [vmem:[%s209 + $0x128] sm:$0xff]
      %v7283 = vld [vmem:[%s209 + $0x130] sm:$0xff]
      %v7284 = vld [vmem:[%s209 + $0x138] sm:$0xff]
      %v7285 = vld [vmem:[%s209 + $0x140] sm:$0xff]
      %v7286 = vld [vmem:[%s209 + $0x148] sm:$0xff]
      %v7287 = vld [vmem:[%s209 + $0x150] sm:$0xff]
      %v7288 = vld [vmem:[%s209 + $0x158] sm:$0xff]
      %v7289 = vld [vmem:[%s209 + $0x160] sm:$0xff]
      %v7290 = vld [vmem:[%s209 + $0x168] sm:$0xff]
      %v7291 = vld [vmem:[%s209 + $0x170] sm:$0xff]
      %v7292 = vld [vmem:[%s209 + $0x178] sm:$0xff]
      %v7293 = vld [vmem:[%s209 + $0x180] sm:$0xff]
      %v7294 = vld [vmem:[%s209 + $0x188] sm:$0xff]
      %v7295 = vld [vmem:[%s209 + $0x190] sm:$0xff]
      %v7296 = vld [vmem:[%s209 + $0x198] sm:$0xff]
      %v7297 = vld [vmem:[%s209 + $0x1a0] sm:$0xff]
      %v7298 = vld [vmem:[%s209 + $0x1a8] sm:$0xff]
      %v7299 = vld [vmem:[%s209 + $0x1b0] sm:$0xff]
      %v7300 = vld [vmem:[%s209 + $0x1b8] sm:$0xff]
      %v7301 = vld [vmem:[%s209 + $0x1c0] sm:$0xff]
      %v7302 = vld [vmem:[%s209 + $0x1c8] sm:$0xff]
      %v7303 = vld [vmem:[%s209 + $0x1d0] sm:$0xff]
      %v7304 = vld [vmem:[%s209 + $0x1d8] sm:$0xff]
      %v7305 = vld [vmem:[%s209 + $0x1e0] sm:$0xff]
      %v7306 = vld [vmem:[%s209 + $0x1e8] sm:$0xff]
      %v7307 = vld [vmem:[%s209 + $0x1f0] sm:$0xff]
      %v7308 = vld [vmem:[%s209 + $0x1f8] sm:$0xff]
      %v7309 = vld [vmem:[%s202] sm:$0xff]
      %v7310 = vld [vmem:[%s202 + $0x8] sm:$0xff]
      %v7311 = vld [vmem:[%s202 + $0x10] sm:$0xff]
      %v7312 = vld [vmem:[%s202 + $0x18] sm:$0xff]
      %v7313 = vld [vmem:[%s202 + $0x20] sm:$0xff]
      %v7314 = vld [vmem:[%s202 + $0x28] sm:$0xff]
      %v7315 = vld [vmem:[%s202 + $0x30] sm:$0xff]
      %v7316 = vld [vmem:[%s202 + $0x38] sm:$0xff]
      %v7317 = vld [vmem:[%s202 + $0x40] sm:$0xff]
      %v7318 = vld [vmem:[%s202 + $0x48] sm:$0xff]
      %v7319 = vld [vmem:[%s202 + $0x50] sm:$0xff]
      %v7320 = vld [vmem:[%s202 + $0x58] sm:$0xff]
      %v7321 = vld [vmem:[%s202 + $0x60] sm:$0xff]
      %v7322 = vld [vmem:[%s202 + $0x68] sm:$0xff]
      %v7323 = vld [vmem:[%s202 + $0x70] sm:$0xff]
      %v7324 = vld [vmem:[%s202 + $0x78] sm:$0xff]
      %v7325 = vld [vmem:[%s202 + $0x80] sm:$0xff]
      %v7326 = vld [vmem:[%s202 + $0x88] sm:$0xff]
      %v7327 = vld [vmem:[%s202 + $0x90] sm:$0xff]
      %v7328 = vld [vmem:[%s202 + $0x98] sm:$0xff]
      %v7329 = vld [vmem:[%s202 + $0xa0] sm:$0xff]
      %v7330 = vld [vmem:[%s202 + $0xa8] sm:$0xff]
      %v7331 = vld [vmem:[%s202 + $0xb0] sm:$0xff]
      %v7332 = vld [vmem:[%s202 + $0xb8] sm:$0xff]
      %v7333 = vld [vmem:[%s202 + $0xc0] sm:$0xff]
      %v7334 = vld [vmem:[%s202 + $0xc8] sm:$0xff]
      %v7335 = vld [vmem:[%s202 + $0xd0] sm:$0xff]
      %v7336 = vld [vmem:[%s202 + $0xd8] sm:$0xff]
      %v7337 = vld [vmem:[%s202 + $0xe0] sm:$0xff]
      %v7338 = vld [vmem:[%s202 + $0xe8] sm:$0xff]
      %v7339 = vld [vmem:[%s202 + $0xf0] sm:$0xff]
      %v7340 = vld [vmem:[%s202 + $0xf8] sm:$0xff]
      %7342 = vset.pattern.permute.xlu0 0
      %7343 = vperm.xlu0 %7342, %v7309
      %v7344 = vpop.permute.xlu0 %7343
      %7347 = vset.pattern.permute.xlu0 0
      %7348 = vperm.xlu0 %7347, %v7310
      %v7349 = vpop.permute.xlu0 %7348
      %7352 = vset.pattern.permute.xlu0 0
      %7353 = vperm.xlu0 %7352, %v7311
      %v7354 = vpop.permute.xlu0 %7353
      %7357 = vset.pattern.permute.xlu0 0
      %7358 = vperm.xlu0 %7357, %v7312
      %v7359 = vpop.permute.xlu0 %7358
      %7362 = vset.pattern.permute.xlu0 0
      %7363 = vperm.xlu0 %7362, %v7313
      %v7364 = vpop.permute.xlu0 %7363
      %7367 = vset.pattern.permute.xlu0 0
      %7368 = vperm.xlu0 %7367, %v7314
      %v7369 = vpop.permute.xlu0 %7368
      %7372 = vset.pattern.permute.xlu0 0
      %7373 = vperm.xlu0 %7372, %v7315
      %v7374 = vpop.permute.xlu0 %7373
      %7377 = vset.pattern.permute.xlu0 0
      %7378 = vperm.xlu0 %7377, %v7316
      %v7379 = vpop.permute.xlu0 %7378
      %7382 = vset.pattern.permute.xlu0 0
      %7383 = vperm.xlu0 %7382, %v7317
      %v7384 = vpop.permute.xlu0 %7383
      %7387 = vset.pattern.permute.xlu0 0
      %7388 = vperm.xlu0 %7387, %v7318
      %v7389 = vpop.permute.xlu0 %7388
      %7392 = vset.pattern.permute.xlu0 0
      %7393 = vperm.xlu0 %7392, %v7319
      %v7394 = vpop.permute.xlu0 %7393
      %7397 = vset.pattern.permute.xlu0 0
      %7398 = vperm.xlu0 %7397, %v7320
      %v7399 = vpop.permute.xlu0 %7398
      %7402 = vset.pattern.permute.xlu0 0
      %7403 = vperm.xlu0 %7402, %v7321
      %v7404 = vpop.permute.xlu0 %7403
      %7407 = vset.pattern.permute.xlu0 0
      %7408 = vperm.xlu0 %7407, %v7322
      %v7409 = vpop.permute.xlu0 %7408
      %7412 = vset.pattern.permute.xlu0 0
      %7413 = vperm.xlu0 %7412, %v7323
      %v7414 = vpop.permute.xlu0 %7413
      %7417 = vset.pattern.permute.xlu0 0
      %7418 = vperm.xlu0 %7417, %v7324
      %v7419 = vpop.permute.xlu0 %7418
      %7422 = vset.pattern.permute.xlu0 0
      %7423 = vperm.xlu0 %7422, %v7325
      %v7424 = vpop.permute.xlu0 %7423
      %7427 = vset.pattern.permute.xlu0 0
      %7428 = vperm.xlu0 %7427, %v7326
      %v7429 = vpop.permute.xlu0 %7428
      %7432 = vset.pattern.permute.xlu0 0
      %7433 = vperm.xlu0 %7432, %v7327
      %v7434 = vpop.permute.xlu0 %7433
      %7437 = vset.pattern.permute.xlu0 0
      %7438 = vperm.xlu0 %7437, %v7328
      %v7439 = vpop.permute.xlu0 %7438
      %7442 = vset.pattern.permute.xlu0 0
      %7443 = vperm.xlu0 %7442, %v7329
      %v7444 = vpop.permute.xlu0 %7443
      %7447 = vset.pattern.permute.xlu0 0
      %7448 = vperm.xlu0 %7447, %v7330
      %v7449 = vpop.permute.xlu0 %7448
      %7452 = vset.pattern.permute.xlu0 0
      %7453 = vperm.xlu0 %7452, %v7331
      %v7454 = vpop.permute.xlu0 %7453
      %7457 = vset.pattern.permute.xlu0 0
      %7458 = vperm.xlu0 %7457, %v7332
      %v7459 = vpop.permute.xlu0 %7458
      %7462 = vset.pattern.permute.xlu0 0
      %7463 = vperm.xlu0 %7462, %v7333
      %v7464 = vpop.permute.xlu0 %7463
      %7467 = vset.pattern.permute.xlu0 0
      %7468 = vperm.xlu0 %7467, %v7334
      %v7469 = vpop.permute.xlu0 %7468
      %7472 = vset.pattern.permute.xlu0 0
      %7473 = vperm.xlu0 %7472, %v7335
      %v7474 = vpop.permute.xlu0 %7473
      %7477 = vset.pattern.permute.xlu0 0
      %7478 = vperm.xlu0 %7477, %v7336
      %v7479 = vpop.permute.xlu0 %7478
      %7482 = vset.pattern.permute.xlu0 0
      %7483 = vperm.xlu0 %7482, %v7337
      %v7484 = vpop.permute.xlu0 %7483
      %7487 = vset.pattern.permute.xlu0 0
      %7488 = vperm.xlu0 %7487, %v7338
      %v7489 = vpop.permute.xlu0 %7488
      %7492 = vset.pattern.permute.xlu0 0
      %7493 = vperm.xlu0 %7492, %v7339
      %v7494 = vpop.permute.xlu0 %7493
      %7497 = vset.pattern.permute.xlu0 0
      %7498 = vperm.xlu0 %7497, %v7340
      %v7499 = vpop.permute.xlu0 %7498
      %v7501 = vmul.f32 %v7245, %v7344
      %v7502 = vmul.f32 %v7246, %v7344
      %v7503 = vmul.f32 %v7247, %v7349
      %v7504 = vmul.f32 %v7248, %v7349
      %v7505 = vmul.f32 %v7249, %v7354
      %v7506 = vmul.f32 %v7250, %v7354
      %v7507 = vmul.f32 %v7251, %v7359
      %v7508 = vmul.f32 %v7252, %v7359
      %v7509 = vmul.f32 %v7253, %v7364
      %v7510 = vmul.f32 %v7254, %v7364
      %v7511 = vmul.f32 %v7255, %v7369
      %v7512 = vmul.f32 %v7256, %v7369
      %v7513 = vmul.f32 %v7257, %v7374
      %v7514 = vmul.f32 %v7258, %v7374
      %v7515 = vmul.f32 %v7259, %v7379
      %v7516 = vmul.f32 %v7260, %v7379
      %v7517 = vmul.f32 %v7261, %v7384
      %v7518 = vmul.f32 %v7262, %v7384
      %v7519 = vmul.f32 %v7263, %v7389
      %v7520 = vmul.f32 %v7264, %v7389
      %v7521 = vmul.f32 %v7265, %v7394
      %v7522 = vmul.f32 %v7266, %v7394
      %v7523 = vmul.f32 %v7267, %v7399
      %v7524 = vmul.f32 %v7268, %v7399
      %v7525 = vmul.f32 %v7269, %v7404
      %v7526 = vmul.f32 %v7270, %v7404
      %v7527 = vmul.f32 %v7271, %v7409
      %v7528 = vmul.f32 %v7272, %v7409
      %v7529 = vmul.f32 %v7273, %v7414
      %v7530 = vmul.f32 %v7274, %v7414
      %v7531 = vmul.f32 %v7275, %v7419
      %v7532 = vmul.f32 %v7276, %v7419
      %v7533 = vmul.f32 %v7277, %v7424
      %v7534 = vmul.f32 %v7278, %v7424
      %v7535 = vmul.f32 %v7279, %v7429
      %v7536 = vmul.f32 %v7280, %v7429
      %v7537 = vmul.f32 %v7281, %v7434
      %v7538 = vmul.f32 %v7282, %v7434
      %v7539 = vmul.f32 %v7283, %v7439
      %v7540 = vmul.f32 %v7284, %v7439
      %v7541 = vmul.f32 %v7285, %v7444
      %v7542 = vmul.f32 %v7286, %v7444
      %v7543 = vmul.f32 %v7287, %v7449
      %v7544 = vmul.f32 %v7288, %v7449
      %v7545 = vmul.f32 %v7289, %v7454
      %v7546 = vmul.f32 %v7290, %v7454
      %v7547 = vmul.f32 %v7291, %v7459
      %v7548 = vmul.f32 %v7292, %v7459
      %v7549 = vmul.f32 %v7293, %v7464
      %v7550 = vmul.f32 %v7294, %v7464
      %v7551 = vmul.f32 %v7295, %v7469
      %v7552 = vmul.f32 %v7296, %v7469
      %v7553 = vmul.f32 %v7297, %v7474
      %v7554 = vmul.f32 %v7298, %v7474
      %v7555 = vmul.f32 %v7299, %v7479
      %v7556 = vmul.f32 %v7300, %v7479
      %v7557 = vmul.f32 %v7301, %v7484
      %v7558 = vmul.f32 %v7302, %v7484
      %v7559 = vmul.f32 %v7303, %v7489
      %v7560 = vmul.f32 %v7304, %v7489
      %v7561 = vmul.f32 %v7305, %v7494
      %v7562 = vmul.f32 %v7306, %v7494
      %v7563 = vmul.f32 %v7307, %v7499
      %v7564 = vmul.f32 %v7308, %v7499
      %v7565 = vadd.f32 %v7501, %v7503
      %v7566 = vadd.f32 %v7565, %v7505
      %v7567 = vadd.f32 %v7566, %v7507
      %v7568 = vadd.f32 %v7567, %v7509
      %v7569 = vadd.f32 %v7568, %v7511
      %v7570 = vadd.f32 %v7569, %v7513
      %v7571 = vadd.f32 %v7570, %v7515
      %v7572 = vadd.f32 %v7571, %v7517
      %v7573 = vadd.f32 %v7572, %v7519
      %v7574 = vadd.f32 %v7573, %v7521
      %v7575 = vadd.f32 %v7574, %v7523
      %v7576 = vadd.f32 %v7575, %v7525
      %v7577 = vadd.f32 %v7576, %v7527
      %v7578 = vadd.f32 %v7577, %v7529
      %v7579 = vadd.f32 %v7578, %v7531
      %v7580 = vadd.f32 %v7579, %v7533
      %v7581 = vadd.f32 %v7580, %v7535
      %v7582 = vadd.f32 %v7581, %v7537
      %v7583 = vadd.f32 %v7582, %v7539
      %v7584 = vadd.f32 %v7583, %v7541
      %v7585 = vadd.f32 %v7584, %v7543
      %v7586 = vadd.f32 %v7585, %v7545
      %v7587 = vadd.f32 %v7586, %v7547
      %v7588 = vadd.f32 %v7587, %v7549
      %v7589 = vadd.f32 %v7588, %v7551
      %v7590 = vadd.f32 %v7589, %v7553
      %v7591 = vadd.f32 %v7590, %v7555
      %v7592 = vadd.f32 %v7591, %v7557
      %v7593 = vadd.f32 %v7592, %v7559
      %v7594 = vadd.f32 %v7593, %v7561
      %v7595 = vadd.f32 %v7594, %v7563
      %v7596 = vrot.slane %v7595, 4
      %v7597 = vadd.f32 %v7595, %v7596
      %v7598 = vrot.slane %v7597, 2
      %v7599 = vadd.f32 %v7597, %v7598
      %v7600 = vrot.slane %v7599, 1
      %v7601 = vadd.f32 %v7599, %v7600
      %v7602 = vadd.f32 %v7502, %v7504
      %v7603 = vadd.f32 %v7602, %v7506
      %v7604 = vadd.f32 %v7603, %v7508
      %v7605 = vadd.f32 %v7604, %v7510
      %v7606 = vadd.f32 %v7605, %v7512
      %v7607 = vadd.f32 %v7606, %v7514
      %v7608 = vadd.f32 %v7607, %v7516
      %v7609 = vadd.f32 %v7608, %v7518
      %v7610 = vadd.f32 %v7609, %v7520
      %v7611 = vadd.f32 %v7610, %v7522
      %v7612 = vadd.f32 %v7611, %v7524
      %v7613 = vadd.f32 %v7612, %v7526
      %v7614 = vadd.f32 %v7613, %v7528
      %v7615 = vadd.f32 %v7614, %v7530
      %v7616 = vadd.f32 %v7615, %v7532
      %v7617 = vadd.f32 %v7616, %v7534
      %v7618 = vadd.f32 %v7617, %v7536
      %v7619 = vadd.f32 %v7618, %v7538
      %v7620 = vadd.f32 %v7619, %v7540
      %v7621 = vadd.f32 %v7620, %v7542
      %v7622 = vadd.f32 %v7621, %v7544
      %v7623 = vadd.f32 %v7622, %v7546
      %v7624 = vadd.f32 %v7623, %v7548
      %v7625 = vadd.f32 %v7624, %v7550
      %v7626 = vadd.f32 %v7625, %v7552
      %v7627 = vadd.f32 %v7626, %v7554
      %v7628 = vadd.f32 %v7627, %v7556
      %v7629 = vadd.f32 %v7628, %v7558
      %v7630 = vadd.f32 %v7629, %v7560
      %v7631 = vadd.f32 %v7630, %v7562
      %v7632 = vadd.f32 %v7631, %v7564
      %v7633 = vrot.slane %v7632, 4
      %v7634 = vadd.f32 %v7632, %v7633
      %v7635 = vrot.slane %v7634, 2
      %v7636 = vadd.f32 %v7634, %v7635
      %v7637 = vrot.slane %v7636, 1
      %v7638 = vadd.f32 %v7636, %v7637
      %v7639 = vmul.f32 %v7501, %v7245
      %v7640 = vmul.f32 %v7502, %v7246
      %v7641 = vmul.f32 %v7503, %v7247
      %v7642 = vmul.f32 %v7504, %v7248
      %v7643 = vmul.f32 %v7505, %v7249
      %v7644 = vmul.f32 %v7506, %v7250
      %v7645 = vmul.f32 %v7507, %v7251
      %v7646 = vmul.f32 %v7508, %v7252
      %v7647 = vmul.f32 %v7509, %v7253
      %v7648 = vmul.f32 %v7510, %v7254
      %v7649 = vmul.f32 %v7511, %v7255
      %v7650 = vmul.f32 %v7512, %v7256
      %v7651 = vmul.f32 %v7513, %v7257
      %v7652 = vmul.f32 %v7514, %v7258
      %v7653 = vmul.f32 %v7515, %v7259
      %v7654 = vmul.f32 %v7516, %v7260
      %v7655 = vmul.f32 %v7517, %v7261
      %v7656 = vmul.f32 %v7518, %v7262
      %v7657 = vmul.f32 %v7519, %v7263
      %v7658 = vmul.f32 %v7520, %v7264
      %v7659 = vmul.f32 %v7521, %v7265
      %v7660 = vmul.f32 %v7522, %v7266
      %v7661 = vmul.f32 %v7523, %v7267
      %v7662 = vmul.f32 %v7524, %v7268
      %v7663 = vmul.f32 %v7525, %v7269
      %v7664 = vmul.f32 %v7526, %v7270
      %v7665 = vmul.f32 %v7527, %v7271
      %v7666 = vmul.f32 %v7528, %v7272
      %v7667 = vmul.f32 %v7529, %v7273
      %v7668 = vmul.f32 %v7530, %v7274
      %v7669 = vmul.f32 %v7531, %v7275
      %v7670 = vmul.f32 %v7532, %v7276
      %v7671 = vmul.f32 %v7533, %v7277
      %v7672 = vmul.f32 %v7534, %v7278
      %v7673 = vmul.f32 %v7535, %v7279
      %v7674 = vmul.f32 %v7536, %v7280
      %v7675 = vmul.f32 %v7537, %v7281
      %v7676 = vmul.f32 %v7538, %v7282
      %v7677 = vmul.f32 %v7539, %v7283
      %v7678 = vmul.f32 %v7540, %v7284
      %v7679 = vmul.f32 %v7541, %v7285
      %v7680 = vmul.f32 %v7542, %v7286
      %v7681 = vmul.f32 %v7543, %v7287
      %v7682 = vmul.f32 %v7544, %v7288
      %v7683 = vmul.f32 %v7545, %v7289
      %v7684 = vmul.f32 %v7546, %v7290
      %v7685 = vmul.f32 %v7547, %v7291
      %v7686 = vmul.f32 %v7548, %v7292
      %v7687 = vmul.f32 %v7549, %v7293
      %v7688 = vmul.f32 %v7550, %v7294
      %v7689 = vmul.f32 %v7551, %v7295
      %v7690 = vmul.f32 %v7552, %v7296
      %v7691 = vmul.f32 %v7553, %v7297
      %v7692 = vmul.f32 %v7554, %v7298
      %v7693 = vmul.f32 %v7555, %v7299
      %v7694 = vmul.f32 %v7556, %v7300
      %v7695 = vmul.f32 %v7557, %v7301
      %v7696 = vmul.f32 %v7558, %v7302
      %v7697 = vmul.f32 %v7559, %v7303
      %v7698 = vmul.f32 %v7560, %v7304
      %v7699 = vmul.f32 %v7561, %v7305
      %v7700 = vmul.f32 %v7562, %v7306
      %v7701 = vmul.f32 %v7563, %v7307
      %v7702 = vmul.f32 %v7564, %v7308
      %v7703 = vadd.f32 %v7639, %v7641
      %v7704 = vadd.f32 %v7703, %v7643
      %v7705 = vadd.f32 %v7704, %v7645
      %v7706 = vadd.f32 %v7705, %v7647
      %v7707 = vadd.f32 %v7706, %v7649
      %v7708 = vadd.f32 %v7707, %v7651
      %v7709 = vadd.f32 %v7708, %v7653
      %v7710 = vadd.f32 %v7709, %v7655
      %v7711 = vadd.f32 %v7710, %v7657
      %v7712 = vadd.f32 %v7711, %v7659
      %v7713 = vadd.f32 %v7712, %v7661
      %v7714 = vadd.f32 %v7713, %v7663
      %v7715 = vadd.f32 %v7714, %v7665
      %v7716 = vadd.f32 %v7715, %v7667
      %v7717 = vadd.f32 %v7716, %v7669
      %v7718 = vadd.f32 %v7717, %v7671
      %v7719 = vadd.f32 %v7718, %v7673
      %v7720 = vadd.f32 %v7719, %v7675
      %v7721 = vadd.f32 %v7720, %v7677
      %v7722 = vadd.f32 %v7721, %v7679
      %v7723 = vadd.f32 %v7722, %v7681
      %v7724 = vadd.f32 %v7723, %v7683
      %v7725 = vadd.f32 %v7724, %v7685
      %v7726 = vadd.f32 %v7725, %v7687
      %v7727 = vadd.f32 %v7726, %v7689
      %v7728 = vadd.f32 %v7727, %v7691
      %v7729 = vadd.f32 %v7728, %v7693
      %v7730 = vadd.f32 %v7729, %v7695
      %v7731 = vadd.f32 %v7730, %v7697
      %v7732 = vadd.f32 %v7731, %v7699
      %v7733 = vadd.f32 %v7732, %v7701
      %v7734 = vrot.slane %v7733, 4
      %v7735 = vadd.f32 %v7733, %v7734
      %v7736 = vrot.slane %v7735, 2
      %v7737 = vadd.f32 %v7735, %v7736
      %v7738 = vrot.slane %v7737, 1
      %v7739 = vadd.f32 %v7737, %v7738
      %v7740 = vadd.f32 %v7640, %v7642
      %v7741 = vadd.f32 %v7740, %v7644
      %v7742 = vadd.f32 %v7741, %v7646
      %v7743 = vadd.f32 %v7742, %v7648
      %v7744 = vadd.f32 %v7743, %v7650
      %v7745 = vadd.f32 %v7744, %v7652
      %v7746 = vadd.f32 %v7745, %v7654
      %v7747 = vadd.f32 %v7746, %v7656
      %v7748 = vadd.f32 %v7747, %v7658
      %v7749 = vadd.f32 %v7748, %v7660
      %v7750 = vadd.f32 %v7749, %v7662
      %v7751 = vadd.f32 %v7750, %v7664
      %v7752 = vadd.f32 %v7751, %v7666
      %v7753 = vadd.f32 %v7752, %v7668
      %v7754 = vadd.f32 %v7753, %v7670
      %v7755 = vadd.f32 %v7754, %v7672
      %v7756 = vadd.f32 %v7755, %v7674
      %v7757 = vadd.f32 %v7756, %v7676
      %v7758 = vadd.f32 %v7757, %v7678
      %v7759 = vadd.f32 %v7758, %v7680
      %v7760 = vadd.f32 %v7759, %v7682
      %v7761 = vadd.f32 %v7760, %v7684
      %v7762 = vadd.f32 %v7761, %v7686
      %v7763 = vadd.f32 %v7762, %v7688
      %v7764 = vadd.f32 %v7763, %v7690
      %v7765 = vadd.f32 %v7764, %v7692
      %v7766 = vadd.f32 %v7765, %v7694
      %v7767 = vadd.f32 %v7766, %v7696
      %v7768 = vadd.f32 %v7767, %v7698
      %v7769 = vadd.f32 %v7768, %v7700
      %v7770 = vadd.f32 %v7769, %v7702
      %v7771 = vrot.slane %v7770, 4
      %v7772 = vadd.f32 %v7770, %v7771
      %v7773 = vrot.slane %v7772, 2
      %v7774 = vadd.f32 %v7772, %v7773
      %v7775 = vrot.slane %v7774, 1
      %v7776 = vadd.f32 %v7774, %v7775
      %vm7777 = vcmask 1040384
      %v7778 = vsel %vm7777, %v7601, %v7739
      %v7779 = vsel %vm7777, %v7638, %v7776
      %vm7780 = vcmask 1041408
      %v7781 = vsel %vm7780, %v7778, 0.0
      %v7782 = vsel %vm7780, %v7779, 0.0
      %7783 = vst [vmem:[%s215] sm:$0xff] %v7781
      %7784 = vst [vmem:[%s215 + $0x8] sm:$0xff] %v7782
      %s7785 = smul.u32 32, %s16
      %p7786 = scmp.lt.s32.totalorder %s7785, 63
      %s7787 = scalar_select %p7786, %s7785, 63
      %s7788 = smul.addr %s7787, 2
      %s7789 = smul.addr %s7788, 8
      %s7790 = scalar_lea.vmem %s3, %s7789
      %p7791 = scmp.lt.s32.totalorder %s16, 1
      %s7792 = scalar_select %p7791, %s16, 1
      %s7793 = smul.addr %s7792, 2
      %s7794 = smul.addr %s7793, 8
      %s7795 = scalar_lea.vmem %s4, %s7794
      // Predicated region
      $region33: #{fused_forward.2} parent=31 // pred_check
        %p7796 = pneg %p102
      $region34: #{fused_forward.2} parent=31 // pred_check_branch
        %7798 = sbr.rel (%p7796) target = $region36
      $region35: #{fused_forward.2} parent=31 // pred_region
        %s7799 = smul.u32 32, %s16
      $region36: #{fused_forward.2} parent=31 // pred_fallthru
        _
      // Predicated region
      $region37: #{fused_forward.2} parent=31 // pred_check
        %p7800 = pneg %p128
      $region38: #{fused_forward.2} parent=31 // pred_check_branch
        %7802 = sbr.rel (%p7800) target = $region40
      $region39: #{fused_forward.2} parent=31 // pred_region
        _
      $region40: #{fused_forward.2} parent=31 // pred_fallthru
        _
    $region32: #{fused_forward.2} parent=5 // pred_fallthru
      _
    %p7803 = scmp.le.s32.totalorder 2, %s11
    // Predicated region
    $region41: #{fused_forward.2} parent=5 // pred_check
      %p7804 = pneg %p7803
    $region42: #{fused_forward.2} parent=5 // pred_check_branch
      %7806 = sbr.rel (%p7804) target = $region44
    $region43: #{fused_forward.2} parent=5 // pred_region
      %s7807 = ssub.s32 %s11, 2
      // Predicated region
      $region45: #{fused_forward.2} parent=43 // pred_check
        %p7808 = pneg %p108
      $region46: #{fused_forward.2} parent=43 // pred_check_branch
        %7810 = sbr.rel (%p7808) target = $region48
      $region47: #{fused_forward.2} parent=43 // pred_region
        %s7811 = smul.u32 32, %s17
        %p7812 = scmp.lt.s32.totalorder %s7811, 63
        %s7813 = scalar_select %p7812, %s7811, 63
        %s7814 = smul.addr %s7813, 2
        %s7815 = smul.addr %s7814, 8
        %s7816 = scalar_lea.vmem %s3, %s7815
      $region48: #{fused_forward.2} parent=43 // pred_fallthru
        _
      // Predicated region
      $region49: #{fused_forward.2} parent=43 // pred_check
        %p7817 = pneg %p134
      $region50: #{fused_forward.2} parent=43 // pred_check_branch
        %7819 = sbr.rel (%p7817) target = $region52
      $region51: #{fused_forward.2} parent=43 // pred_region
        %p7820 = scmp.lt.s32.totalorder %s17, 1
        %s7821 = scalar_select %p7820, %s17, 1
        %s7822 = smul.addr %s7821, 2
        %s7823 = smul.addr %s7822, 8
        %s7824 = scalar_lea.vmem %s4, %s7823
      $region52: #{fused_forward.2} parent=43 // pred_fallthru
        _
    $region44: #{fused_forward.2} parent=5 // pred_fallthru
      _
  $region6: #{fused_forward.2} parent=0 // loop_footer
    %s15 = sadd.s32 1, %s11
  $region7: #{fused_forward.2} parent=0 // loop_footer_branch
    %10 = sbr.rel target = $region3
  $region8: #{fused_forward.2} parent=0 // loop_exit
    _

</llo_original>
